<compile_context>
chip_gen: v5e
topology: v5e:2x2
jax: 0.10.0
libtpu: 0.0.40
codegen_flags: <defaults>
</compile_context>

<pallas_src>
import functools

import jax
import jax.numpy as jnp
from jax import lax
from jax.experimental import pallas as pl
from jax.experimental.pallas import tpu as pltpu


def basic_block_kernel(xstr_ref, w1_ref, w2_ref, b1_ref, b2_ref,
                       out_ref, xbf_ref, mid_ref, acc_ref,
                       *, B, Ht, W, Cp, S):
    """One (H-strip, batch-tile) per grid step.

    xstr_ref : (B, Ht+4, W+2, Cp) f32   x strip, 2-row / 1-col zero halo, NHWC
    w1_ref   : (9, Cp, Cp)        bf16  conv1 weights (BN1 scale folded), tap-major
    w2_ref   : (9, Cp, Cp)        bf16  conv2 weights (BN2 scale folded)
    b1_ref   : (1, Cp)            f32   folded BN1 bias (padded lanes: 0)
    b2_ref   : (1, Cp)            f32   folded BN2 bias
    out_ref  : (B, Ht, W, Cp)     f32
    xbf_ref  : (B, Ht+4, W+2, Cp) bf16  scratch: bf16 copy of the x strip
    mid_ref  : (B, Ht+2, W+2, Cp) bf16  scratch: W-padded conv1 output (+1-row halo)
    acc_ref  : (B*(Ht+2)*W, Cp)   f32   scratch: matmul accumulator
    """
    s = pl.program_id(0)            # strip index (0 .. S-1)
    M1 = B * (Ht + 2) * W           # conv1 output rows (incl. 1-row halo each side)
    M2 = B * Ht * W                 # conv2 / final output rows

    # Cast the x strip to bf16 once (MXU operands); residual stays f32.
    xbf_ref[...] = xstr_ref[...].astype(jnp.bfloat16)

    # ---- conv1 (+folded BN1 scale): 9 accumulating MXU dots, K = Cp each ----
    # Note: for W = 7/14/28 (later ResNet stages) padding W to a multiple of 8
    # would keep these (B,h,W,Cp)->(M,Cp) collapses sublane-aligned (perf only).
    for kh in range(3):
        for kw in range(3):
            t = kh * 3 + kw
            patch = xbf_ref[:, kh:kh + Ht + 2, kw:kw + W, :].reshape(M1, Cp)
            d = jnp.dot(patch, w1_ref[t], preferred_element_type=jnp.float32)
            if t == 0:
                acc_ref[...] = d
            else:
                acc_ref[...] += d

    h1 = jnp.maximum(acc_ref[...] + b1_ref[...], 0.0)           # BN1 bias + ReLU
    mid_ref[:, :, 1:1 + W, :] = h1.reshape(B, Ht + 2, W, Cp).astype(jnp.bfloat16)

    # conv2 zero padding: W halo columns always; H halo rows only at image edges
    # (interior strips keep the real h1 halo rows computed above).
    zcol = jnp.zeros((B, Ht + 2, 1, Cp), jnp.bfloat16)
    mid_ref[:, :, 0:1, :] = zcol
    mid_ref[:, :, W + 1:W + 2, :] = zcol

    zrow = jnp.zeros((B, 1, W + 2, Cp), jnp.bfloat16)

    @pl.when(s == 0)
    def _():
        mid_ref[:, 0:1, :, :] = zrow

    @pl.when(s == S - 1)
    def _():
        mid_ref[:, Ht + 1:Ht + 2, :, :] = zrow

    # ---- conv2 (+folded BN2 scale): 9 accumulating MXU dots over Ht rows ----
    for kh in range(3):
        for kw in range(3):
            t = kh * 3 + kw
            patch = mid_ref[:, kh:kh + Ht, kw:kw + W, :].reshape(M2, Cp)
            d = jnp.dot(patch, w2_ref[t], preferred_element_type=jnp.float32)
            if t == 0:
                acc_ref[0:M2, :] = d
            else:
                acc_ref[0:M2, :] += d

    # BN2 bias + residual (read from the centre of the f32 strip) + ReLU,
    # done in (B, Ht, W, Cp) shape so the residual needs no extra reshape.
    h2 = (acc_ref[0:M2, :] + b2_ref[...]).reshape(B, Ht, W, Cp)
    res = xstr_ref[:, 2:2 + Ht, 1:1 + W, :]
    out_ref[...] = jnp.maximum(h2 + res, 0.0)


def _vmem_est(B, Ht, W, Cp):
    """Per-step VMEM working set (bytes) for a (B, Ht) tile."""
    f32, bf16 = 4, 2
    x_blk = B * (Ht + 4) * (W + 2) * Cp * f32 * 2    # double-buffered input strip
    o_blk = B * Ht * W * Cp * f32 * 2                # double-buffered output
    wts = 2 * 9 * Cp * Cp * bf16                     # two bf16 slabs, single-buffered
    bias = 2 * 2 * Cp * f32
    xbf = B * (Ht + 4) * (W + 2) * Cp * bf16         # bf16 strip scratch
    mid = B * (Ht + 2) * (W + 2) * Cp * bf16         # padded intermediate
    acc = B * (Ht + 2) * W * Cp * f32                # accumulator
    return x_blk + o_blk + wts + bias + xbf + mid + acc


def _vmem_budget():
    """Generation-aware VMEM budget (bytes) and physical capacity."""
    try:
        cap = int(pltpu.get_tpu_info().vmem_capacity_bytes)
    except Exception:
        cap = 64 << 20                               # conservative fallback (v7x)
    return int(cap * 0.7), cap


def _pick_tiles(N, H, W, Cp, budget_bytes):
    """Choose (batch tile B, strip height Ht): biggest per-step tile that fits
    the VMEM budget, preferring >= 2 grid steps so both v7x TCs get work."""
    b_divs = [d for d in range(1, N + 1) if N % d == 0]
    h_divs = [h for h in range(1, H + 1) if H % h == 0]
    cands = [(B, Ht) for B in b_divs for Ht in h_divs
             if _vmem_est(B, Ht, W, Cp) <= budget_bytes]
    if not cands:
        return 1, h_divs[0]                          # best effort: smallest tile
    multi = [(B, Ht) for (B, Ht) in cands if (H // Ht) * (N // B) >= 2]
    pool = multi if multi else cands
    # maximize per-step work; tie-break on taller strips (less halo recompute)
    return max(pool, key=lambda t: (t[0] * t[1], t[1]))


def _const_spec(block_shape, index_map):
    """BlockSpec for constant-index blocks (weights/biases): single-buffered."""
    try:
        return pl.BlockSpec(block_shape, index_map, pipeline_mode=pl.Buffered(1))
    except Exception:
        return pl.BlockSpec(block_shape, index_map)


def basic_block_forward(x_nchw, params, tiles=None):
    """x_nchw: (N, C, H, W) float32. Returns (N, C, H, W)."""
    w1 = params["w1"]                  # (Cout, Cin, 3, 3) torch layout
    w2 = params["w2"]                  # (Cout, Cout, 3, 3)
    eps = 1e-5

    N, Cin, H, W = x_nchw.shape
    Cout = w1.shape[0]
    assert Cin == Cout, "downsample=None requires in_channels == out_channels"
    C = Cout
    Cp = max(((C + 127) // 128) * 128, 128)          # lane-pad channels

    # fold BN (eval mode) into per-channel scale/bias; scale is folded into W.
    s1 = params["bn1_gamma"] / jnp.sqrt(params["bn1_var"] + eps)
    b1 = params["bn1_beta"] - params["bn1_mean"] * s1
    s2 = params["bn2_gamma"] / jnp.sqrt(params["bn2_var"] + eps)
    b2 = params["bn2_beta"] - params["bn2_mean"] * s2

    def pad_bias(v):
        return jnp.zeros((1, Cp), jnp.float32).at[0, :C].set(v.astype(jnp.float32))
    b1p = pad_bias(b1)
    b2p = pad_bias(b2)

    def make_slab(w, scale):
        # torch (Cout, Cin, 3, 3) -> (9, Cp, Cp) bf16, BN scale folded into Cout
        cout, cin = w.shape[0], w.shape[1]
        wt = jnp.transpose(w, (2, 3, 1, 0)).astype(jnp.float32)      # (3,3,Cin,Cout)
        wt = wt * scale.astype(jnp.float32)[None, None, None, :]
        wt = jnp.pad(wt, ((0, 0), (0, 0), (0, Cp - cin), (0, Cp - cout)))
        return wt.reshape(9, Cp, Cp).astype(jnp.bfloat16)
    w1s = make_slab(w1, s1)
    w2s = make_slab(w2, s2)

    budget, vmem_cap = _vmem_budget()
    if tiles is None:
        B, Ht = _pick_tiles(N, H, W, Cp, budget)
    else:
        B, Ht = tiles
    assert N % B == 0 and H % Ht == 0
    S = H // Ht                                       # number of H strips
    nb = N // B                                       # number of batch tiles
    est = _vmem_est(B, Ht, W, Cp)
    vmem_limit = int(min(vmem_cap, max(2 * est, 32 << 20)))

    # NCHW -> NHWC, channel lane-pad, 2-row / 1-col zero halo, H-strip expand.
    # Strip s covers image rows [s*Ht - 2, s*Ht + Ht + 2); flattened strip-major
    # so row index = s*N + n and blocks of B images per strip stay contiguous.
    x = jnp.transpose(x_nchw, (0, 2, 3, 1)).astype(jnp.float32)       # (N,H,W,C)
    xpad = jnp.pad(x, ((0, 0), (2, 2), (1, 1), (0, Cp - C)))           # (N,H+4,W+2,Cp)
    if S > 1:
        xstr = jnp.concatenate(
            [xpad[:, s * Ht:s * Ht + Ht + 4] for s in range(S)], axis=0)
    else:
        xstr = xpad                                                    # (S*N,Ht+4,W+2,Cp)

    kernel = functools.partial(basic_block_kernel, B=B, Ht=Ht, W=W, Cp=Cp, S=S)
    M1 = B * (Ht + 2) * W

    x_map = lambda s, b: (s * nb + b, 0, 0, 0)
    o_map = lambda s, b: (s * nb + b, 0, 0, 0)

    out_flat = pl.pallas_call(
        kernel,
        out_shape=jax.ShapeDtypeStruct((S * N, Ht, W, Cp), jnp.float32),
        grid_spec=pltpu.PrefetchScalarGridSpec(
            num_scalar_prefetch=0,
            grid=(S, nb),
            in_specs=[
                pl.BlockSpec((B, Ht + 4, W + 2, Cp), x_map),
                _const_spec((9, Cp, Cp), lambda s, b: (0, 0, 0)),
                _const_spec((9, Cp, Cp), lambda s, b: (0, 0, 0)),
                _const_spec((1, Cp), lambda s, b: (0, 0)),
                _const_spec((1, Cp), lambda s, b: (0, 0)),
            ],
            out_specs=pl.BlockSpec((B, Ht, W, Cp), o_map),
            scratch_shapes=[
                pltpu.VMEM((B, Ht + 4, W + 2, Cp), jnp.bfloat16),   # bf16 x strip
                pltpu.VMEM((B, Ht + 2, W + 2, Cp), jnp.bfloat16),   # padded mid
                pltpu.VMEM((M1, Cp), jnp.float32),                  # accumulator
            ],
        ),
        compiler_params=pltpu.CompilerParams(
            dimension_semantics=("parallel", "parallel"),
            vmem_limit_bytes=vmem_limit),
    )(xstr, w1s, w2s, b1p, b2p)

    # reassemble strips -> image, drop channel lane padding, back to NCHW
    out = out_flat.reshape(S, N, Ht, W, Cp)
    out = jnp.transpose(out, (1, 0, 2, 3, 4)).reshape(N, H, W, Cp)
    out = out[..., :C]
    return jnp.transpose(out, (0, 3, 1, 2))


def reference_forward(x_nchw, params):
    """Pure-JAX reference (NCHW, eval-mode BN, f32) for a sanity check."""
    eps = 1e-5

    def conv(x, w):
        return lax.conv_general_dilated(
            x, w, window_strides=(1, 1), padding=((1, 1), (1, 1)),
            dimension_numbers=("NCHW", "OIHW", "NCHW"))

    def bn(x, g, b, m, v):
        g = g[None, :, None, None]; b = b[None, :, None, None]
        m = m[None, :, None, None]; v = v[None, :, None, None]
        return (x - m) / jnp.sqrt(v + eps) * g + b

    out = conv(x_nchw, params["w1"])
    out = jnp.maximum(bn(out, params["bn1_gamma"], params["bn1_beta"],
                         params["bn1_mean"], params["bn1_var"]), 0.0)
    out = conv(out, params["w2"])
    out = bn(out, params["bn2_gamma"], params["bn2_beta"],
             params["bn2_mean"], params["bn2_var"])
    return jnp.maximum(out + x_nchw, 0.0)


def make_params(key, in_channels, out_channels):
    ks = jax.random.split(key, 8)
    return {
        "w1": 0.1 * jax.random.normal(ks[0], (out_channels, in_channels, 3, 3), jnp.float32),
        "w2": 0.1 * jax.random.normal(ks[1], (out_channels, out_channels, 3, 3), jnp.float32),
        "bn1_gamma": 1.0 + 0.1 * jax.random.normal(ks[2], (out_channels,), jnp.float32),
        "bn1_beta": 0.1 * jax.random.normal(ks[3], (out_channels,), jnp.float32),
        "bn1_mean": 0.05 * jax.random.normal(ks[4], (out_channels,), jnp.float32),
        "bn1_var": jnp.abs(1.0 + 0.1 * jax.random.normal(ks[5], (out_channels,), jnp.float32)),
        "bn2_gamma": 1.0 + 0.1 * jax.random.normal(ks[6], (out_channels,), jnp.float32),
        "bn2_beta": 0.1 * jax.random.normal(ks[7], (out_channels,), jnp.float32),
        "bn2_mean": jnp.zeros((out_channels,), jnp.float32),
        "bn2_var": jnp.ones((out_channels,), jnp.float32),
    }


if __name__ == "__main__":
    key = jax.random.PRNGKey(0)
    k_x, k_p = jax.random.split(key)

    N, C, H, W = 2, 4, 16, 16          # small shapes; stride=1, downsample=None
    x = jax.random.normal(k_x, (N, C, H, W), jnp.float32)
    params = make_params(k_p, C, C)

    ref = reference_forward(x, params)

    # default tiling (auto-picked; single strip, >=2 grid steps)
    out = jax.block_until_ready(basic_block_forward(x, params))
    assert out.shape == (N, C, H, W)
    # bf16 MXU inputs with f32 accumulation -> slightly looser tolerance vs f32 ref
    assert jnp.allclose(out, ref, atol=5e-2, rtol=5e-2), "mismatch (default tiling)"

    # explicitly exercise the multi-batch-per-step and multi-strip (halo) paths
    out2 = jax.block_until_ready(basic_block_forward(x, params, tiles=(2, 8)))
    assert jnp.allclose(out2, ref, atol=5e-2, rtol=5e-2), "mismatch (B=2, Ht=8)"

    out3 = jax.block_until_ready(basic_block_forward(x, params, tiles=(1, 4)))
    assert jnp.allclose(out3, ref, atol=5e-2, rtol=5e-2), "mismatch (B=1, Ht=4)"

    print("KERNEL_OK")
</pallas_src>

<mosaic_0001>
module attributes {stable_mosaic.version = 11 : i64} {
  func.func @basic_block_kernel(%arg0: i32, %arg1: i32, %arg2: memref<1x20x18x128xf32, #tpu.memory_space<vmem>>, %arg3: memref<9x128x128xbf16, #tpu.memory_space<vmem>>, %arg4: memref<9x128x128xbf16, #tpu.memory_space<vmem>>, %arg5: memref<1x128xf32, #tpu.memory_space<vmem>>, %arg6: memref<1x128xf32, #tpu.memory_space<vmem>>, %arg7: memref<1x16x16x128xf32, #tpu.memory_space<vmem>>, %arg8: memref<1x20x18x128xbf16, #tpu.memory_space<vmem>>, %arg9: memref<1x18x18x128xbf16, #tpu.memory_space<vmem>>, %arg10: memref<288x128xf32, #tpu.memory_space<vmem>>) attributes {dimension_semantics = [#tpu.dimension_semantics<parallel>, #tpu.dimension_semantics<parallel>], iteration_bounds = array<i64: 1, 2>, scalar_prefetch = 0 : i64, scratch_operands = 3 : i64, tpu.core_type = #tpu.core_type<tc>, window_params = [{transform_indices = @transform_0, window_bounds = array<i64: 1, 20, 18, 128>}, {pipeline_mode = #tpu.pipeline_mode<synchronous>, transform_indices = @transform_1, window_bounds = array<i64: 9, 128, 128>}, {pipeline_mode = #tpu.pipeline_mode<synchronous>, transform_indices = @transform_2, window_bounds = array<i64: 9, 128, 128>}, {pipeline_mode = #tpu.pipeline_mode<synchronous>, transform_indices = @transform_3, window_bounds = array<i64: 1, 128>}, {pipeline_mode = #tpu.pipeline_mode<synchronous>, transform_indices = @transform_4, window_bounds = array<i64: 1, 128>}, {transform_indices = @transform_5, window_bounds = array<i64: 1, 16, 16, 128>}]} {
    %c0 = arith.constant 0 : index
    %c0_0 = arith.constant 0 : index
    %c0_1 = arith.constant 0 : index
    %c0_2 = arith.constant 0 : index
    %0 = vector.load %arg2[%c0, %c0_0, %c0_1, %c0_2] : memref<1x20x18x128xf32, #tpu.memory_space<vmem>>, vector<1x20x18x128xf32>
    %1 = arith.truncf %0 : vector<1x20x18x128xf32> to vector<1x20x18x128xbf16>
    %c0_3 = arith.constant 0 : index
    %c0_4 = arith.constant 0 : index
    %c0_5 = arith.constant 0 : index
    %c0_6 = arith.constant 0 : index
    %2 = vector.load %arg8[%c0_3, %c0_4, %c0_5, %c0_6] : memref<1x20x18x128xbf16, #tpu.memory_space<vmem>>, vector<1x20x18x128xbf16>
    tpu.vector_store %arg8[%c0_3, %c0_4, %c0_5, %c0_6], %1 {strides = array<i32>} : memref<1x20x18x128xbf16, #tpu.memory_space<vmem>>, vector<1x20x18x128xbf16>,
    %c0_7 = arith.constant 0 : index
    %c0_8 = arith.constant 0 : index
    %c0_9 = arith.constant 0 : index
    %c0_10 = arith.constant 0 : index
    %3 = vector.load %arg8[%c0_7, %c0_8, %c0_9, %c0_10] : memref<1x20x18x128xbf16, #tpu.memory_space<vmem>>, vector<1x18x16x128xbf16>
    %4 = vector.shape_cast %3 : vector<1x18x16x128xbf16> to vector<288x128xbf16>
    %c0_11 = arith.constant 0 : index
    %c0_12 = arith.constant 0 : index
    %c0_13 = arith.constant 0 : index
    %5 = vector.load %arg3[%c0_11, %c0_12, %c0_13] : memref<9x128x128xbf16, #tpu.memory_space<vmem>>, vector<1x128x128xbf16>
    %6 = vector.shape_cast %5 : vector<1x128x128xbf16> to vector<128x128xbf16>
    %cst = arith.constant dense<0.000000e+00> : vector<288x128xf32>
    %7 = tpu.matmul %4, %6, %cst {dimension_numbers = #tpu.dot_dimension_numbers<[1], [0], [0], [1], [0, 0, 1, 1], [], []>} : vector<288x128xbf16>, vector<128x128xbf16>, vector<288x128xf32> -> vector<288x128xf32>
    %c0_14 = arith.constant 0 : index
    %c0_15 = arith.constant 0 : index
    %8 = vector.load %arg10[%c0_14, %c0_15] : memref<288x128xf32, #tpu.memory_space<vmem>>, vector<288x128xf32>
    tpu.vector_store %arg10[%c0_14, %c0_15], %7 {strides = array<i32>} : memref<288x128xf32, #tpu.memory_space<vmem>>, vector<288x128xf32>,
    %c0_16 = arith.constant 0 : index
    %c0_17 = arith.constant 0 : index
    %c1 = arith.constant 1 : index
    %c0_18 = arith.constant 0 : index
    %9 = vector.load %arg8[%c0_16, %c0_17, %c1, %c0_18] : memref<1x20x18x128xbf16, #tpu.memory_space<vmem>>, vector<1x18x16x128xbf16>
    %10 = vector.shape_cast %9 : vector<1x18x16x128xbf16> to vector<288x128xbf16>
    %c1_19 = arith.constant 1 : index
    %c0_20 = arith.constant 0 : index
    %c0_21 = arith.constant 0 : index
    %11 = vector.load %arg3[%c1_19, %c0_20, %c0_21] : memref<9x128x128xbf16, #tpu.memory_space<vmem>>, vector<1x128x128xbf16>
    %12 = vector.shape_cast %11 : vector<1x128x128xbf16> to vector<128x128xbf16>
    %cst_22 = arith.constant dense<0.000000e+00> : vector<288x128xf32>
    %13 = tpu.matmul %10, %12, %cst_22 {dimension_numbers = #tpu.dot_dimension_numbers<[1], [0], [0], [1], [0, 0, 1, 1], [], []>} : vector<288x128xbf16>, vector<128x128xbf16>, vector<288x128xf32> -> vector<288x128xf32>
    %c0_23 = arith.constant 0 : index
    %c0_24 = arith.constant 0 : index
    %14 = vector.load %arg10[%c0_23, %c0_24] : memref<288x128xf32, #tpu.memory_space<vmem>>, vector<288x128xf32>
    %15 = arith.addf %14, %13 : vector<288x128xf32>
    %c0_25 = arith.constant 0 : index
    %c0_26 = arith.constant 0 : index
    %16 = vector.load %arg10[%c0_25, %c0_26] : memref<288x128xf32, #tpu.memory_space<vmem>>, vector<288x128xf32>
    tpu.vector_store %arg10[%c0_25, %c0_26], %15 {strides = array<i32>} : memref<288x128xf32, #tpu.memory_space<vmem>>, vector<288x128xf32>,
    %c0_27 = arith.constant 0 : index
    %c0_28 = arith.constant 0 : index
    %c2 = arith.constant 2 : index
    %c0_29 = arith.constant 0 : index
    %17 = vector.load %arg8[%c0_27, %c0_28, %c2, %c0_29] : memref<1x20x18x128xbf16, #tpu.memory_space<vmem>>, vector<1x18x16x128xbf16>
    %18 = vector.shape_cast %17 : vector<1x18x16x128xbf16> to vector<288x128xbf16>
    %c2_30 = arith.constant 2 : index
    %c0_31 = arith.constant 0 : index
    %c0_32 = arith.constant 0 : index
    %19 = vector.load %arg3[%c2_30, %c0_31, %c0_32] : memref<9x128x128xbf16, #tpu.memory_space<vmem>>, vector<1x128x128xbf16>
    %20 = vector.shape_cast %19 : vector<1x128x128xbf16> to vector<128x128xbf16>
    %cst_33 = arith.constant dense<0.000000e+00> : vector<288x128xf32>
    %21 = tpu.matmul %18, %20, %cst_33 {dimension_numbers = #tpu.dot_dimension_numbers<[1], [0], [0], [1], [0, 0, 1, 1], [], []>} : vector<288x128xbf16>, vector<128x128xbf16>, vector<288x128xf32> -> vector<288x128xf32>
    %c0_34 = arith.constant 0 : index
    %c0_35 = arith.constant 0 : index
    %22 = vector.load %arg10[%c0_34, %c0_35] : memref<288x128xf32, #tpu.memory_space<vmem>>, vector<288x128xf32>
    %23 = arith.addf %22, %21 : vector<288x128xf32>
    %c0_36 = arith.constant 0 : index
    %c0_37 = arith.constant 0 : index
    %24 = vector.load %arg10[%c0_36, %c0_37] : memref<288x128xf32, #tpu.memory_space<vmem>>, vector<288x128xf32>
    tpu.vector_store %arg10[%c0_36, %c0_37], %23 {strides = array<i32>} : memref<288x128xf32, #tpu.memory_space<vmem>>, vector<288x128xf32>,
    %c0_38 = arith.constant 0 : index
    %c1_39 = arith.constant 1 : index
    %c0_40 = arith.constant 0 : index
    %c0_41 = arith.constant 0 : index
    %25 = vector.load %arg8[%c0_38, %c1_39, %c0_40, %c0_41] : memref<1x20x18x128xbf16, #tpu.memory_space<vmem>>, vector<1x18x16x128xbf16>
    %26 = vector.shape_cast %25 : vector<1x18x16x128xbf16> to vector<288x128xbf16>
    %c3 = arith.constant 3 : index
    %c0_42 = arith.constant 0 : index
    %c0_43 = arith.constant 0 : index
    %27 = vector.load %arg3[%c3, %c0_42, %c0_43] : memref<9x128x128xbf16, #tpu.memory_space<vmem>>, vector<1x128x128xbf16>
    %28 = vector.shape_cast %27 : vector<1x128x128xbf16> to vector<128x128xbf16>
    %cst_44 = arith.constant dense<0.000000e+00> : vector<288x128xf32>
    %29 = tpu.matmul %26, %28, %cst_44 {dimension_numbers = #tpu.dot_dimension_numbers<[1], [0], [0], [1], [0, 0, 1, 1], [], []>} : vector<288x128xbf16>, vector<128x128xbf16>, vector<288x128xf32> -> vector<288x128xf32>
    %c0_45 = arith.constant 0 : index
    %c0_46 = arith.constant 0 : index
    %30 = vector.load %arg10[%c0_45, %c0_46] : memref<288x128xf32, #tpu.memory_space<vmem>>, vector<288x128xf32>
    %31 = arith.addf %30, %29 : vector<288x128xf32>
    %c0_47 = arith.constant 0 : index
    %c0_48 = arith.constant 0 : index
    %32 = vector.load %arg10[%c0_47, %c0_48] : memref<288x128xf32, #tpu.memory_space<vmem>>, vector<288x128xf32>
    tpu.vector_store %arg10[%c0_47, %c0_48], %31 {strides = array<i32>} : memref<288x128xf32, #tpu.memory_space<vmem>>, vector<288x128xf32>,
    %c0_49 = arith.constant 0 : index
    %c1_50 = arith.constant 1 : index
    %c1_51 = arith.constant 1 : index
    %c0_52 = arith.constant 0 : index
    %33 = vector.load %arg8[%c0_49, %c1_50, %c1_51, %c0_52] : memref<1x20x18x128xbf16, #tpu.memory_space<vmem>>, vector<1x18x16x128xbf16>
    %34 = vector.shape_cast %33 : vector<1x18x16x128xbf16> to vector<288x128xbf16>
    %c4 = arith.constant 4 : index
    %c0_53 = arith.constant 0 : index
    %c0_54 = arith.constant 0 : index
    %35 = vector.load %arg3[%c4, %c0_53, %c0_54] : memref<9x128x128xbf16, #tpu.memory_space<vmem>>, vector<1x128x128xbf16>
    %36 = vector.shape_cast %35 : vector<1x128x128xbf16> to vector<128x128xbf16>
    %cst_55 = arith.constant dense<0.000000e+00> : vector<288x128xf32>
    %37 = tpu.matmul %34, %36, %cst_55 {dimension_numbers = #tpu.dot_dimension_numbers<[1], [0], [0], [1], [0, 0, 1, 1], [], []>} : vector<288x128xbf16>, vector<128x128xbf16>, vector<288x128xf32> -> vector<288x128xf32>
    %c0_56 = arith.constant 0 : index
    %c0_57 = arith.constant 0 : index
    %38 = vector.load %arg10[%c0_56, %c0_57] : memref<288x128xf32, #tpu.memory_space<vmem>>, vector<288x128xf32>
    %39 = arith.addf %38, %37 : vector<288x128xf32>
    %c0_58 = arith.constant 0 : index
    %c0_59 = arith.constant 0 : index
    %40 = vector.load %arg10[%c0_58, %c0_59] : memref<288x128xf32, #tpu.memory_space<vmem>>, vector<288x128xf32>
    tpu.vector_store %arg10[%c0_58, %c0_59], %39 {strides = array<i32>} : memref<288x128xf32, #tpu.memory_space<vmem>>, vector<288x128xf32>,
    %c0_60 = arith.constant 0 : index
    %c1_61 = arith.constant 1 : index
    %c2_62 = arith.constant 2 : index
    %c0_63 = arith.constant 0 : index
    %41 = vector.load %arg8[%c0_60, %c1_61, %c2_62, %c0_63] : memref<1x20x18x128xbf16, #tpu.memory_space<vmem>>, vector<1x18x16x128xbf16>
    %42 = vector.shape_cast %41 : vector<1x18x16x128xbf16> to vector<288x128xbf16>
    %c5 = arith.constant 5 : index
    %c0_64 = arith.constant 0 : index
    %c0_65 = arith.constant 0 : index
    %43 = vector.load %arg3[%c5, %c0_64, %c0_65] : memref<9x128x128xbf16, #tpu.memory_space<vmem>>, vector<1x128x128xbf16>
    %44 = vector.shape_cast %43 : vector<1x128x128xbf16> to vector<128x128xbf16>
    %cst_66 = arith.constant dense<0.000000e+00> : vector<288x128xf32>
    %45 = tpu.matmul %42, %44, %cst_66 {dimension_numbers = #tpu.dot_dimension_numbers<[1], [0], [0], [1], [0, 0, 1, 1], [], []>} : vector<288x128xbf16>, vector<128x128xbf16>, vector<288x128xf32> -> vector<288x128xf32>
    %c0_67 = arith.constant 0 : index
    %c0_68 = arith.constant 0 : index
    %46 = vector.load %arg10[%c0_67, %c0_68] : memref<288x128xf32, #tpu.memory_space<vmem>>, vector<288x128xf32>
    %47 = arith.addf %46, %45 : vector<288x128xf32>
    %c0_69 = arith.constant 0 : index
    %c0_70 = arith.constant 0 : index
    %48 = vector.load %arg10[%c0_69, %c0_70] : memref<288x128xf32, #tpu.memory_space<vmem>>, vector<288x128xf32>
    tpu.vector_store %arg10[%c0_69, %c0_70], %47 {strides = array<i32>} : memref<288x128xf32, #tpu.memory_space<vmem>>, vector<288x128xf32>,
    %c0_71 = arith.constant 0 : index
    %c2_72 = arith.constant 2 : index
    %c0_73 = arith.constant 0 : index
    %c0_74 = arith.constant 0 : index
    %49 = vector.load %arg8[%c0_71, %c2_72, %c0_73, %c0_74] : memref<1x20x18x128xbf16, #tpu.memory_space<vmem>>, vector<1x18x16x128xbf16>
    %50 = vector.shape_cast %49 : vector<1x18x16x128xbf16> to vector<288x128xbf16>
    %c6 = arith.constant 6 : index
    %c0_75 = arith.constant 0 : index
    %c0_76 = arith.constant 0 : index
    %51 = vector.load %arg3[%c6, %c0_75, %c0_76] : memref<9x128x128xbf16, #tpu.memory_space<vmem>>, vector<1x128x128xbf16>
    %52 = vector.shape_cast %51 : vector<1x128x128xbf16> to vector<128x128xbf16>
    %cst_77 = arith.constant dense<0.000000e+00> : vector<288x128xf32>
    %53 = tpu.matmul %50, %52, %cst_77 {dimension_numbers = #tpu.dot_dimension_numbers<[1], [0], [0], [1], [0, 0, 1, 1], [], []>} : vector<288x128xbf16>, vector<128x128xbf16>, vector<288x128xf32> -> vector<288x128xf32>
    %c0_78 = arith.constant 0 : index
    %c0_79 = arith.constant 0 : index
    %54 = vector.load %arg10[%c0_78, %c0_79] : memref<288x128xf32, #tpu.memory_space<vmem>>, vector<288x128xf32>
    %55 = arith.addf %54, %53 : vector<288x128xf32>
    %c0_80 = arith.constant 0 : index
    %c0_81 = arith.constant 0 : index
    %56 = vector.load %arg10[%c0_80, %c0_81] : memref<288x128xf32, #tpu.memory_space<vmem>>, vector<288x128xf32>
    tpu.vector_store %arg10[%c0_80, %c0_81], %55 {strides = array<i32>} : memref<288x128xf32, #tpu.memory_space<vmem>>, vector<288x128xf32>,
    %c0_82 = arith.constant 0 : index
    %c2_83 = arith.constant 2 : index
    %c1_84 = arith.constant 1 : index
    %c0_85 = arith.constant 0 : index
    %57 = vector.load %arg8[%c0_82, %c2_83, %c1_84, %c0_85] : memref<1x20x18x128xbf16, #tpu.memory_space<vmem>>, vector<1x18x16x128xbf16>
    %58 = vector.shape_cast %57 : vector<1x18x16x128xbf16> to vector<288x128xbf16>
    %c7 = arith.constant 7 : index
    %c0_86 = arith.constant 0 : index
    %c0_87 = arith.constant 0 : index
    %59 = vector.load %arg3[%c7, %c0_86, %c0_87] : memref<9x128x128xbf16, #tpu.memory_space<vmem>>, vector<1x128x128xbf16>
    %60 = vector.shape_cast %59 : vector<1x128x128xbf16> to vector<128x128xbf16>
    %cst_88 = arith.constant dense<0.000000e+00> : vector<288x128xf32>
    %61 = tpu.matmul %58, %60, %cst_88 {dimension_numbers = #tpu.dot_dimension_numbers<[1], [0], [0], [1], [0, 0, 1, 1], [], []>} : vector<288x128xbf16>, vector<128x128xbf16>, vector<288x128xf32> -> vector<288x128xf32>
    %c0_89 = arith.constant 0 : index
    %c0_90 = arith.constant 0 : index
    %62 = vector.load %arg10[%c0_89, %c0_90] : memref<288x128xf32, #tpu.memory_space<vmem>>, vector<288x128xf32>
    %63 = arith.addf %62, %61 : vector<288x128xf32>
    %c0_91 = arith.constant 0 : index
    %c0_92 = arith.constant 0 : index
    %64 = vector.load %arg10[%c0_91, %c0_92] : memref<288x128xf32, #tpu.memory_space<vmem>>, vector<288x128xf32>
    tpu.vector_store %arg10[%c0_91, %c0_92], %63 {strides = array<i32>} : memref<288x128xf32, #tpu.memory_space<vmem>>, vector<288x128xf32>,
    %c0_93 = arith.constant 0 : index
    %c2_94 = arith.constant 2 : index
    %c2_95 = arith.constant 2 : index
    %c0_96 = arith.constant 0 : index
    %65 = vector.load %arg8[%c0_93, %c2_94, %c2_95, %c0_96] : memref<1x20x18x128xbf16, #tpu.memory_space<vmem>>, vector<1x18x16x128xbf16>
    %66 = vector.shape_cast %65 : vector<1x18x16x128xbf16> to vector<288x128xbf16>
    %c8 = arith.constant 8 : index
    %c0_97 = arith.constant 0 : index
    %c0_98 = arith.constant 0 : index
    %67 = vector.load %arg3[%c8, %c0_97, %c0_98] : memref<9x128x128xbf16, #tpu.memory_space<vmem>>, vector<1x128x128xbf16>
    %68 = vector.shape_cast %67 : vector<1x128x128xbf16> to vector<128x128xbf16>
    %cst_99 = arith.constant dense<0.000000e+00> : vector<288x128xf32>
    %69 = tpu.matmul %66, %68, %cst_99 {dimension_numbers = #tpu.dot_dimension_numbers<[1], [0], [0], [1], [0, 0, 1, 1], [], []>} : vector<288x128xbf16>, vector<128x128xbf16>, vector<288x128xf32> -> vector<288x128xf32>
    %c0_100 = arith.constant 0 : index
    %c0_101 = arith.constant 0 : index
    %70 = vector.load %arg10[%c0_100, %c0_101] : memref<288x128xf32, #tpu.memory_space<vmem>>, vector<288x128xf32>
    %71 = arith.addf %70, %69 : vector<288x128xf32>
    %c0_102 = arith.constant 0 : index
    %c0_103 = arith.constant 0 : index
    %72 = vector.load %arg10[%c0_102, %c0_103] : memref<288x128xf32, #tpu.memory_space<vmem>>, vector<288x128xf32>
    tpu.vector_store %arg10[%c0_102, %c0_103], %71 {strides = array<i32>} : memref<288x128xf32, #tpu.memory_space<vmem>>, vector<288x128xf32>,
    %c0_104 = arith.constant 0 : index
    %c0_105 = arith.constant 0 : index
    %73 = vector.load %arg10[%c0_104, %c0_105] : memref<288x128xf32, #tpu.memory_space<vmem>>, vector<288x128xf32>
    %c0_106 = arith.constant 0 : index
    %c0_107 = arith.constant 0 : index
    %74 = vector.load %arg5[%c0_106, %c0_107] : memref<1x128xf32, #tpu.memory_space<vmem>>, vector<1x128xf32>
    %75 = vector.broadcast %74 : vector<1x128xf32> to vector<288x128xf32>
    %76 = arith.addf %73, %75 : vector<288x128xf32>
    %cst_108 = arith.constant 0.000000e+00 : f32
    %77 = vector.broadcast %cst_108 : f32 to vector<288x128xf32>
    %78 = arith.maximumf %76, %77 : vector<288x128xf32>
    %79 = vector.shape_cast %78 : vector<288x128xf32> to vector<1x18x16x128xf32>
    %80 = arith.truncf %79 : vector<1x18x16x128xf32> to vector<1x18x16x128xbf16>
    %c0_109 = arith.constant 0 : index
    %c0_110 = arith.constant 0 : index
    %c1_111 = arith.constant 1 : index
    %c0_112 = arith.constant 0 : index
    %81 = vector.load %arg9[%c0_109, %c0_110, %c1_111, %c0_112] : memref<1x18x18x128xbf16, #tpu.memory_space<vmem>>, vector<1x18x16x128xbf16>
    tpu.vector_store %arg9[%c0_109, %c0_110, %c1_111, %c0_112], %80 {strides = array<i32>} : memref<1x18x18x128xbf16, #tpu.memory_space<vmem>>, vector<1x18x16x128xbf16>,
    %cst_113 = arith.constant 0.000000e+00 : bf16
    %82 = vector.broadcast %cst_113 : bf16 to vector<1x18x1x128xbf16>
    %c0_114 = arith.constant 0 : index
    %c0_115 = arith.constant 0 : index
    %c0_116 = arith.constant 0 : index
    %c0_117 = arith.constant 0 : index
    %83 = vector.load %arg9[%c0_114, %c0_115, %c0_116, %c0_117] : memref<1x18x18x128xbf16, #tpu.memory_space<vmem>>, vector<1x18x1x128xbf16>
    tpu.vector_store %arg9[%c0_114, %c0_115, %c0_116, %c0_117], %82 {strides = array<i32>} : memref<1x18x18x128xbf16, #tpu.memory_space<vmem>>, vector<1x18x1x128xbf16>,
    %c0_118 = arith.constant 0 : index
    %c0_119 = arith.constant 0 : index
    %c17 = arith.constant 17 : index
    %c0_120 = arith.constant 0 : index
    %84 = vector.load %arg9[%c0_118, %c0_119, %c17, %c0_120] : memref<1x18x18x128xbf16, #tpu.memory_space<vmem>>, vector<1x18x1x128xbf16>
    tpu.vector_store %arg9[%c0_118, %c0_119, %c17, %c0_120], %82 {strides = array<i32>} : memref<1x18x18x128xbf16, #tpu.memory_space<vmem>>, vector<1x18x1x128xbf16>,
    %cst_121 = arith.constant 0.000000e+00 : bf16
    %85 = vector.broadcast %cst_121 : bf16 to vector<1x1x18x128xbf16>
    %c0_i32 = arith.constant 0 : i32
    %86 = arith.cmpi eq, %arg0, %c0_i32 : i32
    %87 = arith.extui %86 : i1 to i32
    %c0_i32_122 = arith.constant 0 : i32
    %88 = arith.cmpi ne, %87, %c0_i32_122 : i32
    scf.if %88 {
      %c0_244 = arith.constant 0 : index
      %c0_245 = arith.constant 0 : index
      %c0_246 = arith.constant 0 : index
      %c0_247 = arith.constant 0 : index
      %172 = vector.load %arg9[%c0_244, %c0_245, %c0_246, %c0_247] : memref<1x18x18x128xbf16, #tpu.memory_space<vmem>>, vector<1x1x18x128xbf16>
      tpu.vector_store %arg9[%c0_244, %c0_245, %c0_246, %c0_247], %85 {strides = array<i32>} : memref<1x18x18x128xbf16, #tpu.memory_space<vmem>>, vector<1x1x18x128xbf16>,
    } else {
    }
    %c0_i32_123 = arith.constant 0 : i32
    %89 = arith.cmpi eq, %arg0, %c0_i32_123 : i32
    %90 = arith.extui %89 : i1 to i32
    %c0_i32_124 = arith.constant 0 : i32
    %91 = arith.cmpi ne, %90, %c0_i32_124 : i32
    scf.if %91 {
      %c0_244 = arith.constant 0 : index
      %c17_245 = arith.constant 17 : index
      %c0_246 = arith.constant 0 : index
      %c0_247 = arith.constant 0 : index
      %172 = vector.load %arg9[%c0_244, %c17_245, %c0_246, %c0_247] : memref<1x18x18x128xbf16, #tpu.memory_space<vmem>>, vector<1x1x18x128xbf16>
      tpu.vector_store %arg9[%c0_244, %c17_245, %c0_246, %c0_247], %85 {strides = array<i32>} : memref<1x18x18x128xbf16, #tpu.memory_space<vmem>>, vector<1x1x18x128xbf16>,
    } else {
    }
    %c0_125 = arith.constant 0 : index
    %c0_126 = arith.constant 0 : index
    %c0_127 = arith.constant 0 : index
    %c0_128 = arith.constant 0 : index
    %92 = vector.load %arg9[%c0_125, %c0_126, %c0_127, %c0_128] : memref<1x18x18x128xbf16, #tpu.memory_space<vmem>>, vector<1x16x16x128xbf16>
    %93 = vector.shape_cast %92 : vector<1x16x16x128xbf16> to vector<256x128xbf16>
    %c0_129 = arith.constant 0 : index
    %c0_130 = arith.constant 0 : index
    %c0_131 = arith.constant 0 : index
    %94 = vector.load %arg4[%c0_129, %c0_130, %c0_131] : memref<9x128x128xbf16, #tpu.memory_space<vmem>>, vector<1x128x128xbf16>
    %95 = vector.shape_cast %94 : vector<1x128x128xbf16> to vector<128x128xbf16>
    %cst_132 = arith.constant dense<0.000000e+00> : vector<256x128xf32>
    %96 = tpu.matmul %93, %95, %cst_132 {dimension_numbers = #tpu.dot_dimension_numbers<[1], [0], [0], [1], [0, 0, 1, 1], [], []>} : vector<256x128xbf16>, vector<128x128xbf16>, vector<256x128xf32> -> vector<256x128xf32>
    %c0_133 = arith.constant 0 : index
    %c0_134 = arith.constant 0 : index
    %97 = vector.load %arg10[%c0_133, %c0_134] : memref<288x128xf32, #tpu.memory_space<vmem>>, vector<256x128xf32>
    tpu.vector_store %arg10[%c0_133, %c0_134], %96 {strides = array<i32>} : memref<288x128xf32, #tpu.memory_space<vmem>>, vector<256x128xf32>,
    %c0_135 = arith.constant 0 : index
    %c0_136 = arith.constant 0 : index
    %c1_137 = arith.constant 1 : index
    %c0_138 = arith.constant 0 : index
    %98 = vector.load %arg9[%c0_135, %c0_136, %c1_137, %c0_138] : memref<1x18x18x128xbf16, #tpu.memory_space<vmem>>, vector<1x16x16x128xbf16>
    %99 = vector.shape_cast %98 : vector<1x16x16x128xbf16> to vector<256x128xbf16>
    %c1_139 = arith.constant 1 : index
    %c0_140 = arith.constant 0 : index
    %c0_141 = arith.constant 0 : index
    %100 = vector.load %arg4[%c1_139, %c0_140, %c0_141] : memref<9x128x128xbf16, #tpu.memory_space<vmem>>, vector<1x128x128xbf16>
    %101 = vector.shape_cast %100 : vector<1x128x128xbf16> to vector<128x128xbf16>
    %cst_142 = arith.constant dense<0.000000e+00> : vector<256x128xf32>
    %102 = tpu.matmul %99, %101, %cst_142 {dimension_numbers = #tpu.dot_dimension_numbers<[1], [0], [0], [1], [0, 0, 1, 1], [], []>} : vector<256x128xbf16>, vector<128x128xbf16>, vector<256x128xf32> -> vector<256x128xf32>
    %c0_143 = arith.constant 0 : index
    %c0_144 = arith.constant 0 : index
    %103 = vector.load %arg10[%c0_143, %c0_144] : memref<288x128xf32, #tpu.memory_space<vmem>>, vector<256x128xf32>
    %104 = arith.addf %103, %102 : vector<256x128xf32>
    %c0_145 = arith.constant 0 : index
    %c0_146 = arith.constant 0 : index
    %105 = vector.load %arg10[%c0_145, %c0_146] : memref<288x128xf32, #tpu.memory_space<vmem>>, vector<256x128xf32>
    tpu.vector_store %arg10[%c0_145, %c0_146], %104 {strides = array<i32>} : memref<288x128xf32, #tpu.memory_space<vmem>>, vector<256x128xf32>,
    %c0_147 = arith.constant 0 : index
    %c0_148 = arith.constant 0 : index
    %c2_149 = arith.constant 2 : index
    %c0_150 = arith.constant 0 : index
    %106 = vector.load %arg9[%c0_147, %c0_148, %c2_149, %c0_150] : memref<1x18x18x128xbf16, #tpu.memory_space<vmem>>, vector<1x16x16x128xbf16>
    %107 = vector.shape_cast %106 : vector<1x16x16x128xbf16> to vector<256x128xbf16>
    %c2_151 = arith.constant 2 : index
    %c0_152 = arith.constant 0 : index
    %c0_153 = arith.constant 0 : index
    %108 = vector.load %arg4[%c2_151, %c0_152, %c0_153] : memref<9x128x128xbf16, #tpu.memory_space<vmem>>, vector<1x128x128xbf16>
    %109 = vector.shape_cast %108 : vector<1x128x128xbf16> to vector<128x128xbf16>
    %cst_154 = arith.constant dense<0.000000e+00> : vector<256x128xf32>
    %110 = tpu.matmul %107, %109, %cst_154 {dimension_numbers = #tpu.dot_dimension_numbers<[1], [0], [0], [1], [0, 0, 1, 1], [], []>} : vector<256x128xbf16>, vector<128x128xbf16>, vector<256x128xf32> -> vector<256x128xf32>
    %c0_155 = arith.constant 0 : index
    %c0_156 = arith.constant 0 : index
    %111 = vector.load %arg10[%c0_155, %c0_156] : memref<288x128xf32, #tpu.memory_space<vmem>>, vector<256x128xf32>
    %112 = arith.addf %111, %110 : vector<256x128xf32>
    %c0_157 = arith.constant 0 : index
    %c0_158 = arith.constant 0 : index
    %113 = vector.load %arg10[%c0_157, %c0_158] : memref<288x128xf32, #tpu.memory_space<vmem>>, vector<256x128xf32>
    tpu.vector_store %arg10[%c0_157, %c0_158], %112 {strides = array<i32>} : memref<288x128xf32, #tpu.memory_space<vmem>>, vector<256x128xf32>,
    %c0_159 = arith.constant 0 : index
    %c1_160 = arith.constant 1 : index
    %c0_161 = arith.constant 0 : index
    %c0_162 = arith.constant 0 : index
    %114 = vector.load %arg9[%c0_159, %c1_160, %c0_161, %c0_162] : memref<1x18x18x128xbf16, #tpu.memory_space<vmem>>, vector<1x16x16x128xbf16>
    %115 = vector.shape_cast %114 : vector<1x16x16x128xbf16> to vector<256x128xbf16>
    %c3_163 = arith.constant 3 : index
    %c0_164 = arith.constant 0 : index
    %c0_165 = arith.constant 0 : index
    %116 = vector.load %arg4[%c3_163, %c0_164, %c0_165] : memref<9x128x128xbf16, #tpu.memory_space<vmem>>, vector<1x128x128xbf16>
    %117 = vector.shape_cast %116 : vector<1x128x128xbf16> to vector<128x128xbf16>
    %cst_166 = arith.constant dense<0.000000e+00> : vector<256x128xf32>
    %118 = tpu.matmul %115, %117, %cst_166 {dimension_numbers = #tpu.dot_dimension_numbers<[1], [0], [0], [1], [0, 0, 1, 1], [], []>} : vector<256x128xbf16>, vector<128x128xbf16>, vector<256x128xf32> -> vector<256x128xf32>
    %c0_167 = arith.constant 0 : index
    %c0_168 = arith.constant 0 : index
    %119 = vector.load %arg10[%c0_167, %c0_168] : memref<288x128xf32, #tpu.memory_space<vmem>>, vector<256x128xf32>
    %120 = arith.addf %119, %118 : vector<256x128xf32>
    %c0_169 = arith.constant 0 : index
    %c0_170 = arith.constant 0 : index
    %121 = vector.load %arg10[%c0_169, %c0_170] : memref<288x128xf32, #tpu.memory_space<vmem>>, vector<256x128xf32>
    tpu.vector_store %arg10[%c0_169, %c0_170], %120 {strides = array<i32>} : memref<288x128xf32, #tpu.memory_space<vmem>>, vector<256x128xf32>,
    %c0_171 = arith.constant 0 : index
    %c1_172 = arith.constant 1 : index
    %c1_173 = arith.constant 1 : index
    %c0_174 = arith.constant 0 : index
    %122 = vector.load %arg9[%c0_171, %c1_172, %c1_173, %c0_174] : memref<1x18x18x128xbf16, #tpu.memory_space<vmem>>, vector<1x16x16x128xbf16>
    %123 = vector.shape_cast %122 : vector<1x16x16x128xbf16> to vector<256x128xbf16>
    %c4_175 = arith.constant 4 : index
    %c0_176 = arith.constant 0 : index
    %c0_177 = arith.constant 0 : index
    %124 = vector.load %arg4[%c4_175, %c0_176, %c0_177] : memref<9x128x128xbf16, #tpu.memory_space<vmem>>, vector<1x128x128xbf16>
    %125 = vector.shape_cast %124 : vector<1x128x128xbf16> to vector<128x128xbf16>
    %cst_178 = arith.constant dense<0.000000e+00> : vector<256x128xf32>
    %126 = tpu.matmul %123, %125, %cst_178 {dimension_numbers = #tpu.dot_dimension_numbers<[1], [0], [0], [1], [0, 0, 1, 1], [], []>} : vector<256x128xbf16>, vector<128x128xbf16>, vector<256x128xf32> -> vector<256x128xf32>
    %c0_179 = arith.constant 0 : index
    %c0_180 = arith.constant 0 : index
    %127 = vector.load %arg10[%c0_179, %c0_180] : memref<288x128xf32, #tpu.memory_space<vmem>>, vector<256x128xf32>
    %128 = arith.addf %127, %126 : vector<256x128xf32>
    %c0_181 = arith.constant 0 : index
    %c0_182 = arith.constant 0 : index
    %129 = vector.load %arg10[%c0_181, %c0_182] : memref<288x128xf32, #tpu.memory_space<vmem>>, vector<256x128xf32>
    tpu.vector_store %arg10[%c0_181, %c0_182], %128 {strides = array<i32>} : memref<288x128xf32, #tpu.memory_space<vmem>>, vector<256x128xf32>,
    %c0_183 = arith.constant 0 : index
    %c1_184 = arith.constant 1 : index
    %c2_185 = arith.constant 2 : index
    %c0_186 = arith.constant 0 : index
    %130 = vector.load %arg9[%c0_183, %c1_184, %c2_185, %c0_186] : memref<1x18x18x128xbf16, #tpu.memory_space<vmem>>, vector<1x16x16x128xbf16>
    %131 = vector.shape_cast %130 : vector<1x16x16x128xbf16> to vector<256x128xbf16>
    %c5_187 = arith.constant 5 : index
    %c0_188 = arith.constant 0 : index
    %c0_189 = arith.constant 0 : index
    %132 = vector.load %arg4[%c5_187, %c0_188, %c0_189] : memref<9x128x128xbf16, #tpu.memory_space<vmem>>, vector<1x128x128xbf16>
    %133 = vector.shape_cast %132 : vector<1x128x128xbf16> to vector<128x128xbf16>
    %cst_190 = arith.constant dense<0.000000e+00> : vector<256x128xf32>
    %134 = tpu.matmul %131, %133, %cst_190 {dimension_numbers = #tpu.dot_dimension_numbers<[1], [0], [0], [1], [0, 0, 1, 1], [], []>} : vector<256x128xbf16>, vector<128x128xbf16>, vector<256x128xf32> -> vector<256x128xf32>
    %c0_191 = arith.constant 0 : index
    %c0_192 = arith.constant 0 : index
    %135 = vector.load %arg10[%c0_191, %c0_192] : memref<288x128xf32, #tpu.memory_space<vmem>>, vector<256x128xf32>
    %136 = arith.addf %135, %134 : vector<256x128xf32>
    %c0_193 = arith.constant 0 : index
    %c0_194 = arith.constant 0 : index
    %137 = vector.load %arg10[%c0_193, %c0_194] : memref<288x128xf32, #tpu.memory_space<vmem>>, vector<256x128xf32>
    tpu.vector_store %arg10[%c0_193, %c0_194], %136 {strides = array<i32>} : memref<288x128xf32, #tpu.memory_space<vmem>>, vector<256x128xf32>,
    %c0_195 = arith.constant 0 : index
    %c2_196 = arith.constant 2 : index
    %c0_197 = arith.constant 0 : index
    %c0_198 = arith.constant 0 : index
    %138 = vector.load %arg9[%c0_195, %c2_196, %c0_197, %c0_198] : memref<1x18x18x128xbf16, #tpu.memory_space<vmem>>, vector<1x16x16x128xbf16>
    %139 = vector.shape_cast %138 : vector<1x16x16x128xbf16> to vector<256x128xbf16>
    %c6_199 = arith.constant 6 : index
    %c0_200 = arith.constant 0 : index
    %c0_201 = arith.constant 0 : index
    %140 = vector.load %arg4[%c6_199, %c0_200, %c0_201] : memref<9x128x128xbf16, #tpu.memory_space<vmem>>, vector<1x128x128xbf16>
    %141 = vector.shape_cast %140 : vector<1x128x128xbf16> to vector<128x128xbf16>
    %cst_202 = arith.constant dense<0.000000e+00> : vector<256x128xf32>
    %142 = tpu.matmul %139, %141, %cst_202 {dimension_numbers = #tpu.dot_dimension_numbers<[1], [0], [0], [1], [0, 0, 1, 1], [], []>} : vector<256x128xbf16>, vector<128x128xbf16>, vector<256x128xf32> -> vector<256x128xf32>
    %c0_203 = arith.constant 0 : index
    %c0_204 = arith.constant 0 : index
    %143 = vector.load %arg10[%c0_203, %c0_204] : memref<288x128xf32, #tpu.memory_space<vmem>>, vector<256x128xf32>
    %144 = arith.addf %143, %142 : vector<256x128xf32>
    %c0_205 = arith.constant 0 : index
    %c0_206 = arith.constant 0 : index
    %145 = vector.load %arg10[%c0_205, %c0_206] : memref<288x128xf32, #tpu.memory_space<vmem>>, vector<256x128xf32>
    tpu.vector_store %arg10[%c0_205, %c0_206], %144 {strides = array<i32>} : memref<288x128xf32, #tpu.memory_space<vmem>>, vector<256x128xf32>,
    %c0_207 = arith.constant 0 : index
    %c2_208 = arith.constant 2 : index
    %c1_209 = arith.constant 1 : index
    %c0_210 = arith.constant 0 : index
    %146 = vector.load %arg9[%c0_207, %c2_208, %c1_209, %c0_210] : memref<1x18x18x128xbf16, #tpu.memory_space<vmem>>, vector<1x16x16x128xbf16>
    %147 = vector.shape_cast %146 : vector<1x16x16x128xbf16> to vector<256x128xbf16>
    %c7_211 = arith.constant 7 : index
    %c0_212 = arith.constant 0 : index
    %c0_213 = arith.constant 0 : index
    %148 = vector.load %arg4[%c7_211, %c0_212, %c0_213] : memref<9x128x128xbf16, #tpu.memory_space<vmem>>, vector<1x128x128xbf16>
    %149 = vector.shape_cast %148 : vector<1x128x128xbf16> to vector<128x128xbf16>
    %cst_214 = arith.constant dense<0.000000e+00> : vector<256x128xf32>
    %150 = tpu.matmul %147, %149, %cst_214 {dimension_numbers = #tpu.dot_dimension_numbers<[1], [0], [0], [1], [0, 0, 1, 1], [], []>} : vector<256x128xbf16>, vector<128x128xbf16>, vector<256x128xf32> -> vector<256x128xf32>
    %c0_215 = arith.constant 0 : index
    %c0_216 = arith.constant 0 : index
    %151 = vector.load %arg10[%c0_215, %c0_216] : memref<288x128xf32, #tpu.memory_space<vmem>>, vector<256x128xf32>
    %152 = arith.addf %151, %150 : vector<256x128xf32>
    %c0_217 = arith.constant 0 : index
    %c0_218 = arith.constant 0 : index
    %153 = vector.load %arg10[%c0_217, %c0_218] : memref<288x128xf32, #tpu.memory_space<vmem>>, vector<256x128xf32>
    tpu.vector_store %arg10[%c0_217, %c0_218], %152 {strides = array<i32>} : memref<288x128xf32, #tpu.memory_space<vmem>>, vector<256x128xf32>,
    %c0_219 = arith.constant 0 : index
    %c2_220 = arith.constant 2 : index
    %c2_221 = arith.constant 2 : index
    %c0_222 = arith.constant 0 : index
    %154 = vector.load %arg9[%c0_219, %c2_220, %c2_221, %c0_222] : memref<1x18x18x128xbf16, #tpu.memory_space<vmem>>, vector<1x16x16x128xbf16>
    %155 = vector.shape_cast %154 : vector<1x16x16x128xbf16> to vector<256x128xbf16>
    %c8_223 = arith.constant 8 : index
    %c0_224 = arith.constant 0 : index
    %c0_225 = arith.constant 0 : index
    %156 = vector.load %arg4[%c8_223, %c0_224, %c0_225] : memref<9x128x128xbf16, #tpu.memory_space<vmem>>, vector<1x128x128xbf16>
    %157 = vector.shape_cast %156 : vector<1x128x128xbf16> to vector<128x128xbf16>
    %cst_226 = arith.constant dense<0.000000e+00> : vector<256x128xf32>
    %158 = tpu.matmul %155, %157, %cst_226 {dimension_numbers = #tpu.dot_dimension_numbers<[1], [0], [0], [1], [0, 0, 1, 1], [], []>} : vector<256x128xbf16>, vector<128x128xbf16>, vector<256x128xf32> -> vector<256x128xf32>
    %c0_227 = arith.constant 0 : index
    %c0_228 = arith.constant 0 : index
    %159 = vector.load %arg10[%c0_227, %c0_228] : memref<288x128xf32, #tpu.memory_space<vmem>>, vector<256x128xf32>
    %160 = arith.addf %159, %158 : vector<256x128xf32>
    %c0_229 = arith.constant 0 : index
    %c0_230 = arith.constant 0 : index
    %161 = vector.load %arg10[%c0_229, %c0_230] : memref<288x128xf32, #tpu.memory_space<vmem>>, vector<256x128xf32>
    tpu.vector_store %arg10[%c0_229, %c0_230], %160 {strides = array<i32>} : memref<288x128xf32, #tpu.memory_space<vmem>>, vector<256x128xf32>,
    %c0_231 = arith.constant 0 : index
    %c0_232 = arith.constant 0 : index
    %162 = vector.load %arg10[%c0_231, %c0_232] : memref<288x128xf32, #tpu.memory_space<vmem>>, vector<256x128xf32>
    %c0_233 = arith.constant 0 : index
    %c0_234 = arith.constant 0 : index
    %163 = vector.load %arg6[%c0_233, %c0_234] : memref<1x128xf32, #tpu.memory_space<vmem>>, vector<1x128xf32>
    %164 = vector.broadcast %163 : vector<1x128xf32> to vector<256x128xf32>
    %165 = arith.addf %162, %164 : vector<256x128xf32>
    %166 = vector.shape_cast %165 : vector<256x128xf32> to vector<1x16x16x128xf32>
    %c0_235 = arith.constant 0 : index
    %c2_236 = arith.constant 2 : index
    %c1_237 = arith.constant 1 : index
    %c0_238 = arith.constant 0 : index
    %167 = vector.load %arg2[%c0_235, %c2_236, %c1_237, %c0_238] : memref<1x20x18x128xf32, #tpu.memory_space<vmem>>, vector<1x16x16x128xf32>
    %168 = arith.addf %166, %167 : vector<1x16x16x128xf32>
    %cst_239 = arith.constant 0.000000e+00 : f32
    %169 = vector.broadcast %cst_239 : f32 to vector<1x16x16x128xf32>
    %170 = arith.maximumf %168, %169 : vector<1x16x16x128xf32>
    %c0_240 = arith.constant 0 : index
    %c0_241 = arith.constant 0 : index
    %c0_242 = arith.constant 0 : index
    %c0_243 = arith.constant 0 : index
    %171 = vector.load %arg7[%c0_240, %c0_241, %c0_242, %c0_243] : memref<1x16x16x128xf32, #tpu.memory_space<vmem>>, vector<1x16x16x128xf32>
    tpu.vector_store %arg7[%c0_240, %c0_241, %c0_242, %c0_243], %170 {strides = array<i32>} : memref<1x16x16x128xf32, #tpu.memory_space<vmem>>, vector<1x16x16x128xf32>,
    return
  }
  func.func @transform_0(%arg0: i32, %arg1: i32) -> (i32, i32, i32, i32) {
    %c2_i32 = arith.constant 2 : i32
    %0 = arith.muli %arg0, %c2_i32 : i32
    %1 = arith.addi %0, %arg1 : i32
    %c0_i32 = arith.constant 0 : i32
    %c0_i32_0 = arith.constant 0 : i32
    %c0_i32_1 = arith.constant 0 : i32
    %c0_i32_2 = arith.constant 0 : i32
    return %1, %c0_i32, %c0_i32_0, %c0_i32_1 : i32, i32, i32, i32
  }
  func.func @transform_1(%arg0: i32, %arg1: i32) -> (i32, i32, i32) {
    %c0_i32 = arith.constant 0 : i32
    %c0_i32_0 = arith.constant 0 : i32
    %c0_i32_1 = arith.constant 0 : i32
    %c0_i32_2 = arith.constant 0 : i32
    return %c0_i32, %c0_i32_0, %c0_i32_1 : i32, i32, i32
  }
  func.func @transform_2(%arg0: i32, %arg1: i32) -> (i32, i32, i32) {
    %c0_i32 = arith.constant 0 : i32
    %c0_i32_0 = arith.constant 0 : i32
    %c0_i32_1 = arith.constant 0 : i32
    %c0_i32_2 = arith.constant 0 : i32
    return %c0_i32, %c0_i32_0, %c0_i32_1 : i32, i32, i32
  }
  func.func @transform_3(%arg0: i32, %arg1: i32) -> (i32, i32) {
    %c0_i32 = arith.constant 0 : i32
    %c0_i32_0 = arith.constant 0 : i32
    %c0_i32_1 = arith.constant 0 : i32
    return %c0_i32, %c0_i32_0 : i32, i32
  }
  func.func @transform_4(%arg0: i32, %arg1: i32) -> (i32, i32) {
    %c0_i32 = arith.constant 0 : i32
    %c0_i32_0 = arith.constant 0 : i32
    %c0_i32_1 = arith.constant 0 : i32
    return %c0_i32, %c0_i32_0 : i32, i32
  }
  func.func @transform_5(%arg0: i32, %arg1: i32) -> (i32, i32, i32, i32) {
    %c2_i32 = arith.constant 2 : i32
    %0 = arith.muli %arg0, %c2_i32 : i32
    %1 = arith.addi %0, %arg1 : i32
    %c0_i32 = arith.constant 0 : i32
    %c0_i32_0 = arith.constant 0 : i32
    %c0_i32_1 = arith.constant 0 : i32
    %c0_i32_2 = arith.constant 0 : i32
    return %1, %c0_i32, %c0_i32_0, %c0_i32_1 : i32, i32, i32, i32
  }
}

</mosaic_0001>

<llo_original>
// kernel: tpu_custom_call.1
$region0: #{tpu_custom_call.1}
  #allocation0 [shape = 'u32[]', space=smem, size = 0x4, offset = 0x4, fixed_abs, tag = 'smem constant byte address 0x4 - core index']
  #allocation1 [shape = 'u32[72,128]{1,0:T(1,128)}', space=vmem, size = 0x9000, scoped, tag = 'internal scratch']
  #allocation2 [shape = 'bf16[1,20,18,128]{3,2,1,0:T(8,128)(2,1)}', space=vmem, size = 0x1e000, scoped, tag = 'scratch operand']
  #allocation3 [shape = 'bf16[1,18,18,128]{3,2,1,0:T(8,128)(2,1)}', space=vmem, size = 0x1b000, scoped, tag = 'scratch operand']
  #allocation4 [shape = 'f32[288,128]{1,0:T(8,128)}', space=vmem, size = 0x24000, scoped, tag = 'scratch operand']
  %s0 = inlined_call_operand.vmem [shape: f32[2,20,18,128], index: 0, kind: input, shape index: {}]
  %s1 = inlined_call_operand.vmem [shape: bf16[9,128,128], index: 1, kind: input, shape index: {}]
  %s2 = inlined_call_operand.vmem [shape: bf16[9,128,128], index: 2, kind: input, shape index: {}]
  %s3 = inlined_call_operand.vmem [shape: f32[1,128], index: 3, kind: input, shape index: {}]
  %s4 = inlined_call_operand.vmem [shape: f32[1,128], index: 4, kind: input, shape index: {}]
  %s5 = inlined_call_operand.hbm [shape: f32[2,16,16,128], index: 5, kind: output, shape index: {}]
  %s6 = sld [smem:[#allocation0]]
  $region57: #{tpu_custom_call.1} parent=0
    _
  %s8 = ssub.s32 1, %s6
  %s9 = scalar_select 0, %s8, %s6
  $region1: #{tpu_custom_call.1} parent=0
    #allocation5 [shape = 'u8[262144]{0}', space=vmem, size = 0x40000, scoped, tag = 'output window, operand 0']
    #allocation6 [shape = 's32[2]{0}', space=sflag, size = 0x8, scoped, tag = 'scoped memory for tpu_custom_call.1']
    %10 = vsyncpa [#allocation6], 0
    %s11 = scalar_lea.sflag [#allocation6], 1
    %12 = vsyncpa %s11, 0
    loop: start=0, step=1, limit=4
    $region2: #{tpu_custom_call.1} parent=1 // loop_pre_header
      _
    $region3: #{tpu_custom_call.1} parent=1 // loop_header
      %s14 = sphi 0, %s18
      %p15 = scmp.ge.s32.totalorder %s14, 4
      %s21 = sphi 0, %s33
      %s22 = sphi 0, %s29
      %s23 = sphi 0, %s21
      %s24 = sphi 0, %s22
      %s25 = sphi 0, %s23
      %s26 = sphi 0, %s24
      %s40 = sphi 0, %s42
      %s43 = sphi 0, %s40
      %s44 = sphi 0, %s43
      %s60 = sphi 0, %s44
      %s64 = sphi 0, %s64
      %s66 = sphi 0, %s64
      %s67 = sphi 0, %s66
      %s81 = sphi 0, %s67
      %s85 = sphi 0, %s85
      %s87 = sphi 0, %s85
      %s88 = sphi 0, %s87
      %s102 = sphi 0, %s88
      %s106 = sphi 0, %s106
      %s108 = sphi 0, %s106
      %s109 = sphi 0, %s108
      %s123 = sphi 0, %s109
      %s127 = sphi 0, %s127
      %s129 = sphi 0, %s127
      %s130 = sphi 0, %s129
      %s144 = sphi 0, %s130
      %s154 = sphi 0, %s156
      %s157 = sphi 0, %s154
      %s158 = sphi 0, %s157
      %s174 = sphi 0, %s158
    $region4: #{tpu_custom_call.1} parent=1 // loop_header_branch
      %17 = sbr.rel (%p15) target = $region8
    $region5: #{tpu_custom_call.1} parent=1 // loop_body
      %s19 = ssub.s32 %s14, 1
      %s20 = ssub.s32 %s14, 2
      %s27 = sadd.s32 1, %s22
      %p28 = scmp.ge.s32.totalorder %s27, 2
      %s29 = scalar_select %p28, 0, %s27
      %s30 = sadd.s32 1, %s21
      %s31 = scalar_select %p28, %s30, %s21
      %p32 = scmp.ge.s32.totalorder %s31, 1
      %s33 = scalar_select %p32, 0, %s31
      %s34 = smul.u32 %s21, 2
      %s35 = sadd.s32 %s34, %s22
      %s36 = smul.u32 %s33, 2
      %s37 = sadd.s32 %s36, %s29
      %s38 = ssub.s32 %s35, %s37
      %p39 = scmp.eq.s32.totalorder %s38, 0
      %s41 = sadd.s32 %s40, 1
      %s42 = scalar_select %p39, %s40, %s41
      %p45 = pneg %p39
      %p46 = scmp.eq.s32.totalorder %s14, 1
      %p47 = por %p45, %p46
      %p48 = scmp.ne.s32.totalorder %s40, %s43
      %p49 = scmp.eq.s32.totalorder %s14, 0
      %p50 = por %p48, %p49
      %p51 = scmp.ne.s32.totalorder %s40, %s43
      %p52 = scmp.eq.s32.totalorder %s19, 1
      %p53 = por %p51, %p52
      %p54 = scmp.ne.s32.totalorder %s43, %s44
      %p55 = scmp.eq.s32.totalorder %s19, 0
      %p56 = por %p54, %p55
      %p57 = scmp.ne.s32.totalorder %s43, %s44
      %p58 = scmp.eq.s32.totalorder %s20, 1
      %p59 = por %p57, %p58
      %p61 = scmp.ne.s32.totalorder %s44, %s60
      %p62 = scmp.eq.s32.totalorder %s20, 0
      %p63 = por %p61, %p62
      %s65 = sadd.s32 %s64, 1
      %p68 = scmp.eq.s32.totalorder %s14, 1
      %p69 = scmp.ne.s32.totalorder %s64, %s66
      %p70 = scmp.eq.s32.totalorder %s14, 0
      %p71 = por %p69, %p70
      %p72 = scmp.ne.s32.totalorder %s64, %s66
      %p73 = scmp.eq.s32.totalorder %s19, 1
      %p74 = por %p72, %p73
      %p75 = scmp.ne.s32.totalorder %s66, %s67
      %p76 = scmp.eq.s32.totalorder %s19, 0
      %p77 = por %p75, %p76
      %p78 = scmp.ne.s32.totalorder %s66, %s67
      %p79 = scmp.eq.s32.totalorder %s20, 1
      %p80 = por %p78, %p79
      %p82 = scmp.ne.s32.totalorder %s67, %s81
      %p83 = scmp.eq.s32.totalorder %s20, 0
      %p84 = por %p82, %p83
      %s86 = sadd.s32 %s85, 1
      %p89 = scmp.eq.s32.totalorder %s14, 1
      %p90 = scmp.ne.s32.totalorder %s85, %s87
      %p91 = scmp.eq.s32.totalorder %s14, 0
      %p92 = por %p90, %p91
      %p93 = scmp.ne.s32.totalorder %s85, %s87
      %p94 = scmp.eq.s32.totalorder %s19, 1
      %p95 = por %p93, %p94
      %p96 = scmp.ne.s32.totalorder %s87, %s88
      %p97 = scmp.eq.s32.totalorder %s19, 0
      %p98 = por %p96, %p97
      %p99 = scmp.ne.s32.totalorder %s87, %s88
      %p100 = scmp.eq.s32.totalorder %s20, 1
      %p101 = por %p99, %p100
      %p103 = scmp.ne.s32.totalorder %s88, %s102
      %p104 = scmp.eq.s32.totalorder %s20, 0
      %p105 = por %p103, %p104
      %s107 = sadd.s32 %s106, 1
      %p110 = scmp.eq.s32.totalorder %s14, 1
      %p111 = scmp.ne.s32.totalorder %s106, %s108
      %p112 = scmp.eq.s32.totalorder %s14, 0
      %p113 = por %p111, %p112
      %p114 = scmp.ne.s32.totalorder %s106, %s108
      %p115 = scmp.eq.s32.totalorder %s19, 1
      %p116 = por %p114, %p115
      %p117 = scmp.ne.s32.totalorder %s108, %s109
      %p118 = scmp.eq.s32.totalorder %s19, 0
      %p119 = por %p117, %p118
      %p120 = scmp.ne.s32.totalorder %s108, %s109
      %p121 = scmp.eq.s32.totalorder %s20, 1
      %p122 = por %p120, %p121
      %p124 = scmp.ne.s32.totalorder %s109, %s123
      %p125 = scmp.eq.s32.totalorder %s20, 0
      %p126 = por %p124, %p125
      %s128 = sadd.s32 %s127, 1
      %p131 = scmp.eq.s32.totalorder %s14, 1
      %p132 = scmp.ne.s32.totalorder %s127, %s129
      %p133 = scmp.eq.s32.totalorder %s14, 0
      %p134 = por %p132, %p133
      %p135 = scmp.ne.s32.totalorder %s127, %s129
      %p136 = scmp.eq.s32.totalorder %s19, 1
      %p137 = por %p135, %p136
      %p138 = scmp.ne.s32.totalorder %s129, %s130
      %p139 = scmp.eq.s32.totalorder %s19, 0
      %p140 = por %p138, %p139
      %p141 = scmp.ne.s32.totalorder %s129, %s130
      %p142 = scmp.eq.s32.totalorder %s20, 1
      %p143 = por %p141, %p142
      %p145 = scmp.ne.s32.totalorder %s130, %s144
      %p146 = scmp.eq.s32.totalorder %s20, 0
      %p147 = por %p145, %p146
      %s148 = smul.u32 %s21, 2
      %s149 = sadd.s32 %s148, %s22
      %s150 = smul.u32 %s33, 2
      %s151 = sadd.s32 %s150, %s29
      %s152 = ssub.s32 %s149, %s151
      %p153 = scmp.eq.s32.totalorder %s152, 0
      %s155 = sadd.s32 %s154, 1
      %s156 = scalar_select %p153, %s154, %s155
      %p159 = pneg %p153
      %p160 = scmp.eq.s32.totalorder %s14, 1
      %p161 = por %p159, %p160
      %p162 = scmp.ne.s32.totalorder %s154, %s157
      %p163 = scmp.eq.s32.totalorder %s14, 0
      %p164 = por %p162, %p163
      %p165 = scmp.ne.s32.totalorder %s154, %s157
      %p166 = scmp.eq.s32.totalorder %s19, 1
      %p167 = por %p165, %p166
      %p168 = scmp.ne.s32.totalorder %s157, %s158
      %p169 = scmp.eq.s32.totalorder %s19, 0
      %p170 = por %p168, %p169
      %p171 = scmp.ne.s32.totalorder %s157, %s158
      %p172 = scmp.eq.s32.totalorder %s20, 1
      %p173 = por %p171, %p172
      %p175 = scmp.ne.s32.totalorder %s158, %s174
      %p176 = scmp.eq.s32.totalorder %s20, 0
      %p177 = por %p175, %p176
      %p178 = scmp.le.s32.totalorder 1, %s14
      %p179 = scmp.lt.s32.totalorder %s14, 3
      %p180 = pnand %p178, %p179
      %p181 = pneg %p180
      // Predicated region
      $region9: #{tpu_custom_call.1} parent=5 // pred_check
        _
      $region10: #{tpu_custom_call.1} parent=5 // pred_check_branch
        %183 = sbr.rel (%p180) target = $region12
      $region11: #{tpu_custom_call.1} parent=5 // pred_region
        %s184 = ssub.s32 %s14, 1
        // Predicated region
        $region13: #{tpu_custom_call.1} parent=11 // pred_check
          %p185 = pneg %p77
        $region14: #{tpu_custom_call.1} parent=11 // pred_check_branch
          %187 = sbr.rel (%p185) target = $region16
        $region15: #{tpu_custom_call.1} parent=11 // pred_region
          _
        $region16: #{tpu_custom_call.1} parent=11 // pred_fallthru
          _
        // Predicated region
        $region17: #{tpu_custom_call.1} parent=11 // pred_check
          %p188 = pneg %p98
        $region18: #{tpu_custom_call.1} parent=11 // pred_check_branch
          %190 = sbr.rel (%p188) target = $region20
        $region19: #{tpu_custom_call.1} parent=11 // pred_region
          _
        $region20: #{tpu_custom_call.1} parent=11 // pred_fallthru
          _
        // Predicated region
        $region21: #{tpu_custom_call.1} parent=11 // pred_check
          %p191 = pneg %p119
        $region22: #{tpu_custom_call.1} parent=11 // pred_check_branch
          %193 = sbr.rel (%p191) target = $region24
        $region23: #{tpu_custom_call.1} parent=11 // pred_region
          _
        $region24: #{tpu_custom_call.1} parent=11 // pred_fallthru
          _
        // Predicated region
        $region25: #{tpu_custom_call.1} parent=11 // pred_check
          %p194 = pneg %p140
        $region26: #{tpu_custom_call.1} parent=11 // pred_check_branch
          %196 = sbr.rel (%p194) target = $region28
        $region27: #{tpu_custom_call.1} parent=11 // pred_region
          _
        $region28: #{tpu_custom_call.1} parent=11 // pred_fallthru
          _
      $region12: #{tpu_custom_call.1} parent=5 // pred_fallthru
        _
      %p197 = scmp.lt.s32.totalorder %s14, 2
      // Predicated region
      $region29: #{tpu_custom_call.1} parent=5 // pred_check
        %p198 = pneg %p197
      $region30: #{tpu_custom_call.1} parent=5 // pred_check_branch
        %200 = sbr.rel (%p198) target = $region32
      $region31: #{tpu_custom_call.1} parent=5 // pred_region
        // Predicated region
        $region33: #{tpu_custom_call.1} parent=31 // pred_check
          %p201 = pneg %p50
        $region34: #{tpu_custom_call.1} parent=31 // pred_check_branch
          %203 = sbr.rel (%p201) target = $region36
        $region35: #{tpu_custom_call.1} parent=31 // pred_region
          %s204 = smul.u32 %s21, 2
          %s205 = sadd.s32 %s204, %s22
          %p206 = scmp.lt.s32.totalorder %s205, 1
          %s207 = scalar_select %p206, %s205, 1
          %s208 = smul.addr %s207, 60
          %s209 = smul.addr %s208, 8
          %s210 = scalar_lea.vmem %s0, %s209
          %s211 = smul.u32 %s21, 2
          %s212 = sadd.s32 %s211, %s22
        $region36: #{tpu_custom_call.1} parent=31 // pred_fallthru
          _
      $region32: #{tpu_custom_call.1} parent=5 // pred_fallthru
        _
      %p213 = scmp.le.s32.totalorder 1, %s14
      %p214 = scmp.lt.s32.totalorder %s14, 3
      %p215 = pnand %p213, %p214
      %p216 = pneg %p215
      // Predicated region
      $region37: #{tpu_custom_call.1} parent=5 // pred_check
        _
      $region38: #{tpu_custom_call.1} parent=5 // pred_check_branch
        %218 = sbr.rel (%p215) target = $region40
      $region39: #{tpu_custom_call.1} parent=5 // pred_region
        %s219 = ssub.s32 %s14, 1
        %s220 = smul.u32 %s23, 2
        %s221 = sadd.s32 %s220, %s24
        %p222 = scmp.lt.s32.totalorder %s221, 1
        %s223 = scalar_select %p222, %s221, 1
        %s224 = smul.addr %s223, 60
        %s225 = smul.addr %s224, 8
        %s226 = scalar_lea.vmem %s0, %s225
        %p227 = pneg %p56
        %p228 = pneg %p53
        %p229 = pneg %p77
        %p230 = pneg %p74
        %p231 = pneg %p98
        %p232 = pneg %p95
        %p233 = pneg %p119
        %p234 = pneg %p116
        %p235 = pneg %p140
        %p236 = pneg %p137
        %p237 = pneg %p170
        %p238 = pneg %p167
        %s239 = sand.u32 %s157, 1
        %s240 = scalar_lea.sflag [#allocation6], %s239
        %s241 = sand.u32 %s157, 1
        %s242 = smul.addr %s241, 256
        %s243 = scalar_lea.vmem [#allocation5], %s242
        %s244 = smul.u32 %s23, 2
        %s245 = sadd.s32 %s244, %s24
        %p246 = scmp.lt.s32.totalorder %s245, 1
        %s247 = scalar_select %p246, %s245, 1
        %s248 = smul.addr %s247, 60
        %s249 = smul.addr %s248, 8
        %s250 = scalar_lea.vmem %s0, %s249
        %s251 = smul.u32 %s23, 2
        %s252 = sadd.s32 %s251, %s24
        %s253 = smul.u32 %s23, 2
        %s254 = sadd.s32 %s253, %s24
        %v256 = vld [vmem:[%s250] sm:$0xff]
        %v257 = vld [vmem:[%s250 + $0x8] sm:$0xff]
        %v258 = vld [vmem:[%s250 + $0x10] sm:$0x3]
        %v259 = vld [vmem:[%s250 + $0x18] sm:$0xff]
        %v260 = vld [vmem:[%s250 + $0x20] sm:$0xff]
        %v261 = vld [vmem:[%s250 + $0x28] sm:$0x3]
        %v262 = vld [vmem:[%s250 + $0x30] sm:$0xff]
        %v263 = vld [vmem:[%s250 + $0x38] sm:$0xff]
        %v264 = vld [vmem:[%s250 + $0x40] sm:$0x3]
        %v265 = vld [vmem:[%s250 + $0x48] sm:$0xff]
        %v266 = vld [vmem:[%s250 + $0x50] sm:$0xff]
        %v267 = vld [vmem:[%s250 + $0x58] sm:$0x3]
        %v268 = vld [vmem:[%s250 + $0x60] sm:$0xff]
        %v269 = vld [vmem:[%s250 + $0x68] sm:$0xff]
        %v270 = vld [vmem:[%s250 + $0x70] sm:$0x3]
        %v271 = vld [vmem:[%s250 + $0x78] sm:$0xff]
        %v272 = vld [vmem:[%s250 + $0x80] sm:$0xff]
        %v273 = vld [vmem:[%s250 + $0x88] sm:$0x3]
        %v274 = vld [vmem:[%s250 + $0x90] sm:$0xff]
        %v275 = vld [vmem:[%s250 + $0x98] sm:$0xff]
        %v276 = vld [vmem:[%s250 + $0xa0] sm:$0x3]
        %v277 = vld [vmem:[%s250 + $0xa8] sm:$0xff]
        %v278 = vld [vmem:[%s250 + $0xb0] sm:$0xff]
        %v279 = vld [vmem:[%s250 + $0xb8] sm:$0x3]
        %v280 = vld [vmem:[%s250 + $0xc0] sm:$0xff]
        %v281 = vld [vmem:[%s250 + $0xc8] sm:$0xff]
        %v282 = vld [vmem:[%s250 + $0xd0] sm:$0x3]
        %v283 = vld [vmem:[%s250 + $0xd8] sm:$0xff]
        %v284 = vld [vmem:[%s250 + $0xe0] sm:$0xff]
        %v285 = vld [vmem:[%s250 + $0xe8] sm:$0x3]
        %v286 = vld [vmem:[%s250 + $0xf0] sm:$0xff]
        %v287 = vld [vmem:[%s250 + $0xf8] sm:$0xff]
        %v288 = vld [vmem:[%s250 + $0x100] sm:$0x3]
        %v289 = vld [vmem:[%s250 + $0x108] sm:$0xff]
        %v290 = vld [vmem:[%s250 + $0x110] sm:$0xff]
        %v291 = vld [vmem:[%s250 + $0x118] sm:$0x3]
        %v292 = vld [vmem:[%s250 + $0x120] sm:$0xff]
        %v293 = vld [vmem:[%s250 + $0x128] sm:$0xff]
        %v294 = vld [vmem:[%s250 + $0x130] sm:$0x3]
        %v295 = vld [vmem:[%s250 + $0x138] sm:$0xff]
        %v296 = vld [vmem:[%s250 + $0x140] sm:$0xff]
        %v297 = vld [vmem:[%s250 + $0x148] sm:$0x3]
        %v298 = vld [vmem:[%s250 + $0x150] sm:$0xff]
        %v299 = vld [vmem:[%s250 + $0x158] sm:$0xff]
        %v300 = vld [vmem:[%s250 + $0x160] sm:$0x3]
        %v301 = vld [vmem:[%s250 + $0x168] sm:$0xff]
        %v302 = vld [vmem:[%s250 + $0x170] sm:$0xff]
        %v303 = vld [vmem:[%s250 + $0x178] sm:$0x3]
        %v304 = vld [vmem:[%s250 + $0x180] sm:$0xff]
        %v305 = vld [vmem:[%s250 + $0x188] sm:$0xff]
        %v306 = vld [vmem:[%s250 + $0x190] sm:$0x3]
        %v307 = vld [vmem:[%s250 + $0x198] sm:$0xff]
        %v308 = vld [vmem:[%s250 + $0x1a0] sm:$0xff]
        %v309 = vld [vmem:[%s250 + $0x1a8] sm:$0x3]
        %v310 = vld [vmem:[%s250 + $0x1b0] sm:$0xff]
        %v311 = vld [vmem:[%s250 + $0x1b8] sm:$0xff]
        %v312 = vld [vmem:[%s250 + $0x1c0] sm:$0x3]
        %v313 = vld [vmem:[%s250 + $0x1c8] sm:$0xff]
        %v314 = vld [vmem:[%s250 + $0x1d0] sm:$0xff]
        %v315 = vld [vmem:[%s250 + $0x1d8] sm:$0x3]
        %v316 = vpack.c.bf16 %v256, %v256
        %v317 = vpack.c.bf16 %v257, %v257
        %v318 = vpack.c.bf16 %v258, %v258
        %v319 = vpack.c.bf16 %v259, %v259
        %v320 = vpack.c.bf16 %v260, %v260
        %v321 = vpack.c.bf16 %v261, %v261
        %v322 = vpack.c.bf16 %v262, %v262
        %v323 = vpack.c.bf16 %v263, %v263
        %v324 = vpack.c.bf16 %v264, %v264
        %v325 = vpack.c.bf16 %v265, %v265
        %v326 = vpack.c.bf16 %v266, %v266
        %v327 = vpack.c.bf16 %v267, %v267
        %v328 = vpack.c.bf16 %v268, %v268
        %v329 = vpack.c.bf16 %v269, %v269
        %v330 = vpack.c.bf16 %v270, %v270
        %v331 = vpack.c.bf16 %v271, %v271
        %v332 = vpack.c.bf16 %v272, %v272
        %v333 = vpack.c.bf16 %v273, %v273
        %v334 = vpack.c.bf16 %v274, %v274
        %v335 = vpack.c.bf16 %v275, %v275
        %v336 = vpack.c.bf16 %v276, %v276
        %v337 = vpack.c.bf16 %v277, %v277
        %v338 = vpack.c.bf16 %v278, %v278
        %v339 = vpack.c.bf16 %v279, %v279
        %v340 = vpack.c.bf16 %v280, %v280
        %v341 = vpack.c.bf16 %v281, %v281
        %v342 = vpack.c.bf16 %v282, %v282
        %v343 = vpack.c.bf16 %v283, %v283
        %v344 = vpack.c.bf16 %v284, %v284
        %v345 = vpack.c.bf16 %v285, %v285
        %v346 = vpack.c.bf16 %v286, %v286
        %v347 = vpack.c.bf16 %v287, %v287
        %v348 = vpack.c.bf16 %v288, %v288
        %v349 = vpack.c.bf16 %v289, %v289
        %v350 = vpack.c.bf16 %v290, %v290
        %v351 = vpack.c.bf16 %v291, %v291
        %v352 = vpack.c.bf16 %v292, %v292
        %v353 = vpack.c.bf16 %v293, %v293
        %v354 = vpack.c.bf16 %v294, %v294
        %v355 = vpack.c.bf16 %v295, %v295
        %v356 = vpack.c.bf16 %v296, %v296
        %v357 = vpack.c.bf16 %v297, %v297
        %v358 = vpack.c.bf16 %v298, %v298
        %v359 = vpack.c.bf16 %v299, %v299
        %v360 = vpack.c.bf16 %v300, %v300
        %v361 = vpack.c.bf16 %v301, %v301
        %v362 = vpack.c.bf16 %v302, %v302
        %v363 = vpack.c.bf16 %v303, %v303
        %v364 = vpack.c.bf16 %v304, %v304
        %v365 = vpack.c.bf16 %v305, %v305
        %v366 = vpack.c.bf16 %v306, %v306
        %v367 = vpack.c.bf16 %v307, %v307
        %v368 = vpack.c.bf16 %v308, %v308
        %v369 = vpack.c.bf16 %v309, %v309
        %v370 = vpack.c.bf16 %v310, %v310
        %v371 = vpack.c.bf16 %v311, %v311
        %v372 = vpack.c.bf16 %v312, %v312
        %v373 = vpack.c.bf16 %v313, %v313
        %v374 = vpack.c.bf16 %v314, %v314
        %v375 = vpack.c.bf16 %v315, %v315
        %376 = vst [vmem:[#allocation2] sm:$0xf] %v316
        %377 = vst [vmem:[#allocation2 + $0x4] sm:$0xf] %v317
        %378 = vst [vmem:[#allocation2 + $0x8] sm:$0x1] %v318
        %379 = vst [vmem:[#allocation2 + $0xc] sm:$0xf] %v319
        %380 = vst [vmem:[#allocation2 + $0x10] sm:$0xf] %v320
        %381 = vst [vmem:[#allocation2 + $0x14] sm:$0x1] %v321
        %382 = vst [vmem:[#allocation2 + $0x18] sm:$0xf] %v322
        %383 = vst [vmem:[#allocation2 + $0x1c] sm:$0xf] %v323
        %384 = vst [vmem:[#allocation2 + $0x20] sm:$0x1] %v324
        %385 = vst [vmem:[#allocation2 + $0x24] sm:$0xf] %v325
        %386 = vst [vmem:[#allocation2 + $0x28] sm:$0xf] %v326
        %387 = vst [vmem:[#allocation2 + $0x2c] sm:$0x1] %v327
        %388 = vst [vmem:[#allocation2 + $0x30] sm:$0xf] %v328
        %389 = vst [vmem:[#allocation2 + $0x34] sm:$0xf] %v329
        %390 = vst [vmem:[#allocation2 + $0x38] sm:$0x1] %v330
        %391 = vst [vmem:[#allocation2 + $0x3c] sm:$0xf] %v331
        %392 = vst [vmem:[#allocation2 + $0x40] sm:$0xf] %v332
        %393 = vst [vmem:[#allocation2 + $0x44] sm:$0x1] %v333
        %394 = vst [vmem:[#allocation2 + $0x48] sm:$0xf] %v334
        %395 = vst [vmem:[#allocation2 + $0x4c] sm:$0xf] %v335
        %396 = vst [vmem:[#allocation2 + $0x50] sm:$0x1] %v336
        %397 = vst [vmem:[#allocation2 + $0x54] sm:$0xf] %v337
        %398 = vst [vmem:[#allocation2 + $0x58] sm:$0xf] %v338
        %399 = vst [vmem:[#allocation2 + $0x5c] sm:$0x1] %v339
        %400 = vst [vmem:[#allocation2 + $0x60] sm:$0xf] %v340
        %401 = vst [vmem:[#allocation2 + $0x64] sm:$0xf] %v341
        %402 = vst [vmem:[#allocation2 + $0x68] sm:$0x1] %v342
        %403 = vst [vmem:[#allocation2 + $0x6c] sm:$0xf] %v343
        %404 = vst [vmem:[#allocation2 + $0x70] sm:$0xf] %v344
        %405 = vst [vmem:[#allocation2 + $0x74] sm:$0x1] %v345
        %406 = vst [vmem:[#allocation2 + $0x78] sm:$0xf] %v346
        %407 = vst [vmem:[#allocation2 + $0x7c] sm:$0xf] %v347
        %408 = vst [vmem:[#allocation2 + $0x80] sm:$0x1] %v348
        %409 = vst [vmem:[#allocation2 + $0x84] sm:$0xf] %v349
        %410 = vst [vmem:[#allocation2 + $0x88] sm:$0xf] %v350
        %411 = vst [vmem:[#allocation2 + $0x8c] sm:$0x1] %v351
        %412 = vst [vmem:[#allocation2 + $0x90] sm:$0xf] %v352
        %413 = vst [vmem:[#allocation2 + $0x94] sm:$0xf] %v353
        %414 = vst [vmem:[#allocation2 + $0x98] sm:$0x1] %v354
        %415 = vst [vmem:[#allocation2 + $0x9c] sm:$0xf] %v355
        %416 = vst [vmem:[#allocation2 + $0xa0] sm:$0xf] %v356
        %417 = vst [vmem:[#allocation2 + $0xa4] sm:$0x1] %v357
        %418 = vst [vmem:[#allocation2 + $0xa8] sm:$0xf] %v358
        %419 = vst [vmem:[#allocation2 + $0xac] sm:$0xf] %v359
        %420 = vst [vmem:[#allocation2 + $0xb0] sm:$0x1] %v360
        %421 = vst [vmem:[#allocation2 + $0xb4] sm:$0xf] %v361
        %422 = vst [vmem:[#allocation2 + $0xb8] sm:$0xf] %v362
        %423 = vst [vmem:[#allocation2 + $0xbc] sm:$0x1] %v363
        %424 = vst [vmem:[#allocation2 + $0xc0] sm:$0xf] %v364
        %425 = vst [vmem:[#allocation2 + $0xc4] sm:$0xf] %v365
        %426 = vst [vmem:[#allocation2 + $0xc8] sm:$0x1] %v366
        %427 = vst [vmem:[#allocation2 + $0xcc] sm:$0xf] %v367
        %428 = vst [vmem:[#allocation2 + $0xd0] sm:$0xf] %v368
        %429 = vst [vmem:[#allocation2 + $0xd4] sm:$0x1] %v369
        %430 = vst [vmem:[#allocation2 + $0xd8] sm:$0xf] %v370
        %431 = vst [vmem:[#allocation2 + $0xdc] sm:$0xf] %v371
        %432 = vst [vmem:[#allocation2 + $0xe0] sm:$0x1] %v372
        %433 = vst [vmem:[#allocation2 + $0xe4] sm:$0xf] %v373
        %434 = vst [vmem:[#allocation2 + $0xe8] sm:$0xf] %v374
        %435 = vst [vmem:[#allocation2 + $0xec] sm:$0x1] %v375
        %v436 = vld [vmem:[#allocation2] sm:$0xf]
        %v437 = vld [vmem:[#allocation2 + $0x4] sm:$0xf]
        %v438 = vld [vmem:[#allocation2 + $0xc] sm:$0xf]
        %v439 = vld [vmem:[#allocation2 + $0x10] sm:$0xf]
        %v440 = vld [vmem:[#allocation2 + $0x18] sm:$0xf]
        %v441 = vld [vmem:[#allocation2 + $0x1c] sm:$0xf]
        %v442 = vld [vmem:[#allocation2 + $0x24] sm:$0xf]
        %v443 = vld [vmem:[#allocation2 + $0x28] sm:$0xf]
        %v444 = vld [vmem:[#allocation2 + $0x30] sm:$0xf]
        %v445 = vld [vmem:[#allocation2 + $0x34] sm:$0xf]
        %v446 = vld [vmem:[#allocation2 + $0x3c] sm:$0xf]
        %v447 = vld [vmem:[#allocation2 + $0x40] sm:$0xf]
        %v448 = vld [vmem:[#allocation2 + $0x48] sm:$0xf]
        %v449 = vld [vmem:[#allocation2 + $0x4c] sm:$0xf]
        %v450 = vld [vmem:[#allocation2 + $0x54] sm:$0xf]
        %v451 = vld [vmem:[#allocation2 + $0x58] sm:$0xf]
        %v452 = vld [vmem:[#allocation2 + $0x60] sm:$0xf]
        %v453 = vld [vmem:[#allocation2 + $0x64] sm:$0xf]
        %v454 = vld [vmem:[#allocation2 + $0x6c] sm:$0xf]
        %v455 = vld [vmem:[#allocation2 + $0x70] sm:$0xf]
        %v456 = vld [vmem:[#allocation2 + $0x78] sm:$0xf]
        %v457 = vld [vmem:[#allocation2 + $0x7c] sm:$0xf]
        %v458 = vld [vmem:[#allocation2 + $0x84] sm:$0xf]
        %v459 = vld [vmem:[#allocation2 + $0x88] sm:$0xf]
        %v460 = vld [vmem:[#allocation2 + $0x90] sm:$0xf]
        %v461 = vld [vmem:[#allocation2 + $0x94] sm:$0xf]
        %v462 = vld [vmem:[#allocation2 + $0x9c] sm:$0xf]
        %v463 = vld [vmem:[#allocation2 + $0xa0] sm:$0xf]
        %v464 = vld [vmem:[#allocation2 + $0xa8] sm:$0xf]
        %v465 = vld [vmem:[#allocation2 + $0xac] sm:$0xf]
        %v466 = vld [vmem:[#allocation2 + $0xb4] sm:$0xf]
        %v467 = vld [vmem:[#allocation2 + $0xb8] sm:$0xf]
        %v468 = vld [vmem:[#allocation2 + $0xc0] sm:$0xf]
        %v469 = vld [vmem:[#allocation2 + $0xc4] sm:$0xf]
        %v470 = vld [vmem:[#allocation2 + $0xcc] sm:$0xf]
        %v471 = vld [vmem:[#allocation2 + $0xd0] sm:$0xf]
        %v472 = vld [vmem:[%s1] sm:$0xf]
        %v473 = vld [vmem:[%s1 + $0x4] sm:$0xf]
        %v474 = vld [vmem:[%s1 + $0x8] sm:$0xf]
        %v475 = vld [vmem:[%s1 + $0xc] sm:$0xf]
        %v476 = vld [vmem:[%s1 + $0x10] sm:$0xf]
        %v477 = vld [vmem:[%s1 + $0x14] sm:$0xf]
        %v478 = vld [vmem:[%s1 + $0x18] sm:$0xf]
        %v479 = vld [vmem:[%s1 + $0x1c] sm:$0xf]
        %v480 = vld [vmem:[%s1 + $0x20] sm:$0xf]
        %v481 = vld [vmem:[%s1 + $0x24] sm:$0xf]
        %v482 = vld [vmem:[%s1 + $0x28] sm:$0xf]
        %v483 = vld [vmem:[%s1 + $0x2c] sm:$0xf]
        %v484 = vld [vmem:[%s1 + $0x30] sm:$0xf]
        %v485 = vld [vmem:[%s1 + $0x34] sm:$0xf]
        %v486 = vld [vmem:[%s1 + $0x38] sm:$0xf]
        %v487 = vld [vmem:[%s1 + $0x3c] sm:$0xf]
        %v524 = vunpack.c.l.b16 %v436
        %v525 = vunpack.c.l.b16 %v437
        %v526 = vunpack.c.l.b16 %v438
        %v527 = vunpack.c.l.b16 %v439
        %v528 = vunpack.c.l.b16 %v440
        %v529 = vunpack.c.l.b16 %v441
        %v530 = vunpack.c.l.b16 %v442
        %v531 = vunpack.c.l.b16 %v443
        %v532 = vunpack.c.l.b16 %v444
        %v533 = vunpack.c.l.b16 %v445
        %v534 = vunpack.c.l.b16 %v446
        %v535 = vunpack.c.l.b16 %v447
        %v536 = vunpack.c.l.b16 %v448
        %v537 = vunpack.c.l.b16 %v449
        %v538 = vunpack.c.l.b16 %v450
        %v539 = vunpack.c.l.b16 %v451
        %v540 = vunpack.c.l.b16 %v452
        %v541 = vunpack.c.l.b16 %v453
        %v542 = vunpack.c.l.b16 %v454
        %v543 = vunpack.c.l.b16 %v455
        %v544 = vunpack.c.l.b16 %v456
        %v545 = vunpack.c.l.b16 %v457
        %v546 = vunpack.c.l.b16 %v458
        %v547 = vunpack.c.l.b16 %v459
        %v548 = vunpack.c.l.b16 %v460
        %v549 = vunpack.c.l.b16 %v461
        %v550 = vunpack.c.l.b16 %v462
        %v551 = vunpack.c.l.b16 %v463
        %v552 = vunpack.c.l.b16 %v464
        %v553 = vunpack.c.l.b16 %v465
        %v554 = vunpack.c.l.b16 %v466
        %v555 = vunpack.c.l.b16 %v467
        %v556 = vunpack.c.l.b16 %v468
        %v557 = vunpack.c.l.b16 %v469
        %v558 = vunpack.c.l.b16 %v470
        %v559 = vunpack.c.l.b16 %v471
        %v560 = vpack.c.b16 %v525, %v524
        %v561 = vpack.c.b16 %v527, %v526
        %v562 = vpack.c.b16 %v529, %v528
        %v563 = vpack.c.b16 %v531, %v530
        %v564 = vpack.c.b16 %v533, %v532
        %v565 = vpack.c.b16 %v535, %v534
        %v566 = vpack.c.b16 %v537, %v536
        %v567 = vpack.c.b16 %v539, %v538
        %v568 = vpack.c.b16 %v541, %v540
        %v569 = vpack.c.b16 %v543, %v542
        %v570 = vpack.c.b16 %v545, %v544
        %v571 = vpack.c.b16 %v547, %v546
        %v572 = vpack.c.b16 %v549, %v548
        %v573 = vpack.c.b16 %v551, %v550
        %v574 = vpack.c.b16 %v553, %v552
        %v575 = vpack.c.b16 %v555, %v554
        %v576 = vpack.c.b16 %v557, %v556
        %v577 = vpack.c.b16 %v559, %v558
        %v612 = vunpack.c.l.b16 %v472
        %v613 = vunpack.c.l.b16 %v473
        %v614 = vunpack.c.l.b16 %v474
        %v615 = vunpack.c.l.b16 %v475
        %v616 = vunpack.c.l.b16 %v476
        %v617 = vunpack.c.l.b16 %v477
        %v618 = vunpack.c.l.b16 %v478
        %v619 = vunpack.c.l.b16 %v479
        %v620 = vunpack.c.l.b16 %v480
        %v621 = vunpack.c.l.b16 %v481
        %v622 = vunpack.c.l.b16 %v482
        %v623 = vunpack.c.l.b16 %v483
        %v624 = vunpack.c.l.b16 %v484
        %v625 = vunpack.c.l.b16 %v485
        %v626 = vunpack.c.l.b16 %v486
        %v627 = vunpack.c.l.b16 %v487
        %v628 = vpack.c.b16 %v613, %v612
        %v629 = vpack.c.b16 %v615, %v614
        %v630 = vpack.c.b16 %v617, %v616
        %v631 = vpack.c.b16 %v619, %v618
        %v632 = vpack.c.b16 %v621, %v620
        %v633 = vpack.c.b16 %v623, %v622
        %v634 = vpack.c.b16 %v625, %v624
        %v635 = vpack.c.b16 %v627, %v626
        %644 = vmatpush.bf16.msra.mxu0 %v635
        %645 = vmatpush.bf16.msra.mxu0 %v634
        %646 = vmatpush.bf16.msra.mxu0 %v633
        %647 = vmatpush.bf16.msra.mxu0 %v632
        %648 = vmatpush.bf16.msra.mxu0 %v631
        %649 = vmatpush.bf16.msra.mxu0 %v630
        %650 = vmatpush.bf16.msra.mxu0 %v629
        %651 = vmatpush.bf16.msra.mxu0 %v628
        %652 = vmatmul.bf16.gmra.mxu0 %v560
        %v653 = vpop.f32.mrf.mxu0
        %v654 = vadd.f32 0.0, %v653
        %v655 = vpop.f32.mrf.mxu0
        %v656 = vadd.f32 0.0, %v655
        %657 = vmatmul.bf16.gmra.mxu0 %v561
        %v658 = vpop.f32.mrf.mxu0
        %v659 = vadd.f32 0.0, %v658
        %v660 = vpop.f32.mrf.mxu0
        %v661 = vadd.f32 0.0, %v660
        %662 = vmatmul.bf16.gmra.mxu0 %v562
        %v663 = vpop.f32.mrf.mxu0
        %v664 = vadd.f32 0.0, %v663
        %v665 = vpop.f32.mrf.mxu0
        %v666 = vadd.f32 0.0, %v665
        %667 = vmatmul.bf16.gmra.mxu0 %v563
        %v668 = vpop.f32.mrf.mxu0
        %v669 = vadd.f32 0.0, %v668
        %v670 = vpop.f32.mrf.mxu0
        %v671 = vadd.f32 0.0, %v670
        %672 = vmatmul.bf16.gmra.mxu0 %v564
        %v673 = vpop.f32.mrf.mxu0
        %v674 = vadd.f32 0.0, %v673
        %v675 = vpop.f32.mrf.mxu0
        %v676 = vadd.f32 0.0, %v675
        %677 = vmatmul.bf16.gmra.mxu0 %v565
        %v678 = vpop.f32.mrf.mxu0
        %v679 = vadd.f32 0.0, %v678
        %v680 = vpop.f32.mrf.mxu0
        %v681 = vadd.f32 0.0, %v680
        %682 = vmatmul.bf16.gmra.mxu0 %v566
        %v683 = vpop.f32.mrf.mxu0
        %v684 = vadd.f32 0.0, %v683
        %v685 = vpop.f32.mrf.mxu0
        %v686 = vadd.f32 0.0, %v685
        %687 = vmatmul.bf16.gmra.mxu0 %v567
        %v688 = vpop.f32.mrf.mxu0
        %v689 = vadd.f32 0.0, %v688
        %v690 = vpop.f32.mrf.mxu0
        %v691 = vadd.f32 0.0, %v690
        %692 = vmatmul.bf16.gmra.mxu0 %v568
        %v693 = vpop.f32.mrf.mxu0
        %v694 = vadd.f32 0.0, %v693
        %v695 = vpop.f32.mrf.mxu0
        %v696 = vadd.f32 0.0, %v695
        %697 = vmatmul.bf16.gmra.mxu0 %v569
        %v698 = vpop.f32.mrf.mxu0
        %v699 = vadd.f32 0.0, %v698
        %v700 = vpop.f32.mrf.mxu0
        %v701 = vadd.f32 0.0, %v700
        %702 = vmatmul.bf16.gmra.mxu0 %v570
        %v703 = vpop.f32.mrf.mxu0
        %v704 = vadd.f32 0.0, %v703
        %v705 = vpop.f32.mrf.mxu0
        %v706 = vadd.f32 0.0, %v705
        %707 = vmatmul.bf16.gmra.mxu0 %v571
        %v708 = vpop.f32.mrf.mxu0
        %v709 = vadd.f32 0.0, %v708
        %v710 = vpop.f32.mrf.mxu0
        %v711 = vadd.f32 0.0, %v710
        %712 = vmatmul.bf16.gmra.mxu0 %v572
        %v713 = vpop.f32.mrf.mxu0
        %v714 = vadd.f32 0.0, %v713
        %v715 = vpop.f32.mrf.mxu0
        %v716 = vadd.f32 0.0, %v715
        %717 = vmatmul.bf16.gmra.mxu0 %v573
        %v718 = vpop.f32.mrf.mxu0
        %v719 = vadd.f32 0.0, %v718
        %v720 = vpop.f32.mrf.mxu0
        %v721 = vadd.f32 0.0, %v720
        %722 = vmatmul.bf16.gmra.mxu0 %v574
        %v723 = vpop.f32.mrf.mxu0
        %v724 = vadd.f32 0.0, %v723
        %v725 = vpop.f32.mrf.mxu0
        %v726 = vadd.f32 0.0, %v725
        %727 = vmatmul.bf16.gmra.mxu0 %v575
        %v728 = vpop.f32.mrf.mxu0
        %v729 = vadd.f32 0.0, %v728
        %v730 = vpop.f32.mrf.mxu0
        %v731 = vadd.f32 0.0, %v730
        %732 = vmatmul.bf16.gmra.mxu0 %v576
        %v733 = vpop.f32.mrf.mxu0
        %v734 = vadd.f32 0.0, %v733
        %v735 = vpop.f32.mrf.mxu0
        %v736 = vadd.f32 0.0, %v735
        %737 = vmatmul.bf16.gmra.mxu0 %v577
        %v738 = vpop.f32.mrf.mxu0
        %v739 = vadd.f32 0.0, %v738
        %v740 = vpop.f32.mrf.mxu0
        %v741 = vadd.f32 0.0, %v740
        %742 = vdwg.mxu0
        %743 = vst [vmem:[#allocation4] sm:$0xff] %v654
        %744 = vst [vmem:[#allocation4 + $0x8] sm:$0xff] %v656
        %745 = vst [vmem:[#allocation4 + $0x10] sm:$0xff] %v659
        %746 = vst [vmem:[#allocation4 + $0x18] sm:$0xff] %v661
        %747 = vst [vmem:[#allocation4 + $0x20] sm:$0xff] %v664
        %748 = vst [vmem:[#allocation4 + $0x28] sm:$0xff] %v666
        %749 = vst [vmem:[#allocation4 + $0x30] sm:$0xff] %v669
        %750 = vst [vmem:[#allocation4 + $0x38] sm:$0xff] %v671
        %751 = vst [vmem:[#allocation4 + $0x40] sm:$0xff] %v674
        %752 = vst [vmem:[#allocation4 + $0x48] sm:$0xff] %v676
        %753 = vst [vmem:[#allocation4 + $0x50] sm:$0xff] %v679
        %754 = vst [vmem:[#allocation4 + $0x58] sm:$0xff] %v681
        %755 = vst [vmem:[#allocation4 + $0x60] sm:$0xff] %v684
        %756 = vst [vmem:[#allocation4 + $0x68] sm:$0xff] %v686
        %757 = vst [vmem:[#allocation4 + $0x70] sm:$0xff] %v689
        %758 = vst [vmem:[#allocation4 + $0x78] sm:$0xff] %v691
        %759 = vst [vmem:[#allocation4 + $0x80] sm:$0xff] %v694
        %760 = vst [vmem:[#allocation4 + $0x88] sm:$0xff] %v696
        %761 = vst [vmem:[#allocation4 + $0x90] sm:$0xff] %v699
        %762 = vst [vmem:[#allocation4 + $0x98] sm:$0xff] %v701
        %763 = vst [vmem:[#allocation4 + $0xa0] sm:$0xff] %v704
        %764 = vst [vmem:[#allocation4 + $0xa8] sm:$0xff] %v706
        %765 = vst [vmem:[#allocation4 + $0xb0] sm:$0xff] %v709
        %766 = vst [vmem:[#allocation4 + $0xb8] sm:$0xff] %v711
        %767 = vst [vmem:[#allocation4 + $0xc0] sm:$0xff] %v714
        %768 = vst [vmem:[#allocation4 + $0xc8] sm:$0xff] %v716
        %769 = vst [vmem:[#allocation4 + $0xd0] sm:$0xff] %v719
        %770 = vst [vmem:[#allocation4 + $0xd8] sm:$0xff] %v721
        %771 = vst [vmem:[#allocation4 + $0xe0] sm:$0xff] %v724
        %772 = vst [vmem:[#allocation4 + $0xe8] sm:$0xff] %v726
        %773 = vst [vmem:[#allocation4 + $0xf0] sm:$0xff] %v729
        %774 = vst [vmem:[#allocation4 + $0xf8] sm:$0xff] %v731
        %775 = vst [vmem:[#allocation4 + $0x100] sm:$0xff] %v734
        %776 = vst [vmem:[#allocation4 + $0x108] sm:$0xff] %v736
        %777 = vst [vmem:[#allocation4 + $0x110] sm:$0xff] %v739
        %778 = vst [vmem:[#allocation4 + $0x118] sm:$0xff] %v741
        %v779 = vld [vmem:[#allocation2] sm:$0xf]
        %v780 = vld [vmem:[#allocation2 + $0x4] sm:$0xf]
        %v781 = vld [vmem:[#allocation2 + $0x8] sm:$0x1]
        %v782 = vld [vmem:[#allocation2 + $0xc] sm:$0xf]
        %v783 = vld [vmem:[#allocation2 + $0x10] sm:$0xf]
        %v784 = vld [vmem:[#allocation2 + $0x14] sm:$0x1]
        %v785 = vld [vmem:[#allocation2 + $0x18] sm:$0xf]
        %v786 = vld [vmem:[#allocation2 + $0x1c] sm:$0xf]
        %v787 = vld [vmem:[#allocation2 + $0x20] sm:$0x1]
        %v788 = vld [vmem:[#allocation2 + $0x24] sm:$0xf]
        %v789 = vld [vmem:[#allocation2 + $0x28] sm:$0xf]
        %v790 = vld [vmem:[#allocation2 + $0x2c] sm:$0x1]
        %v791 = vld [vmem:[#allocation2 + $0x30] sm:$0xf]
        %v792 = vld [vmem:[#allocation2 + $0x34] sm:$0xf]
        %v793 = vld [vmem:[#allocation2 + $0x38] sm:$0x1]
        %v794 = vld [vmem:[#allocation2 + $0x3c] sm:$0xf]
        %v795 = vld [vmem:[#allocation2 + $0x40] sm:$0xf]
        %v796 = vld [vmem:[#allocation2 + $0x44] sm:$0x1]
        %v797 = vld [vmem:[#allocation2 + $0x48] sm:$0xf]
        %v798 = vld [vmem:[#allocation2 + $0x4c] sm:$0xf]
        %v799 = vld [vmem:[#allocation2 + $0x50] sm:$0x1]
        %v800 = vld [vmem:[#allocation2 + $0x54] sm:$0xf]
        %v801 = vld [vmem:[#allocation2 + $0x58] sm:$0xf]
        %v802 = vld [vmem:[#allocation2 + $0x5c] sm:$0x1]
        %v803 = vld [vmem:[#allocation2 + $0x60] sm:$0xf]
        %v804 = vld [vmem:[#allocation2 + $0x64] sm:$0xf]
        %v805 = vld [vmem:[#allocation2 + $0x68] sm:$0x1]
        %v806 = vld [vmem:[#allocation2 + $0x6c] sm:$0xf]
        %v807 = vld [vmem:[#allocation2 + $0x70] sm:$0xf]
        %v808 = vld [vmem:[#allocation2 + $0x74] sm:$0x1]
        %v809 = vld [vmem:[#allocation2 + $0x78] sm:$0xf]
        %v810 = vld [vmem:[#allocation2 + $0x7c] sm:$0xf]
        %v811 = vld [vmem:[#allocation2 + $0x80] sm:$0x1]
        %v812 = vld [vmem:[#allocation2 + $0x84] sm:$0xf]
        %v813 = vld [vmem:[#allocation2 + $0x88] sm:$0xf]
        %v814 = vld [vmem:[#allocation2 + $0x8c] sm:$0x1]
        %v815 = vld [vmem:[#allocation2 + $0x90] sm:$0xf]
        %v816 = vld [vmem:[#allocation2 + $0x94] sm:$0xf]
        %v817 = vld [vmem:[#allocation2 + $0x98] sm:$0x1]
        %v818 = vld [vmem:[#allocation2 + $0x9c] sm:$0xf]
        %v819 = vld [vmem:[#allocation2 + $0xa0] sm:$0xf]
        %v820 = vld [vmem:[#allocation2 + $0xa4] sm:$0x1]
        %v821 = vld [vmem:[#allocation2 + $0xa8] sm:$0xf]
        %v822 = vld [vmem:[#allocation2 + $0xac] sm:$0xf]
        %v823 = vld [vmem:[#allocation2 + $0xb0] sm:$0x1]
        %v824 = vld [vmem:[#allocation2 + $0xb4] sm:$0xf]
        %v825 = vld [vmem:[#allocation2 + $0xb8] sm:$0xf]
        %v826 = vld [vmem:[#allocation2 + $0xbc] sm:$0x1]
        %v827 = vld [vmem:[#allocation2 + $0xc0] sm:$0xf]
        %v828 = vld [vmem:[#allocation2 + $0xc4] sm:$0xf]
        %v829 = vld [vmem:[#allocation2 + $0xc8] sm:$0x1]
        %v830 = vld [vmem:[#allocation2 + $0xcc] sm:$0xf]
        %v831 = vld [vmem:[#allocation2 + $0xd0] sm:$0xf]
        %v832 = vld [vmem:[#allocation2 + $0xd4] sm:$0x1]
        %vm833 = vsmask.f32 3328
        %vm834 = vsmask.f32 7440
        %vm835 = vmor %vm833, %vm834
        %v837 = vshrl.u32 %v779, 16
        %v839 = vrot.slane %v837, 4
        %v840 = vshll.u32 %v779, 16
        %v842 = vrot.slane %v840, 5
        %v843 = vor.u32 %v839, %v842
        %v844 = vrot.slane %v843, 4
        %v846 = vshll.u32 %v780, 16
        %v848 = vrot.slane %v846, 5
        %v849 = vsel %vm835, %v844, %v848
        %v850 = vshrl.u32 %v780, 16
        %v852 = vrot.slane %v850, 4
        %v853 = vor.u32 %v852, %v848
        %v854 = vrot.slane %v853, 4
        %v856 = vshll.u32 %v781, 16
        %v858 = vrot.slane %v856, 5
        %v859 = vsel %vm835, %v854, %v858
        %v861 = vshrl.u32 %v782, 16
        %v863 = vrot.slane %v861, 4
        %v864 = vshll.u32 %v782, 16
        %v866 = vrot.slane %v864, 5
        %v867 = vor.u32 %v863, %v866
        %v868 = vrot.slane %v867, 4
        %v870 = vshll.u32 %v783, 16
        %v872 = vrot.slane %v870, 5
        %v873 = vsel %vm835, %v868, %v872
        %v874 = vshrl.u32 %v783, 16
        %v876 = vrot.slane %v874, 4
        %v877 = vor.u32 %v876, %v872
        %v878 = vrot.slane %v877, 4
        %v880 = vshll.u32 %v784, 16
        %v882 = vrot.slane %v880, 5
        %v883 = vsel %vm835, %v878, %v882
        %v885 = vshrl.u32 %v785, 16
        %v887 = vrot.slane %v885, 4
        %v888 = vshll.u32 %v785, 16
        %v890 = vrot.slane %v888, 5
        %v891 = vor.u32 %v887, %v890
        %v892 = vrot.slane %v891, 4
        %v894 = vshll.u32 %v786, 16
        %v896 = vrot.slane %v894, 5
        %v897 = vsel %vm835, %v892, %v896
        %v898 = vshrl.u32 %v786, 16
        %v900 = vrot.slane %v898, 4
        %v901 = vor.u32 %v900, %v896
        %v902 = vrot.slane %v901, 4
        %v904 = vshll.u32 %v787, 16
        %v906 = vrot.slane %v904, 5
        %v907 = vsel %vm835, %v902, %v906
        %v909 = vshrl.u32 %v788, 16
        %v911 = vrot.slane %v909, 4
        %v912 = vshll.u32 %v788, 16
        %v914 = vrot.slane %v912, 5
        %v915 = vor.u32 %v911, %v914
        %v916 = vrot.slane %v915, 4
        %v918 = vshll.u32 %v789, 16
        %v920 = vrot.slane %v918, 5
        %v921 = vsel %vm835, %v916, %v920
        %v922 = vshrl.u32 %v789, 16
        %v924 = vrot.slane %v922, 4
        %v925 = vor.u32 %v924, %v920
        %v926 = vrot.slane %v925, 4
        %v928 = vshll.u32 %v790, 16
        %v930 = vrot.slane %v928, 5
        %v931 = vsel %vm835, %v926, %v930
        %v933 = vshrl.u32 %v791, 16
        %v935 = vrot.slane %v933, 4
        %v936 = vshll.u32 %v791, 16
        %v938 = vrot.slane %v936, 5
        %v939 = vor.u32 %v935, %v938
        %v940 = vrot.slane %v939, 4
        %v942 = vshll.u32 %v792, 16
        %v944 = vrot.slane %v942, 5
        %v945 = vsel %vm835, %v940, %v944
        %v946 = vshrl.u32 %v792, 16
        %v948 = vrot.slane %v946, 4
        %v949 = vor.u32 %v948, %v944
        %v950 = vrot.slane %v949, 4
        %v952 = vshll.u32 %v793, 16
        %v954 = vrot.slane %v952, 5
        %v955 = vsel %vm835, %v950, %v954
        %v957 = vshrl.u32 %v794, 16
        %v959 = vrot.slane %v957, 4
        %v960 = vshll.u32 %v794, 16
        %v962 = vrot.slane %v960, 5
        %v963 = vor.u32 %v959, %v962
        %v964 = vrot.slane %v963, 4
        %v966 = vshll.u32 %v795, 16
        %v968 = vrot.slane %v966, 5
        %v969 = vsel %vm835, %v964, %v968
        %v970 = vshrl.u32 %v795, 16
        %v972 = vrot.slane %v970, 4
        %v973 = vor.u32 %v972, %v968
        %v974 = vrot.slane %v973, 4
        %v976 = vshll.u32 %v796, 16
        %v978 = vrot.slane %v976, 5
        %v979 = vsel %vm835, %v974, %v978
        %v981 = vshrl.u32 %v797, 16
        %v983 = vrot.slane %v981, 4
        %v984 = vshll.u32 %v797, 16
        %v986 = vrot.slane %v984, 5
        %v987 = vor.u32 %v983, %v986
        %v988 = vrot.slane %v987, 4
        %v990 = vshll.u32 %v798, 16
        %v992 = vrot.slane %v990, 5
        %v993 = vsel %vm835, %v988, %v992
        %v994 = vshrl.u32 %v798, 16
        %v996 = vrot.slane %v994, 4
        %v997 = vor.u32 %v996, %v992
        %v998 = vrot.slane %v997, 4
        %v1000 = vshll.u32 %v799, 16
        %v1002 = vrot.slane %v1000, 5
        %v1003 = vsel %vm835, %v998, %v1002
        %v1005 = vshrl.u32 %v800, 16
        %v1007 = vrot.slane %v1005, 4
        %v1008 = vshll.u32 %v800, 16
        %v1010 = vrot.slane %v1008, 5
        %v1011 = vor.u32 %v1007, %v1010
        %v1012 = vrot.slane %v1011, 4
        %v1014 = vshll.u32 %v801, 16
        %v1016 = vrot.slane %v1014, 5
        %v1017 = vsel %vm835, %v1012, %v1016
        %v1018 = vshrl.u32 %v801, 16
        %v1020 = vrot.slane %v1018, 4
        %v1021 = vor.u32 %v1020, %v1016
        %v1022 = vrot.slane %v1021, 4
        %v1024 = vshll.u32 %v802, 16
        %v1026 = vrot.slane %v1024, 5
        %v1027 = vsel %vm835, %v1022, %v1026
        %v1029 = vshrl.u32 %v803, 16
        %v1031 = vrot.slane %v1029, 4
        %v1032 = vshll.u32 %v803, 16
        %v1034 = vrot.slane %v1032, 5
        %v1035 = vor.u32 %v1031, %v1034
        %v1036 = vrot.slane %v1035, 4
        %v1038 = vshll.u32 %v804, 16
        %v1040 = vrot.slane %v1038, 5
        %v1041 = vsel %vm835, %v1036, %v1040
        %v1042 = vshrl.u32 %v804, 16
        %v1044 = vrot.slane %v1042, 4
        %v1045 = vor.u32 %v1044, %v1040
        %v1046 = vrot.slane %v1045, 4
        %v1048 = vshll.u32 %v805, 16
        %v1050 = vrot.slane %v1048, 5
        %v1051 = vsel %vm835, %v1046, %v1050
        %v1053 = vshrl.u32 %v806, 16
        %v1055 = vrot.slane %v1053, 4
        %v1056 = vshll.u32 %v806, 16
        %v1058 = vrot.slane %v1056, 5
        %v1059 = vor.u32 %v1055, %v1058
        %v1060 = vrot.slane %v1059, 4
        %v1062 = vshll.u32 %v807, 16
        %v1064 = vrot.slane %v1062, 5
        %v1065 = vsel %vm835, %v1060, %v1064
        %v1066 = vshrl.u32 %v807, 16
        %v1068 = vrot.slane %v1066, 4
        %v1069 = vor.u32 %v1068, %v1064
        %v1070 = vrot.slane %v1069, 4
        %v1072 = vshll.u32 %v808, 16
        %v1074 = vrot.slane %v1072, 5
        %v1075 = vsel %vm835, %v1070, %v1074
        %v1077 = vshrl.u32 %v809, 16
        %v1079 = vrot.slane %v1077, 4
        %v1080 = vshll.u32 %v809, 16
        %v1082 = vrot.slane %v1080, 5
        %v1083 = vor.u32 %v1079, %v1082
        %v1084 = vrot.slane %v1083, 4
        %v1086 = vshll.u32 %v810, 16
        %v1088 = vrot.slane %v1086, 5
        %v1089 = vsel %vm835, %v1084, %v1088
        %v1090 = vshrl.u32 %v810, 16
        %v1092 = vrot.slane %v1090, 4
        %v1093 = vor.u32 %v1092, %v1088
        %v1094 = vrot.slane %v1093, 4
        %v1096 = vshll.u32 %v811, 16
        %v1098 = vrot.slane %v1096, 5
        %v1099 = vsel %vm835, %v1094, %v1098
        %v1101 = vshrl.u32 %v812, 16
        %v1103 = vrot.slane %v1101, 4
        %v1104 = vshll.u32 %v812, 16
        %v1106 = vrot.slane %v1104, 5
        %v1107 = vor.u32 %v1103, %v1106
        %v1108 = vrot.slane %v1107, 4
        %v1110 = vshll.u32 %v813, 16
        %v1112 = vrot.slane %v1110, 5
        %v1113 = vsel %vm835, %v1108, %v1112
        %v1114 = vshrl.u32 %v813, 16
        %v1116 = vrot.slane %v1114, 4
        %v1117 = vor.u32 %v1116, %v1112
        %v1118 = vrot.slane %v1117, 4
        %v1120 = vshll.u32 %v814, 16
        %v1122 = vrot.slane %v1120, 5
        %v1123 = vsel %vm835, %v1118, %v1122
        %v1125 = vshrl.u32 %v815, 16
        %v1127 = vrot.slane %v1125, 4
        %v1128 = vshll.u32 %v815, 16
        %v1130 = vrot.slane %v1128, 5
        %v1131 = vor.u32 %v1127, %v1130
        %v1132 = vrot.slane %v1131, 4
        %v1134 = vshll.u32 %v816, 16
        %v1136 = vrot.slane %v1134, 5
        %v1137 = vsel %vm835, %v1132, %v1136
        %v1138 = vshrl.u32 %v816, 16
        %v1140 = vrot.slane %v1138, 4
        %v1141 = vor.u32 %v1140, %v1136
        %v1142 = vrot.slane %v1141, 4
        %v1144 = vshll.u32 %v817, 16
        %v1146 = vrot.slane %v1144, 5
        %v1147 = vsel %vm835, %v1142, %v1146
        %v1149 = vshrl.u32 %v818, 16
        %v1151 = vrot.slane %v1149, 4
        %v1152 = vshll.u32 %v818, 16
        %v1154 = vrot.slane %v1152, 5
        %v1155 = vor.u32 %v1151, %v1154
        %v1156 = vrot.slane %v1155, 4
        %v1158 = vshll.u32 %v819, 16
        %v1160 = vrot.slane %v1158, 5
        %v1161 = vsel %vm835, %v1156, %v1160
        %v1162 = vshrl.u32 %v819, 16
        %v1164 = vrot.slane %v1162, 4
        %v1165 = vor.u32 %v1164, %v1160
        %v1166 = vrot.slane %v1165, 4
        %v1168 = vshll.u32 %v820, 16
        %v1170 = vrot.slane %v1168, 5
        %v1171 = vsel %vm835, %v1166, %v1170
        %v1173 = vshrl.u32 %v821, 16
        %v1175 = vrot.slane %v1173, 4
        %v1176 = vshll.u32 %v821, 16
        %v1178 = vrot.slane %v1176, 5
        %v1179 = vor.u32 %v1175, %v1178
        %v1180 = vrot.slane %v1179, 4
        %v1182 = vshll.u32 %v822, 16
        %v1184 = vrot.slane %v1182, 5
        %v1185 = vsel %vm835, %v1180, %v1184
        %v1186 = vshrl.u32 %v822, 16
        %v1188 = vrot.slane %v1186, 4
        %v1189 = vor.u32 %v1188, %v1184
        %v1190 = vrot.slane %v1189, 4
        %v1192 = vshll.u32 %v823, 16
        %v1194 = vrot.slane %v1192, 5
        %v1195 = vsel %vm835, %v1190, %v1194
        %v1197 = vshrl.u32 %v824, 16
        %v1199 = vrot.slane %v1197, 4
        %v1200 = vshll.u32 %v824, 16
        %v1202 = vrot.slane %v1200, 5
        %v1203 = vor.u32 %v1199, %v1202
        %v1204 = vrot.slane %v1203, 4
        %v1206 = vshll.u32 %v825, 16
        %v1208 = vrot.slane %v1206, 5
        %v1209 = vsel %vm835, %v1204, %v1208
        %v1210 = vshrl.u32 %v825, 16
        %v1212 = vrot.slane %v1210, 4
        %v1213 = vor.u32 %v1212, %v1208
        %v1214 = vrot.slane %v1213, 4
        %v1216 = vshll.u32 %v826, 16
        %v1218 = vrot.slane %v1216, 5
        %v1219 = vsel %vm835, %v1214, %v1218
        %v1221 = vshrl.u32 %v827, 16
        %v1223 = vrot.slane %v1221, 4
        %v1224 = vshll.u32 %v827, 16
        %v1226 = vrot.slane %v1224, 5
        %v1227 = vor.u32 %v1223, %v1226
        %v1228 = vrot.slane %v1227, 4
        %v1230 = vshll.u32 %v828, 16
        %v1232 = vrot.slane %v1230, 5
        %v1233 = vsel %vm835, %v1228, %v1232
        %v1234 = vshrl.u32 %v828, 16
        %v1236 = vrot.slane %v1234, 4
        %v1237 = vor.u32 %v1236, %v1232
        %v1238 = vrot.slane %v1237, 4
        %v1240 = vshll.u32 %v829, 16
        %v1242 = vrot.slane %v1240, 5
        %v1243 = vsel %vm835, %v1238, %v1242
        %v1245 = vshrl.u32 %v830, 16
        %v1247 = vrot.slane %v1245, 4
        %v1248 = vshll.u32 %v830, 16
        %v1250 = vrot.slane %v1248, 5
        %v1251 = vor.u32 %v1247, %v1250
        %v1252 = vrot.slane %v1251, 4
        %v1254 = vshll.u32 %v831, 16
        %v1256 = vrot.slane %v1254, 5
        %v1257 = vsel %vm835, %v1252, %v1256
        %v1258 = vshrl.u32 %v831, 16
        %v1260 = vrot.slane %v1258, 4
        %v1261 = vor.u32 %v1260, %v1256
        %v1262 = vrot.slane %v1261, 4
        %v1264 = vshll.u32 %v832, 16
        %v1266 = vrot.slane %v1264, 5
        %v1267 = vsel %vm835, %v1262, %v1266
        %s1268 = scalar_lea.vmem %s1, 64
        %v1269 = vld [vmem:[%s1268] sm:$0xf]
        %v1270 = vld [vmem:[%s1268 + $0x4] sm:$0xf]
        %v1271 = vld [vmem:[%s1268 + $0x8] sm:$0xf]
        %v1272 = vld [vmem:[%s1268 + $0xc] sm:$0xf]
        %v1273 = vld [vmem:[%s1268 + $0x10] sm:$0xf]
        %v1274 = vld [vmem:[%s1268 + $0x14] sm:$0xf]
        %v1275 = vld [vmem:[%s1268 + $0x18] sm:$0xf]
        %v1276 = vld [vmem:[%s1268 + $0x1c] sm:$0xf]
        %v1277 = vld [vmem:[%s1268 + $0x20] sm:$0xf]
        %v1278 = vld [vmem:[%s1268 + $0x24] sm:$0xf]
        %v1279 = vld [vmem:[%s1268 + $0x28] sm:$0xf]
        %v1280 = vld [vmem:[%s1268 + $0x2c] sm:$0xf]
        %v1281 = vld [vmem:[%s1268 + $0x30] sm:$0xf]
        %v1282 = vld [vmem:[%s1268 + $0x34] sm:$0xf]
        %v1283 = vld [vmem:[%s1268 + $0x38] sm:$0xf]
        %v1284 = vld [vmem:[%s1268 + $0x3c] sm:$0xf]
        %v1285 = vunpack.c.l.b16 %v849
        %v1286 = vunpack.c.l.b16 %v859
        %v1287 = vunpack.c.l.b16 %v873
        %v1288 = vunpack.c.l.b16 %v883
        %v1289 = vunpack.c.l.b16 %v897
        %v1290 = vunpack.c.l.b16 %v907
        %v1291 = vunpack.c.l.b16 %v921
        %v1292 = vunpack.c.l.b16 %v931
        %v1293 = vunpack.c.l.b16 %v945
        %v1294 = vunpack.c.l.b16 %v955
        %v1295 = vunpack.c.l.b16 %v969
        %v1296 = vunpack.c.l.b16 %v979
        %v1297 = vunpack.c.l.b16 %v993
        %v1298 = vunpack.c.l.b16 %v1003
        %v1299 = vunpack.c.l.b16 %v1017
        %v1300 = vunpack.c.l.b16 %v1027
        %v1301 = vunpack.c.l.b16 %v1041
        %v1302 = vunpack.c.l.b16 %v1051
        %v1303 = vunpack.c.l.b16 %v1065
        %v1304 = vunpack.c.l.b16 %v1075
        %v1305 = vunpack.c.l.b16 %v1089
        %v1306 = vunpack.c.l.b16 %v1099
        %v1307 = vunpack.c.l.b16 %v1113
        %v1308 = vunpack.c.l.b16 %v1123
        %v1309 = vunpack.c.l.b16 %v1137
        %v1310 = vunpack.c.l.b16 %v1147
        %v1311 = vunpack.c.l.b16 %v1161
        %v1312 = vunpack.c.l.b16 %v1171
        %v1313 = vunpack.c.l.b16 %v1185
        %v1314 = vunpack.c.l.b16 %v1195
        %v1315 = vunpack.c.l.b16 %v1209
        %v1316 = vunpack.c.l.b16 %v1219
        %v1317 = vunpack.c.l.b16 %v1233
        %v1318 = vunpack.c.l.b16 %v1243
        %v1319 = vunpack.c.l.b16 %v1257
        %v1320 = vunpack.c.l.b16 %v1267
        %v1321 = vpack.c.b16 %v1286, %v1285
        %v1322 = vpack.c.b16 %v1288, %v1287
        %v1323 = vpack.c.b16 %v1290, %v1289
        %v1324 = vpack.c.b16 %v1292, %v1291
        %v1325 = vpack.c.b16 %v1294, %v1293
        %v1326 = vpack.c.b16 %v1296, %v1295
        %v1327 = vpack.c.b16 %v1298, %v1297
        %v1328 = vpack.c.b16 %v1300, %v1299
        %v1329 = vpack.c.b16 %v1302, %v1301
        %v1330 = vpack.c.b16 %v1304, %v1303
        %v1331 = vpack.c.b16 %v1306, %v1305
        %v1332 = vpack.c.b16 %v1308, %v1307
        %v1333 = vpack.c.b16 %v1310, %v1309
        %v1334 = vpack.c.b16 %v1312, %v1311
        %v1335 = vpack.c.b16 %v1314, %v1313
        %v1336 = vpack.c.b16 %v1316, %v1315
        %v1337 = vpack.c.b16 %v1318, %v1317
        %v1338 = vpack.c.b16 %v1320, %v1319
        %v1373 = vunpack.c.l.b16 %v1269
        %v1374 = vunpack.c.l.b16 %v1270
        %v1375 = vunpack.c.l.b16 %v1271
        %v1376 = vunpack.c.l.b16 %v1272
        %v1377 = vunpack.c.l.b16 %v1273
        %v1378 = vunpack.c.l.b16 %v1274
        %v1379 = vunpack.c.l.b16 %v1275
        %v1380 = vunpack.c.l.b16 %v1276
        %v1381 = vunpack.c.l.b16 %v1277
        %v1382 = vunpack.c.l.b16 %v1278
        %v1383 = vunpack.c.l.b16 %v1279
        %v1384 = vunpack.c.l.b16 %v1280
        %v1385 = vunpack.c.l.b16 %v1281
        %v1386 = vunpack.c.l.b16 %v1282
        %v1387 = vunpack.c.l.b16 %v1283
        %v1388 = vunpack.c.l.b16 %v1284
        %v1389 = vpack.c.b16 %v1374, %v1373
        %v1390 = vpack.c.b16 %v1376, %v1375
        %v1391 = vpack.c.b16 %v1378, %v1377
        %v1392 = vpack.c.b16 %v1380, %v1379
        %v1393 = vpack.c.b16 %v1382, %v1381
        %v1394 = vpack.c.b16 %v1384, %v1383
        %v1395 = vpack.c.b16 %v1386, %v1385
        %v1396 = vpack.c.b16 %v1388, %v1387
        %1405 = vmatpush.bf16.msra.mxu0 %v1396
        %1406 = vmatpush.bf16.msra.mxu0 %v1395
        %1407 = vmatpush.bf16.msra.mxu0 %v1394
        %1408 = vmatpush.bf16.msra.mxu0 %v1393
        %1409 = vmatpush.bf16.msra.mxu0 %v1392
        %1410 = vmatpush.bf16.msra.mxu0 %v1391
        %1411 = vmatpush.bf16.msra.mxu0 %v1390
        %1412 = vmatpush.bf16.msra.mxu0 %v1389
        %1413 = vmatmul.bf16.gmra.mxu0 %v1321
        %v1414 = vpop.f32.mrf.mxu0
        %v1415 = vadd.f32 0.0, %v1414
        %v1416 = vpop.f32.mrf.mxu0
        %v1417 = vadd.f32 0.0, %v1416
        %1418 = vmatmul.bf16.gmra.mxu0 %v1322
        %v1419 = vpop.f32.mrf.mxu0
        %v1420 = vadd.f32 0.0, %v1419
        %v1421 = vpop.f32.mrf.mxu0
        %v1422 = vadd.f32 0.0, %v1421
        %1423 = vmatmul.bf16.gmra.mxu0 %v1323
        %v1424 = vpop.f32.mrf.mxu0
        %v1425 = vadd.f32 0.0, %v1424
        %v1426 = vpop.f32.mrf.mxu0
        %v1427 = vadd.f32 0.0, %v1426
        %1428 = vmatmul.bf16.gmra.mxu0 %v1324
        %v1429 = vpop.f32.mrf.mxu0
        %v1430 = vadd.f32 0.0, %v1429
        %v1431 = vpop.f32.mrf.mxu0
        %v1432 = vadd.f32 0.0, %v1431
        %1433 = vmatmul.bf16.gmra.mxu0 %v1325
        %v1434 = vpop.f32.mrf.mxu0
        %v1435 = vadd.f32 0.0, %v1434
        %v1436 = vpop.f32.mrf.mxu0
        %v1437 = vadd.f32 0.0, %v1436
        %1438 = vmatmul.bf16.gmra.mxu0 %v1326
        %v1439 = vpop.f32.mrf.mxu0
        %v1440 = vadd.f32 0.0, %v1439
        %v1441 = vpop.f32.mrf.mxu0
        %v1442 = vadd.f32 0.0, %v1441
        %1443 = vmatmul.bf16.gmra.mxu0 %v1327
        %v1444 = vpop.f32.mrf.mxu0
        %v1445 = vadd.f32 0.0, %v1444
        %v1446 = vpop.f32.mrf.mxu0
        %v1447 = vadd.f32 0.0, %v1446
        %1448 = vmatmul.bf16.gmra.mxu0 %v1328
        %v1449 = vpop.f32.mrf.mxu0
        %v1450 = vadd.f32 0.0, %v1449
        %v1451 = vpop.f32.mrf.mxu0
        %v1452 = vadd.f32 0.0, %v1451
        %1453 = vmatmul.bf16.gmra.mxu0 %v1329
        %v1454 = vpop.f32.mrf.mxu0
        %v1455 = vadd.f32 0.0, %v1454
        %v1456 = vpop.f32.mrf.mxu0
        %v1457 = vadd.f32 0.0, %v1456
        %1458 = vmatmul.bf16.gmra.mxu0 %v1330
        %v1459 = vpop.f32.mrf.mxu0
        %v1460 = vadd.f32 0.0, %v1459
        %v1461 = vpop.f32.mrf.mxu0
        %v1462 = vadd.f32 0.0, %v1461
        %1463 = vmatmul.bf16.gmra.mxu0 %v1331
        %v1464 = vpop.f32.mrf.mxu0
        %v1465 = vadd.f32 0.0, %v1464
        %v1466 = vpop.f32.mrf.mxu0
        %v1467 = vadd.f32 0.0, %v1466
        %1468 = vmatmul.bf16.gmra.mxu0 %v1332
        %v1469 = vpop.f32.mrf.mxu0
        %v1470 = vadd.f32 0.0, %v1469
        %v1471 = vpop.f32.mrf.mxu0
        %v1472 = vadd.f32 0.0, %v1471
        %1473 = vmatmul.bf16.gmra.mxu0 %v1333
        %v1474 = vpop.f32.mrf.mxu0
        %v1475 = vadd.f32 0.0, %v1474
        %v1476 = vpop.f32.mrf.mxu0
        %v1477 = vadd.f32 0.0, %v1476
        %1478 = vmatmul.bf16.gmra.mxu0 %v1334
        %v1479 = vpop.f32.mrf.mxu0
        %v1480 = vadd.f32 0.0, %v1479
        %v1481 = vpop.f32.mrf.mxu0
        %v1482 = vadd.f32 0.0, %v1481
        %1483 = vmatmul.bf16.gmra.mxu0 %v1335
        %v1484 = vpop.f32.mrf.mxu0
        %v1485 = vadd.f32 0.0, %v1484
        %v1486 = vpop.f32.mrf.mxu0
        %v1487 = vadd.f32 0.0, %v1486
        %1488 = vmatmul.bf16.gmra.mxu0 %v1336
        %v1489 = vpop.f32.mrf.mxu0
        %v1490 = vadd.f32 0.0, %v1489
        %v1491 = vpop.f32.mrf.mxu0
        %v1492 = vadd.f32 0.0, %v1491
        %1493 = vmatmul.bf16.gmra.mxu0 %v1337
        %v1494 = vpop.f32.mrf.mxu0
        %v1495 = vadd.f32 0.0, %v1494
        %v1496 = vpop.f32.mrf.mxu0
        %v1497 = vadd.f32 0.0, %v1496
        %1498 = vmatmul.bf16.gmra.mxu0 %v1338
        %v1499 = vpop.f32.mrf.mxu0
        %v1500 = vadd.f32 0.0, %v1499
        %v1501 = vpop.f32.mrf.mxu0
        %v1502 = vadd.f32 0.0, %v1501
        %1503 = vdwg.mxu0
        %v1504 = vld [vmem:[#allocation4] sm:$0xff]
        %v1505 = vld [vmem:[#allocation4 + $0x8] sm:$0xff]
        %v1506 = vld [vmem:[#allocation4 + $0x10] sm:$0xff]
        %v1507 = vld [vmem:[#allocation4 + $0x18] sm:$0xff]
        %v1508 = vld [vmem:[#allocation4 + $0x20] sm:$0xff]
        %v1509 = vld [vmem:[#allocation4 + $0x28] sm:$0xff]
        %v1510 = vld [vmem:[#allocation4 + $0x30] sm:$0xff]
        %v1511 = vld [vmem:[#allocation4 + $0x38] sm:$0xff]
        %v1512 = vld [vmem:[#allocation4 + $0x40] sm:$0xff]
        %v1513 = vld [vmem:[#allocation4 + $0x48] sm:$0xff]
        %v1514 = vld [vmem:[#allocation4 + $0x50] sm:$0xff]
        %v1515 = vld [vmem:[#allocation4 + $0x58] sm:$0xff]
        %v1516 = vld [vmem:[#allocation4 + $0x60] sm:$0xff]
        %v1517 = vld [vmem:[#allocation4 + $0x68] sm:$0xff]
        %v1518 = vld [vmem:[#allocation4 + $0x70] sm:$0xff]
        %v1519 = vld [vmem:[#allocation4 + $0x78] sm:$0xff]
        %v1520 = vld [vmem:[#allocation4 + $0x80] sm:$0xff]
        %v1521 = vld [vmem:[#allocation4 + $0x88] sm:$0xff]
        %v1522 = vld [vmem:[#allocation4 + $0x90] sm:$0xff]
        %v1523 = vld [vmem:[#allocation4 + $0x98] sm:$0xff]
        %v1524 = vld [vmem:[#allocation4 + $0xa0] sm:$0xff]
        %v1525 = vld [vmem:[#allocation4 + $0xa8] sm:$0xff]
        %v1526 = vld [vmem:[#allocation4 + $0xb0] sm:$0xff]
        %v1527 = vld [vmem:[#allocation4 + $0xb8] sm:$0xff]
        %v1528 = vld [vmem:[#allocation4 + $0xc0] sm:$0xff]
        %v1529 = vld [vmem:[#allocation4 + $0xc8] sm:$0xff]
        %v1530 = vld [vmem:[#allocation4 + $0xd0] sm:$0xff]
        %v1531 = vld [vmem:[#allocation4 + $0xd8] sm:$0xff]
        %v1532 = vld [vmem:[#allocation4 + $0xe0] sm:$0xff]
        %v1533 = vld [vmem:[#allocation4 + $0xe8] sm:$0xff]
        %v1534 = vld [vmem:[#allocation4 + $0xf0] sm:$0xff]
        %v1535 = vld [vmem:[#allocation4 + $0xf8] sm:$0xff]
        %v1536 = vld [vmem:[#allocation4 + $0x100] sm:$0xff]
        %v1537 = vld [vmem:[#allocation4 + $0x108] sm:$0xff]
        %v1538 = vld [vmem:[#allocation4 + $0x110] sm:$0xff]
        %v1539 = vld [vmem:[#allocation4 + $0x118] sm:$0xff]
        %v1540 = vadd.f32 %v1504, %v1415
        %v1541 = vadd.f32 %v1505, %v1417
        %v1542 = vadd.f32 %v1506, %v1420
        %v1543 = vadd.f32 %v1507, %v1422
        %v1544 = vadd.f32 %v1508, %v1425
        %v1545 = vadd.f32 %v1509, %v1427
        %v1546 = vadd.f32 %v1510, %v1430
        %v1547 = vadd.f32 %v1511, %v1432
        %v1548 = vadd.f32 %v1512, %v1435
        %v1549 = vadd.f32 %v1513, %v1437
        %v1550 = vadd.f32 %v1514, %v1440
        %v1551 = vadd.f32 %v1515, %v1442
        %v1552 = vadd.f32 %v1516, %v1445
        %v1553 = vadd.f32 %v1517, %v1447
        %v1554 = vadd.f32 %v1518, %v1450
        %v1555 = vadd.f32 %v1519, %v1452
        %v1556 = vadd.f32 %v1520, %v1455
        %v1557 = vadd.f32 %v1521, %v1457
        %v1558 = vadd.f32 %v1522, %v1460
        %v1559 = vadd.f32 %v1523, %v1462
        %v1560 = vadd.f32 %v1524, %v1465
        %v1561 = vadd.f32 %v1525, %v1467
        %v1562 = vadd.f32 %v1526, %v1470
        %v1563 = vadd.f32 %v1527, %v1472
        %v1564 = vadd.f32 %v1528, %v1475
        %v1565 = vadd.f32 %v1529, %v1477
        %v1566 = vadd.f32 %v1530, %v1480
        %v1567 = vadd.f32 %v1531, %v1482
        %v1568 = vadd.f32 %v1532, %v1485
        %v1569 = vadd.f32 %v1533, %v1487
        %v1570 = vadd.f32 %v1534, %v1490
        %v1571 = vadd.f32 %v1535, %v1492
        %v1572 = vadd.f32 %v1536, %v1495
        %v1573 = vadd.f32 %v1537, %v1497
        %v1574 = vadd.f32 %v1538, %v1500
        %v1575 = vadd.f32 %v1539, %v1502
        %1576 = vst [vmem:[#allocation4] sm:$0xff] %v1540
        %1577 = vst [vmem:[#allocation4 + $0x8] sm:$0xff] %v1541
        %1578 = vst [vmem:[#allocation4 + $0x10] sm:$0xff] %v1542
        %1579 = vst [vmem:[#allocation4 + $0x18] sm:$0xff] %v1543
        %1580 = vst [vmem:[#allocation4 + $0x20] sm:$0xff] %v1544
        %1581 = vst [vmem:[#allocation4 + $0x28] sm:$0xff] %v1545
        %1582 = vst [vmem:[#allocation4 + $0x30] sm:$0xff] %v1546
        %1583 = vst [vmem:[#allocation4 + $0x38] sm:$0xff] %v1547
        %1584 = vst [vmem:[#allocation4 + $0x40] sm:$0xff] %v1548
        %1585 = vst [vmem:[#allocation4 + $0x48] sm:$0xff] %v1549
        %1586 = vst [vmem:[#allocation4 + $0x50] sm:$0xff] %v1550
        %1587 = vst [vmem:[#allocation4 + $0x58] sm:$0xff] %v1551
        %1588 = vst [vmem:[#allocation4 + $0x60] sm:$0xff] %v1552
        %1589 = vst [vmem:[#allocation4 + $0x68] sm:$0xff] %v1553
        %1590 = vst [vmem:[#allocation4 + $0x70] sm:$0xff] %v1554
        %1591 = vst [vmem:[#allocation4 + $0x78] sm:$0xff] %v1555
        %1592 = vst [vmem:[#allocation4 + $0x80] sm:$0xff] %v1556
        %1593 = vst [vmem:[#allocation4 + $0x88] sm:$0xff] %v1557
        %1594 = vst [vmem:[#allocation4 + $0x90] sm:$0xff] %v1558
        %1595 = vst [vmem:[#allocation4 + $0x98] sm:$0xff] %v1559
        %1596 = vst [vmem:[#allocation4 + $0xa0] sm:$0xff] %v1560
        %1597 = vst [vmem:[#allocation4 + $0xa8] sm:$0xff] %v1561
        %1598 = vst [vmem:[#allocation4 + $0xb0] sm:$0xff] %v1562
        %1599 = vst [vmem:[#allocation4 + $0xb8] sm:$0xff] %v1563
        %1600 = vst [vmem:[#allocation4 + $0xc0] sm:$0xff] %v1564
        %1601 = vst [vmem:[#allocation4 + $0xc8] sm:$0xff] %v1565
        %1602 = vst [vmem:[#allocation4 + $0xd0] sm:$0xff] %v1566
        %1603 = vst [vmem:[#allocation4 + $0xd8] sm:$0xff] %v1567
        %1604 = vst [vmem:[#allocation4 + $0xe0] sm:$0xff] %v1568
        %1605 = vst [vmem:[#allocation4 + $0xe8] sm:$0xff] %v1569
        %1606 = vst [vmem:[#allocation4 + $0xf0] sm:$0xff] %v1570
        %1607 = vst [vmem:[#allocation4 + $0xf8] sm:$0xff] %v1571
        %1608 = vst [vmem:[#allocation4 + $0x100] sm:$0xff] %v1572
        %1609 = vst [vmem:[#allocation4 + $0x108] sm:$0xff] %v1573
        %1610 = vst [vmem:[#allocation4 + $0x110] sm:$0xff] %v1574
        %1611 = vst [vmem:[#allocation4 + $0x118] sm:$0xff] %v1575
        %v1612 = vld [vmem:[#allocation2] sm:$0xe]
        %v1613 = vld [vmem:[#allocation2 + $0x4] sm:$0xf]
        %v1614 = vld [vmem:[#allocation2 + $0x8] sm:$0x1]
        %v1615 = vld [vmem:[#allocation2 + $0xc] sm:$0xe]
        %v1616 = vld [vmem:[#allocation2 + $0x10] sm:$0xf]
        %v1617 = vld [vmem:[#allocation2 + $0x14] sm:$0x1]
        %v1618 = vld [vmem:[#allocation2 + $0x18] sm:$0xe]
        %v1619 = vld [vmem:[#allocation2 + $0x1c] sm:$0xf]
        %v1620 = vld [vmem:[#allocation2 + $0x20] sm:$0x1]
        %v1621 = vld [vmem:[#allocation2 + $0x24] sm:$0xe]
        %v1622 = vld [vmem:[#allocation2 + $0x28] sm:$0xf]
        %v1623 = vld [vmem:[#allocation2 + $0x2c] sm:$0x1]
        %v1624 = vld [vmem:[#allocation2 + $0x30] sm:$0xe]
        %v1625 = vld [vmem:[#allocation2 + $0x34] sm:$0xf]
        %v1626 = vld [vmem:[#allocation2 + $0x38] sm:$0x1]
        %v1627 = vld [vmem:[#allocation2 + $0x3c] sm:$0xe]
        %v1628 = vld [vmem:[#allocation2 + $0x40] sm:$0xf]
        %v1629 = vld [vmem:[#allocation2 + $0x44] sm:$0x1]
        %v1630 = vld [vmem:[#allocation2 + $0x48] sm:$0xe]
        %v1631 = vld [vmem:[#allocation2 + $0x4c] sm:$0xf]
        %v1632 = vld [vmem:[#allocation2 + $0x50] sm:$0x1]
        %v1633 = vld [vmem:[#allocation2 + $0x54] sm:$0xe]
        %v1634 = vld [vmem:[#allocation2 + $0x58] sm:$0xf]
        %v1635 = vld [vmem:[#allocation2 + $0x5c] sm:$0x1]
        %v1636 = vld [vmem:[#allocation2 + $0x60] sm:$0xe]
        %v1637 = vld [vmem:[#allocation2 + $0x64] sm:$0xf]
        %v1638 = vld [vmem:[#allocation2 + $0x68] sm:$0x1]
        %v1639 = vld [vmem:[#allocation2 + $0x6c] sm:$0xe]
        %v1640 = vld [vmem:[#allocation2 + $0x70] sm:$0xf]
        %v1641 = vld [vmem:[#allocation2 + $0x74] sm:$0x1]
        %v1642 = vld [vmem:[#allocation2 + $0x78] sm:$0xe]
        %v1643 = vld [vmem:[#allocation2 + $0x7c] sm:$0xf]
        %v1644 = vld [vmem:[#allocation2 + $0x80] sm:$0x1]
        %v1645 = vld [vmem:[#allocation2 + $0x84] sm:$0xe]
        %v1646 = vld [vmem:[#allocation2 + $0x88] sm:$0xf]
        %v1647 = vld [vmem:[#allocation2 + $0x8c] sm:$0x1]
        %v1648 = vld [vmem:[#allocation2 + $0x90] sm:$0xe]
        %v1649 = vld [vmem:[#allocation2 + $0x94] sm:$0xf]
        %v1650 = vld [vmem:[#allocation2 + $0x98] sm:$0x1]
        %v1651 = vld [vmem:[#allocation2 + $0x9c] sm:$0xe]
        %v1652 = vld [vmem:[#allocation2 + $0xa0] sm:$0xf]
        %v1653 = vld [vmem:[#allocation2 + $0xa4] sm:$0x1]
        %v1654 = vld [vmem:[#allocation2 + $0xa8] sm:$0xe]
        %v1655 = vld [vmem:[#allocation2 + $0xac] sm:$0xf]
        %v1656 = vld [vmem:[#allocation2 + $0xb0] sm:$0x1]
        %v1657 = vld [vmem:[#allocation2 + $0xb4] sm:$0xe]
        %v1658 = vld [vmem:[#allocation2 + $0xb8] sm:$0xf]
        %v1659 = vld [vmem:[#allocation2 + $0xbc] sm:$0x1]
        %v1660 = vld [vmem:[#allocation2 + $0xc0] sm:$0xe]
        %v1661 = vld [vmem:[#allocation2 + $0xc4] sm:$0xf]
        %v1662 = vld [vmem:[#allocation2 + $0xc8] sm:$0x1]
        %v1663 = vld [vmem:[#allocation2 + $0xcc] sm:$0xe]
        %v1664 = vld [vmem:[#allocation2 + $0xd0] sm:$0xf]
        %v1665 = vld [vmem:[#allocation2 + $0xd4] sm:$0x1]
        %vm1720 = vcmask 1042432
        %vm1721 = vcmask 1046532
        %vm1722 = vmor %vm1720, %vm1721
        %v1723 = vrot.slane %v1612, 5
        %v1724 = vrot.slane %v1723, 4
        %v1725 = vrot.slane %v1613, 5
        %v1726 = vsel %vm1722, %v1724, %v1725
        %v1727 = vrot.slane %v1725, 4
        %v1728 = vrot.slane %v1614, 5
        %v1729 = vsel %vm1722, %v1727, %v1728
        %v1730 = vrot.slane %v1615, 5
        %v1731 = vrot.slane %v1730, 4
        %v1732 = vrot.slane %v1616, 5
        %v1733 = vsel %vm1722, %v1731, %v1732
        %v1734 = vrot.slane %v1732, 4
        %v1735 = vrot.slane %v1617, 5
        %v1736 = vsel %vm1722, %v1734, %v1735
        %v1737 = vrot.slane %v1618, 5
        %v1738 = vrot.slane %v1737, 4
        %v1739 = vrot.slane %v1619, 5
        %v1740 = vsel %vm1722, %v1738, %v1739
        %v1741 = vrot.slane %v1739, 4
        %v1742 = vrot.slane %v1620, 5
        %v1743 = vsel %vm1722, %v1741, %v1742
        %v1744 = vrot.slane %v1621, 5
        %v1745 = vrot.slane %v1744, 4
        %v1746 = vrot.slane %v1622, 5
        %v1747 = vsel %vm1722, %v1745, %v1746
        %v1748 = vrot.slane %v1746, 4
        %v1749 = vrot.slane %v1623, 5
        %v1750 = vsel %vm1722, %v1748, %v1749
        %v1751 = vrot.slane %v1624, 5
        %v1752 = vrot.slane %v1751, 4
        %v1753 = vrot.slane %v1625, 5
        %v1754 = vsel %vm1722, %v1752, %v1753
        %v1755 = vrot.slane %v1753, 4
        %v1756 = vrot.slane %v1626, 5
        %v1757 = vsel %vm1722, %v1755, %v1756
        %v1758 = vrot.slane %v1627, 5
        %v1759 = vrot.slane %v1758, 4
        %v1760 = vrot.slane %v1628, 5
        %v1761 = vsel %vm1722, %v1759, %v1760
        %v1762 = vrot.slane %v1760, 4
        %v1763 = vrot.slane %v1629, 5
        %v1764 = vsel %vm1722, %v1762, %v1763
        %v1765 = vrot.slane %v1630, 5
        %v1766 = vrot.slane %v1765, 4
        %v1767 = vrot.slane %v1631, 5
        %v1768 = vsel %vm1722, %v1766, %v1767
        %v1769 = vrot.slane %v1767, 4
        %v1770 = vrot.slane %v1632, 5
        %v1771 = vsel %vm1722, %v1769, %v1770
        %v1772 = vrot.slane %v1633, 5
        %v1773 = vrot.slane %v1772, 4
        %v1774 = vrot.slane %v1634, 5
        %v1775 = vsel %vm1722, %v1773, %v1774
        %v1776 = vrot.slane %v1774, 4
        %v1777 = vrot.slane %v1635, 5
        %v1778 = vsel %vm1722, %v1776, %v1777
        %v1779 = vrot.slane %v1636, 5
        %v1780 = vrot.slane %v1779, 4
        %v1781 = vrot.slane %v1637, 5
        %v1782 = vsel %vm1722, %v1780, %v1781
        %v1783 = vrot.slane %v1781, 4
        %v1784 = vrot.slane %v1638, 5
        %v1785 = vsel %vm1722, %v1783, %v1784
        %v1786 = vrot.slane %v1639, 5
        %v1787 = vrot.slane %v1786, 4
        %v1788 = vrot.slane %v1640, 5
        %v1789 = vsel %vm1722, %v1787, %v1788
        %v1790 = vrot.slane %v1788, 4
        %v1791 = vrot.slane %v1641, 5
        %v1792 = vsel %vm1722, %v1790, %v1791
        %v1793 = vrot.slane %v1642, 5
        %v1794 = vrot.slane %v1793, 4
        %v1795 = vrot.slane %v1643, 5
        %v1796 = vsel %vm1722, %v1794, %v1795
        %v1797 = vrot.slane %v1795, 4
        %v1798 = vrot.slane %v1644, 5
        %v1799 = vsel %vm1722, %v1797, %v1798
        %v1800 = vrot.slane %v1645, 5
        %v1801 = vrot.slane %v1800, 4
        %v1802 = vrot.slane %v1646, 5
        %v1803 = vsel %vm1722, %v1801, %v1802
        %v1804 = vrot.slane %v1802, 4
        %v1805 = vrot.slane %v1647, 5
        %v1806 = vsel %vm1722, %v1804, %v1805
        %v1807 = vrot.slane %v1648, 5
        %v1808 = vrot.slane %v1807, 4
        %v1809 = vrot.slane %v1649, 5
        %v1810 = vsel %vm1722, %v1808, %v1809
        %v1811 = vrot.slane %v1809, 4
        %v1812 = vrot.slane %v1650, 5
        %v1813 = vsel %vm1722, %v1811, %v1812
        %v1814 = vrot.slane %v1651, 5
        %v1815 = vrot.slane %v1814, 4
        %v1816 = vrot.slane %v1652, 5
        %v1817 = vsel %vm1722, %v1815, %v1816
        %v1818 = vrot.slane %v1816, 4
        %v1819 = vrot.slane %v1653, 5
        %v1820 = vsel %vm1722, %v1818, %v1819
        %v1821 = vrot.slane %v1654, 5
        %v1822 = vrot.slane %v1821, 4
        %v1823 = vrot.slane %v1655, 5
        %v1824 = vsel %vm1722, %v1822, %v1823
        %v1825 = vrot.slane %v1823, 4
        %v1826 = vrot.slane %v1656, 5
        %v1827 = vsel %vm1722, %v1825, %v1826
        %v1828 = vrot.slane %v1657, 5
        %v1829 = vrot.slane %v1828, 4
        %v1830 = vrot.slane %v1658, 5
        %v1831 = vsel %vm1722, %v1829, %v1830
        %v1832 = vrot.slane %v1830, 4
        %v1833 = vrot.slane %v1659, 5
        %v1834 = vsel %vm1722, %v1832, %v1833
        %v1835 = vrot.slane %v1660, 5
        %v1836 = vrot.slane %v1835, 4
        %v1837 = vrot.slane %v1661, 5
        %v1838 = vsel %vm1722, %v1836, %v1837
        %v1839 = vrot.slane %v1837, 4
        %v1840 = vrot.slane %v1662, 5
        %v1841 = vsel %vm1722, %v1839, %v1840
        %v1842 = vrot.slane %v1663, 5
        %v1843 = vrot.slane %v1842, 4
        %v1844 = vrot.slane %v1664, 5
        %v1845 = vsel %vm1722, %v1843, %v1844
        %v1846 = vrot.slane %v1844, 4
        %v1847 = vrot.slane %v1665, 5
        %v1848 = vsel %vm1722, %v1846, %v1847
        %s1849 = scalar_lea.vmem %s1, 128
        %v1850 = vld [vmem:[%s1849] sm:$0xf]
        %v1851 = vld [vmem:[%s1849 + $0x4] sm:$0xf]
        %v1852 = vld [vmem:[%s1849 + $0x8] sm:$0xf]
        %v1853 = vld [vmem:[%s1849 + $0xc] sm:$0xf]
        %v1854 = vld [vmem:[%s1849 + $0x10] sm:$0xf]
        %v1855 = vld [vmem:[%s1849 + $0x14] sm:$0xf]
        %v1856 = vld [vmem:[%s1849 + $0x18] sm:$0xf]
        %v1857 = vld [vmem:[%s1849 + $0x1c] sm:$0xf]
        %v1858 = vld [vmem:[%s1849 + $0x20] sm:$0xf]
        %v1859 = vld [vmem:[%s1849 + $0x24] sm:$0xf]
        %v1860 = vld [vmem:[%s1849 + $0x28] sm:$0xf]
        %v1861 = vld [vmem:[%s1849 + $0x2c] sm:$0xf]
        %v1862 = vld [vmem:[%s1849 + $0x30] sm:$0xf]
        %v1863 = vld [vmem:[%s1849 + $0x34] sm:$0xf]
        %v1864 = vld [vmem:[%s1849 + $0x38] sm:$0xf]
        %v1865 = vld [vmem:[%s1849 + $0x3c] sm:$0xf]
        %v1866 = vunpack.c.l.b16 %v1726
        %v1867 = vunpack.c.l.b16 %v1729
        %v1868 = vunpack.c.l.b16 %v1733
        %v1869 = vunpack.c.l.b16 %v1736
        %v1870 = vunpack.c.l.b16 %v1740
        %v1871 = vunpack.c.l.b16 %v1743
        %v1872 = vunpack.c.l.b16 %v1747
        %v1873 = vunpack.c.l.b16 %v1750
        %v1874 = vunpack.c.l.b16 %v1754
        %v1875 = vunpack.c.l.b16 %v1757
        %v1876 = vunpack.c.l.b16 %v1761
        %v1877 = vunpack.c.l.b16 %v1764
        %v1878 = vunpack.c.l.b16 %v1768
        %v1879 = vunpack.c.l.b16 %v1771
        %v1880 = vunpack.c.l.b16 %v1775
        %v1881 = vunpack.c.l.b16 %v1778
        %v1882 = vunpack.c.l.b16 %v1782
        %v1883 = vunpack.c.l.b16 %v1785
        %v1884 = vunpack.c.l.b16 %v1789
        %v1885 = vunpack.c.l.b16 %v1792
        %v1886 = vunpack.c.l.b16 %v1796
        %v1887 = vunpack.c.l.b16 %v1799
        %v1888 = vunpack.c.l.b16 %v1803
        %v1889 = vunpack.c.l.b16 %v1806
        %v1890 = vunpack.c.l.b16 %v1810
        %v1891 = vunpack.c.l.b16 %v1813
        %v1892 = vunpack.c.l.b16 %v1817
        %v1893 = vunpack.c.l.b16 %v1820
        %v1894 = vunpack.c.l.b16 %v1824
        %v1895 = vunpack.c.l.b16 %v1827
        %v1896 = vunpack.c.l.b16 %v1831
        %v1897 = vunpack.c.l.b16 %v1834
        %v1898 = vunpack.c.l.b16 %v1838
        %v1899 = vunpack.c.l.b16 %v1841
        %v1900 = vunpack.c.l.b16 %v1845
        %v1901 = vunpack.c.l.b16 %v1848
        %v1902 = vpack.c.b16 %v1867, %v1866
        %v1903 = vpack.c.b16 %v1869, %v1868
        %v1904 = vpack.c.b16 %v1871, %v1870
        %v1905 = vpack.c.b16 %v1873, %v1872
        %v1906 = vpack.c.b16 %v1875, %v1874
        %v1907 = vpack.c.b16 %v1877, %v1876
        %v1908 = vpack.c.b16 %v1879, %v1878
        %v1909 = vpack.c.b16 %v1881, %v1880
        %v1910 = vpack.c.b16 %v1883, %v1882
        %v1911 = vpack.c.b16 %v1885, %v1884
        %v1912 = vpack.c.b16 %v1887, %v1886
        %v1913 = vpack.c.b16 %v1889, %v1888
        %v1914 = vpack.c.b16 %v1891, %v1890
        %v1915 = vpack.c.b16 %v1893, %v1892
        %v1916 = vpack.c.b16 %v1895, %v1894
        %v1917 = vpack.c.b16 %v1897, %v1896
        %v1918 = vpack.c.b16 %v1899, %v1898
        %v1919 = vpack.c.b16 %v1901, %v1900
        %v1954 = vunpack.c.l.b16 %v1850
        %v1955 = vunpack.c.l.b16 %v1851
        %v1956 = vunpack.c.l.b16 %v1852
        %v1957 = vunpack.c.l.b16 %v1853
        %v1958 = vunpack.c.l.b16 %v1854
        %v1959 = vunpack.c.l.b16 %v1855
        %v1960 = vunpack.c.l.b16 %v1856
        %v1961 = vunpack.c.l.b16 %v1857
        %v1962 = vunpack.c.l.b16 %v1858
        %v1963 = vunpack.c.l.b16 %v1859
        %v1964 = vunpack.c.l.b16 %v1860
        %v1965 = vunpack.c.l.b16 %v1861
        %v1966 = vunpack.c.l.b16 %v1862
        %v1967 = vunpack.c.l.b16 %v1863
        %v1968 = vunpack.c.l.b16 %v1864
        %v1969 = vunpack.c.l.b16 %v1865
        %v1970 = vpack.c.b16 %v1955, %v1954
        %v1971 = vpack.c.b16 %v1957, %v1956
        %v1972 = vpack.c.b16 %v1959, %v1958
        %v1973 = vpack.c.b16 %v1961, %v1960
        %v1974 = vpack.c.b16 %v1963, %v1962
        %v1975 = vpack.c.b16 %v1965, %v1964
        %v1976 = vpack.c.b16 %v1967, %v1966
        %v1977 = vpack.c.b16 %v1969, %v1968
        %1986 = vmatpush.bf16.msra.mxu0 %v1977
        %1987 = vmatpush.bf16.msra.mxu0 %v1976
        %1988 = vmatpush.bf16.msra.mxu0 %v1975
        %1989 = vmatpush.bf16.msra.mxu0 %v1974
        %1990 = vmatpush.bf16.msra.mxu0 %v1973
        %1991 = vmatpush.bf16.msra.mxu0 %v1972
        %1992 = vmatpush.bf16.msra.mxu0 %v1971
        %1993 = vmatpush.bf16.msra.mxu0 %v1970
        %1994 = vmatmul.bf16.gmra.mxu0 %v1902
        %v1995 = vpop.f32.mrf.mxu0
        %v1996 = vadd.f32 0.0, %v1995
        %v1997 = vpop.f32.mrf.mxu0
        %v1998 = vadd.f32 0.0, %v1997
        %1999 = vmatmul.bf16.gmra.mxu0 %v1903
        %v2000 = vpop.f32.mrf.mxu0
        %v2001 = vadd.f32 0.0, %v2000
        %v2002 = vpop.f32.mrf.mxu0
        %v2003 = vadd.f32 0.0, %v2002
        %2004 = vmatmul.bf16.gmra.mxu0 %v1904
        %v2005 = vpop.f32.mrf.mxu0
        %v2006 = vadd.f32 0.0, %v2005
        %v2007 = vpop.f32.mrf.mxu0
        %v2008 = vadd.f32 0.0, %v2007
        %2009 = vmatmul.bf16.gmra.mxu0 %v1905
        %v2010 = vpop.f32.mrf.mxu0
        %v2011 = vadd.f32 0.0, %v2010
        %v2012 = vpop.f32.mrf.mxu0
        %v2013 = vadd.f32 0.0, %v2012
        %2014 = vmatmul.bf16.gmra.mxu0 %v1906
        %v2015 = vpop.f32.mrf.mxu0
        %v2016 = vadd.f32 0.0, %v2015
        %v2017 = vpop.f32.mrf.mxu0
        %v2018 = vadd.f32 0.0, %v2017
        %2019 = vmatmul.bf16.gmra.mxu0 %v1907
        %v2020 = vpop.f32.mrf.mxu0
        %v2021 = vadd.f32 0.0, %v2020
        %v2022 = vpop.f32.mrf.mxu0
        %v2023 = vadd.f32 0.0, %v2022
        %2024 = vmatmul.bf16.gmra.mxu0 %v1908
        %v2025 = vpop.f32.mrf.mxu0
        %v2026 = vadd.f32 0.0, %v2025
        %v2027 = vpop.f32.mrf.mxu0
        %v2028 = vadd.f32 0.0, %v2027
        %2029 = vmatmul.bf16.gmra.mxu0 %v1909
        %v2030 = vpop.f32.mrf.mxu0
        %v2031 = vadd.f32 0.0, %v2030
        %v2032 = vpop.f32.mrf.mxu0
        %v2033 = vadd.f32 0.0, %v2032
        %2034 = vmatmul.bf16.gmra.mxu0 %v1910
        %v2035 = vpop.f32.mrf.mxu0
        %v2036 = vadd.f32 0.0, %v2035
        %v2037 = vpop.f32.mrf.mxu0
        %v2038 = vadd.f32 0.0, %v2037
        %2039 = vmatmul.bf16.gmra.mxu0 %v1911
        %v2040 = vpop.f32.mrf.mxu0
        %v2041 = vadd.f32 0.0, %v2040
        %v2042 = vpop.f32.mrf.mxu0
        %v2043 = vadd.f32 0.0, %v2042
        %2044 = vmatmul.bf16.gmra.mxu0 %v1912
        %v2045 = vpop.f32.mrf.mxu0
        %v2046 = vadd.f32 0.0, %v2045
        %v2047 = vpop.f32.mrf.mxu0
        %v2048 = vadd.f32 0.0, %v2047
        %2049 = vmatmul.bf16.gmra.mxu0 %v1913
        %v2050 = vpop.f32.mrf.mxu0
        %v2051 = vadd.f32 0.0, %v2050
        %v2052 = vpop.f32.mrf.mxu0
        %v2053 = vadd.f32 0.0, %v2052
        %2054 = vmatmul.bf16.gmra.mxu0 %v1914
        %v2055 = vpop.f32.mrf.mxu0
        %v2056 = vadd.f32 0.0, %v2055
        %v2057 = vpop.f32.mrf.mxu0
        %v2058 = vadd.f32 0.0, %v2057
        %2059 = vmatmul.bf16.gmra.mxu0 %v1915
        %v2060 = vpop.f32.mrf.mxu0
        %v2061 = vadd.f32 0.0, %v2060
        %v2062 = vpop.f32.mrf.mxu0
        %v2063 = vadd.f32 0.0, %v2062
        %2064 = vmatmul.bf16.gmra.mxu0 %v1916
        %v2065 = vpop.f32.mrf.mxu0
        %v2066 = vadd.f32 0.0, %v2065
        %v2067 = vpop.f32.mrf.mxu0
        %v2068 = vadd.f32 0.0, %v2067
        %2069 = vmatmul.bf16.gmra.mxu0 %v1917
        %v2070 = vpop.f32.mrf.mxu0
        %v2071 = vadd.f32 0.0, %v2070
        %v2072 = vpop.f32.mrf.mxu0
        %v2073 = vadd.f32 0.0, %v2072
        %2074 = vmatmul.bf16.gmra.mxu0 %v1918
        %v2075 = vpop.f32.mrf.mxu0
        %v2076 = vadd.f32 0.0, %v2075
        %v2077 = vpop.f32.mrf.mxu0
        %v2078 = vadd.f32 0.0, %v2077
        %2079 = vmatmul.bf16.gmra.mxu0 %v1919
        %v2080 = vpop.f32.mrf.mxu0
        %v2081 = vadd.f32 0.0, %v2080
        %v2082 = vpop.f32.mrf.mxu0
        %v2083 = vadd.f32 0.0, %v2082
        %2084 = vdwg.mxu0
        %v2085 = vld [vmem:[#allocation4] sm:$0xff]
        %v2086 = vld [vmem:[#allocation4 + $0x8] sm:$0xff]
        %v2087 = vld [vmem:[#allocation4 + $0x10] sm:$0xff]
        %v2088 = vld [vmem:[#allocation4 + $0x18] sm:$0xff]
        %v2089 = vld [vmem:[#allocation4 + $0x20] sm:$0xff]
        %v2090 = vld [vmem:[#allocation4 + $0x28] sm:$0xff]
        %v2091 = vld [vmem:[#allocation4 + $0x30] sm:$0xff]
        %v2092 = vld [vmem:[#allocation4 + $0x38] sm:$0xff]
        %v2093 = vld [vmem:[#allocation4 + $0x40] sm:$0xff]
        %v2094 = vld [vmem:[#allocation4 + $0x48] sm:$0xff]
        %v2095 = vld [vmem:[#allocation4 + $0x50] sm:$0xff]
        %v2096 = vld [vmem:[#allocation4 + $0x58] sm:$0xff]
        %v2097 = vld [vmem:[#allocation4 + $0x60] sm:$0xff]
        %v2098 = vld [vmem:[#allocation4 + $0x68] sm:$0xff]
        %v2099 = vld [vmem:[#allocation4 + $0x70] sm:$0xff]
        %v2100 = vld [vmem:[#allocation4 + $0x78] sm:$0xff]
        %v2101 = vld [vmem:[#allocation4 + $0x80] sm:$0xff]
        %v2102 = vld [vmem:[#allocation4 + $0x88] sm:$0xff]
        %v2103 = vld [vmem:[#allocation4 + $0x90] sm:$0xff]
        %v2104 = vld [vmem:[#allocation4 + $0x98] sm:$0xff]
        %v2105 = vld [vmem:[#allocation4 + $0xa0] sm:$0xff]
        %v2106 = vld [vmem:[#allocation4 + $0xa8] sm:$0xff]
        %v2107 = vld [vmem:[#allocation4 + $0xb0] sm:$0xff]
        %v2108 = vld [vmem:[#allocation4 + $0xb8] sm:$0xff]
        %v2109 = vld [vmem:[#allocation4 + $0xc0] sm:$0xff]
        %v2110 = vld [vmem:[#allocation4 + $0xc8] sm:$0xff]
        %v2111 = vld [vmem:[#allocation4 + $0xd0] sm:$0xff]
        %v2112 = vld [vmem:[#allocation4 + $0xd8] sm:$0xff]
        %v2113 = vld [vmem:[#allocation4 + $0xe0] sm:$0xff]
        %v2114 = vld [vmem:[#allocation4 + $0xe8] sm:$0xff]
        %v2115 = vld [vmem:[#allocation4 + $0xf0] sm:$0xff]
        %v2116 = vld [vmem:[#allocation4 + $0xf8] sm:$0xff]
        %v2117 = vld [vmem:[#allocation4 + $0x100] sm:$0xff]
        %v2118 = vld [vmem:[#allocation4 + $0x108] sm:$0xff]
        %v2119 = vld [vmem:[#allocation4 + $0x110] sm:$0xff]
        %v2120 = vld [vmem:[#allocation4 + $0x118] sm:$0xff]
        %v2121 = vadd.f32 %v2085, %v1996
        %v2122 = vadd.f32 %v2086, %v1998
        %v2123 = vadd.f32 %v2087, %v2001
        %v2124 = vadd.f32 %v2088, %v2003
        %v2125 = vadd.f32 %v2089, %v2006
        %v2126 = vadd.f32 %v2090, %v2008
        %v2127 = vadd.f32 %v2091, %v2011
        %v2128 = vadd.f32 %v2092, %v2013
        %v2129 = vadd.f32 %v2093, %v2016
        %v2130 = vadd.f32 %v2094, %v2018
        %v2131 = vadd.f32 %v2095, %v2021
        %v2132 = vadd.f32 %v2096, %v2023
        %v2133 = vadd.f32 %v2097, %v2026
        %v2134 = vadd.f32 %v2098, %v2028
        %v2135 = vadd.f32 %v2099, %v2031
        %v2136 = vadd.f32 %v2100, %v2033
        %v2137 = vadd.f32 %v2101, %v2036
        %v2138 = vadd.f32 %v2102, %v2038
        %v2139 = vadd.f32 %v2103, %v2041
        %v2140 = vadd.f32 %v2104, %v2043
        %v2141 = vadd.f32 %v2105, %v2046
        %v2142 = vadd.f32 %v2106, %v2048
        %v2143 = vadd.f32 %v2107, %v2051
        %v2144 = vadd.f32 %v2108, %v2053
        %v2145 = vadd.f32 %v2109, %v2056
        %v2146 = vadd.f32 %v2110, %v2058
        %v2147 = vadd.f32 %v2111, %v2061
        %v2148 = vadd.f32 %v2112, %v2063
        %v2149 = vadd.f32 %v2113, %v2066
        %v2150 = vadd.f32 %v2114, %v2068
        %v2151 = vadd.f32 %v2115, %v2071
        %v2152 = vadd.f32 %v2116, %v2073
        %v2153 = vadd.f32 %v2117, %v2076
        %v2154 = vadd.f32 %v2118, %v2078
        %v2155 = vadd.f32 %v2119, %v2081
        %v2156 = vadd.f32 %v2120, %v2083
        %2157 = vst [vmem:[#allocation4] sm:$0xff] %v2121
        %2158 = vst [vmem:[#allocation4 + $0x8] sm:$0xff] %v2122
        %2159 = vst [vmem:[#allocation4 + $0x10] sm:$0xff] %v2123
        %2160 = vst [vmem:[#allocation4 + $0x18] sm:$0xff] %v2124
        %2161 = vst [vmem:[#allocation4 + $0x20] sm:$0xff] %v2125
        %2162 = vst [vmem:[#allocation4 + $0x28] sm:$0xff] %v2126
        %2163 = vst [vmem:[#allocation4 + $0x30] sm:$0xff] %v2127
        %2164 = vst [vmem:[#allocation4 + $0x38] sm:$0xff] %v2128
        %2165 = vst [vmem:[#allocation4 + $0x40] sm:$0xff] %v2129
        %2166 = vst [vmem:[#allocation4 + $0x48] sm:$0xff] %v2130
        %2167 = vst [vmem:[#allocation4 + $0x50] sm:$0xff] %v2131
        %2168 = vst [vmem:[#allocation4 + $0x58] sm:$0xff] %v2132
        %2169 = vst [vmem:[#allocation4 + $0x60] sm:$0xff] %v2133
        %2170 = vst [vmem:[#allocation4 + $0x68] sm:$0xff] %v2134
        %2171 = vst [vmem:[#allocation4 + $0x70] sm:$0xff] %v2135
        %2172 = vst [vmem:[#allocation4 + $0x78] sm:$0xff] %v2136
        %2173 = vst [vmem:[#allocation4 + $0x80] sm:$0xff] %v2137
        %2174 = vst [vmem:[#allocation4 + $0x88] sm:$0xff] %v2138
        %2175 = vst [vmem:[#allocation4 + $0x90] sm:$0xff] %v2139
        %2176 = vst [vmem:[#allocation4 + $0x98] sm:$0xff] %v2140
        %2177 = vst [vmem:[#allocation4 + $0xa0] sm:$0xff] %v2141
        %2178 = vst [vmem:[#allocation4 + $0xa8] sm:$0xff] %v2142
        %2179 = vst [vmem:[#allocation4 + $0xb0] sm:$0xff] %v2143
        %2180 = vst [vmem:[#allocation4 + $0xb8] sm:$0xff] %v2144
        %2181 = vst [vmem:[#allocation4 + $0xc0] sm:$0xff] %v2145
        %2182 = vst [vmem:[#allocation4 + $0xc8] sm:$0xff] %v2146
        %2183 = vst [vmem:[#allocation4 + $0xd0] sm:$0xff] %v2147
        %2184 = vst [vmem:[#allocation4 + $0xd8] sm:$0xff] %v2148
        %2185 = vst [vmem:[#allocation4 + $0xe0] sm:$0xff] %v2149
        %2186 = vst [vmem:[#allocation4 + $0xe8] sm:$0xff] %v2150
        %2187 = vst [vmem:[#allocation4 + $0xf0] sm:$0xff] %v2151
        %2188 = vst [vmem:[#allocation4 + $0xf8] sm:$0xff] %v2152
        %2189 = vst [vmem:[#allocation4 + $0x100] sm:$0xff] %v2153
        %2190 = vst [vmem:[#allocation4 + $0x108] sm:$0xff] %v2154
        %2191 = vst [vmem:[#allocation4 + $0x110] sm:$0xff] %v2155
        %2192 = vst [vmem:[#allocation4 + $0x118] sm:$0xff] %v2156
        %s2193 = scalar_lea.vmem [#allocation2], 12
        %v2194 = vld [vmem:[%s2193] sm:$0xf]
        %v2195 = vld [vmem:[%s2193 + $0x4] sm:$0xf]
        %v2196 = vld [vmem:[%s2193 + $0xc] sm:$0xf]
        %v2197 = vld [vmem:[%s2193 + $0x10] sm:$0xf]
        %v2198 = vld [vmem:[%s2193 + $0x18] sm:$0xf]
        %v2199 = vld [vmem:[%s2193 + $0x1c] sm:$0xf]
        %v2200 = vld [vmem:[%s2193 + $0x24] sm:$0xf]
        %v2201 = vld [vmem:[%s2193 + $0x28] sm:$0xf]
        %v2202 = vld [vmem:[%s2193 + $0x30] sm:$0xf]
        %v2203 = vld [vmem:[%s2193 + $0x34] sm:$0xf]
        %v2204 = vld [vmem:[%s2193 + $0x3c] sm:$0xf]
        %v2205 = vld [vmem:[%s2193 + $0x40] sm:$0xf]
        %v2206 = vld [vmem:[%s2193 + $0x48] sm:$0xf]
        %v2207 = vld [vmem:[%s2193 + $0x4c] sm:$0xf]
        %v2208 = vld [vmem:[%s2193 + $0x54] sm:$0xf]
        %v2209 = vld [vmem:[%s2193 + $0x58] sm:$0xf]
        %v2210 = vld [vmem:[%s2193 + $0x60] sm:$0xf]
        %v2211 = vld [vmem:[%s2193 + $0x64] sm:$0xf]
        %v2212 = vld [vmem:[%s2193 + $0x6c] sm:$0xf]
        %v2213 = vld [vmem:[%s2193 + $0x70] sm:$0xf]
        %v2214 = vld [vmem:[%s2193 + $0x78] sm:$0xf]
        %v2215 = vld [vmem:[%s2193 + $0x7c] sm:$0xf]
        %v2216 = vld [vmem:[%s2193 + $0x84] sm:$0xf]
        %v2217 = vld [vmem:[%s2193 + $0x88] sm:$0xf]
        %v2218 = vld [vmem:[%s2193 + $0x90] sm:$0xf]
        %v2219 = vld [vmem:[%s2193 + $0x94] sm:$0xf]
        %v2220 = vld [vmem:[%s2193 + $0x9c] sm:$0xf]
        %v2221 = vld [vmem:[%s2193 + $0xa0] sm:$0xf]
        %v2222 = vld [vmem:[%s2193 + $0xa8] sm:$0xf]
        %v2223 = vld [vmem:[%s2193 + $0xac] sm:$0xf]
        %v2224 = vld [vmem:[%s2193 + $0xb4] sm:$0xf]
        %v2225 = vld [vmem:[%s2193 + $0xb8] sm:$0xf]
        %v2226 = vld [vmem:[%s2193 + $0xc0] sm:$0xf]
        %v2227 = vld [vmem:[%s2193 + $0xc4] sm:$0xf]
        %v2228 = vld [vmem:[%s2193 + $0xcc] sm:$0xf]
        %v2229 = vld [vmem:[%s2193 + $0xd0] sm:$0xf]
        %s2230 = scalar_lea.vmem %s1, 192
        %v2231 = vld [vmem:[%s2230] sm:$0xf]
        %v2232 = vld [vmem:[%s2230 + $0x4] sm:$0xf]
        %v2233 = vld [vmem:[%s2230 + $0x8] sm:$0xf]
        %v2234 = vld [vmem:[%s2230 + $0xc] sm:$0xf]
        %v2235 = vld [vmem:[%s2230 + $0x10] sm:$0xf]
        %v2236 = vld [vmem:[%s2230 + $0x14] sm:$0xf]
        %v2237 = vld [vmem:[%s2230 + $0x18] sm:$0xf]
        %v2238 = vld [vmem:[%s2230 + $0x1c] sm:$0xf]
        %v2239 = vld [vmem:[%s2230 + $0x20] sm:$0xf]
        %v2240 = vld [vmem:[%s2230 + $0x24] sm:$0xf]
        %v2241 = vld [vmem:[%s2230 + $0x28] sm:$0xf]
        %v2242 = vld [vmem:[%s2230 + $0x2c] sm:$0xf]
        %v2243 = vld [vmem:[%s2230 + $0x30] sm:$0xf]
        %v2244 = vld [vmem:[%s2230 + $0x34] sm:$0xf]
        %v2245 = vld [vmem:[%s2230 + $0x38] sm:$0xf]
        %v2246 = vld [vmem:[%s2230 + $0x3c] sm:$0xf]
        %v2283 = vunpack.c.l.b16 %v2194
        %v2284 = vunpack.c.l.b16 %v2195
        %v2285 = vunpack.c.l.b16 %v2196
        %v2286 = vunpack.c.l.b16 %v2197
        %v2287 = vunpack.c.l.b16 %v2198
        %v2288 = vunpack.c.l.b16 %v2199
        %v2289 = vunpack.c.l.b16 %v2200
        %v2290 = vunpack.c.l.b16 %v2201
        %v2291 = vunpack.c.l.b16 %v2202
        %v2292 = vunpack.c.l.b16 %v2203
        %v2293 = vunpack.c.l.b16 %v2204
        %v2294 = vunpack.c.l.b16 %v2205
        %v2295 = vunpack.c.l.b16 %v2206
        %v2296 = vunpack.c.l.b16 %v2207
        %v2297 = vunpack.c.l.b16 %v2208
        %v2298 = vunpack.c.l.b16 %v2209
        %v2299 = vunpack.c.l.b16 %v2210
        %v2300 = vunpack.c.l.b16 %v2211
        %v2301 = vunpack.c.l.b16 %v2212
        %v2302 = vunpack.c.l.b16 %v2213
        %v2303 = vunpack.c.l.b16 %v2214
        %v2304 = vunpack.c.l.b16 %v2215
        %v2305 = vunpack.c.l.b16 %v2216
        %v2306 = vunpack.c.l.b16 %v2217
        %v2307 = vunpack.c.l.b16 %v2218
        %v2308 = vunpack.c.l.b16 %v2219
        %v2309 = vunpack.c.l.b16 %v2220
        %v2310 = vunpack.c.l.b16 %v2221
        %v2311 = vunpack.c.l.b16 %v2222
        %v2312 = vunpack.c.l.b16 %v2223
        %v2313 = vunpack.c.l.b16 %v2224
        %v2314 = vunpack.c.l.b16 %v2225
        %v2315 = vunpack.c.l.b16 %v2226
        %v2316 = vunpack.c.l.b16 %v2227
        %v2317 = vunpack.c.l.b16 %v2228
        %v2318 = vunpack.c.l.b16 %v2229
        %v2319 = vpack.c.b16 %v2284, %v2283
        %v2320 = vpack.c.b16 %v2286, %v2285
        %v2321 = vpack.c.b16 %v2288, %v2287
        %v2322 = vpack.c.b16 %v2290, %v2289
        %v2323 = vpack.c.b16 %v2292, %v2291
        %v2324 = vpack.c.b16 %v2294, %v2293
        %v2325 = vpack.c.b16 %v2296, %v2295
        %v2326 = vpack.c.b16 %v2298, %v2297
        %v2327 = vpack.c.b16 %v2300, %v2299
        %v2328 = vpack.c.b16 %v2302, %v2301
        %v2329 = vpack.c.b16 %v2304, %v2303
        %v2330 = vpack.c.b16 %v2306, %v2305
        %v2331 = vpack.c.b16 %v2308, %v2307
        %v2332 = vpack.c.b16 %v2310, %v2309
        %v2333 = vpack.c.b16 %v2312, %v2311
        %v2334 = vpack.c.b16 %v2314, %v2313
        %v2335 = vpack.c.b16 %v2316, %v2315
        %v2336 = vpack.c.b16 %v2318, %v2317
        %v2371 = vunpack.c.l.b16 %v2231
        %v2372 = vunpack.c.l.b16 %v2232
        %v2373 = vunpack.c.l.b16 %v2233
        %v2374 = vunpack.c.l.b16 %v2234
        %v2375 = vunpack.c.l.b16 %v2235
        %v2376 = vunpack.c.l.b16 %v2236
        %v2377 = vunpack.c.l.b16 %v2237
        %v2378 = vunpack.c.l.b16 %v2238
        %v2379 = vunpack.c.l.b16 %v2239
        %v2380 = vunpack.c.l.b16 %v2240
        %v2381 = vunpack.c.l.b16 %v2241
        %v2382 = vunpack.c.l.b16 %v2242
        %v2383 = vunpack.c.l.b16 %v2243
        %v2384 = vunpack.c.l.b16 %v2244
        %v2385 = vunpack.c.l.b16 %v2245
        %v2386 = vunpack.c.l.b16 %v2246
        %v2387 = vpack.c.b16 %v2372, %v2371
        %v2388 = vpack.c.b16 %v2374, %v2373
        %v2389 = vpack.c.b16 %v2376, %v2375
        %v2390 = vpack.c.b16 %v2378, %v2377
        %v2391 = vpack.c.b16 %v2380, %v2379
        %v2392 = vpack.c.b16 %v2382, %v2381
        %v2393 = vpack.c.b16 %v2384, %v2383
        %v2394 = vpack.c.b16 %v2386, %v2385
        %2403 = vmatpush.bf16.msra.mxu0 %v2394
        %2404 = vmatpush.bf16.msra.mxu0 %v2393
        %2405 = vmatpush.bf16.msra.mxu0 %v2392
        %2406 = vmatpush.bf16.msra.mxu0 %v2391
        %2407 = vmatpush.bf16.msra.mxu0 %v2390
        %2408 = vmatpush.bf16.msra.mxu0 %v2389
        %2409 = vmatpush.bf16.msra.mxu0 %v2388
        %2410 = vmatpush.bf16.msra.mxu0 %v2387
        %2411 = vmatmul.bf16.gmra.mxu0 %v2319
        %v2412 = vpop.f32.mrf.mxu0
        %v2413 = vadd.f32 0.0, %v2412
        %v2414 = vpop.f32.mrf.mxu0
        %v2415 = vadd.f32 0.0, %v2414
        %2416 = vmatmul.bf16.gmra.mxu0 %v2320
        %v2417 = vpop.f32.mrf.mxu0
        %v2418 = vadd.f32 0.0, %v2417
        %v2419 = vpop.f32.mrf.mxu0
        %v2420 = vadd.f32 0.0, %v2419
        %2421 = vmatmul.bf16.gmra.mxu0 %v2321
        %v2422 = vpop.f32.mrf.mxu0
        %v2423 = vadd.f32 0.0, %v2422
        %v2424 = vpop.f32.mrf.mxu0
        %v2425 = vadd.f32 0.0, %v2424
        %2426 = vmatmul.bf16.gmra.mxu0 %v2322
        %v2427 = vpop.f32.mrf.mxu0
        %v2428 = vadd.f32 0.0, %v2427
        %v2429 = vpop.f32.mrf.mxu0
        %v2430 = vadd.f32 0.0, %v2429
        %2431 = vmatmul.bf16.gmra.mxu0 %v2323
        %v2432 = vpop.f32.mrf.mxu0
        %v2433 = vadd.f32 0.0, %v2432
        %v2434 = vpop.f32.mrf.mxu0
        %v2435 = vadd.f32 0.0, %v2434
        %2436 = vmatmul.bf16.gmra.mxu0 %v2324
        %v2437 = vpop.f32.mrf.mxu0
        %v2438 = vadd.f32 0.0, %v2437
        %v2439 = vpop.f32.mrf.mxu0
        %v2440 = vadd.f32 0.0, %v2439
        %2441 = vmatmul.bf16.gmra.mxu0 %v2325
        %v2442 = vpop.f32.mrf.mxu0
        %v2443 = vadd.f32 0.0, %v2442
        %v2444 = vpop.f32.mrf.mxu0
        %v2445 = vadd.f32 0.0, %v2444
        %2446 = vmatmul.bf16.gmra.mxu0 %v2326
        %v2447 = vpop.f32.mrf.mxu0
        %v2448 = vadd.f32 0.0, %v2447
        %v2449 = vpop.f32.mrf.mxu0
        %v2450 = vadd.f32 0.0, %v2449
        %2451 = vmatmul.bf16.gmra.mxu0 %v2327
        %v2452 = vpop.f32.mrf.mxu0
        %v2453 = vadd.f32 0.0, %v2452
        %v2454 = vpop.f32.mrf.mxu0
        %v2455 = vadd.f32 0.0, %v2454
        %2456 = vmatmul.bf16.gmra.mxu0 %v2328
        %v2457 = vpop.f32.mrf.mxu0
        %v2458 = vadd.f32 0.0, %v2457
        %v2459 = vpop.f32.mrf.mxu0
        %v2460 = vadd.f32 0.0, %v2459
        %2461 = vmatmul.bf16.gmra.mxu0 %v2329
        %v2462 = vpop.f32.mrf.mxu0
        %v2463 = vadd.f32 0.0, %v2462
        %v2464 = vpop.f32.mrf.mxu0
        %v2465 = vadd.f32 0.0, %v2464
        %2466 = vmatmul.bf16.gmra.mxu0 %v2330
        %v2467 = vpop.f32.mrf.mxu0
        %v2468 = vadd.f32 0.0, %v2467
        %v2469 = vpop.f32.mrf.mxu0
        %v2470 = vadd.f32 0.0, %v2469
        %2471 = vmatmul.bf16.gmra.mxu0 %v2331
        %v2472 = vpop.f32.mrf.mxu0
        %v2473 = vadd.f32 0.0, %v2472
        %v2474 = vpop.f32.mrf.mxu0
        %v2475 = vadd.f32 0.0, %v2474
        %2476 = vmatmul.bf16.gmra.mxu0 %v2332
        %v2477 = vpop.f32.mrf.mxu0
        %v2478 = vadd.f32 0.0, %v2477
        %v2479 = vpop.f32.mrf.mxu0
        %v2480 = vadd.f32 0.0, %v2479
        %2481 = vmatmul.bf16.gmra.mxu0 %v2333
        %v2482 = vpop.f32.mrf.mxu0
        %v2483 = vadd.f32 0.0, %v2482
        %v2484 = vpop.f32.mrf.mxu0
        %v2485 = vadd.f32 0.0, %v2484
        %2486 = vmatmul.bf16.gmra.mxu0 %v2334
        %v2487 = vpop.f32.mrf.mxu0
        %v2488 = vadd.f32 0.0, %v2487
        %v2489 = vpop.f32.mrf.mxu0
        %v2490 = vadd.f32 0.0, %v2489
        %2491 = vmatmul.bf16.gmra.mxu0 %v2335
        %v2492 = vpop.f32.mrf.mxu0
        %v2493 = vadd.f32 0.0, %v2492
        %v2494 = vpop.f32.mrf.mxu0
        %v2495 = vadd.f32 0.0, %v2494
        %2496 = vmatmul.bf16.gmra.mxu0 %v2336
        %v2497 = vpop.f32.mrf.mxu0
        %v2498 = vadd.f32 0.0, %v2497
        %v2499 = vpop.f32.mrf.mxu0
        %v2500 = vadd.f32 0.0, %v2499
        %2501 = vdwg.mxu0
        %v2502 = vld [vmem:[#allocation4] sm:$0xff]
        %v2503 = vld [vmem:[#allocation4 + $0x8] sm:$0xff]
        %v2504 = vld [vmem:[#allocation4 + $0x10] sm:$0xff]
        %v2505 = vld [vmem:[#allocation4 + $0x18] sm:$0xff]
        %v2506 = vld [vmem:[#allocation4 + $0x20] sm:$0xff]
        %v2507 = vld [vmem:[#allocation4 + $0x28] sm:$0xff]
        %v2508 = vld [vmem:[#allocation4 + $0x30] sm:$0xff]
        %v2509 = vld [vmem:[#allocation4 + $0x38] sm:$0xff]
        %v2510 = vld [vmem:[#allocation4 + $0x40] sm:$0xff]
        %v2511 = vld [vmem:[#allocation4 + $0x48] sm:$0xff]
        %v2512 = vld [vmem:[#allocation4 + $0x50] sm:$0xff]
        %v2513 = vld [vmem:[#allocation4 + $0x58] sm:$0xff]
        %v2514 = vld [vmem:[#allocation4 + $0x60] sm:$0xff]
        %v2515 = vld [vmem:[#allocation4 + $0x68] sm:$0xff]
        %v2516 = vld [vmem:[#allocation4 + $0x70] sm:$0xff]
        %v2517 = vld [vmem:[#allocation4 + $0x78] sm:$0xff]
        %v2518 = vld [vmem:[#allocation4 + $0x80] sm:$0xff]
        %v2519 = vld [vmem:[#allocation4 + $0x88] sm:$0xff]
        %v2520 = vld [vmem:[#allocation4 + $0x90] sm:$0xff]
        %v2521 = vld [vmem:[#allocation4 + $0x98] sm:$0xff]
        %v2522 = vld [vmem:[#allocation4 + $0xa0] sm:$0xff]
        %v2523 = vld [vmem:[#allocation4 + $0xa8] sm:$0xff]
        %v2524 = vld [vmem:[#allocation4 + $0xb0] sm:$0xff]
        %v2525 = vld [vmem:[#allocation4 + $0xb8] sm:$0xff]
        %v2526 = vld [vmem:[#allocation4 + $0xc0] sm:$0xff]
        %v2527 = vld [vmem:[#allocation4 + $0xc8] sm:$0xff]
        %v2528 = vld [vmem:[#allocation4 + $0xd0] sm:$0xff]
        %v2529 = vld [vmem:[#allocation4 + $0xd8] sm:$0xff]
        %v2530 = vld [vmem:[#allocation4 + $0xe0] sm:$0xff]
        %v2531 = vld [vmem:[#allocation4 + $0xe8] sm:$0xff]
        %v2532 = vld [vmem:[#allocation4 + $0xf0] sm:$0xff]
        %v2533 = vld [vmem:[#allocation4 + $0xf8] sm:$0xff]
        %v2534 = vld [vmem:[#allocation4 + $0x100] sm:$0xff]
        %v2535 = vld [vmem:[#allocation4 + $0x108] sm:$0xff]
        %v2536 = vld [vmem:[#allocation4 + $0x110] sm:$0xff]
        %v2537 = vld [vmem:[#allocation4 + $0x118] sm:$0xff]
        %v2538 = vadd.f32 %v2502, %v2413
        %v2539 = vadd.f32 %v2503, %v2415
        %v2540 = vadd.f32 %v2504, %v2418
        %v2541 = vadd.f32 %v2505, %v2420
        %v2542 = vadd.f32 %v2506, %v2423
        %v2543 = vadd.f32 %v2507, %v2425
        %v2544 = vadd.f32 %v2508, %v2428
        %v2545 = vadd.f32 %v2509, %v2430
        %v2546 = vadd.f32 %v2510, %v2433
        %v2547 = vadd.f32 %v2511, %v2435
        %v2548 = vadd.f32 %v2512, %v2438
        %v2549 = vadd.f32 %v2513, %v2440
        %v2550 = vadd.f32 %v2514, %v2443
        %v2551 = vadd.f32 %v2515, %v2445
        %v2552 = vadd.f32 %v2516, %v2448
        %v2553 = vadd.f32 %v2517, %v2450
        %v2554 = vadd.f32 %v2518, %v2453
        %v2555 = vadd.f32 %v2519, %v2455
        %v2556 = vadd.f32 %v2520, %v2458
        %v2557 = vadd.f32 %v2521, %v2460
        %v2558 = vadd.f32 %v2522, %v2463
        %v2559 = vadd.f32 %v2523, %v2465
        %v2560 = vadd.f32 %v2524, %v2468
        %v2561 = vadd.f32 %v2525, %v2470
        %v2562 = vadd.f32 %v2526, %v2473
        %v2563 = vadd.f32 %v2527, %v2475
        %v2564 = vadd.f32 %v2528, %v2478
        %v2565 = vadd.f32 %v2529, %v2480
        %v2566 = vadd.f32 %v2530, %v2483
        %v2567 = vadd.f32 %v2531, %v2485
        %v2568 = vadd.f32 %v2532, %v2488
        %v2569 = vadd.f32 %v2533, %v2490
        %v2570 = vadd.f32 %v2534, %v2493
        %v2571 = vadd.f32 %v2535, %v2495
        %v2572 = vadd.f32 %v2536, %v2498
        %v2573 = vadd.f32 %v2537, %v2500
        %2574 = vst [vmem:[#allocation4] sm:$0xff] %v2538
        %2575 = vst [vmem:[#allocation4 + $0x8] sm:$0xff] %v2539
        %2576 = vst [vmem:[#allocation4 + $0x10] sm:$0xff] %v2540
        %2577 = vst [vmem:[#allocation4 + $0x18] sm:$0xff] %v2541
        %2578 = vst [vmem:[#allocation4 + $0x20] sm:$0xff] %v2542
        %2579 = vst [vmem:[#allocation4 + $0x28] sm:$0xff] %v2543
        %2580 = vst [vmem:[#allocation4 + $0x30] sm:$0xff] %v2544
        %2581 = vst [vmem:[#allocation4 + $0x38] sm:$0xff] %v2545
        %2582 = vst [vmem:[#allocation4 + $0x40] sm:$0xff] %v2546
        %2583 = vst [vmem:[#allocation4 + $0x48] sm:$0xff] %v2547
        %2584 = vst [vmem:[#allocation4 + $0x50] sm:$0xff] %v2548
        %2585 = vst [vmem:[#allocation4 + $0x58] sm:$0xff] %v2549
        %2586 = vst [vmem:[#allocation4 + $0x60] sm:$0xff] %v2550
        %2587 = vst [vmem:[#allocation4 + $0x68] sm:$0xff] %v2551
        %2588 = vst [vmem:[#allocation4 + $0x70] sm:$0xff] %v2552
        %2589 = vst [vmem:[#allocation4 + $0x78] sm:$0xff] %v2553
        %2590 = vst [vmem:[#allocation4 + $0x80] sm:$0xff] %v2554
        %2591 = vst [vmem:[#allocation4 + $0x88] sm:$0xff] %v2555
        %2592 = vst [vmem:[#allocation4 + $0x90] sm:$0xff] %v2556
        %2593 = vst [vmem:[#allocation4 + $0x98] sm:$0xff] %v2557
        %2594 = vst [vmem:[#allocation4 + $0xa0] sm:$0xff] %v2558
        %2595 = vst [vmem:[#allocation4 + $0xa8] sm:$0xff] %v2559
        %2596 = vst [vmem:[#allocation4 + $0xb0] sm:$0xff] %v2560
        %2597 = vst [vmem:[#allocation4 + $0xb8] sm:$0xff] %v2561
        %2598 = vst [vmem:[#allocation4 + $0xc0] sm:$0xff] %v2562
        %2599 = vst [vmem:[#allocation4 + $0xc8] sm:$0xff] %v2563
        %2600 = vst [vmem:[#allocation4 + $0xd0] sm:$0xff] %v2564
        %2601 = vst [vmem:[#allocation4 + $0xd8] sm:$0xff] %v2565
        %2602 = vst [vmem:[#allocation4 + $0xe0] sm:$0xff] %v2566
        %2603 = vst [vmem:[#allocation4 + $0xe8] sm:$0xff] %v2567
        %2604 = vst [vmem:[#allocation4 + $0xf0] sm:$0xff] %v2568
        %2605 = vst [vmem:[#allocation4 + $0xf8] sm:$0xff] %v2569
        %2606 = vst [vmem:[#allocation4 + $0x100] sm:$0xff] %v2570
        %2607 = vst [vmem:[#allocation4 + $0x108] sm:$0xff] %v2571
        %2608 = vst [vmem:[#allocation4 + $0x110] sm:$0xff] %v2572
        %2609 = vst [vmem:[#allocation4 + $0x118] sm:$0xff] %v2573
        %v2610 = vld [vmem:[%s2193] sm:$0xf]
        %v2611 = vld [vmem:[%s2193 + $0x4] sm:$0xf]
        %v2612 = vld [vmem:[%s2193 + $0x8] sm:$0x1]
        %v2613 = vld [vmem:[%s2193 + $0xc] sm:$0xf]
        %v2614 = vld [vmem:[%s2193 + $0x10] sm:$0xf]
        %v2615 = vld [vmem:[%s2193 + $0x14] sm:$0x1]
        %v2616 = vld [vmem:[%s2193 + $0x18] sm:$0xf]
        %v2617 = vld [vmem:[%s2193 + $0x1c] sm:$0xf]
        %v2618 = vld [vmem:[%s2193 + $0x20] sm:$0x1]
        %v2619 = vld [vmem:[%s2193 + $0x24] sm:$0xf]
        %v2620 = vld [vmem:[%s2193 + $0x28] sm:$0xf]
        %v2621 = vld [vmem:[%s2193 + $0x2c] sm:$0x1]
        %v2622 = vld [vmem:[%s2193 + $0x30] sm:$0xf]
        %v2623 = vld [vmem:[%s2193 + $0x34] sm:$0xf]
        %v2624 = vld [vmem:[%s2193 + $0x38] sm:$0x1]
        %v2625 = vld [vmem:[%s2193 + $0x3c] sm:$0xf]
        %v2626 = vld [vmem:[%s2193 + $0x40] sm:$0xf]
        %v2627 = vld [vmem:[%s2193 + $0x44] sm:$0x1]
        %v2628 = vld [vmem:[%s2193 + $0x48] sm:$0xf]
        %v2629 = vld [vmem:[%s2193 + $0x4c] sm:$0xf]
        %v2630 = vld [vmem:[%s2193 + $0x50] sm:$0x1]
        %v2631 = vld [vmem:[%s2193 + $0x54] sm:$0xf]
        %v2632 = vld [vmem:[%s2193 + $0x58] sm:$0xf]
        %v2633 = vld [vmem:[%s2193 + $0x5c] sm:$0x1]
        %v2634 = vld [vmem:[%s2193 + $0x60] sm:$0xf]
        %v2635 = vld [vmem:[%s2193 + $0x64] sm:$0xf]
        %v2636 = vld [vmem:[%s2193 + $0x68] sm:$0x1]
        %v2637 = vld [vmem:[%s2193 + $0x6c] sm:$0xf]
        %v2638 = vld [vmem:[%s2193 + $0x70] sm:$0xf]
        %v2639 = vld [vmem:[%s2193 + $0x74] sm:$0x1]
        %v2640 = vld [vmem:[%s2193 + $0x78] sm:$0xf]
        %v2641 = vld [vmem:[%s2193 + $0x7c] sm:$0xf]
        %v2642 = vld [vmem:[%s2193 + $0x80] sm:$0x1]
        %v2643 = vld [vmem:[%s2193 + $0x84] sm:$0xf]
        %v2644 = vld [vmem:[%s2193 + $0x88] sm:$0xf]
        %v2645 = vld [vmem:[%s2193 + $0x8c] sm:$0x1]
        %v2646 = vld [vmem:[%s2193 + $0x90] sm:$0xf]
        %v2647 = vld [vmem:[%s2193 + $0x94] sm:$0xf]
        %v2648 = vld [vmem:[%s2193 + $0x98] sm:$0x1]
        %v2649 = vld [vmem:[%s2193 + $0x9c] sm:$0xf]
        %v2650 = vld [vmem:[%s2193 + $0xa0] sm:$0xf]
        %v2651 = vld [vmem:[%s2193 + $0xa4] sm:$0x1]
        %v2652 = vld [vmem:[%s2193 + $0xa8] sm:$0xf]
        %v2653 = vld [vmem:[%s2193 + $0xac] sm:$0xf]
        %v2654 = vld [vmem:[%s2193 + $0xb0] sm:$0x1]
        %v2655 = vld [vmem:[%s2193 + $0xb4] sm:$0xf]
        %v2656 = vld [vmem:[%s2193 + $0xb8] sm:$0xf]
        %v2657 = vld [vmem:[%s2193 + $0xbc] sm:$0x1]
        %v2658 = vld [vmem:[%s2193 + $0xc0] sm:$0xf]
        %v2659 = vld [vmem:[%s2193 + $0xc4] sm:$0xf]
        %v2660 = vld [vmem:[%s2193 + $0xc8] sm:$0x1]
        %v2661 = vld [vmem:[%s2193 + $0xcc] sm:$0xf]
        %v2662 = vld [vmem:[%s2193 + $0xd0] sm:$0xf]
        %v2663 = vld [vmem:[%s2193 + $0xd4] sm:$0x1]
        %v2665 = vshrl.u32 %v2610, 16
        %v2667 = vrot.slane %v2665, 4
        %v2668 = vshll.u32 %v2610, 16
        %v2670 = vrot.slane %v2668, 5
        %v2671 = vor.u32 %v2667, %v2670
        %v2672 = vrot.slane %v2671, 4
        %v2674 = vshll.u32 %v2611, 16
        %v2676 = vrot.slane %v2674, 5
        %v2677 = vsel %vm835, %v2672, %v2676
        %v2678 = vshrl.u32 %v2611, 16
        %v2680 = vrot.slane %v2678, 4
        %v2681 = vor.u32 %v2680, %v2676
        %v2682 = vrot.slane %v2681, 4
        %v2684 = vshll.u32 %v2612, 16
        %v2686 = vrot.slane %v2684, 5
        %v2687 = vsel %vm835, %v2682, %v2686
        %v2689 = vshrl.u32 %v2613, 16
        %v2691 = vrot.slane %v2689, 4
        %v2692 = vshll.u32 %v2613, 16
        %v2694 = vrot.slane %v2692, 5
        %v2695 = vor.u32 %v2691, %v2694
        %v2696 = vrot.slane %v2695, 4
        %v2698 = vshll.u32 %v2614, 16
        %v2700 = vrot.slane %v2698, 5
        %v2701 = vsel %vm835, %v2696, %v2700
        %v2702 = vshrl.u32 %v2614, 16
        %v2704 = vrot.slane %v2702, 4
        %v2705 = vor.u32 %v2704, %v2700
        %v2706 = vrot.slane %v2705, 4
        %v2708 = vshll.u32 %v2615, 16
        %v2710 = vrot.slane %v2708, 5
        %v2711 = vsel %vm835, %v2706, %v2710
        %v2713 = vshrl.u32 %v2616, 16
        %v2715 = vrot.slane %v2713, 4
        %v2716 = vshll.u32 %v2616, 16
        %v2718 = vrot.slane %v2716, 5
        %v2719 = vor.u32 %v2715, %v2718
        %v2720 = vrot.slane %v2719, 4
        %v2722 = vshll.u32 %v2617, 16
        %v2724 = vrot.slane %v2722, 5
        %v2725 = vsel %vm835, %v2720, %v2724
        %v2726 = vshrl.u32 %v2617, 16
        %v2728 = vrot.slane %v2726, 4
        %v2729 = vor.u32 %v2728, %v2724
        %v2730 = vrot.slane %v2729, 4
        %v2732 = vshll.u32 %v2618, 16
        %v2734 = vrot.slane %v2732, 5
        %v2735 = vsel %vm835, %v2730, %v2734
        %v2737 = vshrl.u32 %v2619, 16
        %v2739 = vrot.slane %v2737, 4
        %v2740 = vshll.u32 %v2619, 16
        %v2742 = vrot.slane %v2740, 5
        %v2743 = vor.u32 %v2739, %v2742
        %v2744 = vrot.slane %v2743, 4
        %v2746 = vshll.u32 %v2620, 16
        %v2748 = vrot.slane %v2746, 5
        %v2749 = vsel %vm835, %v2744, %v2748
        %v2750 = vshrl.u32 %v2620, 16
        %v2752 = vrot.slane %v2750, 4
        %v2753 = vor.u32 %v2752, %v2748
        %v2754 = vrot.slane %v2753, 4
        %v2756 = vshll.u32 %v2621, 16
        %v2758 = vrot.slane %v2756, 5
        %v2759 = vsel %vm835, %v2754, %v2758
        %v2761 = vshrl.u32 %v2622, 16
        %v2763 = vrot.slane %v2761, 4
        %v2764 = vshll.u32 %v2622, 16
        %v2766 = vrot.slane %v2764, 5
        %v2767 = vor.u32 %v2763, %v2766
        %v2768 = vrot.slane %v2767, 4
        %v2770 = vshll.u32 %v2623, 16
        %v2772 = vrot.slane %v2770, 5
        %v2773 = vsel %vm835, %v2768, %v2772
        %v2774 = vshrl.u32 %v2623, 16
        %v2776 = vrot.slane %v2774, 4
        %v2777 = vor.u32 %v2776, %v2772
        %v2778 = vrot.slane %v2777, 4
        %v2780 = vshll.u32 %v2624, 16
        %v2782 = vrot.slane %v2780, 5
        %v2783 = vsel %vm835, %v2778, %v2782
        %v2785 = vshrl.u32 %v2625, 16
        %v2787 = vrot.slane %v2785, 4
        %v2788 = vshll.u32 %v2625, 16
        %v2790 = vrot.slane %v2788, 5
        %v2791 = vor.u32 %v2787, %v2790
        %v2792 = vrot.slane %v2791, 4
        %v2794 = vshll.u32 %v2626, 16
        %v2796 = vrot.slane %v2794, 5
        %v2797 = vsel %vm835, %v2792, %v2796
        %v2798 = vshrl.u32 %v2626, 16
        %v2800 = vrot.slane %v2798, 4
        %v2801 = vor.u32 %v2800, %v2796
        %v2802 = vrot.slane %v2801, 4
        %v2804 = vshll.u32 %v2627, 16
        %v2806 = vrot.slane %v2804, 5
        %v2807 = vsel %vm835, %v2802, %v2806
        %v2809 = vshrl.u32 %v2628, 16
        %v2811 = vrot.slane %v2809, 4
        %v2812 = vshll.u32 %v2628, 16
        %v2814 = vrot.slane %v2812, 5
        %v2815 = vor.u32 %v2811, %v2814
        %v2816 = vrot.slane %v2815, 4
        %v2818 = vshll.u32 %v2629, 16
        %v2820 = vrot.slane %v2818, 5
        %v2821 = vsel %vm835, %v2816, %v2820
        %v2822 = vshrl.u32 %v2629, 16
        %v2824 = vrot.slane %v2822, 4
        %v2825 = vor.u32 %v2824, %v2820
        %v2826 = vrot.slane %v2825, 4
        %v2828 = vshll.u32 %v2630, 16
        %v2830 = vrot.slane %v2828, 5
        %v2831 = vsel %vm835, %v2826, %v2830
        %v2833 = vshrl.u32 %v2631, 16
        %v2835 = vrot.slane %v2833, 4
        %v2836 = vshll.u32 %v2631, 16
        %v2838 = vrot.slane %v2836, 5
        %v2839 = vor.u32 %v2835, %v2838
        %v2840 = vrot.slane %v2839, 4
        %v2842 = vshll.u32 %v2632, 16
        %v2844 = vrot.slane %v2842, 5
        %v2845 = vsel %vm835, %v2840, %v2844
        %v2846 = vshrl.u32 %v2632, 16
        %v2848 = vrot.slane %v2846, 4
        %v2849 = vor.u32 %v2848, %v2844
        %v2850 = vrot.slane %v2849, 4
        %v2852 = vshll.u32 %v2633, 16
        %v2854 = vrot.slane %v2852, 5
        %v2855 = vsel %vm835, %v2850, %v2854
        %v2857 = vshrl.u32 %v2634, 16
        %v2859 = vrot.slane %v2857, 4
        %v2860 = vshll.u32 %v2634, 16
        %v2862 = vrot.slane %v2860, 5
        %v2863 = vor.u32 %v2859, %v2862
        %v2864 = vrot.slane %v2863, 4
        %v2866 = vshll.u32 %v2635, 16
        %v2868 = vrot.slane %v2866, 5
        %v2869 = vsel %vm835, %v2864, %v2868
        %v2870 = vshrl.u32 %v2635, 16
        %v2872 = vrot.slane %v2870, 4
        %v2873 = vor.u32 %v2872, %v2868
        %v2874 = vrot.slane %v2873, 4
        %v2876 = vshll.u32 %v2636, 16
        %v2878 = vrot.slane %v2876, 5
        %v2879 = vsel %vm835, %v2874, %v2878
        %v2881 = vshrl.u32 %v2637, 16
        %v2883 = vrot.slane %v2881, 4
        %v2884 = vshll.u32 %v2637, 16
        %v2886 = vrot.slane %v2884, 5
        %v2887 = vor.u32 %v2883, %v2886
        %v2888 = vrot.slane %v2887, 4
        %v2890 = vshll.u32 %v2638, 16
        %v2892 = vrot.slane %v2890, 5
        %v2893 = vsel %vm835, %v2888, %v2892
        %v2894 = vshrl.u32 %v2638, 16
        %v2896 = vrot.slane %v2894, 4
        %v2897 = vor.u32 %v2896, %v2892
        %v2898 = vrot.slane %v2897, 4
        %v2900 = vshll.u32 %v2639, 16
        %v2902 = vrot.slane %v2900, 5
        %v2903 = vsel %vm835, %v2898, %v2902
        %v2905 = vshrl.u32 %v2640, 16
        %v2907 = vrot.slane %v2905, 4
        %v2908 = vshll.u32 %v2640, 16
        %v2910 = vrot.slane %v2908, 5
        %v2911 = vor.u32 %v2907, %v2910
        %v2912 = vrot.slane %v2911, 4
        %v2914 = vshll.u32 %v2641, 16
        %v2916 = vrot.slane %v2914, 5
        %v2917 = vsel %vm835, %v2912, %v2916
        %v2918 = vshrl.u32 %v2641, 16
        %v2920 = vrot.slane %v2918, 4
        %v2921 = vor.u32 %v2920, %v2916
        %v2922 = vrot.slane %v2921, 4
        %v2924 = vshll.u32 %v2642, 16
        %v2926 = vrot.slane %v2924, 5
        %v2927 = vsel %vm835, %v2922, %v2926
        %v2929 = vshrl.u32 %v2643, 16
        %v2931 = vrot.slane %v2929, 4
        %v2932 = vshll.u32 %v2643, 16
        %v2934 = vrot.slane %v2932, 5
        %v2935 = vor.u32 %v2931, %v2934
        %v2936 = vrot.slane %v2935, 4
        %v2938 = vshll.u32 %v2644, 16
        %v2940 = vrot.slane %v2938, 5
        %v2941 = vsel %vm835, %v2936, %v2940
        %v2942 = vshrl.u32 %v2644, 16
        %v2944 = vrot.slane %v2942, 4
        %v2945 = vor.u32 %v2944, %v2940
        %v2946 = vrot.slane %v2945, 4
        %v2948 = vshll.u32 %v2645, 16
        %v2950 = vrot.slane %v2948, 5
        %v2951 = vsel %vm835, %v2946, %v2950
        %v2953 = vshrl.u32 %v2646, 16
        %v2955 = vrot.slane %v2953, 4
        %v2956 = vshll.u32 %v2646, 16
        %v2958 = vrot.slane %v2956, 5
        %v2959 = vor.u32 %v2955, %v2958
        %v2960 = vrot.slane %v2959, 4
        %v2962 = vshll.u32 %v2647, 16
        %v2964 = vrot.slane %v2962, 5
        %v2965 = vsel %vm835, %v2960, %v2964
        %v2966 = vshrl.u32 %v2647, 16
        %v2968 = vrot.slane %v2966, 4
        %v2969 = vor.u32 %v2968, %v2964
        %v2970 = vrot.slane %v2969, 4
        %v2972 = vshll.u32 %v2648, 16
        %v2974 = vrot.slane %v2972, 5
        %v2975 = vsel %vm835, %v2970, %v2974
        %v2977 = vshrl.u32 %v2649, 16
        %v2979 = vrot.slane %v2977, 4
        %v2980 = vshll.u32 %v2649, 16
        %v2982 = vrot.slane %v2980, 5
        %v2983 = vor.u32 %v2979, %v2982
        %v2984 = vrot.slane %v2983, 4
        %v2986 = vshll.u32 %v2650, 16
        %v2988 = vrot.slane %v2986, 5
        %v2989 = vsel %vm835, %v2984, %v2988
        %v2990 = vshrl.u32 %v2650, 16
        %v2992 = vrot.slane %v2990, 4
        %v2993 = vor.u32 %v2992, %v2988
        %v2994 = vrot.slane %v2993, 4
        %v2996 = vshll.u32 %v2651, 16
        %v2998 = vrot.slane %v2996, 5
        %v2999 = vsel %vm835, %v2994, %v2998
        %v3001 = vshrl.u32 %v2652, 16
        %v3003 = vrot.slane %v3001, 4
        %v3004 = vshll.u32 %v2652, 16
        %v3006 = vrot.slane %v3004, 5
        %v3007 = vor.u32 %v3003, %v3006
        %v3008 = vrot.slane %v3007, 4
        %v3010 = vshll.u32 %v2653, 16
        %v3012 = vrot.slane %v3010, 5
        %v3013 = vsel %vm835, %v3008, %v3012
        %v3014 = vshrl.u32 %v2653, 16
        %v3016 = vrot.slane %v3014, 4
        %v3017 = vor.u32 %v3016, %v3012
        %v3018 = vrot.slane %v3017, 4
        %v3020 = vshll.u32 %v2654, 16
        %v3022 = vrot.slane %v3020, 5
        %v3023 = vsel %vm835, %v3018, %v3022
        %v3025 = vshrl.u32 %v2655, 16
        %v3027 = vrot.slane %v3025, 4
        %v3028 = vshll.u32 %v2655, 16
        %v3030 = vrot.slane %v3028, 5
        %v3031 = vor.u32 %v3027, %v3030
        %v3032 = vrot.slane %v3031, 4
        %v3034 = vshll.u32 %v2656, 16
        %v3036 = vrot.slane %v3034, 5
        %v3037 = vsel %vm835, %v3032, %v3036
        %v3038 = vshrl.u32 %v2656, 16
        %v3040 = vrot.slane %v3038, 4
        %v3041 = vor.u32 %v3040, %v3036
        %v3042 = vrot.slane %v3041, 4
        %v3044 = vshll.u32 %v2657, 16
        %v3046 = vrot.slane %v3044, 5
        %v3047 = vsel %vm835, %v3042, %v3046
        %v3049 = vshrl.u32 %v2658, 16
        %v3051 = vrot.slane %v3049, 4
        %v3052 = vshll.u32 %v2658, 16
        %v3054 = vrot.slane %v3052, 5
        %v3055 = vor.u32 %v3051, %v3054
        %v3056 = vrot.slane %v3055, 4
        %v3058 = vshll.u32 %v2659, 16
        %v3060 = vrot.slane %v3058, 5
        %v3061 = vsel %vm835, %v3056, %v3060
        %v3062 = vshrl.u32 %v2659, 16
        %v3064 = vrot.slane %v3062, 4
        %v3065 = vor.u32 %v3064, %v3060
        %v3066 = vrot.slane %v3065, 4
        %v3068 = vshll.u32 %v2660, 16
        %v3070 = vrot.slane %v3068, 5
        %v3071 = vsel %vm835, %v3066, %v3070
        %v3073 = vshrl.u32 %v2661, 16
        %v3075 = vrot.slane %v3073, 4
        %v3076 = vshll.u32 %v2661, 16
        %v3078 = vrot.slane %v3076, 5
        %v3079 = vor.u32 %v3075, %v3078
        %v3080 = vrot.slane %v3079, 4
        %v3082 = vshll.u32 %v2662, 16
        %v3084 = vrot.slane %v3082, 5
        %v3085 = vsel %vm835, %v3080, %v3084
        %v3086 = vshrl.u32 %v2662, 16
        %v3088 = vrot.slane %v3086, 4
        %v3089 = vor.u32 %v3088, %v3084
        %v3090 = vrot.slane %v3089, 4
        %v3092 = vshll.u32 %v2663, 16
        %v3094 = vrot.slane %v3092, 5
        %v3095 = vsel %vm835, %v3090, %v3094
        %s3096 = scalar_lea.vmem %s1, 256
        %v3097 = vld [vmem:[%s3096] sm:$0xf]
        %v3098 = vld [vmem:[%s3096 + $0x4] sm:$0xf]
        %v3099 = vld [vmem:[%s3096 + $0x8] sm:$0xf]
        %v3100 = vld [vmem:[%s3096 + $0xc] sm:$0xf]
        %v3101 = vld [vmem:[%s3096 + $0x10] sm:$0xf]
        %v3102 = vld [vmem:[%s3096 + $0x14] sm:$0xf]
        %v3103 = vld [vmem:[%s3096 + $0x18] sm:$0xf]
        %v3104 = vld [vmem:[%s3096 + $0x1c] sm:$0xf]
        %v3105 = vld [vmem:[%s3096 + $0x20] sm:$0xf]
        %v3106 = vld [vmem:[%s3096 + $0x24] sm:$0xf]
        %v3107 = vld [vmem:[%s3096 + $0x28] sm:$0xf]
        %v3108 = vld [vmem:[%s3096 + $0x2c] sm:$0xf]
        %v3109 = vld [vmem:[%s3096 + $0x30] sm:$0xf]
        %v3110 = vld [vmem:[%s3096 + $0x34] sm:$0xf]
        %v3111 = vld [vmem:[%s3096 + $0x38] sm:$0xf]
        %v3112 = vld [vmem:[%s3096 + $0x3c] sm:$0xf]
        %v3113 = vunpack.c.l.b16 %v2677
        %v3114 = vunpack.c.l.b16 %v2687
        %v3115 = vunpack.c.l.b16 %v2701
        %v3116 = vunpack.c.l.b16 %v2711
        %v3117 = vunpack.c.l.b16 %v2725
        %v3118 = vunpack.c.l.b16 %v2735
        %v3119 = vunpack.c.l.b16 %v2749
        %v3120 = vunpack.c.l.b16 %v2759
        %v3121 = vunpack.c.l.b16 %v2773
        %v3122 = vunpack.c.l.b16 %v2783
        %v3123 = vunpack.c.l.b16 %v2797
        %v3124 = vunpack.c.l.b16 %v2807
        %v3125 = vunpack.c.l.b16 %v2821
        %v3126 = vunpack.c.l.b16 %v2831
        %v3127 = vunpack.c.l.b16 %v2845
        %v3128 = vunpack.c.l.b16 %v2855
        %v3129 = vunpack.c.l.b16 %v2869
        %v3130 = vunpack.c.l.b16 %v2879
        %v3131 = vunpack.c.l.b16 %v2893
        %v3132 = vunpack.c.l.b16 %v2903
        %v3133 = vunpack.c.l.b16 %v2917
        %v3134 = vunpack.c.l.b16 %v2927
        %v3135 = vunpack.c.l.b16 %v2941
        %v3136 = vunpack.c.l.b16 %v2951
        %v3137 = vunpack.c.l.b16 %v2965
        %v3138 = vunpack.c.l.b16 %v2975
        %v3139 = vunpack.c.l.b16 %v2989
        %v3140 = vunpack.c.l.b16 %v2999
        %v3141 = vunpack.c.l.b16 %v3013
        %v3142 = vunpack.c.l.b16 %v3023
        %v3143 = vunpack.c.l.b16 %v3037
        %v3144 = vunpack.c.l.b16 %v3047
        %v3145 = vunpack.c.l.b16 %v3061
        %v3146 = vunpack.c.l.b16 %v3071
        %v3147 = vunpack.c.l.b16 %v3085
        %v3148 = vunpack.c.l.b16 %v3095
        %v3149 = vpack.c.b16 %v3114, %v3113
        %v3150 = vpack.c.b16 %v3116, %v3115
        %v3151 = vpack.c.b16 %v3118, %v3117
        %v3152 = vpack.c.b16 %v3120, %v3119
        %v3153 = vpack.c.b16 %v3122, %v3121
        %v3154 = vpack.c.b16 %v3124, %v3123
        %v3155 = vpack.c.b16 %v3126, %v3125
        %v3156 = vpack.c.b16 %v3128, %v3127
        %v3157 = vpack.c.b16 %v3130, %v3129
        %v3158 = vpack.c.b16 %v3132, %v3131
        %v3159 = vpack.c.b16 %v3134, %v3133
        %v3160 = vpack.c.b16 %v3136, %v3135
        %v3161 = vpack.c.b16 %v3138, %v3137
        %v3162 = vpack.c.b16 %v3140, %v3139
        %v3163 = vpack.c.b16 %v3142, %v3141
        %v3164 = vpack.c.b16 %v3144, %v3143
        %v3165 = vpack.c.b16 %v3146, %v3145
        %v3166 = vpack.c.b16 %v3148, %v3147
        %v3201 = vunpack.c.l.b16 %v3097
        %v3202 = vunpack.c.l.b16 %v3098
        %v3203 = vunpack.c.l.b16 %v3099
        %v3204 = vunpack.c.l.b16 %v3100
        %v3205 = vunpack.c.l.b16 %v3101
        %v3206 = vunpack.c.l.b16 %v3102
        %v3207 = vunpack.c.l.b16 %v3103
        %v3208 = vunpack.c.l.b16 %v3104
        %v3209 = vunpack.c.l.b16 %v3105
        %v3210 = vunpack.c.l.b16 %v3106
        %v3211 = vunpack.c.l.b16 %v3107
        %v3212 = vunpack.c.l.b16 %v3108
        %v3213 = vunpack.c.l.b16 %v3109
        %v3214 = vunpack.c.l.b16 %v3110
        %v3215 = vunpack.c.l.b16 %v3111
        %v3216 = vunpack.c.l.b16 %v3112
        %v3217 = vpack.c.b16 %v3202, %v3201
        %v3218 = vpack.c.b16 %v3204, %v3203
        %v3219 = vpack.c.b16 %v3206, %v3205
        %v3220 = vpack.c.b16 %v3208, %v3207
        %v3221 = vpack.c.b16 %v3210, %v3209
        %v3222 = vpack.c.b16 %v3212, %v3211
        %v3223 = vpack.c.b16 %v3214, %v3213
        %v3224 = vpack.c.b16 %v3216, %v3215
        %3233 = vmatpush.bf16.msra.mxu0 %v3224
        %3234 = vmatpush.bf16.msra.mxu0 %v3223
        %3235 = vmatpush.bf16.msra.mxu0 %v3222
        %3236 = vmatpush.bf16.msra.mxu0 %v3221
        %3237 = vmatpush.bf16.msra.mxu0 %v3220
        %3238 = vmatpush.bf16.msra.mxu0 %v3219
        %3239 = vmatpush.bf16.msra.mxu0 %v3218
        %3240 = vmatpush.bf16.msra.mxu0 %v3217
        %3241 = vmatmul.bf16.gmra.mxu0 %v3149
        %v3242 = vpop.f32.mrf.mxu0
        %v3243 = vadd.f32 0.0, %v3242
        %v3244 = vpop.f32.mrf.mxu0
        %v3245 = vadd.f32 0.0, %v3244
        %3246 = vmatmul.bf16.gmra.mxu0 %v3150
        %v3247 = vpop.f32.mrf.mxu0
        %v3248 = vadd.f32 0.0, %v3247
        %v3249 = vpop.f32.mrf.mxu0
        %v3250 = vadd.f32 0.0, %v3249
        %3251 = vmatmul.bf16.gmra.mxu0 %v3151
        %v3252 = vpop.f32.mrf.mxu0
        %v3253 = vadd.f32 0.0, %v3252
        %v3254 = vpop.f32.mrf.mxu0
        %v3255 = vadd.f32 0.0, %v3254
        %3256 = vmatmul.bf16.gmra.mxu0 %v3152
        %v3257 = vpop.f32.mrf.mxu0
        %v3258 = vadd.f32 0.0, %v3257
        %v3259 = vpop.f32.mrf.mxu0
        %v3260 = vadd.f32 0.0, %v3259
        %3261 = vmatmul.bf16.gmra.mxu0 %v3153
        %v3262 = vpop.f32.mrf.mxu0
        %v3263 = vadd.f32 0.0, %v3262
        %v3264 = vpop.f32.mrf.mxu0
        %v3265 = vadd.f32 0.0, %v3264
        %3266 = vmatmul.bf16.gmra.mxu0 %v3154
        %v3267 = vpop.f32.mrf.mxu0
        %v3268 = vadd.f32 0.0, %v3267
        %v3269 = vpop.f32.mrf.mxu0
        %v3270 = vadd.f32 0.0, %v3269
        %3271 = vmatmul.bf16.gmra.mxu0 %v3155
        %v3272 = vpop.f32.mrf.mxu0
        %v3273 = vadd.f32 0.0, %v3272
        %v3274 = vpop.f32.mrf.mxu0
        %v3275 = vadd.f32 0.0, %v3274
        %3276 = vmatmul.bf16.gmra.mxu0 %v3156
        %v3277 = vpop.f32.mrf.mxu0
        %v3278 = vadd.f32 0.0, %v3277
        %v3279 = vpop.f32.mrf.mxu0
        %v3280 = vadd.f32 0.0, %v3279
        %3281 = vmatmul.bf16.gmra.mxu0 %v3157
        %v3282 = vpop.f32.mrf.mxu0
        %v3283 = vadd.f32 0.0, %v3282
        %v3284 = vpop.f32.mrf.mxu0
        %v3285 = vadd.f32 0.0, %v3284
        %3286 = vmatmul.bf16.gmra.mxu0 %v3158
        %v3287 = vpop.f32.mrf.mxu0
        %v3288 = vadd.f32 0.0, %v3287
        %v3289 = vpop.f32.mrf.mxu0
        %v3290 = vadd.f32 0.0, %v3289
        %3291 = vmatmul.bf16.gmra.mxu0 %v3159
        %v3292 = vpop.f32.mrf.mxu0
        %v3293 = vadd.f32 0.0, %v3292
        %v3294 = vpop.f32.mrf.mxu0
        %v3295 = vadd.f32 0.0, %v3294
        %3296 = vmatmul.bf16.gmra.mxu0 %v3160
        %v3297 = vpop.f32.mrf.mxu0
        %v3298 = vadd.f32 0.0, %v3297
        %v3299 = vpop.f32.mrf.mxu0
        %v3300 = vadd.f32 0.0, %v3299
        %3301 = vmatmul.bf16.gmra.mxu0 %v3161
        %v3302 = vpop.f32.mrf.mxu0
        %v3303 = vadd.f32 0.0, %v3302
        %v3304 = vpop.f32.mrf.mxu0
        %v3305 = vadd.f32 0.0, %v3304
        %3306 = vmatmul.bf16.gmra.mxu0 %v3162
        %v3307 = vpop.f32.mrf.mxu0
        %v3308 = vadd.f32 0.0, %v3307
        %v3309 = vpop.f32.mrf.mxu0
        %v3310 = vadd.f32 0.0, %v3309
        %3311 = vmatmul.bf16.gmra.mxu0 %v3163
        %v3312 = vpop.f32.mrf.mxu0
        %v3313 = vadd.f32 0.0, %v3312
        %v3314 = vpop.f32.mrf.mxu0
        %v3315 = vadd.f32 0.0, %v3314
        %3316 = vmatmul.bf16.gmra.mxu0 %v3164
        %v3317 = vpop.f32.mrf.mxu0
        %v3318 = vadd.f32 0.0, %v3317
        %v3319 = vpop.f32.mrf.mxu0
        %v3320 = vadd.f32 0.0, %v3319
        %3321 = vmatmul.bf16.gmra.mxu0 %v3165
        %v3322 = vpop.f32.mrf.mxu0
        %v3323 = vadd.f32 0.0, %v3322
        %v3324 = vpop.f32.mrf.mxu0
        %v3325 = vadd.f32 0.0, %v3324
        %3326 = vmatmul.bf16.gmra.mxu0 %v3166
        %v3327 = vpop.f32.mrf.mxu0
        %v3328 = vadd.f32 0.0, %v3327
        %v3329 = vpop.f32.mrf.mxu0
        %v3330 = vadd.f32 0.0, %v3329
        %3331 = vdwg.mxu0
        %v3332 = vld [vmem:[#allocation4] sm:$0xff]
        %v3333 = vld [vmem:[#allocation4 + $0x8] sm:$0xff]
        %v3334 = vld [vmem:[#allocation4 + $0x10] sm:$0xff]
        %v3335 = vld [vmem:[#allocation4 + $0x18] sm:$0xff]
        %v3336 = vld [vmem:[#allocation4 + $0x20] sm:$0xff]
        %v3337 = vld [vmem:[#allocation4 + $0x28] sm:$0xff]
        %v3338 = vld [vmem:[#allocation4 + $0x30] sm:$0xff]
        %v3339 = vld [vmem:[#allocation4 + $0x38] sm:$0xff]
        %v3340 = vld [vmem:[#allocation4 + $0x40] sm:$0xff]
        %v3341 = vld [vmem:[#allocation4 + $0x48] sm:$0xff]
        %v3342 = vld [vmem:[#allocation4 + $0x50] sm:$0xff]
        %v3343 = vld [vmem:[#allocation4 + $0x58] sm:$0xff]
        %v3344 = vld [vmem:[#allocation4 + $0x60] sm:$0xff]
        %v3345 = vld [vmem:[#allocation4 + $0x68] sm:$0xff]
        %v3346 = vld [vmem:[#allocation4 + $0x70] sm:$0xff]
        %v3347 = vld [vmem:[#allocation4 + $0x78] sm:$0xff]
        %v3348 = vld [vmem:[#allocation4 + $0x80] sm:$0xff]
        %v3349 = vld [vmem:[#allocation4 + $0x88] sm:$0xff]
        %v3350 = vld [vmem:[#allocation4 + $0x90] sm:$0xff]
        %v3351 = vld [vmem:[#allocation4 + $0x98] sm:$0xff]
        %v3352 = vld [vmem:[#allocation4 + $0xa0] sm:$0xff]
        %v3353 = vld [vmem:[#allocation4 + $0xa8] sm:$0xff]
        %v3354 = vld [vmem:[#allocation4 + $0xb0] sm:$0xff]
        %v3355 = vld [vmem:[#allocation4 + $0xb8] sm:$0xff]
        %v3356 = vld [vmem:[#allocation4 + $0xc0] sm:$0xff]
        %v3357 = vld [vmem:[#allocation4 + $0xc8] sm:$0xff]
        %v3358 = vld [vmem:[#allocation4 + $0xd0] sm:$0xff]
        %v3359 = vld [vmem:[#allocation4 + $0xd8] sm:$0xff]
        %v3360 = vld [vmem:[#allocation4 + $0xe0] sm:$0xff]
        %v3361 = vld [vmem:[#allocation4 + $0xe8] sm:$0xff]
        %v3362 = vld [vmem:[#allocation4 + $0xf0] sm:$0xff]
        %v3363 = vld [vmem:[#allocation4 + $0xf8] sm:$0xff]
        %v3364 = vld [vmem:[#allocation4 + $0x100] sm:$0xff]
        %v3365 = vld [vmem:[#allocation4 + $0x108] sm:$0xff]
        %v3366 = vld [vmem:[#allocation4 + $0x110] sm:$0xff]
        %v3367 = vld [vmem:[#allocation4 + $0x118] sm:$0xff]
        %v3368 = vadd.f32 %v3332, %v3243
        %v3369 = vadd.f32 %v3333, %v3245
        %v3370 = vadd.f32 %v3334, %v3248
        %v3371 = vadd.f32 %v3335, %v3250
        %v3372 = vadd.f32 %v3336, %v3253
        %v3373 = vadd.f32 %v3337, %v3255
        %v3374 = vadd.f32 %v3338, %v3258
        %v3375 = vadd.f32 %v3339, %v3260
        %v3376 = vadd.f32 %v3340, %v3263
        %v3377 = vadd.f32 %v3341, %v3265
        %v3378 = vadd.f32 %v3342, %v3268
        %v3379 = vadd.f32 %v3343, %v3270
        %v3380 = vadd.f32 %v3344, %v3273
        %v3381 = vadd.f32 %v3345, %v3275
        %v3382 = vadd.f32 %v3346, %v3278
        %v3383 = vadd.f32 %v3347, %v3280
        %v3384 = vadd.f32 %v3348, %v3283
        %v3385 = vadd.f32 %v3349, %v3285
        %v3386 = vadd.f32 %v3350, %v3288
        %v3387 = vadd.f32 %v3351, %v3290
        %v3388 = vadd.f32 %v3352, %v3293
        %v3389 = vadd.f32 %v3353, %v3295
        %v3390 = vadd.f32 %v3354, %v3298
        %v3391 = vadd.f32 %v3355, %v3300
        %v3392 = vadd.f32 %v3356, %v3303
        %v3393 = vadd.f32 %v3357, %v3305
        %v3394 = vadd.f32 %v3358, %v3308
        %v3395 = vadd.f32 %v3359, %v3310
        %v3396 = vadd.f32 %v3360, %v3313
        %v3397 = vadd.f32 %v3361, %v3315
        %v3398 = vadd.f32 %v3362, %v3318
        %v3399 = vadd.f32 %v3363, %v3320
        %v3400 = vadd.f32 %v3364, %v3323
        %v3401 = vadd.f32 %v3365, %v3325
        %v3402 = vadd.f32 %v3366, %v3328
        %v3403 = vadd.f32 %v3367, %v3330
        %3404 = vst [vmem:[#allocation4] sm:$0xff] %v3368
        %3405 = vst [vmem:[#allocation4 + $0x8] sm:$0xff] %v3369
        %3406 = vst [vmem:[#allocation4 + $0x10] sm:$0xff] %v3370
        %3407 = vst [vmem:[#allocation4 + $0x18] sm:$0xff] %v3371
        %3408 = vst [vmem:[#allocation4 + $0x20] sm:$0xff] %v3372
        %3409 = vst [vmem:[#allocation4 + $0x28] sm:$0xff] %v3373
        %3410 = vst [vmem:[#allocation4 + $0x30] sm:$0xff] %v3374
        %3411 = vst [vmem:[#allocation4 + $0x38] sm:$0xff] %v3375
        %3412 = vst [vmem:[#allocation4 + $0x40] sm:$0xff] %v3376
        %3413 = vst [vmem:[#allocation4 + $0x48] sm:$0xff] %v3377
        %3414 = vst [vmem:[#allocation4 + $0x50] sm:$0xff] %v3378
        %3415 = vst [vmem:[#allocation4 + $0x58] sm:$0xff] %v3379
        %3416 = vst [vmem:[#allocation4 + $0x60] sm:$0xff] %v3380
        %3417 = vst [vmem:[#allocation4 + $0x68] sm:$0xff] %v3381
        %3418 = vst [vmem:[#allocation4 + $0x70] sm:$0xff] %v3382
        %3419 = vst [vmem:[#allocation4 + $0x78] sm:$0xff] %v3383
        %3420 = vst [vmem:[#allocation4 + $0x80] sm:$0xff] %v3384
        %3421 = vst [vmem:[#allocation4 + $0x88] sm:$0xff] %v3385
        %3422 = vst [vmem:[#allocation4 + $0x90] sm:$0xff] %v3386
        %3423 = vst [vmem:[#allocation4 + $0x98] sm:$0xff] %v3387
        %3424 = vst [vmem:[#allocation4 + $0xa0] sm:$0xff] %v3388
        %3425 = vst [vmem:[#allocation4 + $0xa8] sm:$0xff] %v3389
        %3426 = vst [vmem:[#allocation4 + $0xb0] sm:$0xff] %v3390
        %3427 = vst [vmem:[#allocation4 + $0xb8] sm:$0xff] %v3391
        %3428 = vst [vmem:[#allocation4 + $0xc0] sm:$0xff] %v3392
        %3429 = vst [vmem:[#allocation4 + $0xc8] sm:$0xff] %v3393
        %3430 = vst [vmem:[#allocation4 + $0xd0] sm:$0xff] %v3394
        %3431 = vst [vmem:[#allocation4 + $0xd8] sm:$0xff] %v3395
        %3432 = vst [vmem:[#allocation4 + $0xe0] sm:$0xff] %v3396
        %3433 = vst [vmem:[#allocation4 + $0xe8] sm:$0xff] %v3397
        %3434 = vst [vmem:[#allocation4 + $0xf0] sm:$0xff] %v3398
        %3435 = vst [vmem:[#allocation4 + $0xf8] sm:$0xff] %v3399
        %3436 = vst [vmem:[#allocation4 + $0x100] sm:$0xff] %v3400
        %3437 = vst [vmem:[#allocation4 + $0x108] sm:$0xff] %v3401
        %3438 = vst [vmem:[#allocation4 + $0x110] sm:$0xff] %v3402
        %3439 = vst [vmem:[#allocation4 + $0x118] sm:$0xff] %v3403
        %v3440 = vld [vmem:[%s2193] sm:$0xe]
        %v3441 = vld [vmem:[%s2193 + $0x4] sm:$0xf]
        %v3442 = vld [vmem:[%s2193 + $0x8] sm:$0x1]
        %v3443 = vld [vmem:[%s2193 + $0xc] sm:$0xe]
        %v3444 = vld [vmem:[%s2193 + $0x10] sm:$0xf]
        %v3445 = vld [vmem:[%s2193 + $0x14] sm:$0x1]
        %v3446 = vld [vmem:[%s2193 + $0x18] sm:$0xe]
        %v3447 = vld [vmem:[%s2193 + $0x1c] sm:$0xf]
        %v3448 = vld [vmem:[%s2193 + $0x20] sm:$0x1]
        %v3449 = vld [vmem:[%s2193 + $0x24] sm:$0xe]
        %v3450 = vld [vmem:[%s2193 + $0x28] sm:$0xf]
        %v3451 = vld [vmem:[%s2193 + $0x2c] sm:$0x1]
        %v3452 = vld [vmem:[%s2193 + $0x30] sm:$0xe]
        %v3453 = vld [vmem:[%s2193 + $0x34] sm:$0xf]
        %v3454 = vld [vmem:[%s2193 + $0x38] sm:$0x1]
        %v3455 = vld [vmem:[%s2193 + $0x3c] sm:$0xe]
        %v3456 = vld [vmem:[%s2193 + $0x40] sm:$0xf]
        %v3457 = vld [vmem:[%s2193 + $0x44] sm:$0x1]
        %v3458 = vld [vmem:[%s2193 + $0x48] sm:$0xe]
        %v3459 = vld [vmem:[%s2193 + $0x4c] sm:$0xf]
        %v3460 = vld [vmem:[%s2193 + $0x50] sm:$0x1]
        %v3461 = vld [vmem:[%s2193 + $0x54] sm:$0xe]
        %v3462 = vld [vmem:[%s2193 + $0x58] sm:$0xf]
        %v3463 = vld [vmem:[%s2193 + $0x5c] sm:$0x1]
        %v3464 = vld [vmem:[%s2193 + $0x60] sm:$0xe]
        %v3465 = vld [vmem:[%s2193 + $0x64] sm:$0xf]
        %v3466 = vld [vmem:[%s2193 + $0x68] sm:$0x1]
        %v3467 = vld [vmem:[%s2193 + $0x6c] sm:$0xe]
        %v3468 = vld [vmem:[%s2193 + $0x70] sm:$0xf]
        %v3469 = vld [vmem:[%s2193 + $0x74] sm:$0x1]
        %v3470 = vld [vmem:[%s2193 + $0x78] sm:$0xe]
        %v3471 = vld [vmem:[%s2193 + $0x7c] sm:$0xf]
        %v3472 = vld [vmem:[%s2193 + $0x80] sm:$0x1]
        %v3473 = vld [vmem:[%s2193 + $0x84] sm:$0xe]
        %v3474 = vld [vmem:[%s2193 + $0x88] sm:$0xf]
        %v3475 = vld [vmem:[%s2193 + $0x8c] sm:$0x1]
        %v3476 = vld [vmem:[%s2193 + $0x90] sm:$0xe]
        %v3477 = vld [vmem:[%s2193 + $0x94] sm:$0xf]
        %v3478 = vld [vmem:[%s2193 + $0x98] sm:$0x1]
        %v3479 = vld [vmem:[%s2193 + $0x9c] sm:$0xe]
        %v3480 = vld [vmem:[%s2193 + $0xa0] sm:$0xf]
        %v3481 = vld [vmem:[%s2193 + $0xa4] sm:$0x1]
        %v3482 = vld [vmem:[%s2193 + $0xa8] sm:$0xe]
        %v3483 = vld [vmem:[%s2193 + $0xac] sm:$0xf]
        %v3484 = vld [vmem:[%s2193 + $0xb0] sm:$0x1]
        %v3485 = vld [vmem:[%s2193 + $0xb4] sm:$0xe]
        %v3486 = vld [vmem:[%s2193 + $0xb8] sm:$0xf]
        %v3487 = vld [vmem:[%s2193 + $0xbc] sm:$0x1]
        %v3488 = vld [vmem:[%s2193 + $0xc0] sm:$0xe]
        %v3489 = vld [vmem:[%s2193 + $0xc4] sm:$0xf]
        %v3490 = vld [vmem:[%s2193 + $0xc8] sm:$0x1]
        %v3491 = vld [vmem:[%s2193 + $0xcc] sm:$0xe]
        %v3492 = vld [vmem:[%s2193 + $0xd0] sm:$0xf]
        %v3493 = vld [vmem:[%s2193 + $0xd4] sm:$0x1]
        %v3548 = vrot.slane %v3440, 5
        %v3549 = vrot.slane %v3548, 4
        %v3550 = vrot.slane %v3441, 5
        %v3551 = vsel %vm1722, %v3549, %v3550
        %v3552 = vrot.slane %v3550, 4
        %v3553 = vrot.slane %v3442, 5
        %v3554 = vsel %vm1722, %v3552, %v3553
        %v3555 = vrot.slane %v3443, 5
        %v3556 = vrot.slane %v3555, 4
        %v3557 = vrot.slane %v3444, 5
        %v3558 = vsel %vm1722, %v3556, %v3557
        %v3559 = vrot.slane %v3557, 4
        %v3560 = vrot.slane %v3445, 5
        %v3561 = vsel %vm1722, %v3559, %v3560
        %v3562 = vrot.slane %v3446, 5
        %v3563 = vrot.slane %v3562, 4
        %v3564 = vrot.slane %v3447, 5
        %v3565 = vsel %vm1722, %v3563, %v3564
        %v3566 = vrot.slane %v3564, 4
        %v3567 = vrot.slane %v3448, 5
        %v3568 = vsel %vm1722, %v3566, %v3567
        %v3569 = vrot.slane %v3449, 5
        %v3570 = vrot.slane %v3569, 4
        %v3571 = vrot.slane %v3450, 5
        %v3572 = vsel %vm1722, %v3570, %v3571
        %v3573 = vrot.slane %v3571, 4
        %v3574 = vrot.slane %v3451, 5
        %v3575 = vsel %vm1722, %v3573, %v3574
        %v3576 = vrot.slane %v3452, 5
        %v3577 = vrot.slane %v3576, 4
        %v3578 = vrot.slane %v3453, 5
        %v3579 = vsel %vm1722, %v3577, %v3578
        %v3580 = vrot.slane %v3578, 4
        %v3581 = vrot.slane %v3454, 5
        %v3582 = vsel %vm1722, %v3580, %v3581
        %v3583 = vrot.slane %v3455, 5
        %v3584 = vrot.slane %v3583, 4
        %v3585 = vrot.slane %v3456, 5
        %v3586 = vsel %vm1722, %v3584, %v3585
        %v3587 = vrot.slane %v3585, 4
        %v3588 = vrot.slane %v3457, 5
        %v3589 = vsel %vm1722, %v3587, %v3588
        %v3590 = vrot.slane %v3458, 5
        %v3591 = vrot.slane %v3590, 4
        %v3592 = vrot.slane %v3459, 5
        %v3593 = vsel %vm1722, %v3591, %v3592
        %v3594 = vrot.slane %v3592, 4
        %v3595 = vrot.slane %v3460, 5
        %v3596 = vsel %vm1722, %v3594, %v3595
        %v3597 = vrot.slane %v3461, 5
        %v3598 = vrot.slane %v3597, 4
        %v3599 = vrot.slane %v3462, 5
        %v3600 = vsel %vm1722, %v3598, %v3599
        %v3601 = vrot.slane %v3599, 4
        %v3602 = vrot.slane %v3463, 5
        %v3603 = vsel %vm1722, %v3601, %v3602
        %v3604 = vrot.slane %v3464, 5
        %v3605 = vrot.slane %v3604, 4
        %v3606 = vrot.slane %v3465, 5
        %v3607 = vsel %vm1722, %v3605, %v3606
        %v3608 = vrot.slane %v3606, 4
        %v3609 = vrot.slane %v3466, 5
        %v3610 = vsel %vm1722, %v3608, %v3609
        %v3611 = vrot.slane %v3467, 5
        %v3612 = vrot.slane %v3611, 4
        %v3613 = vrot.slane %v3468, 5
        %v3614 = vsel %vm1722, %v3612, %v3613
        %v3615 = vrot.slane %v3613, 4
        %v3616 = vrot.slane %v3469, 5
        %v3617 = vsel %vm1722, %v3615, %v3616
        %v3618 = vrot.slane %v3470, 5
        %v3619 = vrot.slane %v3618, 4
        %v3620 = vrot.slane %v3471, 5
        %v3621 = vsel %vm1722, %v3619, %v3620
        %v3622 = vrot.slane %v3620, 4
        %v3623 = vrot.slane %v3472, 5
        %v3624 = vsel %vm1722, %v3622, %v3623
        %v3625 = vrot.slane %v3473, 5
        %v3626 = vrot.slane %v3625, 4
        %v3627 = vrot.slane %v3474, 5
        %v3628 = vsel %vm1722, %v3626, %v3627
        %v3629 = vrot.slane %v3627, 4
        %v3630 = vrot.slane %v3475, 5
        %v3631 = vsel %vm1722, %v3629, %v3630
        %v3632 = vrot.slane %v3476, 5
        %v3633 = vrot.slane %v3632, 4
        %v3634 = vrot.slane %v3477, 5
        %v3635 = vsel %vm1722, %v3633, %v3634
        %v3636 = vrot.slane %v3634, 4
        %v3637 = vrot.slane %v3478, 5
        %v3638 = vsel %vm1722, %v3636, %v3637
        %v3639 = vrot.slane %v3479, 5
        %v3640 = vrot.slane %v3639, 4
        %v3641 = vrot.slane %v3480, 5
        %v3642 = vsel %vm1722, %v3640, %v3641
        %v3643 = vrot.slane %v3641, 4
        %v3644 = vrot.slane %v3481, 5
        %v3645 = vsel %vm1722, %v3643, %v3644
        %v3646 = vrot.slane %v3482, 5
        %v3647 = vrot.slane %v3646, 4
        %v3648 = vrot.slane %v3483, 5
        %v3649 = vsel %vm1722, %v3647, %v3648
        %v3650 = vrot.slane %v3648, 4
        %v3651 = vrot.slane %v3484, 5
        %v3652 = vsel %vm1722, %v3650, %v3651
        %v3653 = vrot.slane %v3485, 5
        %v3654 = vrot.slane %v3653, 4
        %v3655 = vrot.slane %v3486, 5
        %v3656 = vsel %vm1722, %v3654, %v3655
        %v3657 = vrot.slane %v3655, 4
        %v3658 = vrot.slane %v3487, 5
        %v3659 = vsel %vm1722, %v3657, %v3658
        %v3660 = vrot.slane %v3488, 5
        %v3661 = vrot.slane %v3660, 4
        %v3662 = vrot.slane %v3489, 5
        %v3663 = vsel %vm1722, %v3661, %v3662
        %v3664 = vrot.slane %v3662, 4
        %v3665 = vrot.slane %v3490, 5
        %v3666 = vsel %vm1722, %v3664, %v3665
        %v3667 = vrot.slane %v3491, 5
        %v3668 = vrot.slane %v3667, 4
        %v3669 = vrot.slane %v3492, 5
        %v3670 = vsel %vm1722, %v3668, %v3669
        %v3671 = vrot.slane %v3669, 4
        %v3672 = vrot.slane %v3493, 5
        %v3673 = vsel %vm1722, %v3671, %v3672
        %s3674 = scalar_lea.vmem %s1, 320
        %v3675 = vld [vmem:[%s3674] sm:$0xf]
        %v3676 = vld [vmem:[%s3674 + $0x4] sm:$0xf]
        %v3677 = vld [vmem:[%s3674 + $0x8] sm:$0xf]
        %v3678 = vld [vmem:[%s3674 + $0xc] sm:$0xf]
        %v3679 = vld [vmem:[%s3674 + $0x10] sm:$0xf]
        %v3680 = vld [vmem:[%s3674 + $0x14] sm:$0xf]
        %v3681 = vld [vmem:[%s3674 + $0x18] sm:$0xf]
        %v3682 = vld [vmem:[%s3674 + $0x1c] sm:$0xf]
        %v3683 = vld [vmem:[%s3674 + $0x20] sm:$0xf]
        %v3684 = vld [vmem:[%s3674 + $0x24] sm:$0xf]
        %v3685 = vld [vmem:[%s3674 + $0x28] sm:$0xf]
        %v3686 = vld [vmem:[%s3674 + $0x2c] sm:$0xf]
        %v3687 = vld [vmem:[%s3674 + $0x30] sm:$0xf]
        %v3688 = vld [vmem:[%s3674 + $0x34] sm:$0xf]
        %v3689 = vld [vmem:[%s3674 + $0x38] sm:$0xf]
        %v3690 = vld [vmem:[%s3674 + $0x3c] sm:$0xf]
        %v3691 = vunpack.c.l.b16 %v3551
        %v3692 = vunpack.c.l.b16 %v3554
        %v3693 = vunpack.c.l.b16 %v3558
        %v3694 = vunpack.c.l.b16 %v3561
        %v3695 = vunpack.c.l.b16 %v3565
        %v3696 = vunpack.c.l.b16 %v3568
        %v3697 = vunpack.c.l.b16 %v3572
        %v3698 = vunpack.c.l.b16 %v3575
        %v3699 = vunpack.c.l.b16 %v3579
        %v3700 = vunpack.c.l.b16 %v3582
        %v3701 = vunpack.c.l.b16 %v3586
        %v3702 = vunpack.c.l.b16 %v3589
        %v3703 = vunpack.c.l.b16 %v3593
        %v3704 = vunpack.c.l.b16 %v3596
        %v3705 = vunpack.c.l.b16 %v3600
        %v3706 = vunpack.c.l.b16 %v3603
        %v3707 = vunpack.c.l.b16 %v3607
        %v3708 = vunpack.c.l.b16 %v3610
        %v3709 = vunpack.c.l.b16 %v3614
        %v3710 = vunpack.c.l.b16 %v3617
        %v3711 = vunpack.c.l.b16 %v3621
        %v3712 = vunpack.c.l.b16 %v3624
        %v3713 = vunpack.c.l.b16 %v3628
        %v3714 = vunpack.c.l.b16 %v3631
        %v3715 = vunpack.c.l.b16 %v3635
        %v3716 = vunpack.c.l.b16 %v3638
        %v3717 = vunpack.c.l.b16 %v3642
        %v3718 = vunpack.c.l.b16 %v3645
        %v3719 = vunpack.c.l.b16 %v3649
        %v3720 = vunpack.c.l.b16 %v3652
        %v3721 = vunpack.c.l.b16 %v3656
        %v3722 = vunpack.c.l.b16 %v3659
        %v3723 = vunpack.c.l.b16 %v3663
        %v3724 = vunpack.c.l.b16 %v3666
        %v3725 = vunpack.c.l.b16 %v3670
        %v3726 = vunpack.c.l.b16 %v3673
        %v3727 = vpack.c.b16 %v3692, %v3691
        %v3728 = vpack.c.b16 %v3694, %v3693
        %v3729 = vpack.c.b16 %v3696, %v3695
        %v3730 = vpack.c.b16 %v3698, %v3697
        %v3731 = vpack.c.b16 %v3700, %v3699
        %v3732 = vpack.c.b16 %v3702, %v3701
        %v3733 = vpack.c.b16 %v3704, %v3703
        %v3734 = vpack.c.b16 %v3706, %v3705
        %v3735 = vpack.c.b16 %v3708, %v3707
        %v3736 = vpack.c.b16 %v3710, %v3709
        %v3737 = vpack.c.b16 %v3712, %v3711
        %v3738 = vpack.c.b16 %v3714, %v3713
        %v3739 = vpack.c.b16 %v3716, %v3715
        %v3740 = vpack.c.b16 %v3718, %v3717
        %v3741 = vpack.c.b16 %v3720, %v3719
        %v3742 = vpack.c.b16 %v3722, %v3721
        %v3743 = vpack.c.b16 %v3724, %v3723
        %v3744 = vpack.c.b16 %v3726, %v3725
        %v3779 = vunpack.c.l.b16 %v3675
        %v3780 = vunpack.c.l.b16 %v3676
        %v3781 = vunpack.c.l.b16 %v3677
        %v3782 = vunpack.c.l.b16 %v3678
        %v3783 = vunpack.c.l.b16 %v3679
        %v3784 = vunpack.c.l.b16 %v3680
        %v3785 = vunpack.c.l.b16 %v3681
        %v3786 = vunpack.c.l.b16 %v3682
        %v3787 = vunpack.c.l.b16 %v3683
        %v3788 = vunpack.c.l.b16 %v3684
        %v3789 = vunpack.c.l.b16 %v3685
        %v3790 = vunpack.c.l.b16 %v3686
        %v3791 = vunpack.c.l.b16 %v3687
        %v3792 = vunpack.c.l.b16 %v3688
        %v3793 = vunpack.c.l.b16 %v3689
        %v3794 = vunpack.c.l.b16 %v3690
        %v3795 = vpack.c.b16 %v3780, %v3779
        %v3796 = vpack.c.b16 %v3782, %v3781
        %v3797 = vpack.c.b16 %v3784, %v3783
        %v3798 = vpack.c.b16 %v3786, %v3785
        %v3799 = vpack.c.b16 %v3788, %v3787
        %v3800 = vpack.c.b16 %v3790, %v3789
        %v3801 = vpack.c.b16 %v3792, %v3791
        %v3802 = vpack.c.b16 %v3794, %v3793
        %3811 = vmatpush.bf16.msra.mxu0 %v3802
        %3812 = vmatpush.bf16.msra.mxu0 %v3801
        %3813 = vmatpush.bf16.msra.mxu0 %v3800
        %3814 = vmatpush.bf16.msra.mxu0 %v3799
        %3815 = vmatpush.bf16.msra.mxu0 %v3798
        %3816 = vmatpush.bf16.msra.mxu0 %v3797
        %3817 = vmatpush.bf16.msra.mxu0 %v3796
        %3818 = vmatpush.bf16.msra.mxu0 %v3795
        %3819 = vmatmul.bf16.gmra.mxu0 %v3727
        %v3820 = vpop.f32.mrf.mxu0
        %v3821 = vadd.f32 0.0, %v3820
        %v3822 = vpop.f32.mrf.mxu0
        %v3823 = vadd.f32 0.0, %v3822
        %3824 = vmatmul.bf16.gmra.mxu0 %v3728
        %v3825 = vpop.f32.mrf.mxu0
        %v3826 = vadd.f32 0.0, %v3825
        %v3827 = vpop.f32.mrf.mxu0
        %v3828 = vadd.f32 0.0, %v3827
        %3829 = vmatmul.bf16.gmra.mxu0 %v3729
        %v3830 = vpop.f32.mrf.mxu0
        %v3831 = vadd.f32 0.0, %v3830
        %v3832 = vpop.f32.mrf.mxu0
        %v3833 = vadd.f32 0.0, %v3832
        %3834 = vmatmul.bf16.gmra.mxu0 %v3730
        %v3835 = vpop.f32.mrf.mxu0
        %v3836 = vadd.f32 0.0, %v3835
        %v3837 = vpop.f32.mrf.mxu0
        %v3838 = vadd.f32 0.0, %v3837
        %3839 = vmatmul.bf16.gmra.mxu0 %v3731
        %v3840 = vpop.f32.mrf.mxu0
        %v3841 = vadd.f32 0.0, %v3840
        %v3842 = vpop.f32.mrf.mxu0
        %v3843 = vadd.f32 0.0, %v3842
        %3844 = vmatmul.bf16.gmra.mxu0 %v3732
        %v3845 = vpop.f32.mrf.mxu0
        %v3846 = vadd.f32 0.0, %v3845
        %v3847 = vpop.f32.mrf.mxu0
        %v3848 = vadd.f32 0.0, %v3847
        %3849 = vmatmul.bf16.gmra.mxu0 %v3733
        %v3850 = vpop.f32.mrf.mxu0
        %v3851 = vadd.f32 0.0, %v3850
        %v3852 = vpop.f32.mrf.mxu0
        %v3853 = vadd.f32 0.0, %v3852
        %3854 = vmatmul.bf16.gmra.mxu0 %v3734
        %v3855 = vpop.f32.mrf.mxu0
        %v3856 = vadd.f32 0.0, %v3855
        %v3857 = vpop.f32.mrf.mxu0
        %v3858 = vadd.f32 0.0, %v3857
        %3859 = vmatmul.bf16.gmra.mxu0 %v3735
        %v3860 = vpop.f32.mrf.mxu0
        %v3861 = vadd.f32 0.0, %v3860
        %v3862 = vpop.f32.mrf.mxu0
        %v3863 = vadd.f32 0.0, %v3862
        %3864 = vmatmul.bf16.gmra.mxu0 %v3736
        %v3865 = vpop.f32.mrf.mxu0
        %v3866 = vadd.f32 0.0, %v3865
        %v3867 = vpop.f32.mrf.mxu0
        %v3868 = vadd.f32 0.0, %v3867
        %3869 = vmatmul.bf16.gmra.mxu0 %v3737
        %v3870 = vpop.f32.mrf.mxu0
        %v3871 = vadd.f32 0.0, %v3870
        %v3872 = vpop.f32.mrf.mxu0
        %v3873 = vadd.f32 0.0, %v3872
        %3874 = vmatmul.bf16.gmra.mxu0 %v3738
        %v3875 = vpop.f32.mrf.mxu0
        %v3876 = vadd.f32 0.0, %v3875
        %v3877 = vpop.f32.mrf.mxu0
        %v3878 = vadd.f32 0.0, %v3877
        %3879 = vmatmul.bf16.gmra.mxu0 %v3739
        %v3880 = vpop.f32.mrf.mxu0
        %v3881 = vadd.f32 0.0, %v3880
        %v3882 = vpop.f32.mrf.mxu0
        %v3883 = vadd.f32 0.0, %v3882
        %3884 = vmatmul.bf16.gmra.mxu0 %v3740
        %v3885 = vpop.f32.mrf.mxu0
        %v3886 = vadd.f32 0.0, %v3885
        %v3887 = vpop.f32.mrf.mxu0
        %v3888 = vadd.f32 0.0, %v3887
        %3889 = vmatmul.bf16.gmra.mxu0 %v3741
        %v3890 = vpop.f32.mrf.mxu0
        %v3891 = vadd.f32 0.0, %v3890
        %v3892 = vpop.f32.mrf.mxu0
        %v3893 = vadd.f32 0.0, %v3892
        %3894 = vmatmul.bf16.gmra.mxu0 %v3742
        %v3895 = vpop.f32.mrf.mxu0
        %v3896 = vadd.f32 0.0, %v3895
        %v3897 = vpop.f32.mrf.mxu0
        %v3898 = vadd.f32 0.0, %v3897
        %3899 = vmatmul.bf16.gmra.mxu0 %v3743
        %v3900 = vpop.f32.mrf.mxu0
        %v3901 = vadd.f32 0.0, %v3900
        %v3902 = vpop.f32.mrf.mxu0
        %v3903 = vadd.f32 0.0, %v3902
        %3904 = vmatmul.bf16.gmra.mxu0 %v3744
        %v3905 = vpop.f32.mrf.mxu0
        %v3906 = vadd.f32 0.0, %v3905
        %v3907 = vpop.f32.mrf.mxu0
        %v3908 = vadd.f32 0.0, %v3907
        %3909 = vdwg.mxu0
        %v3910 = vld [vmem:[#allocation4] sm:$0xff]
        %v3911 = vld [vmem:[#allocation4 + $0x8] sm:$0xff]
        %v3912 = vld [vmem:[#allocation4 + $0x10] sm:$0xff]
        %v3913 = vld [vmem:[#allocation4 + $0x18] sm:$0xff]
        %v3914 = vld [vmem:[#allocation4 + $0x20] sm:$0xff]
        %v3915 = vld [vmem:[#allocation4 + $0x28] sm:$0xff]
        %v3916 = vld [vmem:[#allocation4 + $0x30] sm:$0xff]
        %v3917 = vld [vmem:[#allocation4 + $0x38] sm:$0xff]
        %v3918 = vld [vmem:[#allocation4 + $0x40] sm:$0xff]
        %v3919 = vld [vmem:[#allocation4 + $0x48] sm:$0xff]
        %v3920 = vld [vmem:[#allocation4 + $0x50] sm:$0xff]
        %v3921 = vld [vmem:[#allocation4 + $0x58] sm:$0xff]
        %v3922 = vld [vmem:[#allocation4 + $0x60] sm:$0xff]
        %v3923 = vld [vmem:[#allocation4 + $0x68] sm:$0xff]
        %v3924 = vld [vmem:[#allocation4 + $0x70] sm:$0xff]
        %v3925 = vld [vmem:[#allocation4 + $0x78] sm:$0xff]
        %v3926 = vld [vmem:[#allocation4 + $0x80] sm:$0xff]
        %v3927 = vld [vmem:[#allocation4 + $0x88] sm:$0xff]
        %v3928 = vld [vmem:[#allocation4 + $0x90] sm:$0xff]
        %v3929 = vld [vmem:[#allocation4 + $0x98] sm:$0xff]
        %v3930 = vld [vmem:[#allocation4 + $0xa0] sm:$0xff]
        %v3931 = vld [vmem:[#allocation4 + $0xa8] sm:$0xff]
        %v3932 = vld [vmem:[#allocation4 + $0xb0] sm:$0xff]
        %v3933 = vld [vmem:[#allocation4 + $0xb8] sm:$0xff]
        %v3934 = vld [vmem:[#allocation4 + $0xc0] sm:$0xff]
        %v3935 = vld [vmem:[#allocation4 + $0xc8] sm:$0xff]
        %v3936 = vld [vmem:[#allocation4 + $0xd0] sm:$0xff]
        %v3937 = vld [vmem:[#allocation4 + $0xd8] sm:$0xff]
        %v3938 = vld [vmem:[#allocation4 + $0xe0] sm:$0xff]
        %v3939 = vld [vmem:[#allocation4 + $0xe8] sm:$0xff]
        %v3940 = vld [vmem:[#allocation4 + $0xf0] sm:$0xff]
        %v3941 = vld [vmem:[#allocation4 + $0xf8] sm:$0xff]
        %v3942 = vld [vmem:[#allocation4 + $0x100] sm:$0xff]
        %v3943 = vld [vmem:[#allocation4 + $0x108] sm:$0xff]
        %v3944 = vld [vmem:[#allocation4 + $0x110] sm:$0xff]
        %v3945 = vld [vmem:[#allocation4 + $0x118] sm:$0xff]
        %v3946 = vadd.f32 %v3910, %v3821
        %v3947 = vadd.f32 %v3911, %v3823
        %v3948 = vadd.f32 %v3912, %v3826
        %v3949 = vadd.f32 %v3913, %v3828
        %v3950 = vadd.f32 %v3914, %v3831
        %v3951 = vadd.f32 %v3915, %v3833
        %v3952 = vadd.f32 %v3916, %v3836
        %v3953 = vadd.f32 %v3917, %v3838
        %v3954 = vadd.f32 %v3918, %v3841
        %v3955 = vadd.f32 %v3919, %v3843
        %v3956 = vadd.f32 %v3920, %v3846
        %v3957 = vadd.f32 %v3921, %v3848
        %v3958 = vadd.f32 %v3922, %v3851
        %v3959 = vadd.f32 %v3923, %v3853
        %v3960 = vadd.f32 %v3924, %v3856
        %v3961 = vadd.f32 %v3925, %v3858
        %v3962 = vadd.f32 %v3926, %v3861
        %v3963 = vadd.f32 %v3927, %v3863
        %v3964 = vadd.f32 %v3928, %v3866
        %v3965 = vadd.f32 %v3929, %v3868
        %v3966 = vadd.f32 %v3930, %v3871
        %v3967 = vadd.f32 %v3931, %v3873
        %v3968 = vadd.f32 %v3932, %v3876
        %v3969 = vadd.f32 %v3933, %v3878
        %v3970 = vadd.f32 %v3934, %v3881
        %v3971 = vadd.f32 %v3935, %v3883
        %v3972 = vadd.f32 %v3936, %v3886
        %v3973 = vadd.f32 %v3937, %v3888
        %v3974 = vadd.f32 %v3938, %v3891
        %v3975 = vadd.f32 %v3939, %v3893
        %v3976 = vadd.f32 %v3940, %v3896
        %v3977 = vadd.f32 %v3941, %v3898
        %v3978 = vadd.f32 %v3942, %v3901
        %v3979 = vadd.f32 %v3943, %v3903
        %v3980 = vadd.f32 %v3944, %v3906
        %v3981 = vadd.f32 %v3945, %v3908
        %3982 = vst [vmem:[#allocation4] sm:$0xff] %v3946
        %3983 = vst [vmem:[#allocation4 + $0x8] sm:$0xff] %v3947
        %3984 = vst [vmem:[#allocation4 + $0x10] sm:$0xff] %v3948
        %3985 = vst [vmem:[#allocation4 + $0x18] sm:$0xff] %v3949
        %3986 = vst [vmem:[#allocation4 + $0x20] sm:$0xff] %v3950
        %3987 = vst [vmem:[#allocation4 + $0x28] sm:$0xff] %v3951
        %3988 = vst [vmem:[#allocation4 + $0x30] sm:$0xff] %v3952
        %3989 = vst [vmem:[#allocation4 + $0x38] sm:$0xff] %v3953
        %3990 = vst [vmem:[#allocation4 + $0x40] sm:$0xff] %v3954
        %3991 = vst [vmem:[#allocation4 + $0x48] sm:$0xff] %v3955
        %3992 = vst [vmem:[#allocation4 + $0x50] sm:$0xff] %v3956
        %3993 = vst [vmem:[#allocation4 + $0x58] sm:$0xff] %v3957
        %3994 = vst [vmem:[#allocation4 + $0x60] sm:$0xff] %v3958
        %3995 = vst [vmem:[#allocation4 + $0x68] sm:$0xff] %v3959
        %3996 = vst [vmem:[#allocation4 + $0x70] sm:$0xff] %v3960
        %3997 = vst [vmem:[#allocation4 + $0x78] sm:$0xff] %v3961
        %3998 = vst [vmem:[#allocation4 + $0x80] sm:$0xff] %v3962
        %3999 = vst [vmem:[#allocation4 + $0x88] sm:$0xff] %v3963
        %4000 = vst [vmem:[#allocation4 + $0x90] sm:$0xff] %v3964
        %4001 = vst [vmem:[#allocation4 + $0x98] sm:$0xff] %v3965
        %4002 = vst [vmem:[#allocation4 + $0xa0] sm:$0xff] %v3966
        %4003 = vst [vmem:[#allocation4 + $0xa8] sm:$0xff] %v3967
        %4004 = vst [vmem:[#allocation4 + $0xb0] sm:$0xff] %v3968
        %4005 = vst [vmem:[#allocation4 + $0xb8] sm:$0xff] %v3969
        %4006 = vst [vmem:[#allocation4 + $0xc0] sm:$0xff] %v3970
        %4007 = vst [vmem:[#allocation4 + $0xc8] sm:$0xff] %v3971
        %4008 = vst [vmem:[#allocation4 + $0xd0] sm:$0xff] %v3972
        %4009 = vst [vmem:[#allocation4 + $0xd8] sm:$0xff] %v3973
        %4010 = vst [vmem:[#allocation4 + $0xe0] sm:$0xff] %v3974
        %4011 = vst [vmem:[#allocation4 + $0xe8] sm:$0xff] %v3975
        %4012 = vst [vmem:[#allocation4 + $0xf0] sm:$0xff] %v3976
        %4013 = vst [vmem:[#allocation4 + $0xf8] sm:$0xff] %v3977
        %4014 = vst [vmem:[#allocation4 + $0x100] sm:$0xff] %v3978
        %4015 = vst [vmem:[#allocation4 + $0x108] sm:$0xff] %v3979
        %4016 = vst [vmem:[#allocation4 + $0x110] sm:$0xff] %v3980
        %4017 = vst [vmem:[#allocation4 + $0x118] sm:$0xff] %v3981
        %s4018 = scalar_lea.vmem [#allocation2], 24
        %v4019 = vld [vmem:[%s4018] sm:$0xf]
        %v4020 = vld [vmem:[%s4018 + $0x4] sm:$0xf]
        %v4021 = vld [vmem:[%s4018 + $0xc] sm:$0xf]
        %v4022 = vld [vmem:[%s4018 + $0x10] sm:$0xf]
        %v4023 = vld [vmem:[%s4018 + $0x18] sm:$0xf]
        %v4024 = vld [vmem:[%s4018 + $0x1c] sm:$0xf]
        %v4025 = vld [vmem:[%s4018 + $0x24] sm:$0xf]
        %v4026 = vld [vmem:[%s4018 + $0x28] sm:$0xf]
        %v4027 = vld [vmem:[%s4018 + $0x30] sm:$0xf]
        %v4028 = vld [vmem:[%s4018 + $0x34] sm:$0xf]
        %v4029 = vld [vmem:[%s4018 + $0x3c] sm:$0xf]
        %v4030 = vld [vmem:[%s4018 + $0x40] sm:$0xf]
        %v4031 = vld [vmem:[%s4018 + $0x48] sm:$0xf]
        %v4032 = vld [vmem:[%s4018 + $0x4c] sm:$0xf]
        %v4033 = vld [vmem:[%s4018 + $0x54] sm:$0xf]
        %v4034 = vld [vmem:[%s4018 + $0x58] sm:$0xf]
        %v4035 = vld [vmem:[%s4018 + $0x60] sm:$0xf]
        %v4036 = vld [vmem:[%s4018 + $0x64] sm:$0xf]
        %v4037 = vld [vmem:[%s4018 + $0x6c] sm:$0xf]
        %v4038 = vld [vmem:[%s4018 + $0x70] sm:$0xf]
        %v4039 = vld [vmem:[%s4018 + $0x78] sm:$0xf]
        %v4040 = vld [vmem:[%s4018 + $0x7c] sm:$0xf]
        %v4041 = vld [vmem:[%s4018 + $0x84] sm:$0xf]
        %v4042 = vld [vmem:[%s4018 + $0x88] sm:$0xf]
        %v4043 = vld [vmem:[%s4018 + $0x90] sm:$0xf]
        %v4044 = vld [vmem:[%s4018 + $0x94] sm:$0xf]
        %v4045 = vld [vmem:[%s4018 + $0x9c] sm:$0xf]
        %v4046 = vld [vmem:[%s4018 + $0xa0] sm:$0xf]
        %v4047 = vld [vmem:[%s4018 + $0xa8] sm:$0xf]
        %v4048 = vld [vmem:[%s4018 + $0xac] sm:$0xf]
        %v4049 = vld [vmem:[%s4018 + $0xb4] sm:$0xf]
        %v4050 = vld [vmem:[%s4018 + $0xb8] sm:$0xf]
        %v4051 = vld [vmem:[%s4018 + $0xc0] sm:$0xf]
        %v4052 = vld [vmem:[%s4018 + $0xc4] sm:$0xf]
        %v4053 = vld [vmem:[%s4018 + $0xcc] sm:$0xf]
        %v4054 = vld [vmem:[%s4018 + $0xd0] sm:$0xf]
        %s4055 = scalar_lea.vmem %s1, 384
        %v4056 = vld [vmem:[%s4055] sm:$0xf]
        %v4057 = vld [vmem:[%s4055 + $0x4] sm:$0xf]
        %v4058 = vld [vmem:[%s4055 + $0x8] sm:$0xf]
        %v4059 = vld [vmem:[%s4055 + $0xc] sm:$0xf]
        %v4060 = vld [vmem:[%s4055 + $0x10] sm:$0xf]
        %v4061 = vld [vmem:[%s4055 + $0x14] sm:$0xf]
        %v4062 = vld [vmem:[%s4055 + $0x18] sm:$0xf]
        %v4063 = vld [vmem:[%s4055 + $0x1c] sm:$0xf]
        %v4064 = vld [vmem:[%s4055 + $0x20] sm:$0xf]
        %v4065 = vld [vmem:[%s4055 + $0x24] sm:$0xf]
        %v4066 = vld [vmem:[%s4055 + $0x28] sm:$0xf]
        %v4067 = vld [vmem:[%s4055 + $0x2c] sm:$0xf]
        %v4068 = vld [vmem:[%s4055 + $0x30] sm:$0xf]
        %v4069 = vld [vmem:[%s4055 + $0x34] sm:$0xf]
        %v4070 = vld [vmem:[%s4055 + $0x38] sm:$0xf]
        %v4071 = vld [vmem:[%s4055 + $0x3c] sm:$0xf]
        %v4108 = vunpack.c.l.b16 %v4019
        %v4109 = vunpack.c.l.b16 %v4020
        %v4110 = vunpack.c.l.b16 %v4021
        %v4111 = vunpack.c.l.b16 %v4022
        %v4112 = vunpack.c.l.b16 %v4023
        %v4113 = vunpack.c.l.b16 %v4024
        %v4114 = vunpack.c.l.b16 %v4025
        %v4115 = vunpack.c.l.b16 %v4026
        %v4116 = vunpack.c.l.b16 %v4027
        %v4117 = vunpack.c.l.b16 %v4028
        %v4118 = vunpack.c.l.b16 %v4029
        %v4119 = vunpack.c.l.b16 %v4030
        %v4120 = vunpack.c.l.b16 %v4031
        %v4121 = vunpack.c.l.b16 %v4032
        %v4122 = vunpack.c.l.b16 %v4033
        %v4123 = vunpack.c.l.b16 %v4034
        %v4124 = vunpack.c.l.b16 %v4035
        %v4125 = vunpack.c.l.b16 %v4036
        %v4126 = vunpack.c.l.b16 %v4037
        %v4127 = vunpack.c.l.b16 %v4038
        %v4128 = vunpack.c.l.b16 %v4039
        %v4129 = vunpack.c.l.b16 %v4040
        %v4130 = vunpack.c.l.b16 %v4041
        %v4131 = vunpack.c.l.b16 %v4042
        %v4132 = vunpack.c.l.b16 %v4043
        %v4133 = vunpack.c.l.b16 %v4044
        %v4134 = vunpack.c.l.b16 %v4045
        %v4135 = vunpack.c.l.b16 %v4046
        %v4136 = vunpack.c.l.b16 %v4047
        %v4137 = vunpack.c.l.b16 %v4048
        %v4138 = vunpack.c.l.b16 %v4049
        %v4139 = vunpack.c.l.b16 %v4050
        %v4140 = vunpack.c.l.b16 %v4051
        %v4141 = vunpack.c.l.b16 %v4052
        %v4142 = vunpack.c.l.b16 %v4053
        %v4143 = vunpack.c.l.b16 %v4054
        %v4144 = vpack.c.b16 %v4109, %v4108
        %v4145 = vpack.c.b16 %v4111, %v4110
        %v4146 = vpack.c.b16 %v4113, %v4112
        %v4147 = vpack.c.b16 %v4115, %v4114
        %v4148 = vpack.c.b16 %v4117, %v4116
        %v4149 = vpack.c.b16 %v4119, %v4118
        %v4150 = vpack.c.b16 %v4121, %v4120
        %v4151 = vpack.c.b16 %v4123, %v4122
        %v4152 = vpack.c.b16 %v4125, %v4124
        %v4153 = vpack.c.b16 %v4127, %v4126
        %v4154 = vpack.c.b16 %v4129, %v4128
        %v4155 = vpack.c.b16 %v4131, %v4130
        %v4156 = vpack.c.b16 %v4133, %v4132
        %v4157 = vpack.c.b16 %v4135, %v4134
        %v4158 = vpack.c.b16 %v4137, %v4136
        %v4159 = vpack.c.b16 %v4139, %v4138
        %v4160 = vpack.c.b16 %v4141, %v4140
        %v4161 = vpack.c.b16 %v4143, %v4142
        %v4196 = vunpack.c.l.b16 %v4056
        %v4197 = vunpack.c.l.b16 %v4057
        %v4198 = vunpack.c.l.b16 %v4058
        %v4199 = vunpack.c.l.b16 %v4059
        %v4200 = vunpack.c.l.b16 %v4060
        %v4201 = vunpack.c.l.b16 %v4061
        %v4202 = vunpack.c.l.b16 %v4062
        %v4203 = vunpack.c.l.b16 %v4063
        %v4204 = vunpack.c.l.b16 %v4064
        %v4205 = vunpack.c.l.b16 %v4065
        %v4206 = vunpack.c.l.b16 %v4066
        %v4207 = vunpack.c.l.b16 %v4067
        %v4208 = vunpack.c.l.b16 %v4068
        %v4209 = vunpack.c.l.b16 %v4069
        %v4210 = vunpack.c.l.b16 %v4070
        %v4211 = vunpack.c.l.b16 %v4071
        %v4212 = vpack.c.b16 %v4197, %v4196
        %v4213 = vpack.c.b16 %v4199, %v4198
        %v4214 = vpack.c.b16 %v4201, %v4200
        %v4215 = vpack.c.b16 %v4203, %v4202
        %v4216 = vpack.c.b16 %v4205, %v4204
        %v4217 = vpack.c.b16 %v4207, %v4206
        %v4218 = vpack.c.b16 %v4209, %v4208
        %v4219 = vpack.c.b16 %v4211, %v4210
        %4228 = vmatpush.bf16.msra.mxu0 %v4219
        %4229 = vmatpush.bf16.msra.mxu0 %v4218
        %4230 = vmatpush.bf16.msra.mxu0 %v4217
        %4231 = vmatpush.bf16.msra.mxu0 %v4216
        %4232 = vmatpush.bf16.msra.mxu0 %v4215
        %4233 = vmatpush.bf16.msra.mxu0 %v4214
        %4234 = vmatpush.bf16.msra.mxu0 %v4213
        %4235 = vmatpush.bf16.msra.mxu0 %v4212
        %4236 = vmatmul.bf16.gmra.mxu0 %v4144
        %v4237 = vpop.f32.mrf.mxu0
        %v4238 = vadd.f32 0.0, %v4237
        %v4239 = vpop.f32.mrf.mxu0
        %v4240 = vadd.f32 0.0, %v4239
        %4241 = vmatmul.bf16.gmra.mxu0 %v4145
        %v4242 = vpop.f32.mrf.mxu0
        %v4243 = vadd.f32 0.0, %v4242
        %v4244 = vpop.f32.mrf.mxu0
        %v4245 = vadd.f32 0.0, %v4244
        %4246 = vmatmul.bf16.gmra.mxu0 %v4146
        %v4247 = vpop.f32.mrf.mxu0
        %v4248 = vadd.f32 0.0, %v4247
        %v4249 = vpop.f32.mrf.mxu0
        %v4250 = vadd.f32 0.0, %v4249
        %4251 = vmatmul.bf16.gmra.mxu0 %v4147
        %v4252 = vpop.f32.mrf.mxu0
        %v4253 = vadd.f32 0.0, %v4252
        %v4254 = vpop.f32.mrf.mxu0
        %v4255 = vadd.f32 0.0, %v4254
        %4256 = vmatmul.bf16.gmra.mxu0 %v4148
        %v4257 = vpop.f32.mrf.mxu0
        %v4258 = vadd.f32 0.0, %v4257
        %v4259 = vpop.f32.mrf.mxu0
        %v4260 = vadd.f32 0.0, %v4259
        %4261 = vmatmul.bf16.gmra.mxu0 %v4149
        %v4262 = vpop.f32.mrf.mxu0
        %v4263 = vadd.f32 0.0, %v4262
        %v4264 = vpop.f32.mrf.mxu0
        %v4265 = vadd.f32 0.0, %v4264
        %4266 = vmatmul.bf16.gmra.mxu0 %v4150
        %v4267 = vpop.f32.mrf.mxu0
        %v4268 = vadd.f32 0.0, %v4267
        %v4269 = vpop.f32.mrf.mxu0
        %v4270 = vadd.f32 0.0, %v4269
        %4271 = vmatmul.bf16.gmra.mxu0 %v4151
        %v4272 = vpop.f32.mrf.mxu0
        %v4273 = vadd.f32 0.0, %v4272
        %v4274 = vpop.f32.mrf.mxu0
        %v4275 = vadd.f32 0.0, %v4274
        %4276 = vmatmul.bf16.gmra.mxu0 %v4152
        %v4277 = vpop.f32.mrf.mxu0
        %v4278 = vadd.f32 0.0, %v4277
        %v4279 = vpop.f32.mrf.mxu0
        %v4280 = vadd.f32 0.0, %v4279
        %4281 = vmatmul.bf16.gmra.mxu0 %v4153
        %v4282 = vpop.f32.mrf.mxu0
        %v4283 = vadd.f32 0.0, %v4282
        %v4284 = vpop.f32.mrf.mxu0
        %v4285 = vadd.f32 0.0, %v4284
        %4286 = vmatmul.bf16.gmra.mxu0 %v4154
        %v4287 = vpop.f32.mrf.mxu0
        %v4288 = vadd.f32 0.0, %v4287
        %v4289 = vpop.f32.mrf.mxu0
        %v4290 = vadd.f32 0.0, %v4289
        %4291 = vmatmul.bf16.gmra.mxu0 %v4155
        %v4292 = vpop.f32.mrf.mxu0
        %v4293 = vadd.f32 0.0, %v4292
        %v4294 = vpop.f32.mrf.mxu0
        %v4295 = vadd.f32 0.0, %v4294
        %4296 = vmatmul.bf16.gmra.mxu0 %v4156
        %v4297 = vpop.f32.mrf.mxu0
        %v4298 = vadd.f32 0.0, %v4297
        %v4299 = vpop.f32.mrf.mxu0
        %v4300 = vadd.f32 0.0, %v4299
        %4301 = vmatmul.bf16.gmra.mxu0 %v4157
        %v4302 = vpop.f32.mrf.mxu0
        %v4303 = vadd.f32 0.0, %v4302
        %v4304 = vpop.f32.mrf.mxu0
        %v4305 = vadd.f32 0.0, %v4304
        %4306 = vmatmul.bf16.gmra.mxu0 %v4158
        %v4307 = vpop.f32.mrf.mxu0
        %v4308 = vadd.f32 0.0, %v4307
        %v4309 = vpop.f32.mrf.mxu0
        %v4310 = vadd.f32 0.0, %v4309
        %4311 = vmatmul.bf16.gmra.mxu0 %v4159
        %v4312 = vpop.f32.mrf.mxu0
        %v4313 = vadd.f32 0.0, %v4312
        %v4314 = vpop.f32.mrf.mxu0
        %v4315 = vadd.f32 0.0, %v4314
        %4316 = vmatmul.bf16.gmra.mxu0 %v4160
        %v4317 = vpop.f32.mrf.mxu0
        %v4318 = vadd.f32 0.0, %v4317
        %v4319 = vpop.f32.mrf.mxu0
        %v4320 = vadd.f32 0.0, %v4319
        %4321 = vmatmul.bf16.gmra.mxu0 %v4161
        %v4322 = vpop.f32.mrf.mxu0
        %v4323 = vadd.f32 0.0, %v4322
        %v4324 = vpop.f32.mrf.mxu0
        %v4325 = vadd.f32 0.0, %v4324
        %4326 = vdwg.mxu0
        %v4327 = vld [vmem:[#allocation4] sm:$0xff]
        %v4328 = vld [vmem:[#allocation4 + $0x8] sm:$0xff]
        %v4329 = vld [vmem:[#allocation4 + $0x10] sm:$0xff]
        %v4330 = vld [vmem:[#allocation4 + $0x18] sm:$0xff]
        %v4331 = vld [vmem:[#allocation4 + $0x20] sm:$0xff]
        %v4332 = vld [vmem:[#allocation4 + $0x28] sm:$0xff]
        %v4333 = vld [vmem:[#allocation4 + $0x30] sm:$0xff]
        %v4334 = vld [vmem:[#allocation4 + $0x38] sm:$0xff]
        %v4335 = vld [vmem:[#allocation4 + $0x40] sm:$0xff]
        %v4336 = vld [vmem:[#allocation4 + $0x48] sm:$0xff]
        %v4337 = vld [vmem:[#allocation4 + $0x50] sm:$0xff]
        %v4338 = vld [vmem:[#allocation4 + $0x58] sm:$0xff]
        %v4339 = vld [vmem:[#allocation4 + $0x60] sm:$0xff]
        %v4340 = vld [vmem:[#allocation4 + $0x68] sm:$0xff]
        %v4341 = vld [vmem:[#allocation4 + $0x70] sm:$0xff]
        %v4342 = vld [vmem:[#allocation4 + $0x78] sm:$0xff]
        %v4343 = vld [vmem:[#allocation4 + $0x80] sm:$0xff]
        %v4344 = vld [vmem:[#allocation4 + $0x88] sm:$0xff]
        %v4345 = vld [vmem:[#allocation4 + $0x90] sm:$0xff]
        %v4346 = vld [vmem:[#allocation4 + $0x98] sm:$0xff]
        %v4347 = vld [vmem:[#allocation4 + $0xa0] sm:$0xff]
        %v4348 = vld [vmem:[#allocation4 + $0xa8] sm:$0xff]
        %v4349 = vld [vmem:[#allocation4 + $0xb0] sm:$0xff]
        %v4350 = vld [vmem:[#allocation4 + $0xb8] sm:$0xff]
        %v4351 = vld [vmem:[#allocation4 + $0xc0] sm:$0xff]
        %v4352 = vld [vmem:[#allocation4 + $0xc8] sm:$0xff]
        %v4353 = vld [vmem:[#allocation4 + $0xd0] sm:$0xff]
        %v4354 = vld [vmem:[#allocation4 + $0xd8] sm:$0xff]
        %v4355 = vld [vmem:[#allocation4 + $0xe0] sm:$0xff]
        %v4356 = vld [vmem:[#allocation4 + $0xe8] sm:$0xff]
        %v4357 = vld [vmem:[#allocation4 + $0xf0] sm:$0xff]
        %v4358 = vld [vmem:[#allocation4 + $0xf8] sm:$0xff]
        %v4359 = vld [vmem:[#allocation4 + $0x100] sm:$0xff]
        %v4360 = vld [vmem:[#allocation4 + $0x108] sm:$0xff]
        %v4361 = vld [vmem:[#allocation4 + $0x110] sm:$0xff]
        %v4362 = vld [vmem:[#allocation4 + $0x118] sm:$0xff]
        %v4363 = vadd.f32 %v4327, %v4238
        %v4364 = vadd.f32 %v4328, %v4240
        %v4365 = vadd.f32 %v4329, %v4243
        %v4366 = vadd.f32 %v4330, %v4245
        %v4367 = vadd.f32 %v4331, %v4248
        %v4368 = vadd.f32 %v4332, %v4250
        %v4369 = vadd.f32 %v4333, %v4253
        %v4370 = vadd.f32 %v4334, %v4255
        %v4371 = vadd.f32 %v4335, %v4258
        %v4372 = vadd.f32 %v4336, %v4260
        %v4373 = vadd.f32 %v4337, %v4263
        %v4374 = vadd.f32 %v4338, %v4265
        %v4375 = vadd.f32 %v4339, %v4268
        %v4376 = vadd.f32 %v4340, %v4270
        %v4377 = vadd.f32 %v4341, %v4273
        %v4378 = vadd.f32 %v4342, %v4275
        %v4379 = vadd.f32 %v4343, %v4278
        %v4380 = vadd.f32 %v4344, %v4280
        %v4381 = vadd.f32 %v4345, %v4283
        %v4382 = vadd.f32 %v4346, %v4285
        %v4383 = vadd.f32 %v4347, %v4288
        %v4384 = vadd.f32 %v4348, %v4290
        %v4385 = vadd.f32 %v4349, %v4293
        %v4386 = vadd.f32 %v4350, %v4295
        %v4387 = vadd.f32 %v4351, %v4298
        %v4388 = vadd.f32 %v4352, %v4300
        %v4389 = vadd.f32 %v4353, %v4303
        %v4390 = vadd.f32 %v4354, %v4305
        %v4391 = vadd.f32 %v4355, %v4308
        %v4392 = vadd.f32 %v4356, %v4310
        %v4393 = vadd.f32 %v4357, %v4313
        %v4394 = vadd.f32 %v4358, %v4315
        %v4395 = vadd.f32 %v4359, %v4318
        %v4396 = vadd.f32 %v4360, %v4320
        %v4397 = vadd.f32 %v4361, %v4323
        %v4398 = vadd.f32 %v4362, %v4325
        %4399 = vst [vmem:[#allocation4] sm:$0xff] %v4363
        %4400 = vst [vmem:[#allocation4 + $0x8] sm:$0xff] %v4364
        %4401 = vst [vmem:[#allocation4 + $0x10] sm:$0xff] %v4365
        %4402 = vst [vmem:[#allocation4 + $0x18] sm:$0xff] %v4366
        %4403 = vst [vmem:[#allocation4 + $0x20] sm:$0xff] %v4367
        %4404 = vst [vmem:[#allocation4 + $0x28] sm:$0xff] %v4368
        %4405 = vst [vmem:[#allocation4 + $0x30] sm:$0xff] %v4369
        %4406 = vst [vmem:[#allocation4 + $0x38] sm:$0xff] %v4370
        %4407 = vst [vmem:[#allocation4 + $0x40] sm:$0xff] %v4371
        %4408 = vst [vmem:[#allocation4 + $0x48] sm:$0xff] %v4372
        %4409 = vst [vmem:[#allocation4 + $0x50] sm:$0xff] %v4373
        %4410 = vst [vmem:[#allocation4 + $0x58] sm:$0xff] %v4374
        %4411 = vst [vmem:[#allocation4 + $0x60] sm:$0xff] %v4375
        %4412 = vst [vmem:[#allocation4 + $0x68] sm:$0xff] %v4376
        %4413 = vst [vmem:[#allocation4 + $0x70] sm:$0xff] %v4377
        %4414 = vst [vmem:[#allocation4 + $0x78] sm:$0xff] %v4378
        %4415 = vst [vmem:[#allocation4 + $0x80] sm:$0xff] %v4379
        %4416 = vst [vmem:[#allocation4 + $0x88] sm:$0xff] %v4380
        %4417 = vst [vmem:[#allocation4 + $0x90] sm:$0xff] %v4381
        %4418 = vst [vmem:[#allocation4 + $0x98] sm:$0xff] %v4382
        %4419 = vst [vmem:[#allocation4 + $0xa0] sm:$0xff] %v4383
        %4420 = vst [vmem:[#allocation4 + $0xa8] sm:$0xff] %v4384
        %4421 = vst [vmem:[#allocation4 + $0xb0] sm:$0xff] %v4385
        %4422 = vst [vmem:[#allocation4 + $0xb8] sm:$0xff] %v4386
        %4423 = vst [vmem:[#allocation4 + $0xc0] sm:$0xff] %v4387
        %4424 = vst [vmem:[#allocation4 + $0xc8] sm:$0xff] %v4388
        %4425 = vst [vmem:[#allocation4 + $0xd0] sm:$0xff] %v4389
        %4426 = vst [vmem:[#allocation4 + $0xd8] sm:$0xff] %v4390
        %4427 = vst [vmem:[#allocation4 + $0xe0] sm:$0xff] %v4391
        %4428 = vst [vmem:[#allocation4 + $0xe8] sm:$0xff] %v4392
        %4429 = vst [vmem:[#allocation4 + $0xf0] sm:$0xff] %v4393
        %4430 = vst [vmem:[#allocation4 + $0xf8] sm:$0xff] %v4394
        %4431 = vst [vmem:[#allocation4 + $0x100] sm:$0xff] %v4395
        %4432 = vst [vmem:[#allocation4 + $0x108] sm:$0xff] %v4396
        %4433 = vst [vmem:[#allocation4 + $0x110] sm:$0xff] %v4397
        %4434 = vst [vmem:[#allocation4 + $0x118] sm:$0xff] %v4398
        %v4435 = vld [vmem:[%s4018] sm:$0xf]
        %v4436 = vld [vmem:[%s4018 + $0x4] sm:$0xf]
        %v4437 = vld [vmem:[%s4018 + $0x8] sm:$0x1]
        %v4438 = vld [vmem:[%s4018 + $0xc] sm:$0xf]
        %v4439 = vld [vmem:[%s4018 + $0x10] sm:$0xf]
        %v4440 = vld [vmem:[%s4018 + $0x14] sm:$0x1]
        %v4441 = vld [vmem:[%s4018 + $0x18] sm:$0xf]
        %v4442 = vld [vmem:[%s4018 + $0x1c] sm:$0xf]
        %v4443 = vld [vmem:[%s4018 + $0x20] sm:$0x1]
        %v4444 = vld [vmem:[%s4018 + $0x24] sm:$0xf]
        %v4445 = vld [vmem:[%s4018 + $0x28] sm:$0xf]
        %v4446 = vld [vmem:[%s4018 + $0x2c] sm:$0x1]
        %v4447 = vld [vmem:[%s4018 + $0x30] sm:$0xf]
        %v4448 = vld [vmem:[%s4018 + $0x34] sm:$0xf]
        %v4449 = vld [vmem:[%s4018 + $0x38] sm:$0x1]
        %v4450 = vld [vmem:[%s4018 + $0x3c] sm:$0xf]
        %v4451 = vld [vmem:[%s4018 + $0x40] sm:$0xf]
        %v4452 = vld [vmem:[%s4018 + $0x44] sm:$0x1]
        %v4453 = vld [vmem:[%s4018 + $0x48] sm:$0xf]
        %v4454 = vld [vmem:[%s4018 + $0x4c] sm:$0xf]
        %v4455 = vld [vmem:[%s4018 + $0x50] sm:$0x1]
        %v4456 = vld [vmem:[%s4018 + $0x54] sm:$0xf]
        %v4457 = vld [vmem:[%s4018 + $0x58] sm:$0xf]
        %v4458 = vld [vmem:[%s4018 + $0x5c] sm:$0x1]
        %v4459 = vld [vmem:[%s4018 + $0x60] sm:$0xf]
        %v4460 = vld [vmem:[%s4018 + $0x64] sm:$0xf]
        %v4461 = vld [vmem:[%s4018 + $0x68] sm:$0x1]
        %v4462 = vld [vmem:[%s4018 + $0x6c] sm:$0xf]
        %v4463 = vld [vmem:[%s4018 + $0x70] sm:$0xf]
        %v4464 = vld [vmem:[%s4018 + $0x74] sm:$0x1]
        %v4465 = vld [vmem:[%s4018 + $0x78] sm:$0xf]
        %v4466 = vld [vmem:[%s4018 + $0x7c] sm:$0xf]
        %v4467 = vld [vmem:[%s4018 + $0x80] sm:$0x1]
        %v4468 = vld [vmem:[%s4018 + $0x84] sm:$0xf]
        %v4469 = vld [vmem:[%s4018 + $0x88] sm:$0xf]
        %v4470 = vld [vmem:[%s4018 + $0x8c] sm:$0x1]
        %v4471 = vld [vmem:[%s4018 + $0x90] sm:$0xf]
        %v4472 = vld [vmem:[%s4018 + $0x94] sm:$0xf]
        %v4473 = vld [vmem:[%s4018 + $0x98] sm:$0x1]
        %v4474 = vld [vmem:[%s4018 + $0x9c] sm:$0xf]
        %v4475 = vld [vmem:[%s4018 + $0xa0] sm:$0xf]
        %v4476 = vld [vmem:[%s4018 + $0xa4] sm:$0x1]
        %v4477 = vld [vmem:[%s4018 + $0xa8] sm:$0xf]
        %v4478 = vld [vmem:[%s4018 + $0xac] sm:$0xf]
        %v4479 = vld [vmem:[%s4018 + $0xb0] sm:$0x1]
        %v4480 = vld [vmem:[%s4018 + $0xb4] sm:$0xf]
        %v4481 = vld [vmem:[%s4018 + $0xb8] sm:$0xf]
        %v4482 = vld [vmem:[%s4018 + $0xbc] sm:$0x1]
        %v4483 = vld [vmem:[%s4018 + $0xc0] sm:$0xf]
        %v4484 = vld [vmem:[%s4018 + $0xc4] sm:$0xf]
        %v4485 = vld [vmem:[%s4018 + $0xc8] sm:$0x1]
        %v4486 = vld [vmem:[%s4018 + $0xcc] sm:$0xf]
        %v4487 = vld [vmem:[%s4018 + $0xd0] sm:$0xf]
        %v4488 = vld [vmem:[%s4018 + $0xd4] sm:$0x1]
        %v4490 = vshrl.u32 %v4435, 16
        %v4492 = vrot.slane %v4490, 4
        %v4493 = vshll.u32 %v4435, 16
        %v4495 = vrot.slane %v4493, 5
        %v4496 = vor.u32 %v4492, %v4495
        %v4497 = vrot.slane %v4496, 4
        %v4499 = vshll.u32 %v4436, 16
        %v4501 = vrot.slane %v4499, 5
        %v4502 = vsel %vm835, %v4497, %v4501
        %v4503 = vshrl.u32 %v4436, 16
        %v4505 = vrot.slane %v4503, 4
        %v4506 = vor.u32 %v4505, %v4501
        %v4507 = vrot.slane %v4506, 4
        %v4509 = vshll.u32 %v4437, 16
        %v4511 = vrot.slane %v4509, 5
        %v4512 = vsel %vm835, %v4507, %v4511
        %v4514 = vshrl.u32 %v4438, 16
        %v4516 = vrot.slane %v4514, 4
        %v4517 = vshll.u32 %v4438, 16
        %v4519 = vrot.slane %v4517, 5
        %v4520 = vor.u32 %v4516, %v4519
        %v4521 = vrot.slane %v4520, 4
        %v4523 = vshll.u32 %v4439, 16
        %v4525 = vrot.slane %v4523, 5
        %v4526 = vsel %vm835, %v4521, %v4525
        %v4527 = vshrl.u32 %v4439, 16
        %v4529 = vrot.slane %v4527, 4
        %v4530 = vor.u32 %v4529, %v4525
        %v4531 = vrot.slane %v4530, 4
        %v4533 = vshll.u32 %v4440, 16
        %v4535 = vrot.slane %v4533, 5
        %v4536 = vsel %vm835, %v4531, %v4535
        %v4538 = vshrl.u32 %v4441, 16
        %v4540 = vrot.slane %v4538, 4
        %v4541 = vshll.u32 %v4441, 16
        %v4543 = vrot.slane %v4541, 5
        %v4544 = vor.u32 %v4540, %v4543
        %v4545 = vrot.slane %v4544, 4
        %v4547 = vshll.u32 %v4442, 16
        %v4549 = vrot.slane %v4547, 5
        %v4550 = vsel %vm835, %v4545, %v4549
        %v4551 = vshrl.u32 %v4442, 16
        %v4553 = vrot.slane %v4551, 4
        %v4554 = vor.u32 %v4553, %v4549
        %v4555 = vrot.slane %v4554, 4
        %v4557 = vshll.u32 %v4443, 16
        %v4559 = vrot.slane %v4557, 5
        %v4560 = vsel %vm835, %v4555, %v4559
        %v4562 = vshrl.u32 %v4444, 16
        %v4564 = vrot.slane %v4562, 4
        %v4565 = vshll.u32 %v4444, 16
        %v4567 = vrot.slane %v4565, 5
        %v4568 = vor.u32 %v4564, %v4567
        %v4569 = vrot.slane %v4568, 4
        %v4571 = vshll.u32 %v4445, 16
        %v4573 = vrot.slane %v4571, 5
        %v4574 = vsel %vm835, %v4569, %v4573
        %v4575 = vshrl.u32 %v4445, 16
        %v4577 = vrot.slane %v4575, 4
        %v4578 = vor.u32 %v4577, %v4573
        %v4579 = vrot.slane %v4578, 4
        %v4581 = vshll.u32 %v4446, 16
        %v4583 = vrot.slane %v4581, 5
        %v4584 = vsel %vm835, %v4579, %v4583
        %v4586 = vshrl.u32 %v4447, 16
        %v4588 = vrot.slane %v4586, 4
        %v4589 = vshll.u32 %v4447, 16
        %v4591 = vrot.slane %v4589, 5
        %v4592 = vor.u32 %v4588, %v4591
        %v4593 = vrot.slane %v4592, 4
        %v4595 = vshll.u32 %v4448, 16
        %v4597 = vrot.slane %v4595, 5
        %v4598 = vsel %vm835, %v4593, %v4597
        %v4599 = vshrl.u32 %v4448, 16
        %v4601 = vrot.slane %v4599, 4
        %v4602 = vor.u32 %v4601, %v4597
        %v4603 = vrot.slane %v4602, 4
        %v4605 = vshll.u32 %v4449, 16
        %v4607 = vrot.slane %v4605, 5
        %v4608 = vsel %vm835, %v4603, %v4607
        %v4610 = vshrl.u32 %v4450, 16
        %v4612 = vrot.slane %v4610, 4
        %v4613 = vshll.u32 %v4450, 16
        %v4615 = vrot.slane %v4613, 5
        %v4616 = vor.u32 %v4612, %v4615
        %v4617 = vrot.slane %v4616, 4
        %v4619 = vshll.u32 %v4451, 16
        %v4621 = vrot.slane %v4619, 5
        %v4622 = vsel %vm835, %v4617, %v4621
        %v4623 = vshrl.u32 %v4451, 16
        %v4625 = vrot.slane %v4623, 4
        %v4626 = vor.u32 %v4625, %v4621
        %v4627 = vrot.slane %v4626, 4
        %v4629 = vshll.u32 %v4452, 16
        %v4631 = vrot.slane %v4629, 5
        %v4632 = vsel %vm835, %v4627, %v4631
        %v4634 = vshrl.u32 %v4453, 16
        %v4636 = vrot.slane %v4634, 4
        %v4637 = vshll.u32 %v4453, 16
        %v4639 = vrot.slane %v4637, 5
        %v4640 = vor.u32 %v4636, %v4639
        %v4641 = vrot.slane %v4640, 4
        %v4643 = vshll.u32 %v4454, 16
        %v4645 = vrot.slane %v4643, 5
        %v4646 = vsel %vm835, %v4641, %v4645
        %v4647 = vshrl.u32 %v4454, 16
        %v4649 = vrot.slane %v4647, 4
        %v4650 = vor.u32 %v4649, %v4645
        %v4651 = vrot.slane %v4650, 4
        %v4653 = vshll.u32 %v4455, 16
        %v4655 = vrot.slane %v4653, 5
        %v4656 = vsel %vm835, %v4651, %v4655
        %v4658 = vshrl.u32 %v4456, 16
        %v4660 = vrot.slane %v4658, 4
        %v4661 = vshll.u32 %v4456, 16
        %v4663 = vrot.slane %v4661, 5
        %v4664 = vor.u32 %v4660, %v4663
        %v4665 = vrot.slane %v4664, 4
        %v4667 = vshll.u32 %v4457, 16
        %v4669 = vrot.slane %v4667, 5
        %v4670 = vsel %vm835, %v4665, %v4669
        %v4671 = vshrl.u32 %v4457, 16
        %v4673 = vrot.slane %v4671, 4
        %v4674 = vor.u32 %v4673, %v4669
        %v4675 = vrot.slane %v4674, 4
        %v4677 = vshll.u32 %v4458, 16
        %v4679 = vrot.slane %v4677, 5
        %v4680 = vsel %vm835, %v4675, %v4679
        %v4682 = vshrl.u32 %v4459, 16
        %v4684 = vrot.slane %v4682, 4
        %v4685 = vshll.u32 %v4459, 16
        %v4687 = vrot.slane %v4685, 5
        %v4688 = vor.u32 %v4684, %v4687
        %v4689 = vrot.slane %v4688, 4
        %v4691 = vshll.u32 %v4460, 16
        %v4693 = vrot.slane %v4691, 5
        %v4694 = vsel %vm835, %v4689, %v4693
        %v4695 = vshrl.u32 %v4460, 16
        %v4697 = vrot.slane %v4695, 4
        %v4698 = vor.u32 %v4697, %v4693
        %v4699 = vrot.slane %v4698, 4
        %v4701 = vshll.u32 %v4461, 16
        %v4703 = vrot.slane %v4701, 5
        %v4704 = vsel %vm835, %v4699, %v4703
        %v4706 = vshrl.u32 %v4462, 16
        %v4708 = vrot.slane %v4706, 4
        %v4709 = vshll.u32 %v4462, 16
        %v4711 = vrot.slane %v4709, 5
        %v4712 = vor.u32 %v4708, %v4711
        %v4713 = vrot.slane %v4712, 4
        %v4715 = vshll.u32 %v4463, 16
        %v4717 = vrot.slane %v4715, 5
        %v4718 = vsel %vm835, %v4713, %v4717
        %v4719 = vshrl.u32 %v4463, 16
        %v4721 = vrot.slane %v4719, 4
        %v4722 = vor.u32 %v4721, %v4717
        %v4723 = vrot.slane %v4722, 4
        %v4725 = vshll.u32 %v4464, 16
        %v4727 = vrot.slane %v4725, 5
        %v4728 = vsel %vm835, %v4723, %v4727
        %v4730 = vshrl.u32 %v4465, 16
        %v4732 = vrot.slane %v4730, 4
        %v4733 = vshll.u32 %v4465, 16
        %v4735 = vrot.slane %v4733, 5
        %v4736 = vor.u32 %v4732, %v4735
        %v4737 = vrot.slane %v4736, 4
        %v4739 = vshll.u32 %v4466, 16
        %v4741 = vrot.slane %v4739, 5
        %v4742 = vsel %vm835, %v4737, %v4741
        %v4743 = vshrl.u32 %v4466, 16
        %v4745 = vrot.slane %v4743, 4
        %v4746 = vor.u32 %v4745, %v4741
        %v4747 = vrot.slane %v4746, 4
        %v4749 = vshll.u32 %v4467, 16
        %v4751 = vrot.slane %v4749, 5
        %v4752 = vsel %vm835, %v4747, %v4751
        %v4754 = vshrl.u32 %v4468, 16
        %v4756 = vrot.slane %v4754, 4
        %v4757 = vshll.u32 %v4468, 16
        %v4759 = vrot.slane %v4757, 5
        %v4760 = vor.u32 %v4756, %v4759
        %v4761 = vrot.slane %v4760, 4
        %v4763 = vshll.u32 %v4469, 16
        %v4765 = vrot.slane %v4763, 5
        %v4766 = vsel %vm835, %v4761, %v4765
        %v4767 = vshrl.u32 %v4469, 16
        %v4769 = vrot.slane %v4767, 4
        %v4770 = vor.u32 %v4769, %v4765
        %v4771 = vrot.slane %v4770, 4
        %v4773 = vshll.u32 %v4470, 16
        %v4775 = vrot.slane %v4773, 5
        %v4776 = vsel %vm835, %v4771, %v4775
        %v4778 = vshrl.u32 %v4471, 16
        %v4780 = vrot.slane %v4778, 4
        %v4781 = vshll.u32 %v4471, 16
        %v4783 = vrot.slane %v4781, 5
        %v4784 = vor.u32 %v4780, %v4783
        %v4785 = vrot.slane %v4784, 4
        %v4787 = vshll.u32 %v4472, 16
        %v4789 = vrot.slane %v4787, 5
        %v4790 = vsel %vm835, %v4785, %v4789
        %v4791 = vshrl.u32 %v4472, 16
        %v4793 = vrot.slane %v4791, 4
        %v4794 = vor.u32 %v4793, %v4789
        %v4795 = vrot.slane %v4794, 4
        %v4797 = vshll.u32 %v4473, 16
        %v4799 = vrot.slane %v4797, 5
        %v4800 = vsel %vm835, %v4795, %v4799
        %v4802 = vshrl.u32 %v4474, 16
        %v4804 = vrot.slane %v4802, 4
        %v4805 = vshll.u32 %v4474, 16
        %v4807 = vrot.slane %v4805, 5
        %v4808 = vor.u32 %v4804, %v4807
        %v4809 = vrot.slane %v4808, 4
        %v4811 = vshll.u32 %v4475, 16
        %v4813 = vrot.slane %v4811, 5
        %v4814 = vsel %vm835, %v4809, %v4813
        %v4815 = vshrl.u32 %v4475, 16
        %v4817 = vrot.slane %v4815, 4
        %v4818 = vor.u32 %v4817, %v4813
        %v4819 = vrot.slane %v4818, 4
        %v4821 = vshll.u32 %v4476, 16
        %v4823 = vrot.slane %v4821, 5
        %v4824 = vsel %vm835, %v4819, %v4823
        %v4826 = vshrl.u32 %v4477, 16
        %v4828 = vrot.slane %v4826, 4
        %v4829 = vshll.u32 %v4477, 16
        %v4831 = vrot.slane %v4829, 5
        %v4832 = vor.u32 %v4828, %v4831
        %v4833 = vrot.slane %v4832, 4
        %v4835 = vshll.u32 %v4478, 16
        %v4837 = vrot.slane %v4835, 5
        %v4838 = vsel %vm835, %v4833, %v4837
        %v4839 = vshrl.u32 %v4478, 16
        %v4841 = vrot.slane %v4839, 4
        %v4842 = vor.u32 %v4841, %v4837
        %v4843 = vrot.slane %v4842, 4
        %v4845 = vshll.u32 %v4479, 16
        %v4847 = vrot.slane %v4845, 5
        %v4848 = vsel %vm835, %v4843, %v4847
        %v4850 = vshrl.u32 %v4480, 16
        %v4852 = vrot.slane %v4850, 4
        %v4853 = vshll.u32 %v4480, 16
        %v4855 = vrot.slane %v4853, 5
        %v4856 = vor.u32 %v4852, %v4855
        %v4857 = vrot.slane %v4856, 4
        %v4859 = vshll.u32 %v4481, 16
        %v4861 = vrot.slane %v4859, 5
        %v4862 = vsel %vm835, %v4857, %v4861
        %v4863 = vshrl.u32 %v4481, 16
        %v4865 = vrot.slane %v4863, 4
        %v4866 = vor.u32 %v4865, %v4861
        %v4867 = vrot.slane %v4866, 4
        %v4869 = vshll.u32 %v4482, 16
        %v4871 = vrot.slane %v4869, 5
        %v4872 = vsel %vm835, %v4867, %v4871
        %v4874 = vshrl.u32 %v4483, 16
        %v4876 = vrot.slane %v4874, 4
        %v4877 = vshll.u32 %v4483, 16
        %v4879 = vrot.slane %v4877, 5
        %v4880 = vor.u32 %v4876, %v4879
        %v4881 = vrot.slane %v4880, 4
        %v4883 = vshll.u32 %v4484, 16
        %v4885 = vrot.slane %v4883, 5
        %v4886 = vsel %vm835, %v4881, %v4885
        %v4887 = vshrl.u32 %v4484, 16
        %v4889 = vrot.slane %v4887, 4
        %v4890 = vor.u32 %v4889, %v4885
        %v4891 = vrot.slane %v4890, 4
        %v4893 = vshll.u32 %v4485, 16
        %v4895 = vrot.slane %v4893, 5
        %v4896 = vsel %vm835, %v4891, %v4895
        %v4898 = vshrl.u32 %v4486, 16
        %v4900 = vrot.slane %v4898, 4
        %v4901 = vshll.u32 %v4486, 16
        %v4903 = vrot.slane %v4901, 5
        %v4904 = vor.u32 %v4900, %v4903
        %v4905 = vrot.slane %v4904, 4
        %v4907 = vshll.u32 %v4487, 16
        %v4909 = vrot.slane %v4907, 5
        %v4910 = vsel %vm835, %v4905, %v4909
        %v4911 = vshrl.u32 %v4487, 16
        %v4913 = vrot.slane %v4911, 4
        %v4914 = vor.u32 %v4913, %v4909
        %v4915 = vrot.slane %v4914, 4
        %v4917 = vshll.u32 %v4488, 16
        %v4919 = vrot.slane %v4917, 5
        %v4920 = vsel %vm835, %v4915, %v4919
        %s4921 = scalar_lea.vmem %s1, 448
        %v4922 = vld [vmem:[%s4921] sm:$0xf]
        %v4923 = vld [vmem:[%s4921 + $0x4] sm:$0xf]
        %v4924 = vld [vmem:[%s4921 + $0x8] sm:$0xf]
        %v4925 = vld [vmem:[%s4921 + $0xc] sm:$0xf]
        %v4926 = vld [vmem:[%s4921 + $0x10] sm:$0xf]
        %v4927 = vld [vmem:[%s4921 + $0x14] sm:$0xf]
        %v4928 = vld [vmem:[%s4921 + $0x18] sm:$0xf]
        %v4929 = vld [vmem:[%s4921 + $0x1c] sm:$0xf]
        %v4930 = vld [vmem:[%s4921 + $0x20] sm:$0xf]
        %v4931 = vld [vmem:[%s4921 + $0x24] sm:$0xf]
        %v4932 = vld [vmem:[%s4921 + $0x28] sm:$0xf]
        %v4933 = vld [vmem:[%s4921 + $0x2c] sm:$0xf]
        %v4934 = vld [vmem:[%s4921 + $0x30] sm:$0xf]
        %v4935 = vld [vmem:[%s4921 + $0x34] sm:$0xf]
        %v4936 = vld [vmem:[%s4921 + $0x38] sm:$0xf]
        %v4937 = vld [vmem:[%s4921 + $0x3c] sm:$0xf]
        %v4938 = vunpack.c.l.b16 %v4502
        %v4939 = vunpack.c.l.b16 %v4512
        %v4940 = vunpack.c.l.b16 %v4526
        %v4941 = vunpack.c.l.b16 %v4536
        %v4942 = vunpack.c.l.b16 %v4550
        %v4943 = vunpack.c.l.b16 %v4560
        %v4944 = vunpack.c.l.b16 %v4574
        %v4945 = vunpack.c.l.b16 %v4584
        %v4946 = vunpack.c.l.b16 %v4598
        %v4947 = vunpack.c.l.b16 %v4608
        %v4948 = vunpack.c.l.b16 %v4622
        %v4949 = vunpack.c.l.b16 %v4632
        %v4950 = vunpack.c.l.b16 %v4646
        %v4951 = vunpack.c.l.b16 %v4656
        %v4952 = vunpack.c.l.b16 %v4670
        %v4953 = vunpack.c.l.b16 %v4680
        %v4954 = vunpack.c.l.b16 %v4694
        %v4955 = vunpack.c.l.b16 %v4704
        %v4956 = vunpack.c.l.b16 %v4718
        %v4957 = vunpack.c.l.b16 %v4728
        %v4958 = vunpack.c.l.b16 %v4742
        %v4959 = vunpack.c.l.b16 %v4752
        %v4960 = vunpack.c.l.b16 %v4766
        %v4961 = vunpack.c.l.b16 %v4776
        %v4962 = vunpack.c.l.b16 %v4790
        %v4963 = vunpack.c.l.b16 %v4800
        %v4964 = vunpack.c.l.b16 %v4814
        %v4965 = vunpack.c.l.b16 %v4824
        %v4966 = vunpack.c.l.b16 %v4838
        %v4967 = vunpack.c.l.b16 %v4848
        %v4968 = vunpack.c.l.b16 %v4862
        %v4969 = vunpack.c.l.b16 %v4872
        %v4970 = vunpack.c.l.b16 %v4886
        %v4971 = vunpack.c.l.b16 %v4896
        %v4972 = vunpack.c.l.b16 %v4910
        %v4973 = vunpack.c.l.b16 %v4920
        %v4974 = vpack.c.b16 %v4939, %v4938
        %v4975 = vpack.c.b16 %v4941, %v4940
        %v4976 = vpack.c.b16 %v4943, %v4942
        %v4977 = vpack.c.b16 %v4945, %v4944
        %v4978 = vpack.c.b16 %v4947, %v4946
        %v4979 = vpack.c.b16 %v4949, %v4948
        %v4980 = vpack.c.b16 %v4951, %v4950
        %v4981 = vpack.c.b16 %v4953, %v4952
        %v4982 = vpack.c.b16 %v4955, %v4954
        %v4983 = vpack.c.b16 %v4957, %v4956
        %v4984 = vpack.c.b16 %v4959, %v4958
        %v4985 = vpack.c.b16 %v4961, %v4960
        %v4986 = vpack.c.b16 %v4963, %v4962
        %v4987 = vpack.c.b16 %v4965, %v4964
        %v4988 = vpack.c.b16 %v4967, %v4966
        %v4989 = vpack.c.b16 %v4969, %v4968
        %v4990 = vpack.c.b16 %v4971, %v4970
        %v4991 = vpack.c.b16 %v4973, %v4972
        %v5026 = vunpack.c.l.b16 %v4922
        %v5027 = vunpack.c.l.b16 %v4923
        %v5028 = vunpack.c.l.b16 %v4924
        %v5029 = vunpack.c.l.b16 %v4925
        %v5030 = vunpack.c.l.b16 %v4926
        %v5031 = vunpack.c.l.b16 %v4927
        %v5032 = vunpack.c.l.b16 %v4928
        %v5033 = vunpack.c.l.b16 %v4929
        %v5034 = vunpack.c.l.b16 %v4930
        %v5035 = vunpack.c.l.b16 %v4931
        %v5036 = vunpack.c.l.b16 %v4932
        %v5037 = vunpack.c.l.b16 %v4933
        %v5038 = vunpack.c.l.b16 %v4934
        %v5039 = vunpack.c.l.b16 %v4935
        %v5040 = vunpack.c.l.b16 %v4936
        %v5041 = vunpack.c.l.b16 %v4937
        %v5042 = vpack.c.b16 %v5027, %v5026
        %v5043 = vpack.c.b16 %v5029, %v5028
        %v5044 = vpack.c.b16 %v5031, %v5030
        %v5045 = vpack.c.b16 %v5033, %v5032
        %v5046 = vpack.c.b16 %v5035, %v5034
        %v5047 = vpack.c.b16 %v5037, %v5036
        %v5048 = vpack.c.b16 %v5039, %v5038
        %v5049 = vpack.c.b16 %v5041, %v5040
        %5058 = vmatpush.bf16.msra.mxu0 %v5049
        %5059 = vmatpush.bf16.msra.mxu0 %v5048
        %5060 = vmatpush.bf16.msra.mxu0 %v5047
        %5061 = vmatpush.bf16.msra.mxu0 %v5046
        %5062 = vmatpush.bf16.msra.mxu0 %v5045
        %5063 = vmatpush.bf16.msra.mxu0 %v5044
        %5064 = vmatpush.bf16.msra.mxu0 %v5043
        %5065 = vmatpush.bf16.msra.mxu0 %v5042
        %5066 = vmatmul.bf16.gmra.mxu0 %v4974
        %v5067 = vpop.f32.mrf.mxu0
        %v5068 = vadd.f32 0.0, %v5067
        %v5069 = vpop.f32.mrf.mxu0
        %v5070 = vadd.f32 0.0, %v5069
        %5071 = vmatmul.bf16.gmra.mxu0 %v4975
        %v5072 = vpop.f32.mrf.mxu0
        %v5073 = vadd.f32 0.0, %v5072
        %v5074 = vpop.f32.mrf.mxu0
        %v5075 = vadd.f32 0.0, %v5074
        %5076 = vmatmul.bf16.gmra.mxu0 %v4976
        %v5077 = vpop.f32.mrf.mxu0
        %v5078 = vadd.f32 0.0, %v5077
        %v5079 = vpop.f32.mrf.mxu0
        %v5080 = vadd.f32 0.0, %v5079
        %5081 = vmatmul.bf16.gmra.mxu0 %v4977
        %v5082 = vpop.f32.mrf.mxu0
        %v5083 = vadd.f32 0.0, %v5082
        %v5084 = vpop.f32.mrf.mxu0
        %v5085 = vadd.f32 0.0, %v5084
        %5086 = vmatmul.bf16.gmra.mxu0 %v4978
        %v5087 = vpop.f32.mrf.mxu0
        %v5088 = vadd.f32 0.0, %v5087
        %v5089 = vpop.f32.mrf.mxu0
        %v5090 = vadd.f32 0.0, %v5089
        %5091 = vmatmul.bf16.gmra.mxu0 %v4979
        %v5092 = vpop.f32.mrf.mxu0
        %v5093 = vadd.f32 0.0, %v5092
        %v5094 = vpop.f32.mrf.mxu0
        %v5095 = vadd.f32 0.0, %v5094
        %5096 = vmatmul.bf16.gmra.mxu0 %v4980
        %v5097 = vpop.f32.mrf.mxu0
        %v5098 = vadd.f32 0.0, %v5097
        %v5099 = vpop.f32.mrf.mxu0
        %v5100 = vadd.f32 0.0, %v5099
        %5101 = vmatmul.bf16.gmra.mxu0 %v4981
        %v5102 = vpop.f32.mrf.mxu0
        %v5103 = vadd.f32 0.0, %v5102
        %v5104 = vpop.f32.mrf.mxu0
        %v5105 = vadd.f32 0.0, %v5104
        %5106 = vmatmul.bf16.gmra.mxu0 %v4982
        %v5107 = vpop.f32.mrf.mxu0
        %v5108 = vadd.f32 0.0, %v5107
        %v5109 = vpop.f32.mrf.mxu0
        %v5110 = vadd.f32 0.0, %v5109
        %5111 = vmatmul.bf16.gmra.mxu0 %v4983
        %v5112 = vpop.f32.mrf.mxu0
        %v5113 = vadd.f32 0.0, %v5112
        %v5114 = vpop.f32.mrf.mxu0
        %v5115 = vadd.f32 0.0, %v5114
        %5116 = vmatmul.bf16.gmra.mxu0 %v4984
        %v5117 = vpop.f32.mrf.mxu0
        %v5118 = vadd.f32 0.0, %v5117
        %v5119 = vpop.f32.mrf.mxu0
        %v5120 = vadd.f32 0.0, %v5119
        %5121 = vmatmul.bf16.gmra.mxu0 %v4985
        %v5122 = vpop.f32.mrf.mxu0
        %v5123 = vadd.f32 0.0, %v5122
        %v5124 = vpop.f32.mrf.mxu0
        %v5125 = vadd.f32 0.0, %v5124
        %5126 = vmatmul.bf16.gmra.mxu0 %v4986
        %v5127 = vpop.f32.mrf.mxu0
        %v5128 = vadd.f32 0.0, %v5127
        %v5129 = vpop.f32.mrf.mxu0
        %v5130 = vadd.f32 0.0, %v5129
        %5131 = vmatmul.bf16.gmra.mxu0 %v4987
        %v5132 = vpop.f32.mrf.mxu0
        %v5133 = vadd.f32 0.0, %v5132
        %v5134 = vpop.f32.mrf.mxu0
        %v5135 = vadd.f32 0.0, %v5134
        %5136 = vmatmul.bf16.gmra.mxu0 %v4988
        %v5137 = vpop.f32.mrf.mxu0
        %v5138 = vadd.f32 0.0, %v5137
        %v5139 = vpop.f32.mrf.mxu0
        %v5140 = vadd.f32 0.0, %v5139
        %5141 = vmatmul.bf16.gmra.mxu0 %v4989
        %v5142 = vpop.f32.mrf.mxu0
        %v5143 = vadd.f32 0.0, %v5142
        %v5144 = vpop.f32.mrf.mxu0
        %v5145 = vadd.f32 0.0, %v5144
        %5146 = vmatmul.bf16.gmra.mxu0 %v4990
        %v5147 = vpop.f32.mrf.mxu0
        %v5148 = vadd.f32 0.0, %v5147
        %v5149 = vpop.f32.mrf.mxu0
        %v5150 = vadd.f32 0.0, %v5149
        %5151 = vmatmul.bf16.gmra.mxu0 %v4991
        %v5152 = vpop.f32.mrf.mxu0
        %v5153 = vadd.f32 0.0, %v5152
        %v5154 = vpop.f32.mrf.mxu0
        %v5155 = vadd.f32 0.0, %v5154
        %5156 = vdwg.mxu0
        %v5157 = vld [vmem:[#allocation4] sm:$0xff]
        %v5158 = vld [vmem:[#allocation4 + $0x8] sm:$0xff]
        %v5159 = vld [vmem:[#allocation4 + $0x10] sm:$0xff]
        %v5160 = vld [vmem:[#allocation4 + $0x18] sm:$0xff]
        %v5161 = vld [vmem:[#allocation4 + $0x20] sm:$0xff]
        %v5162 = vld [vmem:[#allocation4 + $0x28] sm:$0xff]
        %v5163 = vld [vmem:[#allocation4 + $0x30] sm:$0xff]
        %v5164 = vld [vmem:[#allocation4 + $0x38] sm:$0xff]
        %v5165 = vld [vmem:[#allocation4 + $0x40] sm:$0xff]
        %v5166 = vld [vmem:[#allocation4 + $0x48] sm:$0xff]
        %v5167 = vld [vmem:[#allocation4 + $0x50] sm:$0xff]
        %v5168 = vld [vmem:[#allocation4 + $0x58] sm:$0xff]
        %v5169 = vld [vmem:[#allocation4 + $0x60] sm:$0xff]
        %v5170 = vld [vmem:[#allocation4 + $0x68] sm:$0xff]
        %v5171 = vld [vmem:[#allocation4 + $0x70] sm:$0xff]
        %v5172 = vld [vmem:[#allocation4 + $0x78] sm:$0xff]
        %v5173 = vld [vmem:[#allocation4 + $0x80] sm:$0xff]
        %v5174 = vld [vmem:[#allocation4 + $0x88] sm:$0xff]
        %v5175 = vld [vmem:[#allocation4 + $0x90] sm:$0xff]
        %v5176 = vld [vmem:[#allocation4 + $0x98] sm:$0xff]
        %v5177 = vld [vmem:[#allocation4 + $0xa0] sm:$0xff]
        %v5178 = vld [vmem:[#allocation4 + $0xa8] sm:$0xff]
        %v5179 = vld [vmem:[#allocation4 + $0xb0] sm:$0xff]
        %v5180 = vld [vmem:[#allocation4 + $0xb8] sm:$0xff]
        %v5181 = vld [vmem:[#allocation4 + $0xc0] sm:$0xff]
        %v5182 = vld [vmem:[#allocation4 + $0xc8] sm:$0xff]
        %v5183 = vld [vmem:[#allocation4 + $0xd0] sm:$0xff]
        %v5184 = vld [vmem:[#allocation4 + $0xd8] sm:$0xff]
        %v5185 = vld [vmem:[#allocation4 + $0xe0] sm:$0xff]
        %v5186 = vld [vmem:[#allocation4 + $0xe8] sm:$0xff]
        %v5187 = vld [vmem:[#allocation4 + $0xf0] sm:$0xff]
        %v5188 = vld [vmem:[#allocation4 + $0xf8] sm:$0xff]
        %v5189 = vld [vmem:[#allocation4 + $0x100] sm:$0xff]
        %v5190 = vld [vmem:[#allocation4 + $0x108] sm:$0xff]
        %v5191 = vld [vmem:[#allocation4 + $0x110] sm:$0xff]
        %v5192 = vld [vmem:[#allocation4 + $0x118] sm:$0xff]
        %v5193 = vadd.f32 %v5157, %v5068
        %v5194 = vadd.f32 %v5158, %v5070
        %v5195 = vadd.f32 %v5159, %v5073
        %v5196 = vadd.f32 %v5160, %v5075
        %v5197 = vadd.f32 %v5161, %v5078
        %v5198 = vadd.f32 %v5162, %v5080
        %v5199 = vadd.f32 %v5163, %v5083
        %v5200 = vadd.f32 %v5164, %v5085
        %v5201 = vadd.f32 %v5165, %v5088
        %v5202 = vadd.f32 %v5166, %v5090
        %v5203 = vadd.f32 %v5167, %v5093
        %v5204 = vadd.f32 %v5168, %v5095
        %v5205 = vadd.f32 %v5169, %v5098
        %v5206 = vadd.f32 %v5170, %v5100
        %v5207 = vadd.f32 %v5171, %v5103
        %v5208 = vadd.f32 %v5172, %v5105
        %v5209 = vadd.f32 %v5173, %v5108
        %v5210 = vadd.f32 %v5174, %v5110
        %v5211 = vadd.f32 %v5175, %v5113
        %v5212 = vadd.f32 %v5176, %v5115
        %v5213 = vadd.f32 %v5177, %v5118
        %v5214 = vadd.f32 %v5178, %v5120
        %v5215 = vadd.f32 %v5179, %v5123
        %v5216 = vadd.f32 %v5180, %v5125
        %v5217 = vadd.f32 %v5181, %v5128
        %v5218 = vadd.f32 %v5182, %v5130
        %v5219 = vadd.f32 %v5183, %v5133
        %v5220 = vadd.f32 %v5184, %v5135
        %v5221 = vadd.f32 %v5185, %v5138
        %v5222 = vadd.f32 %v5186, %v5140
        %v5223 = vadd.f32 %v5187, %v5143
        %v5224 = vadd.f32 %v5188, %v5145
        %v5225 = vadd.f32 %v5189, %v5148
        %v5226 = vadd.f32 %v5190, %v5150
        %v5227 = vadd.f32 %v5191, %v5153
        %v5228 = vadd.f32 %v5192, %v5155
        %5229 = vst [vmem:[#allocation4] sm:$0xff] %v5193
        %5230 = vst [vmem:[#allocation4 + $0x8] sm:$0xff] %v5194
        %5231 = vst [vmem:[#allocation4 + $0x10] sm:$0xff] %v5195
        %5232 = vst [vmem:[#allocation4 + $0x18] sm:$0xff] %v5196
        %5233 = vst [vmem:[#allocation4 + $0x20] sm:$0xff] %v5197
        %5234 = vst [vmem:[#allocation4 + $0x28] sm:$0xff] %v5198
        %5235 = vst [vmem:[#allocation4 + $0x30] sm:$0xff] %v5199
        %5236 = vst [vmem:[#allocation4 + $0x38] sm:$0xff] %v5200
        %5237 = vst [vmem:[#allocation4 + $0x40] sm:$0xff] %v5201
        %5238 = vst [vmem:[#allocation4 + $0x48] sm:$0xff] %v5202
        %5239 = vst [vmem:[#allocation4 + $0x50] sm:$0xff] %v5203
        %5240 = vst [vmem:[#allocation4 + $0x58] sm:$0xff] %v5204
        %5241 = vst [vmem:[#allocation4 + $0x60] sm:$0xff] %v5205
        %5242 = vst [vmem:[#allocation4 + $0x68] sm:$0xff] %v5206
        %5243 = vst [vmem:[#allocation4 + $0x70] sm:$0xff] %v5207
        %5244 = vst [vmem:[#allocation4 + $0x78] sm:$0xff] %v5208
        %5245 = vst [vmem:[#allocation4 + $0x80] sm:$0xff] %v5209
        %5246 = vst [vmem:[#allocation4 + $0x88] sm:$0xff] %v5210
        %5247 = vst [vmem:[#allocation4 + $0x90] sm:$0xff] %v5211
        %5248 = vst [vmem:[#allocation4 + $0x98] sm:$0xff] %v5212
        %5249 = vst [vmem:[#allocation4 + $0xa0] sm:$0xff] %v5213
        %5250 = vst [vmem:[#allocation4 + $0xa8] sm:$0xff] %v5214
        %5251 = vst [vmem:[#allocation4 + $0xb0] sm:$0xff] %v5215
        %5252 = vst [vmem:[#allocation4 + $0xb8] sm:$0xff] %v5216
        %5253 = vst [vmem:[#allocation4 + $0xc0] sm:$0xff] %v5217
        %5254 = vst [vmem:[#allocation4 + $0xc8] sm:$0xff] %v5218
        %5255 = vst [vmem:[#allocation4 + $0xd0] sm:$0xff] %v5219
        %5256 = vst [vmem:[#allocation4 + $0xd8] sm:$0xff] %v5220
        %5257 = vst [vmem:[#allocation4 + $0xe0] sm:$0xff] %v5221
        %5258 = vst [vmem:[#allocation4 + $0xe8] sm:$0xff] %v5222
        %5259 = vst [vmem:[#allocation4 + $0xf0] sm:$0xff] %v5223
        %5260 = vst [vmem:[#allocation4 + $0xf8] sm:$0xff] %v5224
        %5261 = vst [vmem:[#allocation4 + $0x100] sm:$0xff] %v5225
        %5262 = vst [vmem:[#allocation4 + $0x108] sm:$0xff] %v5226
        %5263 = vst [vmem:[#allocation4 + $0x110] sm:$0xff] %v5227
        %5264 = vst [vmem:[#allocation4 + $0x118] sm:$0xff] %v5228
        %v5265 = vld [vmem:[%s4018] sm:$0xe]
        %v5266 = vld [vmem:[%s4018 + $0x4] sm:$0xf]
        %v5267 = vld [vmem:[%s4018 + $0x8] sm:$0x1]
        %v5268 = vld [vmem:[%s4018 + $0xc] sm:$0xe]
        %v5269 = vld [vmem:[%s4018 + $0x10] sm:$0xf]
        %v5270 = vld [vmem:[%s4018 + $0x14] sm:$0x1]
        %v5271 = vld [vmem:[%s4018 + $0x18] sm:$0xe]
        %v5272 = vld [vmem:[%s4018 + $0x1c] sm:$0xf]
        %v5273 = vld [vmem:[%s4018 + $0x20] sm:$0x1]
        %v5274 = vld [vmem:[%s4018 + $0x24] sm:$0xe]
        %v5275 = vld [vmem:[%s4018 + $0x28] sm:$0xf]
        %v5276 = vld [vmem:[%s4018 + $0x2c] sm:$0x1]
        %v5277 = vld [vmem:[%s4018 + $0x30] sm:$0xe]
        %v5278 = vld [vmem:[%s4018 + $0x34] sm:$0xf]
        %v5279 = vld [vmem:[%s4018 + $0x38] sm:$0x1]
        %v5280 = vld [vmem:[%s4018 + $0x3c] sm:$0xe]
        %v5281 = vld [vmem:[%s4018 + $0x40] sm:$0xf]
        %v5282 = vld [vmem:[%s4018 + $0x44] sm:$0x1]
        %v5283 = vld [vmem:[%s4018 + $0x48] sm:$0xe]
        %v5284 = vld [vmem:[%s4018 + $0x4c] sm:$0xf]
        %v5285 = vld [vmem:[%s4018 + $0x50] sm:$0x1]
        %v5286 = vld [vmem:[%s4018 + $0x54] sm:$0xe]
        %v5287 = vld [vmem:[%s4018 + $0x58] sm:$0xf]
        %v5288 = vld [vmem:[%s4018 + $0x5c] sm:$0x1]
        %v5289 = vld [vmem:[%s4018 + $0x60] sm:$0xe]
        %v5290 = vld [vmem:[%s4018 + $0x64] sm:$0xf]
        %v5291 = vld [vmem:[%s4018 + $0x68] sm:$0x1]
        %v5292 = vld [vmem:[%s4018 + $0x6c] sm:$0xe]
        %v5293 = vld [vmem:[%s4018 + $0x70] sm:$0xf]
        %v5294 = vld [vmem:[%s4018 + $0x74] sm:$0x1]
        %v5295 = vld [vmem:[%s4018 + $0x78] sm:$0xe]
        %v5296 = vld [vmem:[%s4018 + $0x7c] sm:$0xf]
        %v5297 = vld [vmem:[%s4018 + $0x80] sm:$0x1]
        %v5298 = vld [vmem:[%s4018 + $0x84] sm:$0xe]
        %v5299 = vld [vmem:[%s4018 + $0x88] sm:$0xf]
        %v5300 = vld [vmem:[%s4018 + $0x8c] sm:$0x1]
        %v5301 = vld [vmem:[%s4018 + $0x90] sm:$0xe]
        %v5302 = vld [vmem:[%s4018 + $0x94] sm:$0xf]
        %v5303 = vld [vmem:[%s4018 + $0x98] sm:$0x1]
        %v5304 = vld [vmem:[%s4018 + $0x9c] sm:$0xe]
        %v5305 = vld [vmem:[%s4018 + $0xa0] sm:$0xf]
        %v5306 = vld [vmem:[%s4018 + $0xa4] sm:$0x1]
        %v5307 = vld [vmem:[%s4018 + $0xa8] sm:$0xe]
        %v5308 = vld [vmem:[%s4018 + $0xac] sm:$0xf]
        %v5309 = vld [vmem:[%s4018 + $0xb0] sm:$0x1]
        %v5310 = vld [vmem:[%s4018 + $0xb4] sm:$0xe]
        %v5311 = vld [vmem:[%s4018 + $0xb8] sm:$0xf]
        %v5312 = vld [vmem:[%s4018 + $0xbc] sm:$0x1]
        %v5313 = vld [vmem:[%s4018 + $0xc0] sm:$0xe]
        %v5314 = vld [vmem:[%s4018 + $0xc4] sm:$0xf]
        %v5315 = vld [vmem:[%s4018 + $0xc8] sm:$0x1]
        %v5316 = vld [vmem:[%s4018 + $0xcc] sm:$0xe]
        %v5317 = vld [vmem:[%s4018 + $0xd0] sm:$0xf]
        %v5318 = vld [vmem:[%s4018 + $0xd4] sm:$0x1]
        %v5373 = vrot.slane %v5265, 5
        %v5374 = vrot.slane %v5373, 4
        %v5375 = vrot.slane %v5266, 5
        %v5376 = vsel %vm1722, %v5374, %v5375
        %v5377 = vrot.slane %v5375, 4
        %v5378 = vrot.slane %v5267, 5
        %v5379 = vsel %vm1722, %v5377, %v5378
        %v5380 = vrot.slane %v5268, 5
        %v5381 = vrot.slane %v5380, 4
        %v5382 = vrot.slane %v5269, 5
        %v5383 = vsel %vm1722, %v5381, %v5382
        %v5384 = vrot.slane %v5382, 4
        %v5385 = vrot.slane %v5270, 5
        %v5386 = vsel %vm1722, %v5384, %v5385
        %v5387 = vrot.slane %v5271, 5
        %v5388 = vrot.slane %v5387, 4
        %v5389 = vrot.slane %v5272, 5
        %v5390 = vsel %vm1722, %v5388, %v5389
        %v5391 = vrot.slane %v5389, 4
        %v5392 = vrot.slane %v5273, 5
        %v5393 = vsel %vm1722, %v5391, %v5392
        %v5394 = vrot.slane %v5274, 5
        %v5395 = vrot.slane %v5394, 4
        %v5396 = vrot.slane %v5275, 5
        %v5397 = vsel %vm1722, %v5395, %v5396
        %v5398 = vrot.slane %v5396, 4
        %v5399 = vrot.slane %v5276, 5
        %v5400 = vsel %vm1722, %v5398, %v5399
        %v5401 = vrot.slane %v5277, 5
        %v5402 = vrot.slane %v5401, 4
        %v5403 = vrot.slane %v5278, 5
        %v5404 = vsel %vm1722, %v5402, %v5403
        %v5405 = vrot.slane %v5403, 4
        %v5406 = vrot.slane %v5279, 5
        %v5407 = vsel %vm1722, %v5405, %v5406
        %v5408 = vrot.slane %v5280, 5
        %v5409 = vrot.slane %v5408, 4
        %v5410 = vrot.slane %v5281, 5
        %v5411 = vsel %vm1722, %v5409, %v5410
        %v5412 = vrot.slane %v5410, 4
        %v5413 = vrot.slane %v5282, 5
        %v5414 = vsel %vm1722, %v5412, %v5413
        %v5415 = vrot.slane %v5283, 5
        %v5416 = vrot.slane %v5415, 4
        %v5417 = vrot.slane %v5284, 5
        %v5418 = vsel %vm1722, %v5416, %v5417
        %v5419 = vrot.slane %v5417, 4
        %v5420 = vrot.slane %v5285, 5
        %v5421 = vsel %vm1722, %v5419, %v5420
        %v5422 = vrot.slane %v5286, 5
        %v5423 = vrot.slane %v5422, 4
        %v5424 = vrot.slane %v5287, 5
        %v5425 = vsel %vm1722, %v5423, %v5424
        %v5426 = vrot.slane %v5424, 4
        %v5427 = vrot.slane %v5288, 5
        %v5428 = vsel %vm1722, %v5426, %v5427
        %v5429 = vrot.slane %v5289, 5
        %v5430 = vrot.slane %v5429, 4
        %v5431 = vrot.slane %v5290, 5
        %v5432 = vsel %vm1722, %v5430, %v5431
        %v5433 = vrot.slane %v5431, 4
        %v5434 = vrot.slane %v5291, 5
        %v5435 = vsel %vm1722, %v5433, %v5434
        %v5436 = vrot.slane %v5292, 5
        %v5437 = vrot.slane %v5436, 4
        %v5438 = vrot.slane %v5293, 5
        %v5439 = vsel %vm1722, %v5437, %v5438
        %v5440 = vrot.slane %v5438, 4
        %v5441 = vrot.slane %v5294, 5
        %v5442 = vsel %vm1722, %v5440, %v5441
        %v5443 = vrot.slane %v5295, 5
        %v5444 = vrot.slane %v5443, 4
        %v5445 = vrot.slane %v5296, 5
        %v5446 = vsel %vm1722, %v5444, %v5445
        %v5447 = vrot.slane %v5445, 4
        %v5448 = vrot.slane %v5297, 5
        %v5449 = vsel %vm1722, %v5447, %v5448
        %v5450 = vrot.slane %v5298, 5
        %v5451 = vrot.slane %v5450, 4
        %v5452 = vrot.slane %v5299, 5
        %v5453 = vsel %vm1722, %v5451, %v5452
        %v5454 = vrot.slane %v5452, 4
        %v5455 = vrot.slane %v5300, 5
        %v5456 = vsel %vm1722, %v5454, %v5455
        %v5457 = vrot.slane %v5301, 5
        %v5458 = vrot.slane %v5457, 4
        %v5459 = vrot.slane %v5302, 5
        %v5460 = vsel %vm1722, %v5458, %v5459
        %v5461 = vrot.slane %v5459, 4
        %v5462 = vrot.slane %v5303, 5
        %v5463 = vsel %vm1722, %v5461, %v5462
        %v5464 = vrot.slane %v5304, 5
        %v5465 = vrot.slane %v5464, 4
        %v5466 = vrot.slane %v5305, 5
        %v5467 = vsel %vm1722, %v5465, %v5466
        %v5468 = vrot.slane %v5466, 4
        %v5469 = vrot.slane %v5306, 5
        %v5470 = vsel %vm1722, %v5468, %v5469
        %v5471 = vrot.slane %v5307, 5
        %v5472 = vrot.slane %v5471, 4
        %v5473 = vrot.slane %v5308, 5
        %v5474 = vsel %vm1722, %v5472, %v5473
        %v5475 = vrot.slane %v5473, 4
        %v5476 = vrot.slane %v5309, 5
        %v5477 = vsel %vm1722, %v5475, %v5476
        %v5478 = vrot.slane %v5310, 5
        %v5479 = vrot.slane %v5478, 4
        %v5480 = vrot.slane %v5311, 5
        %v5481 = vsel %vm1722, %v5479, %v5480
        %v5482 = vrot.slane %v5480, 4
        %v5483 = vrot.slane %v5312, 5
        %v5484 = vsel %vm1722, %v5482, %v5483
        %v5485 = vrot.slane %v5313, 5
        %v5486 = vrot.slane %v5485, 4
        %v5487 = vrot.slane %v5314, 5
        %v5488 = vsel %vm1722, %v5486, %v5487
        %v5489 = vrot.slane %v5487, 4
        %v5490 = vrot.slane %v5315, 5
        %v5491 = vsel %vm1722, %v5489, %v5490
        %v5492 = vrot.slane %v5316, 5
        %v5493 = vrot.slane %v5492, 4
        %v5494 = vrot.slane %v5317, 5
        %v5495 = vsel %vm1722, %v5493, %v5494
        %v5496 = vrot.slane %v5494, 4
        %v5497 = vrot.slane %v5318, 5
        %v5498 = vsel %vm1722, %v5496, %v5497
        %s5499 = scalar_lea.vmem %s1, 512
        %v5500 = vld [vmem:[%s5499] sm:$0xf]
        %v5501 = vld [vmem:[%s5499 + $0x4] sm:$0xf]
        %v5502 = vld [vmem:[%s5499 + $0x8] sm:$0xf]
        %v5503 = vld [vmem:[%s5499 + $0xc] sm:$0xf]
        %v5504 = vld [vmem:[%s5499 + $0x10] sm:$0xf]
        %v5505 = vld [vmem:[%s5499 + $0x14] sm:$0xf]
        %v5506 = vld [vmem:[%s5499 + $0x18] sm:$0xf]
        %v5507 = vld [vmem:[%s5499 + $0x1c] sm:$0xf]
        %v5508 = vld [vmem:[%s5499 + $0x20] sm:$0xf]
        %v5509 = vld [vmem:[%s5499 + $0x24] sm:$0xf]
        %v5510 = vld [vmem:[%s5499 + $0x28] sm:$0xf]
        %v5511 = vld [vmem:[%s5499 + $0x2c] sm:$0xf]
        %v5512 = vld [vmem:[%s5499 + $0x30] sm:$0xf]
        %v5513 = vld [vmem:[%s5499 + $0x34] sm:$0xf]
        %v5514 = vld [vmem:[%s5499 + $0x38] sm:$0xf]
        %v5515 = vld [vmem:[%s5499 + $0x3c] sm:$0xf]
        %v5516 = vunpack.c.l.b16 %v5376
        %v5517 = vunpack.c.l.b16 %v5379
        %v5518 = vunpack.c.l.b16 %v5383
        %v5519 = vunpack.c.l.b16 %v5386
        %v5520 = vunpack.c.l.b16 %v5390
        %v5521 = vunpack.c.l.b16 %v5393
        %v5522 = vunpack.c.l.b16 %v5397
        %v5523 = vunpack.c.l.b16 %v5400
        %v5524 = vunpack.c.l.b16 %v5404
        %v5525 = vunpack.c.l.b16 %v5407
        %v5526 = vunpack.c.l.b16 %v5411
        %v5527 = vunpack.c.l.b16 %v5414
        %v5528 = vunpack.c.l.b16 %v5418
        %v5529 = vunpack.c.l.b16 %v5421
        %v5530 = vunpack.c.l.b16 %v5425
        %v5531 = vunpack.c.l.b16 %v5428
        %v5532 = vunpack.c.l.b16 %v5432
        %v5533 = vunpack.c.l.b16 %v5435
        %v5534 = vunpack.c.l.b16 %v5439
        %v5535 = vunpack.c.l.b16 %v5442
        %v5536 = vunpack.c.l.b16 %v5446
        %v5537 = vunpack.c.l.b16 %v5449
        %v5538 = vunpack.c.l.b16 %v5453
        %v5539 = vunpack.c.l.b16 %v5456
        %v5540 = vunpack.c.l.b16 %v5460
        %v5541 = vunpack.c.l.b16 %v5463
        %v5542 = vunpack.c.l.b16 %v5467
        %v5543 = vunpack.c.l.b16 %v5470
        %v5544 = vunpack.c.l.b16 %v5474
        %v5545 = vunpack.c.l.b16 %v5477
        %v5546 = vunpack.c.l.b16 %v5481
        %v5547 = vunpack.c.l.b16 %v5484
        %v5548 = vunpack.c.l.b16 %v5488
        %v5549 = vunpack.c.l.b16 %v5491
        %v5550 = vunpack.c.l.b16 %v5495
        %v5551 = vunpack.c.l.b16 %v5498
        %v5552 = vpack.c.b16 %v5517, %v5516
        %v5553 = vpack.c.b16 %v5519, %v5518
        %v5554 = vpack.c.b16 %v5521, %v5520
        %v5555 = vpack.c.b16 %v5523, %v5522
        %v5556 = vpack.c.b16 %v5525, %v5524
        %v5557 = vpack.c.b16 %v5527, %v5526
        %v5558 = vpack.c.b16 %v5529, %v5528
        %v5559 = vpack.c.b16 %v5531, %v5530
        %v5560 = vpack.c.b16 %v5533, %v5532
        %v5561 = vpack.c.b16 %v5535, %v5534
        %v5562 = vpack.c.b16 %v5537, %v5536
        %v5563 = vpack.c.b16 %v5539, %v5538
        %v5564 = vpack.c.b16 %v5541, %v5540
        %v5565 = vpack.c.b16 %v5543, %v5542
        %v5566 = vpack.c.b16 %v5545, %v5544
        %v5567 = vpack.c.b16 %v5547, %v5546
        %v5568 = vpack.c.b16 %v5549, %v5548
        %v5569 = vpack.c.b16 %v5551, %v5550
        %v5604 = vunpack.c.l.b16 %v5500
        %v5605 = vunpack.c.l.b16 %v5501
        %v5606 = vunpack.c.l.b16 %v5502
        %v5607 = vunpack.c.l.b16 %v5503
        %v5608 = vunpack.c.l.b16 %v5504
        %v5609 = vunpack.c.l.b16 %v5505
        %v5610 = vunpack.c.l.b16 %v5506
        %v5611 = vunpack.c.l.b16 %v5507
        %v5612 = vunpack.c.l.b16 %v5508
        %v5613 = vunpack.c.l.b16 %v5509
        %v5614 = vunpack.c.l.b16 %v5510
        %v5615 = vunpack.c.l.b16 %v5511
        %v5616 = vunpack.c.l.b16 %v5512
        %v5617 = vunpack.c.l.b16 %v5513
        %v5618 = vunpack.c.l.b16 %v5514
        %v5619 = vunpack.c.l.b16 %v5515
        %v5620 = vpack.c.b16 %v5605, %v5604
        %v5621 = vpack.c.b16 %v5607, %v5606
        %v5622 = vpack.c.b16 %v5609, %v5608
        %v5623 = vpack.c.b16 %v5611, %v5610
        %v5624 = vpack.c.b16 %v5613, %v5612
        %v5625 = vpack.c.b16 %v5615, %v5614
        %v5626 = vpack.c.b16 %v5617, %v5616
        %v5627 = vpack.c.b16 %v5619, %v5618
        %5636 = vmatpush.bf16.msra.mxu0 %v5627
        %5637 = vmatpush.bf16.msra.mxu0 %v5626
        %5638 = vmatpush.bf16.msra.mxu0 %v5625
        %5639 = vmatpush.bf16.msra.mxu0 %v5624
        %5640 = vmatpush.bf16.msra.mxu0 %v5623
        %5641 = vmatpush.bf16.msra.mxu0 %v5622
        %5642 = vmatpush.bf16.msra.mxu0 %v5621
        %5643 = vmatpush.bf16.msra.mxu0 %v5620
        %5644 = vmatmul.bf16.gmra.mxu0 %v5552
        %v5645 = vpop.f32.mrf.mxu0
        %v5646 = vadd.f32 0.0, %v5645
        %v5647 = vpop.f32.mrf.mxu0
        %v5648 = vadd.f32 0.0, %v5647
        %5649 = vmatmul.bf16.gmra.mxu0 %v5553
        %v5650 = vpop.f32.mrf.mxu0
        %v5651 = vadd.f32 0.0, %v5650
        %v5652 = vpop.f32.mrf.mxu0
        %v5653 = vadd.f32 0.0, %v5652
        %5654 = vmatmul.bf16.gmra.mxu0 %v5554
        %v5655 = vpop.f32.mrf.mxu0
        %v5656 = vadd.f32 0.0, %v5655
        %v5657 = vpop.f32.mrf.mxu0
        %v5658 = vadd.f32 0.0, %v5657
        %5659 = vmatmul.bf16.gmra.mxu0 %v5555
        %v5660 = vpop.f32.mrf.mxu0
        %v5661 = vadd.f32 0.0, %v5660
        %v5662 = vpop.f32.mrf.mxu0
        %v5663 = vadd.f32 0.0, %v5662
        %5664 = vmatmul.bf16.gmra.mxu0 %v5556
        %v5665 = vpop.f32.mrf.mxu0
        %v5666 = vadd.f32 0.0, %v5665
        %v5667 = vpop.f32.mrf.mxu0
        %v5668 = vadd.f32 0.0, %v5667
        %5669 = vmatmul.bf16.gmra.mxu0 %v5557
        %v5670 = vpop.f32.mrf.mxu0
        %v5671 = vadd.f32 0.0, %v5670
        %v5672 = vpop.f32.mrf.mxu0
        %v5673 = vadd.f32 0.0, %v5672
        %5674 = vmatmul.bf16.gmra.mxu0 %v5558
        %v5675 = vpop.f32.mrf.mxu0
        %v5676 = vadd.f32 0.0, %v5675
        %v5677 = vpop.f32.mrf.mxu0
        %v5678 = vadd.f32 0.0, %v5677
        %5679 = vmatmul.bf16.gmra.mxu0 %v5559
        %v5680 = vpop.f32.mrf.mxu0
        %v5681 = vadd.f32 0.0, %v5680
        %v5682 = vpop.f32.mrf.mxu0
        %v5683 = vadd.f32 0.0, %v5682
        %5684 = vmatmul.bf16.gmra.mxu0 %v5560
        %v5685 = vpop.f32.mrf.mxu0
        %v5686 = vadd.f32 0.0, %v5685
        %v5687 = vpop.f32.mrf.mxu0
        %v5688 = vadd.f32 0.0, %v5687
        %5689 = vmatmul.bf16.gmra.mxu0 %v5561
        %v5690 = vpop.f32.mrf.mxu0
        %v5691 = vadd.f32 0.0, %v5690
        %v5692 = vpop.f32.mrf.mxu0
        %v5693 = vadd.f32 0.0, %v5692
        %5694 = vmatmul.bf16.gmra.mxu0 %v5562
        %v5695 = vpop.f32.mrf.mxu0
        %v5696 = vadd.f32 0.0, %v5695
        %v5697 = vpop.f32.mrf.mxu0
        %v5698 = vadd.f32 0.0, %v5697
        %5699 = vmatmul.bf16.gmra.mxu0 %v5563
        %v5700 = vpop.f32.mrf.mxu0
        %v5701 = vadd.f32 0.0, %v5700
        %v5702 = vpop.f32.mrf.mxu0
        %v5703 = vadd.f32 0.0, %v5702
        %5704 = vmatmul.bf16.gmra.mxu0 %v5564
        %v5705 = vpop.f32.mrf.mxu0
        %v5706 = vadd.f32 0.0, %v5705
        %v5707 = vpop.f32.mrf.mxu0
        %v5708 = vadd.f32 0.0, %v5707
        %5709 = vmatmul.bf16.gmra.mxu0 %v5565
        %v5710 = vpop.f32.mrf.mxu0
        %v5711 = vadd.f32 0.0, %v5710
        %v5712 = vpop.f32.mrf.mxu0
        %v5713 = vadd.f32 0.0, %v5712
        %5714 = vmatmul.bf16.gmra.mxu0 %v5566
        %v5715 = vpop.f32.mrf.mxu0
        %v5716 = vadd.f32 0.0, %v5715
        %v5717 = vpop.f32.mrf.mxu0
        %v5718 = vadd.f32 0.0, %v5717
        %5719 = vmatmul.bf16.gmra.mxu0 %v5567
        %v5720 = vpop.f32.mrf.mxu0
        %v5721 = vadd.f32 0.0, %v5720
        %v5722 = vpop.f32.mrf.mxu0
        %v5723 = vadd.f32 0.0, %v5722
        %5724 = vmatmul.bf16.gmra.mxu0 %v5568
        %v5725 = vpop.f32.mrf.mxu0
        %v5726 = vadd.f32 0.0, %v5725
        %v5727 = vpop.f32.mrf.mxu0
        %v5728 = vadd.f32 0.0, %v5727
        %5729 = vmatmul.bf16.gmra.mxu0 %v5569
        %v5730 = vpop.f32.mrf.mxu0
        %v5731 = vadd.f32 0.0, %v5730
        %v5732 = vpop.f32.mrf.mxu0
        %v5733 = vadd.f32 0.0, %v5732
        %5734 = vdwg.mxu0
        %v5735 = vld [vmem:[#allocation4] sm:$0xff]
        %v5736 = vld [vmem:[#allocation4 + $0x8] sm:$0xff]
        %v5737 = vld [vmem:[#allocation4 + $0x10] sm:$0xff]
        %v5738 = vld [vmem:[#allocation4 + $0x18] sm:$0xff]
        %v5739 = vld [vmem:[#allocation4 + $0x20] sm:$0xff]
        %v5740 = vld [vmem:[#allocation4 + $0x28] sm:$0xff]
        %v5741 = vld [vmem:[#allocation4 + $0x30] sm:$0xff]
        %v5742 = vld [vmem:[#allocation4 + $0x38] sm:$0xff]
        %v5743 = vld [vmem:[#allocation4 + $0x40] sm:$0xff]
        %v5744 = vld [vmem:[#allocation4 + $0x48] sm:$0xff]
        %v5745 = vld [vmem:[#allocation4 + $0x50] sm:$0xff]
        %v5746 = vld [vmem:[#allocation4 + $0x58] sm:$0xff]
        %v5747 = vld [vmem:[#allocation4 + $0x60] sm:$0xff]
        %v5748 = vld [vmem:[#allocation4 + $0x68] sm:$0xff]
        %v5749 = vld [vmem:[#allocation4 + $0x70] sm:$0xff]
        %v5750 = vld [vmem:[#allocation4 + $0x78] sm:$0xff]
        %v5751 = vld [vmem:[#allocation4 + $0x80] sm:$0xff]
        %v5752 = vld [vmem:[#allocation4 + $0x88] sm:$0xff]
        %v5753 = vld [vmem:[#allocation4 + $0x90] sm:$0xff]
        %v5754 = vld [vmem:[#allocation4 + $0x98] sm:$0xff]
        %v5755 = vld [vmem:[#allocation4 + $0xa0] sm:$0xff]
        %v5756 = vld [vmem:[#allocation4 + $0xa8] sm:$0xff]
        %v5757 = vld [vmem:[#allocation4 + $0xb0] sm:$0xff]
        %v5758 = vld [vmem:[#allocation4 + $0xb8] sm:$0xff]
        %v5759 = vld [vmem:[#allocation4 + $0xc0] sm:$0xff]
        %v5760 = vld [vmem:[#allocation4 + $0xc8] sm:$0xff]
        %v5761 = vld [vmem:[#allocation4 + $0xd0] sm:$0xff]
        %v5762 = vld [vmem:[#allocation4 + $0xd8] sm:$0xff]
        %v5763 = vld [vmem:[#allocation4 + $0xe0] sm:$0xff]
        %v5764 = vld [vmem:[#allocation4 + $0xe8] sm:$0xff]
        %v5765 = vld [vmem:[#allocation4 + $0xf0] sm:$0xff]
        %v5766 = vld [vmem:[#allocation4 + $0xf8] sm:$0xff]
        %v5767 = vld [vmem:[#allocation4 + $0x100] sm:$0xff]
        %v5768 = vld [vmem:[#allocation4 + $0x108] sm:$0xff]
        %v5769 = vld [vmem:[#allocation4 + $0x110] sm:$0xff]
        %v5770 = vld [vmem:[#allocation4 + $0x118] sm:$0xff]
        %v5771 = vadd.f32 %v5735, %v5646
        %v5772 = vadd.f32 %v5736, %v5648
        %v5773 = vadd.f32 %v5737, %v5651
        %v5774 = vadd.f32 %v5738, %v5653
        %v5775 = vadd.f32 %v5739, %v5656
        %v5776 = vadd.f32 %v5740, %v5658
        %v5777 = vadd.f32 %v5741, %v5661
        %v5778 = vadd.f32 %v5742, %v5663
        %v5779 = vadd.f32 %v5743, %v5666
        %v5780 = vadd.f32 %v5744, %v5668
        %v5781 = vadd.f32 %v5745, %v5671
        %v5782 = vadd.f32 %v5746, %v5673
        %v5783 = vadd.f32 %v5747, %v5676
        %v5784 = vadd.f32 %v5748, %v5678
        %v5785 = vadd.f32 %v5749, %v5681
        %v5786 = vadd.f32 %v5750, %v5683
        %v5787 = vadd.f32 %v5751, %v5686
        %v5788 = vadd.f32 %v5752, %v5688
        %v5789 = vadd.f32 %v5753, %v5691
        %v5790 = vadd.f32 %v5754, %v5693
        %v5791 = vadd.f32 %v5755, %v5696
        %v5792 = vadd.f32 %v5756, %v5698
        %v5793 = vadd.f32 %v5757, %v5701
        %v5794 = vadd.f32 %v5758, %v5703
        %v5795 = vadd.f32 %v5759, %v5706
        %v5796 = vadd.f32 %v5760, %v5708
        %v5797 = vadd.f32 %v5761, %v5711
        %v5798 = vadd.f32 %v5762, %v5713
        %v5799 = vadd.f32 %v5763, %v5716
        %v5800 = vadd.f32 %v5764, %v5718
        %v5801 = vadd.f32 %v5765, %v5721
        %v5802 = vadd.f32 %v5766, %v5723
        %v5803 = vadd.f32 %v5767, %v5726
        %v5804 = vadd.f32 %v5768, %v5728
        %v5805 = vadd.f32 %v5769, %v5731
        %v5806 = vadd.f32 %v5770, %v5733
        %5807 = vst [vmem:[#allocation4] sm:$0xff] %v5771
        %5808 = vst [vmem:[#allocation4 + $0x8] sm:$0xff] %v5772
        %5809 = vst [vmem:[#allocation4 + $0x10] sm:$0xff] %v5773
        %5810 = vst [vmem:[#allocation4 + $0x18] sm:$0xff] %v5774
        %5811 = vst [vmem:[#allocation4 + $0x20] sm:$0xff] %v5775
        %5812 = vst [vmem:[#allocation4 + $0x28] sm:$0xff] %v5776
        %5813 = vst [vmem:[#allocation4 + $0x30] sm:$0xff] %v5777
        %5814 = vst [vmem:[#allocation4 + $0x38] sm:$0xff] %v5778
        %5815 = vst [vmem:[#allocation4 + $0x40] sm:$0xff] %v5779
        %5816 = vst [vmem:[#allocation4 + $0x48] sm:$0xff] %v5780
        %5817 = vst [vmem:[#allocation4 + $0x50] sm:$0xff] %v5781
        %5818 = vst [vmem:[#allocation4 + $0x58] sm:$0xff] %v5782
        %5819 = vst [vmem:[#allocation4 + $0x60] sm:$0xff] %v5783
        %5820 = vst [vmem:[#allocation4 + $0x68] sm:$0xff] %v5784
        %5821 = vst [vmem:[#allocation4 + $0x70] sm:$0xff] %v5785
        %5822 = vst [vmem:[#allocation4 + $0x78] sm:$0xff] %v5786
        %5823 = vst [vmem:[#allocation4 + $0x80] sm:$0xff] %v5787
        %5824 = vst [vmem:[#allocation4 + $0x88] sm:$0xff] %v5788
        %5825 = vst [vmem:[#allocation4 + $0x90] sm:$0xff] %v5789
        %5826 = vst [vmem:[#allocation4 + $0x98] sm:$0xff] %v5790
        %5827 = vst [vmem:[#allocation4 + $0xa0] sm:$0xff] %v5791
        %5828 = vst [vmem:[#allocation4 + $0xa8] sm:$0xff] %v5792
        %5829 = vst [vmem:[#allocation4 + $0xb0] sm:$0xff] %v5793
        %5830 = vst [vmem:[#allocation4 + $0xb8] sm:$0xff] %v5794
        %5831 = vst [vmem:[#allocation4 + $0xc0] sm:$0xff] %v5795
        %5832 = vst [vmem:[#allocation4 + $0xc8] sm:$0xff] %v5796
        %5833 = vst [vmem:[#allocation4 + $0xd0] sm:$0xff] %v5797
        %5834 = vst [vmem:[#allocation4 + $0xd8] sm:$0xff] %v5798
        %5835 = vst [vmem:[#allocation4 + $0xe0] sm:$0xff] %v5799
        %5836 = vst [vmem:[#allocation4 + $0xe8] sm:$0xff] %v5800
        %5837 = vst [vmem:[#allocation4 + $0xf0] sm:$0xff] %v5801
        %5838 = vst [vmem:[#allocation4 + $0xf8] sm:$0xff] %v5802
        %5839 = vst [vmem:[#allocation4 + $0x100] sm:$0xff] %v5803
        %5840 = vst [vmem:[#allocation4 + $0x108] sm:$0xff] %v5804
        %5841 = vst [vmem:[#allocation4 + $0x110] sm:$0xff] %v5805
        %5842 = vst [vmem:[#allocation4 + $0x118] sm:$0xff] %v5806
        %v5843 = vld [vmem:[#allocation4] sm:$0xff]
        %v5844 = vld [vmem:[#allocation4 + $0x8] sm:$0xff]
        %v5845 = vld [vmem:[#allocation4 + $0x10] sm:$0xff]
        %v5846 = vld [vmem:[#allocation4 + $0x18] sm:$0xff]
        %v5847 = vld [vmem:[#allocation4 + $0x20] sm:$0xff]
        %v5848 = vld [vmem:[#allocation4 + $0x28] sm:$0xff]
        %v5849 = vld [vmem:[#allocation4 + $0x30] sm:$0xff]
        %v5850 = vld [vmem:[#allocation4 + $0x38] sm:$0xff]
        %v5851 = vld [vmem:[#allocation4 + $0x40] sm:$0xff]
        %v5852 = vld [vmem:[#allocation4 + $0x48] sm:$0xff]
        %v5853 = vld [vmem:[#allocation4 + $0x50] sm:$0xff]
        %v5854 = vld [vmem:[#allocation4 + $0x58] sm:$0xff]
        %v5855 = vld [vmem:[#allocation4 + $0x60] sm:$0xff]
        %v5856 = vld [vmem:[#allocation4 + $0x68] sm:$0xff]
        %v5857 = vld [vmem:[#allocation4 + $0x70] sm:$0xff]
        %v5858 = vld [vmem:[#allocation4 + $0x78] sm:$0xff]
        %v5859 = vld [vmem:[#allocation4 + $0x80] sm:$0xff]
        %v5860 = vld [vmem:[#allocation4 + $0x88] sm:$0xff]
        %v5861 = vld [vmem:[#allocation4 + $0x90] sm:$0xff]
        %v5862 = vld [vmem:[#allocation4 + $0x98] sm:$0xff]
        %v5863 = vld [vmem:[#allocation4 + $0xa0] sm:$0xff]
        %v5864 = vld [vmem:[#allocation4 + $0xa8] sm:$0xff]
        %v5865 = vld [vmem:[#allocation4 + $0xb0] sm:$0xff]
        %v5866 = vld [vmem:[#allocation4 + $0xb8] sm:$0xff]
        %v5867 = vld [vmem:[#allocation4 + $0xc0] sm:$0xff]
        %v5868 = vld [vmem:[#allocation4 + $0xc8] sm:$0xff]
        %v5869 = vld [vmem:[#allocation4 + $0xd0] sm:$0xff]
        %v5870 = vld [vmem:[#allocation4 + $0xd8] sm:$0xff]
        %v5871 = vld [vmem:[#allocation4 + $0xe0] sm:$0xff]
        %v5872 = vld [vmem:[#allocation4 + $0xe8] sm:$0xff]
        %v5873 = vld [vmem:[#allocation4 + $0xf0] sm:$0xff]
        %v5874 = vld [vmem:[#allocation4 + $0xf8] sm:$0xff]
        %v5875 = vld [vmem:[#allocation4 + $0x100] sm:$0xff]
        %v5876 = vld [vmem:[#allocation4 + $0x108] sm:$0xff]
        %v5877 = vld [vmem:[#allocation4 + $0x110] sm:$0xff]
        %v5878 = vld [vmem:[#allocation4 + $0x118] sm:$0xff]
        %v5879 = vld [vmem:[%s3] sm:$0x1]
        %v5881 = vperm.slane %v5879, 0
        %v5883 = vadd.f32 %v5843, %v5881
        %v5884 = vadd.f32 %v5844, %v5881
        %v5885 = vadd.f32 %v5845, %v5881
        %v5886 = vadd.f32 %v5846, %v5881
        %v5887 = vadd.f32 %v5847, %v5881
        %v5888 = vadd.f32 %v5848, %v5881
        %v5889 = vadd.f32 %v5849, %v5881
        %v5890 = vadd.f32 %v5850, %v5881
        %v5891 = vadd.f32 %v5851, %v5881
        %v5892 = vadd.f32 %v5852, %v5881
        %v5893 = vadd.f32 %v5853, %v5881
        %v5894 = vadd.f32 %v5854, %v5881
        %v5895 = vadd.f32 %v5855, %v5881
        %v5896 = vadd.f32 %v5856, %v5881
        %v5897 = vadd.f32 %v5857, %v5881
        %v5898 = vadd.f32 %v5858, %v5881
        %v5899 = vadd.f32 %v5859, %v5881
        %v5900 = vadd.f32 %v5860, %v5881
        %v5901 = vadd.f32 %v5861, %v5881
        %v5902 = vadd.f32 %v5862, %v5881
        %v5903 = vadd.f32 %v5863, %v5881
        %v5904 = vadd.f32 %v5864, %v5881
        %v5905 = vadd.f32 %v5865, %v5881
        %v5906 = vadd.f32 %v5866, %v5881
        %v5907 = vadd.f32 %v5867, %v5881
        %v5908 = vadd.f32 %v5868, %v5881
        %v5909 = vadd.f32 %v5869, %v5881
        %v5910 = vadd.f32 %v5870, %v5881
        %v5911 = vadd.f32 %v5871, %v5881
        %v5912 = vadd.f32 %v5872, %v5881
        %v5913 = vadd.f32 %v5873, %v5881
        %v5914 = vadd.f32 %v5874, %v5881
        %v5915 = vadd.f32 %v5875, %v5881
        %v5916 = vadd.f32 %v5876, %v5881
        %v5917 = vadd.f32 %v5877, %v5881
        %v5918 = vadd.f32 %v5878, %v5881
        %v5919 = vmax.f32 %v5883, 0.0
        %v5920 = vmax.f32 %v5884, 0.0
        %v5921 = vmax.f32 %v5885, 0.0
        %v5922 = vmax.f32 %v5886, 0.0
        %v5923 = vmax.f32 %v5887, 0.0
        %v5924 = vmax.f32 %v5888, 0.0
        %v5925 = vmax.f32 %v5889, 0.0
        %v5926 = vmax.f32 %v5890, 0.0
        %v5927 = vmax.f32 %v5891, 0.0
        %v5928 = vmax.f32 %v5892, 0.0
        %v5929 = vmax.f32 %v5893, 0.0
        %v5930 = vmax.f32 %v5894, 0.0
        %v5931 = vmax.f32 %v5895, 0.0
        %v5932 = vmax.f32 %v5896, 0.0
        %v5933 = vmax.f32 %v5897, 0.0
        %v5934 = vmax.f32 %v5898, 0.0
        %v5935 = vmax.f32 %v5899, 0.0
        %v5936 = vmax.f32 %v5900, 0.0
        %v5937 = vmax.f32 %v5901, 0.0
        %v5938 = vmax.f32 %v5902, 0.0
        %v5939 = vmax.f32 %v5903, 0.0
        %v5940 = vmax.f32 %v5904, 0.0
        %v5941 = vmax.f32 %v5905, 0.0
        %v5942 = vmax.f32 %v5906, 0.0
        %v5943 = vmax.f32 %v5907, 0.0
        %v5944 = vmax.f32 %v5908, 0.0
        %v5945 = vmax.f32 %v5909, 0.0
        %v5946 = vmax.f32 %v5910, 0.0
        %v5947 = vmax.f32 %v5911, 0.0
        %v5948 = vmax.f32 %v5912, 0.0
        %v5949 = vmax.f32 %v5913, 0.0
        %v5950 = vmax.f32 %v5914, 0.0
        %v5951 = vmax.f32 %v5915, 0.0
        %v5952 = vmax.f32 %v5916, 0.0
        %v5953 = vmax.f32 %v5917, 0.0
        %v5954 = vmax.f32 %v5918, 0.0
        %v5955 = vpack.c.bf16 %v5919, %v5919
        %v5956 = vpack.c.bf16 %v5920, %v5920
        %v5957 = vpack.c.bf16 %v5921, %v5921
        %v5958 = vpack.c.bf16 %v5922, %v5922
        %v5959 = vpack.c.bf16 %v5923, %v5923
        %v5960 = vpack.c.bf16 %v5924, %v5924
        %v5961 = vpack.c.bf16 %v5925, %v5925
        %v5962 = vpack.c.bf16 %v5926, %v5926
        %v5963 = vpack.c.bf16 %v5927, %v5927
        %v5964 = vpack.c.bf16 %v5928, %v5928
        %v5965 = vpack.c.bf16 %v5929, %v5929
        %v5966 = vpack.c.bf16 %v5930, %v5930
        %v5967 = vpack.c.bf16 %v5931, %v5931
        %v5968 = vpack.c.bf16 %v5932, %v5932
        %v5969 = vpack.c.bf16 %v5933, %v5933
        %v5970 = vpack.c.bf16 %v5934, %v5934
        %v5971 = vpack.c.bf16 %v5935, %v5935
        %v5972 = vpack.c.bf16 %v5936, %v5936
        %v5973 = vpack.c.bf16 %v5937, %v5937
        %v5974 = vpack.c.bf16 %v5938, %v5938
        %v5975 = vpack.c.bf16 %v5939, %v5939
        %v5976 = vpack.c.bf16 %v5940, %v5940
        %v5977 = vpack.c.bf16 %v5941, %v5941
        %v5978 = vpack.c.bf16 %v5942, %v5942
        %v5979 = vpack.c.bf16 %v5943, %v5943
        %v5980 = vpack.c.bf16 %v5944, %v5944
        %v5981 = vpack.c.bf16 %v5945, %v5945
        %v5982 = vpack.c.bf16 %v5946, %v5946
        %v5983 = vpack.c.bf16 %v5947, %v5947
        %v5984 = vpack.c.bf16 %v5948, %v5948
        %v5985 = vpack.c.bf16 %v5949, %v5949
        %v5986 = vpack.c.bf16 %v5950, %v5950
        %v5987 = vpack.c.bf16 %v5951, %v5951
        %v5988 = vpack.c.bf16 %v5952, %v5952
        %v5989 = vpack.c.bf16 %v5953, %v5953
        %v5990 = vpack.c.bf16 %v5954, %v5954
        %vm5991 = vsmask.f32 256
        %vm5992 = vsmask.f32 4368
        %vm5993 = vmor %vm5991, %vm5992
        %v5995 = vshrl.u32 %v5955, 16
        %v5997 = vrot.slane %v5995, 7
        %v5998 = vshll.u32 %v5955, 16
        %v6000 = vor.u32 %v5997, %v5998
        %v6001 = vrot.slane %v5997, 4
        %v6003 = vshrl.u32 %v5956, 16
        %v6005 = vrot.slane %v6003, 7
        %v6006 = vshll.u32 %v5956, 16
        %v6008 = vor.u32 %v6005, %v6006
        %v6009 = vsel %vm5993, %v6001, %v6008
        %v6010 = vrot.slane %v6005, 4
        %v6012 = vshrl.u32 %v5957, 16
        %v6014 = vrot.slane %v6012, 7
        %v6015 = vshll.u32 %v5957, 16
        %v6017 = vor.u32 %v6014, %v6015
        %v6018 = vrot.slane %v6014, 4
        %v6020 = vshrl.u32 %v5958, 16
        %v6022 = vrot.slane %v6020, 7
        %v6023 = vshll.u32 %v5958, 16
        %v6025 = vor.u32 %v6022, %v6023
        %v6026 = vsel %vm5993, %v6018, %v6025
        %v6027 = vrot.slane %v6022, 4
        %v6029 = vshrl.u32 %v5959, 16
        %v6031 = vrot.slane %v6029, 7
        %v6032 = vshll.u32 %v5959, 16
        %v6034 = vor.u32 %v6031, %v6032
        %v6035 = vrot.slane %v6031, 4
        %v6037 = vshrl.u32 %v5960, 16
        %v6039 = vrot.slane %v6037, 7
        %v6040 = vshll.u32 %v5960, 16
        %v6042 = vor.u32 %v6039, %v6040
        %v6043 = vsel %vm5993, %v6035, %v6042
        %v6044 = vrot.slane %v6039, 4
        %v6046 = vshrl.u32 %v5961, 16
        %v6048 = vrot.slane %v6046, 7
        %v6049 = vshll.u32 %v5961, 16
        %v6051 = vor.u32 %v6048, %v6049
        %v6052 = vrot.slane %v6048, 4
        %v6054 = vshrl.u32 %v5962, 16
        %v6056 = vrot.slane %v6054, 7
        %v6057 = vshll.u32 %v5962, 16
        %v6059 = vor.u32 %v6056, %v6057
        %v6060 = vsel %vm5993, %v6052, %v6059
        %v6061 = vrot.slane %v6056, 4
        %v6063 = vshrl.u32 %v5963, 16
        %v6065 = vrot.slane %v6063, 7
        %v6066 = vshll.u32 %v5963, 16
        %v6068 = vor.u32 %v6065, %v6066
        %v6069 = vrot.slane %v6065, 4
        %v6071 = vshrl.u32 %v5964, 16
        %v6073 = vrot.slane %v6071, 7
        %v6074 = vshll.u32 %v5964, 16
        %v6076 = vor.u32 %v6073, %v6074
        %v6077 = vsel %vm5993, %v6069, %v6076
        %v6078 = vrot.slane %v6073, 4
        %v6080 = vshrl.u32 %v5965, 16
        %v6082 = vrot.slane %v6080, 7
        %v6083 = vshll.u32 %v5965, 16
        %v6085 = vor.u32 %v6082, %v6083
        %v6086 = vrot.slane %v6082, 4
        %v6088 = vshrl.u32 %v5966, 16
        %v6090 = vrot.slane %v6088, 7
        %v6091 = vshll.u32 %v5966, 16
        %v6093 = vor.u32 %v6090, %v6091
        %v6094 = vsel %vm5993, %v6086, %v6093
        %v6095 = vrot.slane %v6090, 4
        %v6097 = vshrl.u32 %v5967, 16
        %v6099 = vrot.slane %v6097, 7
        %v6100 = vshll.u32 %v5967, 16
        %v6102 = vor.u32 %v6099, %v6100
        %v6103 = vrot.slane %v6099, 4
        %v6105 = vshrl.u32 %v5968, 16
        %v6107 = vrot.slane %v6105, 7
        %v6108 = vshll.u32 %v5968, 16
        %v6110 = vor.u32 %v6107, %v6108
        %v6111 = vsel %vm5993, %v6103, %v6110
        %v6112 = vrot.slane %v6107, 4
        %v6114 = vshrl.u32 %v5969, 16
        %v6116 = vrot.slane %v6114, 7
        %v6117 = vshll.u32 %v5969, 16
        %v6119 = vor.u32 %v6116, %v6117
        %v6120 = vrot.slane %v6116, 4
        %v6122 = vshrl.u32 %v5970, 16
        %v6124 = vrot.slane %v6122, 7
        %v6125 = vshll.u32 %v5970, 16
        %v6127 = vor.u32 %v6124, %v6125
        %v6128 = vsel %vm5993, %v6120, %v6127
        %v6129 = vrot.slane %v6124, 4
        %v6131 = vshrl.u32 %v5971, 16
        %v6133 = vrot.slane %v6131, 7
        %v6134 = vshll.u32 %v5971, 16
        %v6136 = vor.u32 %v6133, %v6134
        %v6137 = vrot.slane %v6133, 4
        %v6139 = vshrl.u32 %v5972, 16
        %v6141 = vrot.slane %v6139, 7
        %v6142 = vshll.u32 %v5972, 16
        %v6144 = vor.u32 %v6141, %v6142
        %v6145 = vsel %vm5993, %v6137, %v6144
        %v6146 = vrot.slane %v6141, 4
        %v6148 = vshrl.u32 %v5973, 16
        %v6150 = vrot.slane %v6148, 7
        %v6151 = vshll.u32 %v5973, 16
        %v6153 = vor.u32 %v6150, %v6151
        %v6154 = vrot.slane %v6150, 4
        %v6156 = vshrl.u32 %v5974, 16
        %v6158 = vrot.slane %v6156, 7
        %v6159 = vshll.u32 %v5974, 16
        %v6161 = vor.u32 %v6158, %v6159
        %v6162 = vsel %vm5993, %v6154, %v6161
        %v6163 = vrot.slane %v6158, 4
        %v6165 = vshrl.u32 %v5975, 16
        %v6167 = vrot.slane %v6165, 7
        %v6168 = vshll.u32 %v5975, 16
        %v6170 = vor.u32 %v6167, %v6168
        %v6171 = vrot.slane %v6167, 4
        %v6173 = vshrl.u32 %v5976, 16
        %v6175 = vrot.slane %v6173, 7
        %v6176 = vshll.u32 %v5976, 16
        %v6178 = vor.u32 %v6175, %v6176
        %v6179 = vsel %vm5993, %v6171, %v6178
        %v6180 = vrot.slane %v6175, 4
        %v6182 = vshrl.u32 %v5977, 16
        %v6184 = vrot.slane %v6182, 7
        %v6185 = vshll.u32 %v5977, 16
        %v6187 = vor.u32 %v6184, %v6185
        %v6188 = vrot.slane %v6184, 4
        %v6190 = vshrl.u32 %v5978, 16
        %v6192 = vrot.slane %v6190, 7
        %v6193 = vshll.u32 %v5978, 16
        %v6195 = vor.u32 %v6192, %v6193
        %v6196 = vsel %vm5993, %v6188, %v6195
        %v6197 = vrot.slane %v6192, 4
        %v6199 = vshrl.u32 %v5979, 16
        %v6201 = vrot.slane %v6199, 7
        %v6202 = vshll.u32 %v5979, 16
        %v6204 = vor.u32 %v6201, %v6202
        %v6205 = vrot.slane %v6201, 4
        %v6207 = vshrl.u32 %v5980, 16
        %v6209 = vrot.slane %v6207, 7
        %v6210 = vshll.u32 %v5980, 16
        %v6212 = vor.u32 %v6209, %v6210
        %v6213 = vsel %vm5993, %v6205, %v6212
        %v6214 = vrot.slane %v6209, 4
        %v6216 = vshrl.u32 %v5981, 16
        %v6218 = vrot.slane %v6216, 7
        %v6219 = vshll.u32 %v5981, 16
        %v6221 = vor.u32 %v6218, %v6219
        %v6222 = vrot.slane %v6218, 4
        %v6224 = vshrl.u32 %v5982, 16
        %v6226 = vrot.slane %v6224, 7
        %v6227 = vshll.u32 %v5982, 16
        %v6229 = vor.u32 %v6226, %v6227
        %v6230 = vsel %vm5993, %v6222, %v6229
        %v6231 = vrot.slane %v6226, 4
        %v6233 = vshrl.u32 %v5983, 16
        %v6235 = vrot.slane %v6233, 7
        %v6236 = vshll.u32 %v5983, 16
        %v6238 = vor.u32 %v6235, %v6236
        %v6239 = vrot.slane %v6235, 4
        %v6241 = vshrl.u32 %v5984, 16
        %v6243 = vrot.slane %v6241, 7
        %v6244 = vshll.u32 %v5984, 16
        %v6246 = vor.u32 %v6243, %v6244
        %v6247 = vsel %vm5993, %v6239, %v6246
        %v6248 = vrot.slane %v6243, 4
        %v6250 = vshrl.u32 %v5985, 16
        %v6252 = vrot.slane %v6250, 7
        %v6253 = vshll.u32 %v5985, 16
        %v6255 = vor.u32 %v6252, %v6253
        %v6256 = vrot.slane %v6252, 4
        %v6258 = vshrl.u32 %v5986, 16
        %v6260 = vrot.slane %v6258, 7
        %v6261 = vshll.u32 %v5986, 16
        %v6263 = vor.u32 %v6260, %v6261
        %v6264 = vsel %vm5993, %v6256, %v6263
        %v6265 = vrot.slane %v6260, 4
        %v6267 = vshrl.u32 %v5987, 16
        %v6269 = vrot.slane %v6267, 7
        %v6270 = vshll.u32 %v5987, 16
        %v6272 = vor.u32 %v6269, %v6270
        %v6273 = vrot.slane %v6269, 4
        %v6275 = vshrl.u32 %v5988, 16
        %v6277 = vrot.slane %v6275, 7
        %v6278 = vshll.u32 %v5988, 16
        %v6280 = vor.u32 %v6277, %v6278
        %v6281 = vsel %vm5993, %v6273, %v6280
        %v6282 = vrot.slane %v6277, 4
        %v6284 = vshrl.u32 %v5989, 16
        %v6286 = vrot.slane %v6284, 7
        %v6287 = vshll.u32 %v5989, 16
        %v6289 = vor.u32 %v6286, %v6287
        %v6290 = vrot.slane %v6286, 4
        %v6292 = vshrl.u32 %v5990, 16
        %v6294 = vrot.slane %v6292, 7
        %v6295 = vshll.u32 %v5990, 16
        %v6297 = vor.u32 %v6294, %v6295
        %v6298 = vsel %vm5993, %v6290, %v6297
        %v6299 = vrot.slane %v6294, 4
        %vm6354 = vcmask 1043456
        %vm6355 = vsmask.f32 7938
        %vm6356 = vmand %vm6354, %vm6355
        %v6357 = vld [vmem:[#allocation3] sm:$0xf]
        %v6358 = vsel %vm6356, %v6000, %v6357
        %6359 = vst [vmem:[#allocation3] sm:$0xf] %v6358
        %6360 = vst [vmem:[#allocation3 + $0x4] sm:$0xf] %v6009
        %vm6361 = vcmask 1040384
        %vm6362 = vmand %vm6361, %vm5991
        %v6363 = vld [vmem:[#allocation3 + $0x8] sm:$0x1]
        %v6364 = vsel %vm6362, %v6010, %v6363
        %6365 = vst [vmem:[#allocation3 + $0x8] sm:$0x1] %v6364
        %v6366 = vld [vmem:[#allocation3 + $0xc] sm:$0xf]
        %v6367 = vsel %vm6356, %v6017, %v6366
        %6368 = vst [vmem:[#allocation3 + $0xc] sm:$0xf] %v6367
        %6369 = vst [vmem:[#allocation3 + $0x10] sm:$0xf] %v6026
        %v6370 = vld [vmem:[#allocation3 + $0x14] sm:$0x1]
        %v6371 = vsel %vm6362, %v6027, %v6370
        %6372 = vst [vmem:[#allocation3 + $0x14] sm:$0x1] %v6371
        %v6373 = vld [vmem:[#allocation3 + $0x18] sm:$0xf]
        %v6374 = vsel %vm6356, %v6034, %v6373
        %6375 = vst [vmem:[#allocation3 + $0x18] sm:$0xf] %v6374
        %6376 = vst [vmem:[#allocation3 + $0x1c] sm:$0xf] %v6043
        %v6377 = vld [vmem:[#allocation3 + $0x20] sm:$0x1]
        %v6378 = vsel %vm6362, %v6044, %v6377
        %6379 = vst [vmem:[#allocation3 + $0x20] sm:$0x1] %v6378
        %v6380 = vld [vmem:[#allocation3 + $0x24] sm:$0xf]
        %v6381 = vsel %vm6356, %v6051, %v6380
        %6382 = vst [vmem:[#allocation3 + $0x24] sm:$0xf] %v6381
        %6383 = vst [vmem:[#allocation3 + $0x28] sm:$0xf] %v6060
        %v6384 = vld [vmem:[#allocation3 + $0x2c] sm:$0x1]
        %v6385 = vsel %vm6362, %v6061, %v6384
        %6386 = vst [vmem:[#allocation3 + $0x2c] sm:$0x1] %v6385
        %v6387 = vld [vmem:[#allocation3 + $0x30] sm:$0xf]
        %v6388 = vsel %vm6356, %v6068, %v6387
        %6389 = vst [vmem:[#allocation3 + $0x30] sm:$0xf] %v6388
        %6390 = vst [vmem:[#allocation3 + $0x34] sm:$0xf] %v6077
        %v6391 = vld [vmem:[#allocation3 + $0x38] sm:$0x1]
        %v6392 = vsel %vm6362, %v6078, %v6391
        %6393 = vst [vmem:[#allocation3 + $0x38] sm:$0x1] %v6392
        %v6394 = vld [vmem:[#allocation3 + $0x3c] sm:$0xf]
        %v6395 = vsel %vm6356, %v6085, %v6394
        %6396 = vst [vmem:[#allocation3 + $0x3c] sm:$0xf] %v6395
        %6397 = vst [vmem:[#allocation3 + $0x40] sm:$0xf] %v6094
        %v6398 = vld [vmem:[#allocation3 + $0x44] sm:$0x1]
        %v6399 = vsel %vm6362, %v6095, %v6398
        %6400 = vst [vmem:[#allocation3 + $0x44] sm:$0x1] %v6399
        %v6401 = vld [vmem:[#allocation3 + $0x48] sm:$0xf]
        %v6402 = vsel %vm6356, %v6102, %v6401
        %6403 = vst [vmem:[#allocation3 + $0x48] sm:$0xf] %v6402
        %6404 = vst [vmem:[#allocation3 + $0x4c] sm:$0xf] %v6111
        %v6405 = vld [vmem:[#allocation3 + $0x50] sm:$0x1]
        %v6406 = vsel %vm6362, %v6112, %v6405
        %6407 = vst [vmem:[#allocation3 + $0x50] sm:$0x1] %v6406
        %v6408 = vld [vmem:[#allocation3 + $0x54] sm:$0xf]
        %v6409 = vsel %vm6356, %v6119, %v6408
        %6410 = vst [vmem:[#allocation3 + $0x54] sm:$0xf] %v6409
        %6411 = vst [vmem:[#allocation3 + $0x58] sm:$0xf] %v6128
        %v6412 = vld [vmem:[#allocation3 + $0x5c] sm:$0x1]
        %v6413 = vsel %vm6362, %v6129, %v6412
        %6414 = vst [vmem:[#allocation3 + $0x5c] sm:$0x1] %v6413
        %v6415 = vld [vmem:[#allocation3 + $0x60] sm:$0xf]
        %v6416 = vsel %vm6356, %v6136, %v6415
        %6417 = vst [vmem:[#allocation3 + $0x60] sm:$0xf] %v6416
        %6418 = vst [vmem:[#allocation3 + $0x64] sm:$0xf] %v6145
        %v6419 = vld [vmem:[#allocation3 + $0x68] sm:$0x1]
        %v6420 = vsel %vm6362, %v6146, %v6419
        %6421 = vst [vmem:[#allocation3 + $0x68] sm:$0x1] %v6420
        %v6422 = vld [vmem:[#allocation3 + $0x6c] sm:$0xf]
        %v6423 = vsel %vm6356, %v6153, %v6422
        %6424 = vst [vmem:[#allocation3 + $0x6c] sm:$0xf] %v6423
        %6425 = vst [vmem:[#allocation3 + $0x70] sm:$0xf] %v6162
        %v6426 = vld [vmem:[#allocation3 + $0x74] sm:$0x1]
        %v6427 = vsel %vm6362, %v6163, %v6426
        %6428 = vst [vmem:[#allocation3 + $0x74] sm:$0x1] %v6427
        %v6429 = vld [vmem:[#allocation3 + $0x78] sm:$0xf]
        %v6430 = vsel %vm6356, %v6170, %v6429
        %6431 = vst [vmem:[#allocation3 + $0x78] sm:$0xf] %v6430
        %6432 = vst [vmem:[#allocation3 + $0x7c] sm:$0xf] %v6179
        %v6433 = vld [vmem:[#allocation3 + $0x80] sm:$0x1]
        %v6434 = vsel %vm6362, %v6180, %v6433
        %6435 = vst [vmem:[#allocation3 + $0x80] sm:$0x1] %v6434
        %v6436 = vld [vmem:[#allocation3 + $0x84] sm:$0xf]
        %v6437 = vsel %vm6356, %v6187, %v6436
        %6438 = vst [vmem:[#allocation3 + $0x84] sm:$0xf] %v6437
        %6439 = vst [vmem:[#allocation3 + $0x88] sm:$0xf] %v6196
        %v6440 = vld [vmem:[#allocation3 + $0x8c] sm:$0x1]
        %v6441 = vsel %vm6362, %v6197, %v6440
        %6442 = vst [vmem:[#allocation3 + $0x8c] sm:$0x1] %v6441
        %v6443 = vld [vmem:[#allocation3 + $0x90] sm:$0xf]
        %v6444 = vsel %vm6356, %v6204, %v6443
        %6445 = vst [vmem:[#allocation3 + $0x90] sm:$0xf] %v6444
        %6446 = vst [vmem:[#allocation3 + $0x94] sm:$0xf] %v6213
        %v6447 = vld [vmem:[#allocation3 + $0x98] sm:$0x1]
        %v6448 = vsel %vm6362, %v6214, %v6447
        %6449 = vst [vmem:[#allocation3 + $0x98] sm:$0x1] %v6448
        %v6450 = vld [vmem:[#allocation3 + $0x9c] sm:$0xf]
        %v6451 = vsel %vm6356, %v6221, %v6450
        %6452 = vst [vmem:[#allocation3 + $0x9c] sm:$0xf] %v6451
        %6453 = vst [vmem:[#allocation3 + $0xa0] sm:$0xf] %v6230
        %v6454 = vld [vmem:[#allocation3 + $0xa4] sm:$0x1]
        %v6455 = vsel %vm6362, %v6231, %v6454
        %6456 = vst [vmem:[#allocation3 + $0xa4] sm:$0x1] %v6455
        %v6457 = vld [vmem:[#allocation3 + $0xa8] sm:$0xf]
        %v6458 = vsel %vm6356, %v6238, %v6457
        %6459 = vst [vmem:[#allocation3 + $0xa8] sm:$0xf] %v6458
        %6460 = vst [vmem:[#allocation3 + $0xac] sm:$0xf] %v6247
        %v6461 = vld [vmem:[#allocation3 + $0xb0] sm:$0x1]
        %v6462 = vsel %vm6362, %v6248, %v6461
        %6463 = vst [vmem:[#allocation3 + $0xb0] sm:$0x1] %v6462
        %v6464 = vld [vmem:[#allocation3 + $0xb4] sm:$0xf]
        %v6465 = vsel %vm6356, %v6255, %v6464
        %6466 = vst [vmem:[#allocation3 + $0xb4] sm:$0xf] %v6465
        %6467 = vst [vmem:[#allocation3 + $0xb8] sm:$0xf] %v6264
        %v6468 = vld [vmem:[#allocation3 + $0xbc] sm:$0x1]
        %v6469 = vsel %vm6362, %v6265, %v6468
        %6470 = vst [vmem:[#allocation3 + $0xbc] sm:$0x1] %v6469
        %v6471 = vld [vmem:[#allocation3 + $0xc0] sm:$0xf]
        %v6472 = vsel %vm6356, %v6272, %v6471
        %6473 = vst [vmem:[#allocation3 + $0xc0] sm:$0xf] %v6472
        %6474 = vst [vmem:[#allocation3 + $0xc4] sm:$0xf] %v6281
        %v6475 = vld [vmem:[#allocation3 + $0xc8] sm:$0x1]
        %v6476 = vsel %vm6362, %v6282, %v6475
        %6477 = vst [vmem:[#allocation3 + $0xc8] sm:$0x1] %v6476
        %v6478 = vld [vmem:[#allocation3 + $0xcc] sm:$0xf]
        %v6479 = vsel %vm6356, %v6289, %v6478
        %6480 = vst [vmem:[#allocation3 + $0xcc] sm:$0xf] %v6479
        %6481 = vst [vmem:[#allocation3 + $0xd0] sm:$0xf] %v6298
        %v6482 = vld [vmem:[#allocation3 + $0xd4] sm:$0x1]
        %v6483 = vsel %vm6362, %v6299, %v6482
        %6484 = vst [vmem:[#allocation3 + $0xd4] sm:$0x1] %v6483
        %v6485 = vld [vmem:[#allocation3] sm:$0x1]
        %v6486 = vsel %vm6362, 0, %v6485
        %6487 = vst [vmem:[#allocation3] sm:$0x1] %v6486
        %v6488 = vld [vmem:[#allocation3 + $0xc] sm:$0x1]
        %v6489 = vsel %vm6362, 0, %v6488
        %6490 = vst [vmem:[#allocation3 + $0xc] sm:$0x1] %v6489
        %v6491 = vld [vmem:[#allocation3 + $0x18] sm:$0x1]
        %v6492 = vsel %vm6362, 0, %v6491
        %6493 = vst [vmem:[#allocation3 + $0x18] sm:$0x1] %v6492
        %v6494 = vld [vmem:[#allocation3 + $0x24] sm:$0x1]
        %v6495 = vsel %vm6362, 0, %v6494
        %6496 = vst [vmem:[#allocation3 + $0x24] sm:$0x1] %v6495
        %v6497 = vld [vmem:[#allocation3 + $0x30] sm:$0x1]
        %v6498 = vsel %vm6362, 0, %v6497
        %6499 = vst [vmem:[#allocation3 + $0x30] sm:$0x1] %v6498
        %v6500 = vld [vmem:[#allocation3 + $0x3c] sm:$0x1]
        %v6501 = vsel %vm6362, 0, %v6500
        %6502 = vst [vmem:[#allocation3 + $0x3c] sm:$0x1] %v6501
        %v6503 = vld [vmem:[#allocation3 + $0x48] sm:$0x1]
        %v6504 = vsel %vm6362, 0, %v6503
        %6505 = vst [vmem:[#allocation3 + $0x48] sm:$0x1] %v6504
        %v6506 = vld [vmem:[#allocation3 + $0x54] sm:$0x1]
        %v6507 = vsel %vm6362, 0, %v6506
        %6508 = vst [vmem:[#allocation3 + $0x54] sm:$0x1] %v6507
        %v6509 = vld [vmem:[#allocation3 + $0x60] sm:$0x1]
        %v6510 = vsel %vm6362, 0, %v6509
        %6511 = vst [vmem:[#allocation3 + $0x60] sm:$0x1] %v6510
        %v6512 = vld [vmem:[#allocation3 + $0x6c] sm:$0x1]
        %v6513 = vsel %vm6362, 0, %v6512
        %6514 = vst [vmem:[#allocation3 + $0x6c] sm:$0x1] %v6513
        %v6515 = vld [vmem:[#allocation3 + $0x78] sm:$0x1]
        %v6516 = vsel %vm6362, 0, %v6515
        %6517 = vst [vmem:[#allocation3 + $0x78] sm:$0x1] %v6516
        %v6518 = vld [vmem:[#allocation3 + $0x84] sm:$0x1]
        %v6519 = vsel %vm6362, 0, %v6518
        %6520 = vst [vmem:[#allocation3 + $0x84] sm:$0x1] %v6519
        %v6521 = vld [vmem:[#allocation3 + $0x90] sm:$0x1]
        %v6522 = vsel %vm6362, 0, %v6521
        %6523 = vst [vmem:[#allocation3 + $0x90] sm:$0x1] %v6522
        %v6524 = vld [vmem:[#allocation3 + $0x9c] sm:$0x1]
        %v6525 = vsel %vm6362, 0, %v6524
        %6526 = vst [vmem:[#allocation3 + $0x9c] sm:$0x1] %v6525
        %v6527 = vld [vmem:[#allocation3 + $0xa8] sm:$0x1]
        %v6528 = vsel %vm6362, 0, %v6527
        %6529 = vst [vmem:[#allocation3 + $0xa8] sm:$0x1] %v6528
        %v6530 = vld [vmem:[#allocation3 + $0xb4] sm:$0x1]
        %v6531 = vsel %vm6362, 0, %v6530
        %6532 = vst [vmem:[#allocation3 + $0xb4] sm:$0x1] %v6531
        %v6533 = vld [vmem:[#allocation3 + $0xc0] sm:$0x1]
        %v6534 = vsel %vm6362, 0, %v6533
        %6535 = vst [vmem:[#allocation3 + $0xc0] sm:$0x1] %v6534
        %v6536 = vld [vmem:[#allocation3 + $0xcc] sm:$0x1]
        %v6537 = vsel %vm6362, 0, %v6536
        %6538 = vst [vmem:[#allocation3 + $0xcc] sm:$0x1] %v6537
        %vm6539 = vmand %vm6361, %vm6355
        %v6540 = vld [vmem:[#allocation3 + $0x8] sm:$0x1]
        %v6541 = vsel %vm6539, 0, %v6540
        %6542 = vst [vmem:[#allocation3 + $0x8] sm:$0x1] %v6541
        %v6543 = vld [vmem:[#allocation3 + $0x14] sm:$0x1]
        %v6544 = vsel %vm6539, 0, %v6543
        %6545 = vst [vmem:[#allocation3 + $0x14] sm:$0x1] %v6544
        %v6546 = vld [vmem:[#allocation3 + $0x20] sm:$0x1]
        %v6547 = vsel %vm6539, 0, %v6546
        %6548 = vst [vmem:[#allocation3 + $0x20] sm:$0x1] %v6547
        %v6549 = vld [vmem:[#allocation3 + $0x2c] sm:$0x1]
        %v6550 = vsel %vm6539, 0, %v6549
        %6551 = vst [vmem:[#allocation3 + $0x2c] sm:$0x1] %v6550
        %v6552 = vld [vmem:[#allocation3 + $0x38] sm:$0x1]
        %v6553 = vsel %vm6539, 0, %v6552
        %6554 = vst [vmem:[#allocation3 + $0x38] sm:$0x1] %v6553
        %v6555 = vld [vmem:[#allocation3 + $0x44] sm:$0x1]
        %v6556 = vsel %vm6539, 0, %v6555
        %6557 = vst [vmem:[#allocation3 + $0x44] sm:$0x1] %v6556
        %v6558 = vld [vmem:[#allocation3 + $0x50] sm:$0x1]
        %v6559 = vsel %vm6539, 0, %v6558
        %6560 = vst [vmem:[#allocation3 + $0x50] sm:$0x1] %v6559
        %v6561 = vld [vmem:[#allocation3 + $0x5c] sm:$0x1]
        %v6562 = vsel %vm6539, 0, %v6561
        %6563 = vst [vmem:[#allocation3 + $0x5c] sm:$0x1] %v6562
        %v6564 = vld [vmem:[#allocation3 + $0x68] sm:$0x1]
        %v6565 = vsel %vm6539, 0, %v6564
        %6566 = vst [vmem:[#allocation3 + $0x68] sm:$0x1] %v6565
        %v6567 = vld [vmem:[#allocation3 + $0x74] sm:$0x1]
        %v6568 = vsel %vm6539, 0, %v6567
        %6569 = vst [vmem:[#allocation3 + $0x74] sm:$0x1] %v6568
        %v6570 = vld [vmem:[#allocation3 + $0x80] sm:$0x1]
        %v6571 = vsel %vm6539, 0, %v6570
        %6572 = vst [vmem:[#allocation3 + $0x80] sm:$0x1] %v6571
        %v6573 = vld [vmem:[#allocation3 + $0x8c] sm:$0x1]
        %v6574 = vsel %vm6539, 0, %v6573
        %6575 = vst [vmem:[#allocation3 + $0x8c] sm:$0x1] %v6574
        %v6576 = vld [vmem:[#allocation3 + $0x98] sm:$0x1]
        %v6577 = vsel %vm6539, 0, %v6576
        %6578 = vst [vmem:[#allocation3 + $0x98] sm:$0x1] %v6577
        %v6579 = vld [vmem:[#allocation3 + $0xa4] sm:$0x1]
        %v6580 = vsel %vm6539, 0, %v6579
        %6581 = vst [vmem:[#allocation3 + $0xa4] sm:$0x1] %v6580
        %v6582 = vld [vmem:[#allocation3 + $0xb0] sm:$0x1]
        %v6583 = vsel %vm6539, 0, %v6582
        %6584 = vst [vmem:[#allocation3 + $0xb0] sm:$0x1] %v6583
        %v6585 = vld [vmem:[#allocation3 + $0xbc] sm:$0x1]
        %v6586 = vsel %vm6539, 0, %v6585
        %6587 = vst [vmem:[#allocation3 + $0xbc] sm:$0x1] %v6586
        %v6588 = vld [vmem:[#allocation3 + $0xc8] sm:$0x1]
        %v6589 = vsel %vm6539, 0, %v6588
        %6590 = vst [vmem:[#allocation3 + $0xc8] sm:$0x1] %v6589
        %v6591 = vld [vmem:[#allocation3 + $0xd4] sm:$0x1]
        %v6592 = vsel %vm6539, 0, %v6591
        %6593 = vst [vmem:[#allocation3 + $0xd4] sm:$0x1] %v6592
        %p6594 = scmp.eq.s32.totalorder %s23, 0
        // Predicated region
        $region41: #{tpu_custom_call.1} parent=39 // pred_check
          %p6595 = pneg %p6594
        $region42: #{tpu_custom_call.1} parent=39 // pred_check_branch
          %6597 = sbr.rel (%p6595) target = $region44
        $region43: #{tpu_custom_call.1} parent=39 // pred_region
          %6598 = vst [vmem:[#allocation3] sm:$0xf] 0
          %6599 = vst [vmem:[#allocation3 + $0x4] sm:$0xf] 0
          %6600 = vst [vmem:[#allocation3 + $0x8] sm:$0x1] 0
          %s6601 = scalar_lea.vmem [#allocation3], 204
          %6602 = vst [vmem:[%s6601] sm:$0xf] 0
          %6603 = vst [vmem:[%s6601 + $0x4] sm:$0xf] 0
          %6604 = vst [vmem:[%s6601 + $0x8] sm:$0x1] 0
        $region44: #{tpu_custom_call.1} parent=39 // pred_fallthru
          _
        %v6605 = vld [vmem:[#allocation3] sm:$0xf]
        %v6606 = vld [vmem:[#allocation3 + $0x4] sm:$0xf]
        %v6607 = vld [vmem:[#allocation3 + $0xc] sm:$0xf]
        %v6608 = vld [vmem:[#allocation3 + $0x10] sm:$0xf]
        %v6609 = vld [vmem:[#allocation3 + $0x18] sm:$0xf]
        %v6610 = vld [vmem:[#allocation3 + $0x1c] sm:$0xf]
        %v6611 = vld [vmem:[#allocation3 + $0x24] sm:$0xf]
        %v6612 = vld [vmem:[#allocation3 + $0x28] sm:$0xf]
        %v6613 = vld [vmem:[#allocation3 + $0x30] sm:$0xf]
        %v6614 = vld [vmem:[#allocation3 + $0x34] sm:$0xf]
        %v6615 = vld [vmem:[#allocation3 + $0x3c] sm:$0xf]
        %v6616 = vld [vmem:[#allocation3 + $0x40] sm:$0xf]
        %v6617 = vld [vmem:[#allocation3 + $0x48] sm:$0xf]
        %v6618 = vld [vmem:[#allocation3 + $0x4c] sm:$0xf]
        %v6619 = vld [vmem:[#allocation3 + $0x54] sm:$0xf]
        %v6620 = vld [vmem:[#allocation3 + $0x58] sm:$0xf]
        %v6621 = vld [vmem:[#allocation3 + $0x60] sm:$0xf]
        %v6622 = vld [vmem:[#allocation3 + $0x64] sm:$0xf]
        %v6623 = vld [vmem:[#allocation3 + $0x6c] sm:$0xf]
        %v6624 = vld [vmem:[#allocation3 + $0x70] sm:$0xf]
        %v6625 = vld [vmem:[#allocation3 + $0x78] sm:$0xf]
        %v6626 = vld [vmem:[#allocation3 + $0x7c] sm:$0xf]
        %v6627 = vld [vmem:[#allocation3 + $0x84] sm:$0xf]
        %v6628 = vld [vmem:[#allocation3 + $0x88] sm:$0xf]
        %v6629 = vld [vmem:[#allocation3 + $0x90] sm:$0xf]
        %v6630 = vld [vmem:[#allocation3 + $0x94] sm:$0xf]
        %v6631 = vld [vmem:[#allocation3 + $0x9c] sm:$0xf]
        %v6632 = vld [vmem:[#allocation3 + $0xa0] sm:$0xf]
        %v6633 = vld [vmem:[#allocation3 + $0xa8] sm:$0xf]
        %v6634 = vld [vmem:[#allocation3 + $0xac] sm:$0xf]
        %v6635 = vld [vmem:[#allocation3 + $0xb4] sm:$0xf]
        %v6636 = vld [vmem:[#allocation3 + $0xb8] sm:$0xf]
        %v6637 = vld [vmem:[%s2] sm:$0xf]
        %v6638 = vld [vmem:[%s2 + $0x4] sm:$0xf]
        %v6639 = vld [vmem:[%s2 + $0x8] sm:$0xf]
        %v6640 = vld [vmem:[%s2 + $0xc] sm:$0xf]
        %v6641 = vld [vmem:[%s2 + $0x10] sm:$0xf]
        %v6642 = vld [vmem:[%s2 + $0x14] sm:$0xf]
        %v6643 = vld [vmem:[%s2 + $0x18] sm:$0xf]
        %v6644 = vld [vmem:[%s2 + $0x1c] sm:$0xf]
        %v6645 = vld [vmem:[%s2 + $0x20] sm:$0xf]
        %v6646 = vld [vmem:[%s2 + $0x24] sm:$0xf]
        %v6647 = vld [vmem:[%s2 + $0x28] sm:$0xf]
        %v6648 = vld [vmem:[%s2 + $0x2c] sm:$0xf]
        %v6649 = vld [vmem:[%s2 + $0x30] sm:$0xf]
        %v6650 = vld [vmem:[%s2 + $0x34] sm:$0xf]
        %v6651 = vld [vmem:[%s2 + $0x38] sm:$0xf]
        %v6652 = vld [vmem:[%s2 + $0x3c] sm:$0xf]
        %v6685 = vunpack.c.l.b16 %v6605
        %v6686 = vunpack.c.l.b16 %v6606
        %v6687 = vunpack.c.l.b16 %v6607
        %v6688 = vunpack.c.l.b16 %v6608
        %v6689 = vunpack.c.l.b16 %v6609
        %v6690 = vunpack.c.l.b16 %v6610
        %v6691 = vunpack.c.l.b16 %v6611
        %v6692 = vunpack.c.l.b16 %v6612
        %v6693 = vunpack.c.l.b16 %v6613
        %v6694 = vunpack.c.l.b16 %v6614
        %v6695 = vunpack.c.l.b16 %v6615
        %v6696 = vunpack.c.l.b16 %v6616
        %v6697 = vunpack.c.l.b16 %v6617
        %v6698 = vunpack.c.l.b16 %v6618
        %v6699 = vunpack.c.l.b16 %v6619
        %v6700 = vunpack.c.l.b16 %v6620
        %v6701 = vunpack.c.l.b16 %v6621
        %v6702 = vunpack.c.l.b16 %v6622
        %v6703 = vunpack.c.l.b16 %v6623
        %v6704 = vunpack.c.l.b16 %v6624
        %v6705 = vunpack.c.l.b16 %v6625
        %v6706 = vunpack.c.l.b16 %v6626
        %v6707 = vunpack.c.l.b16 %v6627
        %v6708 = vunpack.c.l.b16 %v6628
        %v6709 = vunpack.c.l.b16 %v6629
        %v6710 = vunpack.c.l.b16 %v6630
        %v6711 = vunpack.c.l.b16 %v6631
        %v6712 = vunpack.c.l.b16 %v6632
        %v6713 = vunpack.c.l.b16 %v6633
        %v6714 = vunpack.c.l.b16 %v6634
        %v6715 = vunpack.c.l.b16 %v6635
        %v6716 = vunpack.c.l.b16 %v6636
        %v6717 = vpack.c.b16 %v6686, %v6685
        %v6718 = vpack.c.b16 %v6688, %v6687
        %v6719 = vpack.c.b16 %v6690, %v6689
        %v6720 = vpack.c.b16 %v6692, %v6691
        %v6721 = vpack.c.b16 %v6694, %v6693
        %v6722 = vpack.c.b16 %v6696, %v6695
        %v6723 = vpack.c.b16 %v6698, %v6697
        %v6724 = vpack.c.b16 %v6700, %v6699
        %v6725 = vpack.c.b16 %v6702, %v6701
        %v6726 = vpack.c.b16 %v6704, %v6703
        %v6727 = vpack.c.b16 %v6706, %v6705
        %v6728 = vpack.c.b16 %v6708, %v6707
        %v6729 = vpack.c.b16 %v6710, %v6709
        %v6730 = vpack.c.b16 %v6712, %v6711
        %v6731 = vpack.c.b16 %v6714, %v6713
        %v6732 = vpack.c.b16 %v6716, %v6715
        %v6765 = vunpack.c.l.b16 %v6637
        %v6766 = vunpack.c.l.b16 %v6638
        %v6767 = vunpack.c.l.b16 %v6639
        %v6768 = vunpack.c.l.b16 %v6640
        %v6769 = vunpack.c.l.b16 %v6641
        %v6770 = vunpack.c.l.b16 %v6642
        %v6771 = vunpack.c.l.b16 %v6643
        %v6772 = vunpack.c.l.b16 %v6644
        %v6773 = vunpack.c.l.b16 %v6645
        %v6774 = vunpack.c.l.b16 %v6646
        %v6775 = vunpack.c.l.b16 %v6647
        %v6776 = vunpack.c.l.b16 %v6648
        %v6777 = vunpack.c.l.b16 %v6649
        %v6778 = vunpack.c.l.b16 %v6650
        %v6779 = vunpack.c.l.b16 %v6651
        %v6780 = vunpack.c.l.b16 %v6652
        %v6781 = vpack.c.b16 %v6766, %v6765
        %v6782 = vpack.c.b16 %v6768, %v6767
        %v6783 = vpack.c.b16 %v6770, %v6769
        %v6784 = vpack.c.b16 %v6772, %v6771
        %v6785 = vpack.c.b16 %v6774, %v6773
        %v6786 = vpack.c.b16 %v6776, %v6775
        %v6787 = vpack.c.b16 %v6778, %v6777
        %v6788 = vpack.c.b16 %v6780, %v6779
        %6797 = vmatpush.bf16.msra.mxu0 %v6788
        %6798 = vmatpush.bf16.msra.mxu0 %v6787
        %6799 = vmatpush.bf16.msra.mxu0 %v6786
        %6800 = vmatpush.bf16.msra.mxu0 %v6785
        %6801 = vmatpush.bf16.msra.mxu0 %v6784
        %6802 = vmatpush.bf16.msra.mxu0 %v6783
        %6803 = vmatpush.bf16.msra.mxu0 %v6782
        %6804 = vmatpush.bf16.msra.mxu0 %v6781
        %6805 = vmatmul.bf16.gmra.mxu0 %v6717
        %v6806 = vpop.f32.mrf.mxu0
        %v6807 = vadd.f32 0.0, %v6806
        %v6808 = vpop.f32.mrf.mxu0
        %v6809 = vadd.f32 0.0, %v6808
        %6810 = vmatmul.bf16.gmra.mxu0 %v6718
        %v6811 = vpop.f32.mrf.mxu0
        %v6812 = vadd.f32 0.0, %v6811
        %v6813 = vpop.f32.mrf.mxu0
        %v6814 = vadd.f32 0.0, %v6813
        %6815 = vmatmul.bf16.gmra.mxu0 %v6719
        %v6816 = vpop.f32.mrf.mxu0
        %v6817 = vadd.f32 0.0, %v6816
        %v6818 = vpop.f32.mrf.mxu0
        %v6819 = vadd.f32 0.0, %v6818
        %6820 = vmatmul.bf16.gmra.mxu0 %v6720
        %v6821 = vpop.f32.mrf.mxu0
        %v6822 = vadd.f32 0.0, %v6821
        %v6823 = vpop.f32.mrf.mxu0
        %v6824 = vadd.f32 0.0, %v6823
        %6825 = vmatmul.bf16.gmra.mxu0 %v6721
        %v6826 = vpop.f32.mrf.mxu0
        %v6827 = vadd.f32 0.0, %v6826
        %v6828 = vpop.f32.mrf.mxu0
        %v6829 = vadd.f32 0.0, %v6828
        %6830 = vmatmul.bf16.gmra.mxu0 %v6722
        %v6831 = vpop.f32.mrf.mxu0
        %v6832 = vadd.f32 0.0, %v6831
        %v6833 = vpop.f32.mrf.mxu0
        %v6834 = vadd.f32 0.0, %v6833
        %6835 = vmatmul.bf16.gmra.mxu0 %v6723
        %v6836 = vpop.f32.mrf.mxu0
        %v6837 = vadd.f32 0.0, %v6836
        %v6838 = vpop.f32.mrf.mxu0
        %v6839 = vadd.f32 0.0, %v6838
        %6840 = vmatmul.bf16.gmra.mxu0 %v6724
        %v6841 = vpop.f32.mrf.mxu0
        %v6842 = vadd.f32 0.0, %v6841
        %v6843 = vpop.f32.mrf.mxu0
        %v6844 = vadd.f32 0.0, %v6843
        %6845 = vmatmul.bf16.gmra.mxu0 %v6725
        %v6846 = vpop.f32.mrf.mxu0
        %v6847 = vadd.f32 0.0, %v6846
        %v6848 = vpop.f32.mrf.mxu0
        %v6849 = vadd.f32 0.0, %v6848
        %6850 = vmatmul.bf16.gmra.mxu0 %v6726
        %v6851 = vpop.f32.mrf.mxu0
        %v6852 = vadd.f32 0.0, %v6851
        %v6853 = vpop.f32.mrf.mxu0
        %v6854 = vadd.f32 0.0, %v6853
        %6855 = vmatmul.bf16.gmra.mxu0 %v6727
        %v6856 = vpop.f32.mrf.mxu0
        %v6857 = vadd.f32 0.0, %v6856
        %v6858 = vpop.f32.mrf.mxu0
        %v6859 = vadd.f32 0.0, %v6858
        %6860 = vmatmul.bf16.gmra.mxu0 %v6728
        %v6861 = vpop.f32.mrf.mxu0
        %v6862 = vadd.f32 0.0, %v6861
        %v6863 = vpop.f32.mrf.mxu0
        %v6864 = vadd.f32 0.0, %v6863
        %6865 = vmatmul.bf16.gmra.mxu0 %v6729
        %v6866 = vpop.f32.mrf.mxu0
        %v6867 = vadd.f32 0.0, %v6866
        %v6868 = vpop.f32.mrf.mxu0
        %v6869 = vadd.f32 0.0, %v6868
        %6870 = vmatmul.bf16.gmra.mxu0 %v6730
        %v6871 = vpop.f32.mrf.mxu0
        %v6872 = vadd.f32 0.0, %v6871
        %v6873 = vpop.f32.mrf.mxu0
        %v6874 = vadd.f32 0.0, %v6873
        %6875 = vmatmul.bf16.gmra.mxu0 %v6731
        %v6876 = vpop.f32.mrf.mxu0
        %v6877 = vadd.f32 0.0, %v6876
        %v6878 = vpop.f32.mrf.mxu0
        %v6879 = vadd.f32 0.0, %v6878
        %6880 = vmatmul.bf16.gmra.mxu0 %v6732
        %v6881 = vpop.f32.mrf.mxu0
        %v6882 = vadd.f32 0.0, %v6881
        %v6883 = vpop.f32.mrf.mxu0
        %v6884 = vadd.f32 0.0, %v6883
        %6885 = vdwg.mxu0
        %6886 = vst [vmem:[#allocation4] sm:$0xff] %v6807
        %6887 = vst [vmem:[#allocation4 + $0x8] sm:$0xff] %v6809
        %6888 = vst [vmem:[#allocation4 + $0x10] sm:$0xff] %v6812
        %6889 = vst [vmem:[#allocation4 + $0x18] sm:$0xff] %v6814
        %6890 = vst [vmem:[#allocation4 + $0x20] sm:$0xff] %v6817
        %6891 = vst [vmem:[#allocation4 + $0x28] sm:$0xff] %v6819
        %6892 = vst [vmem:[#allocation4 + $0x30] sm:$0xff] %v6822
        %6893 = vst [vmem:[#allocation4 + $0x38] sm:$0xff] %v6824
        %6894 = vst [vmem:[#allocation4 + $0x40] sm:$0xff] %v6827
        %6895 = vst [vmem:[#allocation4 + $0x48] sm:$0xff] %v6829
        %6896 = vst [vmem:[#allocation4 + $0x50] sm:$0xff] %v6832
        %6897 = vst [vmem:[#allocation4 + $0x58] sm:$0xff] %v6834
        %6898 = vst [vmem:[#allocation4 + $0x60] sm:$0xff] %v6837
        %6899 = vst [vmem:[#allocation4 + $0x68] sm:$0xff] %v6839
        %6900 = vst [vmem:[#allocation4 + $0x70] sm:$0xff] %v6842
        %6901 = vst [vmem:[#allocation4 + $0x78] sm:$0xff] %v6844
        %6902 = vst [vmem:[#allocation4 + $0x80] sm:$0xff] %v6847
        %6903 = vst [vmem:[#allocation4 + $0x88] sm:$0xff] %v6849
        %6904 = vst [vmem:[#allocation4 + $0x90] sm:$0xff] %v6852
        %6905 = vst [vmem:[#allocation4 + $0x98] sm:$0xff] %v6854
        %6906 = vst [vmem:[#allocation4 + $0xa0] sm:$0xff] %v6857
        %6907 = vst [vmem:[#allocation4 + $0xa8] sm:$0xff] %v6859
        %6908 = vst [vmem:[#allocation4 + $0xb0] sm:$0xff] %v6862
        %6909 = vst [vmem:[#allocation4 + $0xb8] sm:$0xff] %v6864
        %6910 = vst [vmem:[#allocation4 + $0xc0] sm:$0xff] %v6867
        %6911 = vst [vmem:[#allocation4 + $0xc8] sm:$0xff] %v6869
        %6912 = vst [vmem:[#allocation4 + $0xd0] sm:$0xff] %v6872
        %6913 = vst [vmem:[#allocation4 + $0xd8] sm:$0xff] %v6874
        %6914 = vst [vmem:[#allocation4 + $0xe0] sm:$0xff] %v6877
        %6915 = vst [vmem:[#allocation4 + $0xe8] sm:$0xff] %v6879
        %6916 = vst [vmem:[#allocation4 + $0xf0] sm:$0xff] %v6882
        %6917 = vst [vmem:[#allocation4 + $0xf8] sm:$0xff] %v6884
        %v6918 = vld [vmem:[#allocation3] sm:$0xf]
        %v6919 = vld [vmem:[#allocation3 + $0x4] sm:$0xf]
        %v6920 = vld [vmem:[#allocation3 + $0x8] sm:$0x1]
        %v6921 = vld [vmem:[#allocation3 + $0xc] sm:$0xf]
        %v6922 = vld [vmem:[#allocation3 + $0x10] sm:$0xf]
        %v6923 = vld [vmem:[#allocation3 + $0x14] sm:$0x1]
        %v6924 = vld [vmem:[#allocation3 + $0x18] sm:$0xf]
        %v6925 = vld [vmem:[#allocation3 + $0x1c] sm:$0xf]
        %v6926 = vld [vmem:[#allocation3 + $0x20] sm:$0x1]
        %v6927 = vld [vmem:[#allocation3 + $0x24] sm:$0xf]
        %v6928 = vld [vmem:[#allocation3 + $0x28] sm:$0xf]
        %v6929 = vld [vmem:[#allocation3 + $0x2c] sm:$0x1]
        %v6930 = vld [vmem:[#allocation3 + $0x30] sm:$0xf]
        %v6931 = vld [vmem:[#allocation3 + $0x34] sm:$0xf]
        %v6932 = vld [vmem:[#allocation3 + $0x38] sm:$0x1]
        %v6933 = vld [vmem:[#allocation3 + $0x3c] sm:$0xf]
        %v6934 = vld [vmem:[#allocation3 + $0x40] sm:$0xf]
        %v6935 = vld [vmem:[#allocation3 + $0x44] sm:$0x1]
        %v6936 = vld [vmem:[#allocation3 + $0x48] sm:$0xf]
        %v6937 = vld [vmem:[#allocation3 + $0x4c] sm:$0xf]
        %v6938 = vld [vmem:[#allocation3 + $0x50] sm:$0x1]
        %v6939 = vld [vmem:[#allocation3 + $0x54] sm:$0xf]
        %v6940 = vld [vmem:[#allocation3 + $0x58] sm:$0xf]
        %v6941 = vld [vmem:[#allocation3 + $0x5c] sm:$0x1]
        %v6942 = vld [vmem:[#allocation3 + $0x60] sm:$0xf]
        %v6943 = vld [vmem:[#allocation3 + $0x64] sm:$0xf]
        %v6944 = vld [vmem:[#allocation3 + $0x68] sm:$0x1]
        %v6945 = vld [vmem:[#allocation3 + $0x6c] sm:$0xf]
        %v6946 = vld [vmem:[#allocation3 + $0x70] sm:$0xf]
        %v6947 = vld [vmem:[#allocation3 + $0x74] sm:$0x1]
        %v6948 = vld [vmem:[#allocation3 + $0x78] sm:$0xf]
        %v6949 = vld [vmem:[#allocation3 + $0x7c] sm:$0xf]
        %v6950 = vld [vmem:[#allocation3 + $0x80] sm:$0x1]
        %v6951 = vld [vmem:[#allocation3 + $0x84] sm:$0xf]
        %v6952 = vld [vmem:[#allocation3 + $0x88] sm:$0xf]
        %v6953 = vld [vmem:[#allocation3 + $0x8c] sm:$0x1]
        %v6954 = vld [vmem:[#allocation3 + $0x90] sm:$0xf]
        %v6955 = vld [vmem:[#allocation3 + $0x94] sm:$0xf]
        %v6956 = vld [vmem:[#allocation3 + $0x98] sm:$0x1]
        %v6957 = vld [vmem:[#allocation3 + $0x9c] sm:$0xf]
        %v6958 = vld [vmem:[#allocation3 + $0xa0] sm:$0xf]
        %v6959 = vld [vmem:[#allocation3 + $0xa4] sm:$0x1]
        %v6960 = vld [vmem:[#allocation3 + $0xa8] sm:$0xf]
        %v6961 = vld [vmem:[#allocation3 + $0xac] sm:$0xf]
        %v6962 = vld [vmem:[#allocation3 + $0xb0] sm:$0x1]
        %v6963 = vld [vmem:[#allocation3 + $0xb4] sm:$0xf]
        %v6964 = vld [vmem:[#allocation3 + $0xb8] sm:$0xf]
        %v6965 = vld [vmem:[#allocation3 + $0xbc] sm:$0x1]
        %v6967 = vshrl.u32 %v6918, 16
        %v6969 = vrot.slane %v6967, 4
        %v6970 = vshll.u32 %v6918, 16
        %v6972 = vrot.slane %v6970, 5
        %v6973 = vor.u32 %v6969, %v6972
        %v6974 = vrot.slane %v6973, 4
        %v6976 = vshll.u32 %v6919, 16
        %v6978 = vrot.slane %v6976, 5
        %v6979 = vsel %vm835, %v6974, %v6978
        %v6980 = vshrl.u32 %v6919, 16
        %v6982 = vrot.slane %v6980, 4
        %v6983 = vor.u32 %v6982, %v6978
        %v6984 = vrot.slane %v6983, 4
        %v6986 = vshll.u32 %v6920, 16
        %v6988 = vrot.slane %v6986, 5
        %v6989 = vsel %vm835, %v6984, %v6988
        %v6991 = vshrl.u32 %v6921, 16
        %v6993 = vrot.slane %v6991, 4
        %v6994 = vshll.u32 %v6921, 16
        %v6996 = vrot.slane %v6994, 5
        %v6997 = vor.u32 %v6993, %v6996
        %v6998 = vrot.slane %v6997, 4
        %v7000 = vshll.u32 %v6922, 16
        %v7002 = vrot.slane %v7000, 5
        %v7003 = vsel %vm835, %v6998, %v7002
        %v7004 = vshrl.u32 %v6922, 16
        %v7006 = vrot.slane %v7004, 4
        %v7007 = vor.u32 %v7006, %v7002
        %v7008 = vrot.slane %v7007, 4
        %v7010 = vshll.u32 %v6923, 16
        %v7012 = vrot.slane %v7010, 5
        %v7013 = vsel %vm835, %v7008, %v7012
        %v7015 = vshrl.u32 %v6924, 16
        %v7017 = vrot.slane %v7015, 4
        %v7018 = vshll.u32 %v6924, 16
        %v7020 = vrot.slane %v7018, 5
        %v7021 = vor.u32 %v7017, %v7020
        %v7022 = vrot.slane %v7021, 4
        %v7024 = vshll.u32 %v6925, 16
        %v7026 = vrot.slane %v7024, 5
        %v7027 = vsel %vm835, %v7022, %v7026
        %v7028 = vshrl.u32 %v6925, 16
        %v7030 = vrot.slane %v7028, 4
        %v7031 = vor.u32 %v7030, %v7026
        %v7032 = vrot.slane %v7031, 4
        %v7034 = vshll.u32 %v6926, 16
        %v7036 = vrot.slane %v7034, 5
        %v7037 = vsel %vm835, %v7032, %v7036
        %v7039 = vshrl.u32 %v6927, 16
        %v7041 = vrot.slane %v7039, 4
        %v7042 = vshll.u32 %v6927, 16
        %v7044 = vrot.slane %v7042, 5
        %v7045 = vor.u32 %v7041, %v7044
        %v7046 = vrot.slane %v7045, 4
        %v7048 = vshll.u32 %v6928, 16
        %v7050 = vrot.slane %v7048, 5
        %v7051 = vsel %vm835, %v7046, %v7050
        %v7052 = vshrl.u32 %v6928, 16
        %v7054 = vrot.slane %v7052, 4
        %v7055 = vor.u32 %v7054, %v7050
        %v7056 = vrot.slane %v7055, 4
        %v7058 = vshll.u32 %v6929, 16
        %v7060 = vrot.slane %v7058, 5
        %v7061 = vsel %vm835, %v7056, %v7060
        %v7063 = vshrl.u32 %v6930, 16
        %v7065 = vrot.slane %v7063, 4
        %v7066 = vshll.u32 %v6930, 16
        %v7068 = vrot.slane %v7066, 5
        %v7069 = vor.u32 %v7065, %v7068
        %v7070 = vrot.slane %v7069, 4
        %v7072 = vshll.u32 %v6931, 16
        %v7074 = vrot.slane %v7072, 5
        %v7075 = vsel %vm835, %v7070, %v7074
        %v7076 = vshrl.u32 %v6931, 16
        %v7078 = vrot.slane %v7076, 4
        %v7079 = vor.u32 %v7078, %v7074
        %v7080 = vrot.slane %v7079, 4
        %v7082 = vshll.u32 %v6932, 16
        %v7084 = vrot.slane %v7082, 5
        %v7085 = vsel %vm835, %v7080, %v7084
        %v7087 = vshrl.u32 %v6933, 16
        %v7089 = vrot.slane %v7087, 4
        %v7090 = vshll.u32 %v6933, 16
        %v7092 = vrot.slane %v7090, 5
        %v7093 = vor.u32 %v7089, %v7092
        %v7094 = vrot.slane %v7093, 4
        %v7096 = vshll.u32 %v6934, 16
        %v7098 = vrot.slane %v7096, 5
        %v7099 = vsel %vm835, %v7094, %v7098
        %v7100 = vshrl.u32 %v6934, 16
        %v7102 = vrot.slane %v7100, 4
        %v7103 = vor.u32 %v7102, %v7098
        %v7104 = vrot.slane %v7103, 4
        %v7106 = vshll.u32 %v6935, 16
        %v7108 = vrot.slane %v7106, 5
        %v7109 = vsel %vm835, %v7104, %v7108
        %v7111 = vshrl.u32 %v6936, 16
        %v7113 = vrot.slane %v7111, 4
        %v7114 = vshll.u32 %v6936, 16
        %v7116 = vrot.slane %v7114, 5
        %v7117 = vor.u32 %v7113, %v7116
        %v7118 = vrot.slane %v7117, 4
        %v7120 = vshll.u32 %v6937, 16
        %v7122 = vrot.slane %v7120, 5
        %v7123 = vsel %vm835, %v7118, %v7122
        %v7124 = vshrl.u32 %v6937, 16
        %v7126 = vrot.slane %v7124, 4
        %v7127 = vor.u32 %v7126, %v7122
        %v7128 = vrot.slane %v7127, 4
        %v7130 = vshll.u32 %v6938, 16
        %v7132 = vrot.slane %v7130, 5
        %v7133 = vsel %vm835, %v7128, %v7132
        %v7135 = vshrl.u32 %v6939, 16
        %v7137 = vrot.slane %v7135, 4
        %v7138 = vshll.u32 %v6939, 16
        %v7140 = vrot.slane %v7138, 5
        %v7141 = vor.u32 %v7137, %v7140
        %v7142 = vrot.slane %v7141, 4
        %v7144 = vshll.u32 %v6940, 16
        %v7146 = vrot.slane %v7144, 5
        %v7147 = vsel %vm835, %v7142, %v7146
        %v7148 = vshrl.u32 %v6940, 16
        %v7150 = vrot.slane %v7148, 4
        %v7151 = vor.u32 %v7150, %v7146
        %v7152 = vrot.slane %v7151, 4
        %v7154 = vshll.u32 %v6941, 16
        %v7156 = vrot.slane %v7154, 5
        %v7157 = vsel %vm835, %v7152, %v7156
        %v7159 = vshrl.u32 %v6942, 16
        %v7161 = vrot.slane %v7159, 4
        %v7162 = vshll.u32 %v6942, 16
        %v7164 = vrot.slane %v7162, 5
        %v7165 = vor.u32 %v7161, %v7164
        %v7166 = vrot.slane %v7165, 4
        %v7168 = vshll.u32 %v6943, 16
        %v7170 = vrot.slane %v7168, 5
        %v7171 = vsel %vm835, %v7166, %v7170
        %v7172 = vshrl.u32 %v6943, 16
        %v7174 = vrot.slane %v7172, 4
        %v7175 = vor.u32 %v7174, %v7170
        %v7176 = vrot.slane %v7175, 4
        %v7178 = vshll.u32 %v6944, 16
        %v7180 = vrot.slane %v7178, 5
        %v7181 = vsel %vm835, %v7176, %v7180
        %v7183 = vshrl.u32 %v6945, 16
        %v7185 = vrot.slane %v7183, 4
        %v7186 = vshll.u32 %v6945, 16
        %v7188 = vrot.slane %v7186, 5
        %v7189 = vor.u32 %v7185, %v7188
        %v7190 = vrot.slane %v7189, 4
        %v7192 = vshll.u32 %v6946, 16
        %v7194 = vrot.slane %v7192, 5
        %v7195 = vsel %vm835, %v7190, %v7194
        %v7196 = vshrl.u32 %v6946, 16
        %v7198 = vrot.slane %v7196, 4
        %v7199 = vor.u32 %v7198, %v7194
        %v7200 = vrot.slane %v7199, 4
        %v7202 = vshll.u32 %v6947, 16
        %v7204 = vrot.slane %v7202, 5
        %v7205 = vsel %vm835, %v7200, %v7204
        %v7207 = vshrl.u32 %v6948, 16
        %v7209 = vrot.slane %v7207, 4
        %v7210 = vshll.u32 %v6948, 16
        %v7212 = vrot.slane %v7210, 5
        %v7213 = vor.u32 %v7209, %v7212
        %v7214 = vrot.slane %v7213, 4
        %v7216 = vshll.u32 %v6949, 16
        %v7218 = vrot.slane %v7216, 5
        %v7219 = vsel %vm835, %v7214, %v7218
        %v7220 = vshrl.u32 %v6949, 16
        %v7222 = vrot.slane %v7220, 4
        %v7223 = vor.u32 %v7222, %v7218
        %v7224 = vrot.slane %v7223, 4
        %v7226 = vshll.u32 %v6950, 16
        %v7228 = vrot.slane %v7226, 5
        %v7229 = vsel %vm835, %v7224, %v7228
        %v7231 = vshrl.u32 %v6951, 16
        %v7233 = vrot.slane %v7231, 4
        %v7234 = vshll.u32 %v6951, 16
        %v7236 = vrot.slane %v7234, 5
        %v7237 = vor.u32 %v7233, %v7236
        %v7238 = vrot.slane %v7237, 4
        %v7240 = vshll.u32 %v6952, 16
        %v7242 = vrot.slane %v7240, 5
        %v7243 = vsel %vm835, %v7238, %v7242
        %v7244 = vshrl.u32 %v6952, 16
        %v7246 = vrot.slane %v7244, 4
        %v7247 = vor.u32 %v7246, %v7242
        %v7248 = vrot.slane %v7247, 4
        %v7250 = vshll.u32 %v6953, 16
        %v7252 = vrot.slane %v7250, 5
        %v7253 = vsel %vm835, %v7248, %v7252
        %v7255 = vshrl.u32 %v6954, 16
        %v7257 = vrot.slane %v7255, 4
        %v7258 = vshll.u32 %v6954, 16
        %v7260 = vrot.slane %v7258, 5
        %v7261 = vor.u32 %v7257, %v7260
        %v7262 = vrot.slane %v7261, 4
        %v7264 = vshll.u32 %v6955, 16
        %v7266 = vrot.slane %v7264, 5
        %v7267 = vsel %vm835, %v7262, %v7266
        %v7268 = vshrl.u32 %v6955, 16
        %v7270 = vrot.slane %v7268, 4
        %v7271 = vor.u32 %v7270, %v7266
        %v7272 = vrot.slane %v7271, 4
        %v7274 = vshll.u32 %v6956, 16
        %v7276 = vrot.slane %v7274, 5
        %v7277 = vsel %vm835, %v7272, %v7276
        %v7279 = vshrl.u32 %v6957, 16
        %v7281 = vrot.slane %v7279, 4
        %v7282 = vshll.u32 %v6957, 16
        %v7284 = vrot.slane %v7282, 5
        %v7285 = vor.u32 %v7281, %v7284
        %v7286 = vrot.slane %v7285, 4
        %v7288 = vshll.u32 %v6958, 16
        %v7290 = vrot.slane %v7288, 5
        %v7291 = vsel %vm835, %v7286, %v7290
        %v7292 = vshrl.u32 %v6958, 16
        %v7294 = vrot.slane %v7292, 4
        %v7295 = vor.u32 %v7294, %v7290
        %v7296 = vrot.slane %v7295, 4
        %v7298 = vshll.u32 %v6959, 16
        %v7300 = vrot.slane %v7298, 5
        %v7301 = vsel %vm835, %v7296, %v7300
        %v7303 = vshrl.u32 %v6960, 16
        %v7305 = vrot.slane %v7303, 4
        %v7306 = vshll.u32 %v6960, 16
        %v7308 = vrot.slane %v7306, 5
        %v7309 = vor.u32 %v7305, %v7308
        %v7310 = vrot.slane %v7309, 4
        %v7312 = vshll.u32 %v6961, 16
        %v7314 = vrot.slane %v7312, 5
        %v7315 = vsel %vm835, %v7310, %v7314
        %v7316 = vshrl.u32 %v6961, 16
        %v7318 = vrot.slane %v7316, 4
        %v7319 = vor.u32 %v7318, %v7314
        %v7320 = vrot.slane %v7319, 4
        %v7322 = vshll.u32 %v6962, 16
        %v7324 = vrot.slane %v7322, 5
        %v7325 = vsel %vm835, %v7320, %v7324
        %v7327 = vshrl.u32 %v6963, 16
        %v7329 = vrot.slane %v7327, 4
        %v7330 = vshll.u32 %v6963, 16
        %v7332 = vrot.slane %v7330, 5
        %v7333 = vor.u32 %v7329, %v7332
        %v7334 = vrot.slane %v7333, 4
        %v7336 = vshll.u32 %v6964, 16
        %v7338 = vrot.slane %v7336, 5
        %v7339 = vsel %vm835, %v7334, %v7338
        %v7340 = vshrl.u32 %v6964, 16
        %v7342 = vrot.slane %v7340, 4
        %v7343 = vor.u32 %v7342, %v7338
        %v7344 = vrot.slane %v7343, 4
        %v7346 = vshll.u32 %v6965, 16
        %v7348 = vrot.slane %v7346, 5
        %v7349 = vsel %vm835, %v7344, %v7348
        %s7350 = scalar_lea.vmem %s2, 64
        %v7351 = vld [vmem:[%s7350] sm:$0xf]
        %v7352 = vld [vmem:[%s7350 + $0x4] sm:$0xf]
        %v7353 = vld [vmem:[%s7350 + $0x8] sm:$0xf]
        %v7354 = vld [vmem:[%s7350 + $0xc] sm:$0xf]
        %v7355 = vld [vmem:[%s7350 + $0x10] sm:$0xf]
        %v7356 = vld [vmem:[%s7350 + $0x14] sm:$0xf]
        %v7357 = vld [vmem:[%s7350 + $0x18] sm:$0xf]
        %v7358 = vld [vmem:[%s7350 + $0x1c] sm:$0xf]
        %v7359 = vld [vmem:[%s7350 + $0x20] sm:$0xf]
        %v7360 = vld [vmem:[%s7350 + $0x24] sm:$0xf]
        %v7361 = vld [vmem:[%s7350 + $0x28] sm:$0xf]
        %v7362 = vld [vmem:[%s7350 + $0x2c] sm:$0xf]
        %v7363 = vld [vmem:[%s7350 + $0x30] sm:$0xf]
        %v7364 = vld [vmem:[%s7350 + $0x34] sm:$0xf]
        %v7365 = vld [vmem:[%s7350 + $0x38] sm:$0xf]
        %v7366 = vld [vmem:[%s7350 + $0x3c] sm:$0xf]
        %v7367 = vunpack.c.l.b16 %v6979
        %v7368 = vunpack.c.l.b16 %v6989
        %v7369 = vunpack.c.l.b16 %v7003
        %v7370 = vunpack.c.l.b16 %v7013
        %v7371 = vunpack.c.l.b16 %v7027
        %v7372 = vunpack.c.l.b16 %v7037
        %v7373 = vunpack.c.l.b16 %v7051
        %v7374 = vunpack.c.l.b16 %v7061
        %v7375 = vunpack.c.l.b16 %v7075
        %v7376 = vunpack.c.l.b16 %v7085
        %v7377 = vunpack.c.l.b16 %v7099
        %v7378 = vunpack.c.l.b16 %v7109
        %v7379 = vunpack.c.l.b16 %v7123
        %v7380 = vunpack.c.l.b16 %v7133
        %v7381 = vunpack.c.l.b16 %v7147
        %v7382 = vunpack.c.l.b16 %v7157
        %v7383 = vunpack.c.l.b16 %v7171
        %v7384 = vunpack.c.l.b16 %v7181
        %v7385 = vunpack.c.l.b16 %v7195
        %v7386 = vunpack.c.l.b16 %v7205
        %v7387 = vunpack.c.l.b16 %v7219
        %v7388 = vunpack.c.l.b16 %v7229
        %v7389 = vunpack.c.l.b16 %v7243
        %v7390 = vunpack.c.l.b16 %v7253
        %v7391 = vunpack.c.l.b16 %v7267
        %v7392 = vunpack.c.l.b16 %v7277
        %v7393 = vunpack.c.l.b16 %v7291
        %v7394 = vunpack.c.l.b16 %v7301
        %v7395 = vunpack.c.l.b16 %v7315
        %v7396 = vunpack.c.l.b16 %v7325
        %v7397 = vunpack.c.l.b16 %v7339
        %v7398 = vunpack.c.l.b16 %v7349
        %v7399 = vpack.c.b16 %v7368, %v7367
        %v7400 = vpack.c.b16 %v7370, %v7369
        %v7401 = vpack.c.b16 %v7372, %v7371
        %v7402 = vpack.c.b16 %v7374, %v7373
        %v7403 = vpack.c.b16 %v7376, %v7375
        %v7404 = vpack.c.b16 %v7378, %v7377
        %v7405 = vpack.c.b16 %v7380, %v7379
        %v7406 = vpack.c.b16 %v7382, %v7381
        %v7407 = vpack.c.b16 %v7384, %v7383
        %v7408 = vpack.c.b16 %v7386, %v7385
        %v7409 = vpack.c.b16 %v7388, %v7387
        %v7410 = vpack.c.b16 %v7390, %v7389
        %v7411 = vpack.c.b16 %v7392, %v7391
        %v7412 = vpack.c.b16 %v7394, %v7393
        %v7413 = vpack.c.b16 %v7396, %v7395
        %v7414 = vpack.c.b16 %v7398, %v7397
        %v7447 = vunpack.c.l.b16 %v7351
        %v7448 = vunpack.c.l.b16 %v7352
        %v7449 = vunpack.c.l.b16 %v7353
        %v7450 = vunpack.c.l.b16 %v7354
        %v7451 = vunpack.c.l.b16 %v7355
        %v7452 = vunpack.c.l.b16 %v7356
        %v7453 = vunpack.c.l.b16 %v7357
        %v7454 = vunpack.c.l.b16 %v7358
        %v7455 = vunpack.c.l.b16 %v7359
        %v7456 = vunpack.c.l.b16 %v7360
        %v7457 = vunpack.c.l.b16 %v7361
        %v7458 = vunpack.c.l.b16 %v7362
        %v7459 = vunpack.c.l.b16 %v7363
        %v7460 = vunpack.c.l.b16 %v7364
        %v7461 = vunpack.c.l.b16 %v7365
        %v7462 = vunpack.c.l.b16 %v7366
        %v7463 = vpack.c.b16 %v7448, %v7447
        %v7464 = vpack.c.b16 %v7450, %v7449
        %v7465 = vpack.c.b16 %v7452, %v7451
        %v7466 = vpack.c.b16 %v7454, %v7453
        %v7467 = vpack.c.b16 %v7456, %v7455
        %v7468 = vpack.c.b16 %v7458, %v7457
        %v7469 = vpack.c.b16 %v7460, %v7459
        %v7470 = vpack.c.b16 %v7462, %v7461
        %7479 = vmatpush.bf16.msra.mxu0 %v7470
        %7480 = vmatpush.bf16.msra.mxu0 %v7469
        %7481 = vmatpush.bf16.msra.mxu0 %v7468
        %7482 = vmatpush.bf16.msra.mxu0 %v7467
        %7483 = vmatpush.bf16.msra.mxu0 %v7466
        %7484 = vmatpush.bf16.msra.mxu0 %v7465
        %7485 = vmatpush.bf16.msra.mxu0 %v7464
        %7486 = vmatpush.bf16.msra.mxu0 %v7463
        %7487 = vmatmul.bf16.gmra.mxu0 %v7399
        %v7488 = vpop.f32.mrf.mxu0
        %v7489 = vadd.f32 0.0, %v7488
        %v7490 = vpop.f32.mrf.mxu0
        %v7491 = vadd.f32 0.0, %v7490
        %7492 = vmatmul.bf16.gmra.mxu0 %v7400
        %v7493 = vpop.f32.mrf.mxu0
        %v7494 = vadd.f32 0.0, %v7493
        %v7495 = vpop.f32.mrf.mxu0
        %v7496 = vadd.f32 0.0, %v7495
        %7497 = vmatmul.bf16.gmra.mxu0 %v7401
        %v7498 = vpop.f32.mrf.mxu0
        %v7499 = vadd.f32 0.0, %v7498
        %v7500 = vpop.f32.mrf.mxu0
        %v7501 = vadd.f32 0.0, %v7500
        %7502 = vmatmul.bf16.gmra.mxu0 %v7402
        %v7503 = vpop.f32.mrf.mxu0
        %v7504 = vadd.f32 0.0, %v7503
        %v7505 = vpop.f32.mrf.mxu0
        %v7506 = vadd.f32 0.0, %v7505
        %7507 = vmatmul.bf16.gmra.mxu0 %v7403
        %v7508 = vpop.f32.mrf.mxu0
        %v7509 = vadd.f32 0.0, %v7508
        %v7510 = vpop.f32.mrf.mxu0
        %v7511 = vadd.f32 0.0, %v7510
        %7512 = vmatmul.bf16.gmra.mxu0 %v7404
        %v7513 = vpop.f32.mrf.mxu0
        %v7514 = vadd.f32 0.0, %v7513
        %v7515 = vpop.f32.mrf.mxu0
        %v7516 = vadd.f32 0.0, %v7515
        %7517 = vmatmul.bf16.gmra.mxu0 %v7405
        %v7518 = vpop.f32.mrf.mxu0
        %v7519 = vadd.f32 0.0, %v7518
        %v7520 = vpop.f32.mrf.mxu0
        %v7521 = vadd.f32 0.0, %v7520
        %7522 = vmatmul.bf16.gmra.mxu0 %v7406
        %v7523 = vpop.f32.mrf.mxu0
        %v7524 = vadd.f32 0.0, %v7523
        %v7525 = vpop.f32.mrf.mxu0
        %v7526 = vadd.f32 0.0, %v7525
        %7527 = vmatmul.bf16.gmra.mxu0 %v7407
        %v7528 = vpop.f32.mrf.mxu0
        %v7529 = vadd.f32 0.0, %v7528
        %v7530 = vpop.f32.mrf.mxu0
        %v7531 = vadd.f32 0.0, %v7530
        %7532 = vmatmul.bf16.gmra.mxu0 %v7408
        %v7533 = vpop.f32.mrf.mxu0
        %v7534 = vadd.f32 0.0, %v7533
        %v7535 = vpop.f32.mrf.mxu0
        %v7536 = vadd.f32 0.0, %v7535
        %7537 = vmatmul.bf16.gmra.mxu0 %v7409
        %v7538 = vpop.f32.mrf.mxu0
        %v7539 = vadd.f32 0.0, %v7538
        %v7540 = vpop.f32.mrf.mxu0
        %v7541 = vadd.f32 0.0, %v7540
        %7542 = vmatmul.bf16.gmra.mxu0 %v7410
        %v7543 = vpop.f32.mrf.mxu0
        %v7544 = vadd.f32 0.0, %v7543
        %v7545 = vpop.f32.mrf.mxu0
        %v7546 = vadd.f32 0.0, %v7545
        %7547 = vmatmul.bf16.gmra.mxu0 %v7411
        %v7548 = vpop.f32.mrf.mxu0
        %v7549 = vadd.f32 0.0, %v7548
        %v7550 = vpop.f32.mrf.mxu0
        %v7551 = vadd.f32 0.0, %v7550
        %7552 = vmatmul.bf16.gmra.mxu0 %v7412
        %v7553 = vpop.f32.mrf.mxu0
        %v7554 = vadd.f32 0.0, %v7553
        %v7555 = vpop.f32.mrf.mxu0
        %v7556 = vadd.f32 0.0, %v7555
        %7557 = vmatmul.bf16.gmra.mxu0 %v7413
        %v7558 = vpop.f32.mrf.mxu0
        %v7559 = vadd.f32 0.0, %v7558
        %v7560 = vpop.f32.mrf.mxu0
        %v7561 = vadd.f32 0.0, %v7560
        %7562 = vmatmul.bf16.gmra.mxu0 %v7414
        %v7563 = vpop.f32.mrf.mxu0
        %v7564 = vadd.f32 0.0, %v7563
        %v7565 = vpop.f32.mrf.mxu0
        %v7566 = vadd.f32 0.0, %v7565
        %7567 = vdwg.mxu0
        %v7568 = vld [vmem:[#allocation4] sm:$0xff]
        %v7569 = vld [vmem:[#allocation4 + $0x8] sm:$0xff]
        %v7570 = vld [vmem:[#allocation4 + $0x10] sm:$0xff]
        %v7571 = vld [vmem:[#allocation4 + $0x18] sm:$0xff]
        %v7572 = vld [vmem:[#allocation4 + $0x20] sm:$0xff]
        %v7573 = vld [vmem:[#allocation4 + $0x28] sm:$0xff]
        %v7574 = vld [vmem:[#allocation4 + $0x30] sm:$0xff]
        %v7575 = vld [vmem:[#allocation4 + $0x38] sm:$0xff]
        %v7576 = vld [vmem:[#allocation4 + $0x40] sm:$0xff]
        %v7577 = vld [vmem:[#allocation4 + $0x48] sm:$0xff]
        %v7578 = vld [vmem:[#allocation4 + $0x50] sm:$0xff]
        %v7579 = vld [vmem:[#allocation4 + $0x58] sm:$0xff]
        %v7580 = vld [vmem:[#allocation4 + $0x60] sm:$0xff]
        %v7581 = vld [vmem:[#allocation4 + $0x68] sm:$0xff]
        %v7582 = vld [vmem:[#allocation4 + $0x70] sm:$0xff]
        %v7583 = vld [vmem:[#allocation4 + $0x78] sm:$0xff]
        %v7584 = vld [vmem:[#allocation4 + $0x80] sm:$0xff]
        %v7585 = vld [vmem:[#allocation4 + $0x88] sm:$0xff]
        %v7586 = vld [vmem:[#allocation4 + $0x90] sm:$0xff]
        %v7587 = vld [vmem:[#allocation4 + $0x98] sm:$0xff]
        %v7588 = vld [vmem:[#allocation4 + $0xa0] sm:$0xff]
        %v7589 = vld [vmem:[#allocation4 + $0xa8] sm:$0xff]
        %v7590 = vld [vmem:[#allocation4 + $0xb0] sm:$0xff]
        %v7591 = vld [vmem:[#allocation4 + $0xb8] sm:$0xff]
        %v7592 = vld [vmem:[#allocation4 + $0xc0] sm:$0xff]
        %v7593 = vld [vmem:[#allocation4 + $0xc8] sm:$0xff]
        %v7594 = vld [vmem:[#allocation4 + $0xd0] sm:$0xff]
        %v7595 = vld [vmem:[#allocation4 + $0xd8] sm:$0xff]
        %v7596 = vld [vmem:[#allocation4 + $0xe0] sm:$0xff]
        %v7597 = vld [vmem:[#allocation4 + $0xe8] sm:$0xff]
        %v7598 = vld [vmem:[#allocation4 + $0xf0] sm:$0xff]
        %v7599 = vld [vmem:[#allocation4 + $0xf8] sm:$0xff]
        %v7600 = vadd.f32 %v7568, %v7489
        %v7601 = vadd.f32 %v7569, %v7491
        %v7602 = vadd.f32 %v7570, %v7494
        %v7603 = vadd.f32 %v7571, %v7496
        %v7604 = vadd.f32 %v7572, %v7499
        %v7605 = vadd.f32 %v7573, %v7501
        %v7606 = vadd.f32 %v7574, %v7504
        %v7607 = vadd.f32 %v7575, %v7506
        %v7608 = vadd.f32 %v7576, %v7509
        %v7609 = vadd.f32 %v7577, %v7511
        %v7610 = vadd.f32 %v7578, %v7514
        %v7611 = vadd.f32 %v7579, %v7516
        %v7612 = vadd.f32 %v7580, %v7519
        %v7613 = vadd.f32 %v7581, %v7521
        %v7614 = vadd.f32 %v7582, %v7524
        %v7615 = vadd.f32 %v7583, %v7526
        %v7616 = vadd.f32 %v7584, %v7529
        %v7617 = vadd.f32 %v7585, %v7531
        %v7618 = vadd.f32 %v7586, %v7534
        %v7619 = vadd.f32 %v7587, %v7536
        %v7620 = vadd.f32 %v7588, %v7539
        %v7621 = vadd.f32 %v7589, %v7541
        %v7622 = vadd.f32 %v7590, %v7544
        %v7623 = vadd.f32 %v7591, %v7546
        %v7624 = vadd.f32 %v7592, %v7549
        %v7625 = vadd.f32 %v7593, %v7551
        %v7626 = vadd.f32 %v7594, %v7554
        %v7627 = vadd.f32 %v7595, %v7556
        %v7628 = vadd.f32 %v7596, %v7559
        %v7629 = vadd.f32 %v7597, %v7561
        %v7630 = vadd.f32 %v7598, %v7564
        %v7631 = vadd.f32 %v7599, %v7566
        %7632 = vst [vmem:[#allocation4] sm:$0xff] %v7600
        %7633 = vst [vmem:[#allocation4 + $0x8] sm:$0xff] %v7601
        %7634 = vst [vmem:[#allocation4 + $0x10] sm:$0xff] %v7602
        %7635 = vst [vmem:[#allocation4 + $0x18] sm:$0xff] %v7603
        %7636 = vst [vmem:[#allocation4 + $0x20] sm:$0xff] %v7604
        %7637 = vst [vmem:[#allocation4 + $0x28] sm:$0xff] %v7605
        %7638 = vst [vmem:[#allocation4 + $0x30] sm:$0xff] %v7606
        %7639 = vst [vmem:[#allocation4 + $0x38] sm:$0xff] %v7607
        %7640 = vst [vmem:[#allocation4 + $0x40] sm:$0xff] %v7608
        %7641 = vst [vmem:[#allocation4 + $0x48] sm:$0xff] %v7609
        %7642 = vst [vmem:[#allocation4 + $0x50] sm:$0xff] %v7610
        %7643 = vst [vmem:[#allocation4 + $0x58] sm:$0xff] %v7611
        %7644 = vst [vmem:[#allocation4 + $0x60] sm:$0xff] %v7612
        %7645 = vst [vmem:[#allocation4 + $0x68] sm:$0xff] %v7613
        %7646 = vst [vmem:[#allocation4 + $0x70] sm:$0xff] %v7614
        %7647 = vst [vmem:[#allocation4 + $0x78] sm:$0xff] %v7615
        %7648 = vst [vmem:[#allocation4 + $0x80] sm:$0xff] %v7616
        %7649 = vst [vmem:[#allocation4 + $0x88] sm:$0xff] %v7617
        %7650 = vst [vmem:[#allocation4 + $0x90] sm:$0xff] %v7618
        %7651 = vst [vmem:[#allocation4 + $0x98] sm:$0xff] %v7619
        %7652 = vst [vmem:[#allocation4 + $0xa0] sm:$0xff] %v7620
        %7653 = vst [vmem:[#allocation4 + $0xa8] sm:$0xff] %v7621
        %7654 = vst [vmem:[#allocation4 + $0xb0] sm:$0xff] %v7622
        %7655 = vst [vmem:[#allocation4 + $0xb8] sm:$0xff] %v7623
        %7656 = vst [vmem:[#allocation4 + $0xc0] sm:$0xff] %v7624
        %7657 = vst [vmem:[#allocation4 + $0xc8] sm:$0xff] %v7625
        %7658 = vst [vmem:[#allocation4 + $0xd0] sm:$0xff] %v7626
        %7659 = vst [vmem:[#allocation4 + $0xd8] sm:$0xff] %v7627
        %7660 = vst [vmem:[#allocation4 + $0xe0] sm:$0xff] %v7628
        %7661 = vst [vmem:[#allocation4 + $0xe8] sm:$0xff] %v7629
        %7662 = vst [vmem:[#allocation4 + $0xf0] sm:$0xff] %v7630
        %7663 = vst [vmem:[#allocation4 + $0xf8] sm:$0xff] %v7631
        %v7664 = vld [vmem:[#allocation3] sm:$0xe]
        %v7665 = vld [vmem:[#allocation3 + $0x4] sm:$0xf]
        %v7666 = vld [vmem:[#allocation3 + $0x8] sm:$0x1]
        %v7667 = vld [vmem:[#allocation3 + $0xc] sm:$0xe]
        %v7668 = vld [vmem:[#allocation3 + $0x10] sm:$0xf]
        %v7669 = vld [vmem:[#allocation3 + $0x14] sm:$0x1]
        %v7670 = vld [vmem:[#allocation3 + $0x18] sm:$0xe]
        %v7671 = vld [vmem:[#allocation3 + $0x1c] sm:$0xf]
        %v7672 = vld [vmem:[#allocation3 + $0x20] sm:$0x1]
        %v7673 = vld [vmem:[#allocation3 + $0x24] sm:$0xe]
        %v7674 = vld [vmem:[#allocation3 + $0x28] sm:$0xf]
        %v7675 = vld [vmem:[#allocation3 + $0x2c] sm:$0x1]
        %v7676 = vld [vmem:[#allocation3 + $0x30] sm:$0xe]
        %v7677 = vld [vmem:[#allocation3 + $0x34] sm:$0xf]
        %v7678 = vld [vmem:[#allocation3 + $0x38] sm:$0x1]
        %v7679 = vld [vmem:[#allocation3 + $0x3c] sm:$0xe]
        %v7680 = vld [vmem:[#allocation3 + $0x40] sm:$0xf]
        %v7681 = vld [vmem:[#allocation3 + $0x44] sm:$0x1]
        %v7682 = vld [vmem:[#allocation3 + $0x48] sm:$0xe]
        %v7683 = vld [vmem:[#allocation3 + $0x4c] sm:$0xf]
        %v7684 = vld [vmem:[#allocation3 + $0x50] sm:$0x1]
        %v7685 = vld [vmem:[#allocation3 + $0x54] sm:$0xe]
        %v7686 = vld [vmem:[#allocation3 + $0x58] sm:$0xf]
        %v7687 = vld [vmem:[#allocation3 + $0x5c] sm:$0x1]
        %v7688 = vld [vmem:[#allocation3 + $0x60] sm:$0xe]
        %v7689 = vld [vmem:[#allocation3 + $0x64] sm:$0xf]
        %v7690 = vld [vmem:[#allocation3 + $0x68] sm:$0x1]
        %v7691 = vld [vmem:[#allocation3 + $0x6c] sm:$0xe]
        %v7692 = vld [vmem:[#allocation3 + $0x70] sm:$0xf]
        %v7693 = vld [vmem:[#allocation3 + $0x74] sm:$0x1]
        %v7694 = vld [vmem:[#allocation3 + $0x78] sm:$0xe]
        %v7695 = vld [vmem:[#allocation3 + $0x7c] sm:$0xf]
        %v7696 = vld [vmem:[#allocation3 + $0x80] sm:$0x1]
        %v7697 = vld [vmem:[#allocation3 + $0x84] sm:$0xe]
        %v7698 = vld [vmem:[#allocation3 + $0x88] sm:$0xf]
        %v7699 = vld [vmem:[#allocation3 + $0x8c] sm:$0x1]
        %v7700 = vld [vmem:[#allocation3 + $0x90] sm:$0xe]
        %v7701 = vld [vmem:[#allocation3 + $0x94] sm:$0xf]
        %v7702 = vld [vmem:[#allocation3 + $0x98] sm:$0x1]
        %v7703 = vld [vmem:[#allocation3 + $0x9c] sm:$0xe]
        %v7704 = vld [vmem:[#allocation3 + $0xa0] sm:$0xf]
        %v7705 = vld [vmem:[#allocation3 + $0xa4] sm:$0x1]
        %v7706 = vld [vmem:[#allocation3 + $0xa8] sm:$0xe]
        %v7707 = vld [vmem:[#allocation3 + $0xac] sm:$0xf]
        %v7708 = vld [vmem:[#allocation3 + $0xb0] sm:$0x1]
        %v7709 = vld [vmem:[#allocation3 + $0xb4] sm:$0xe]
        %v7710 = vld [vmem:[#allocation3 + $0xb8] sm:$0xf]
        %v7711 = vld [vmem:[#allocation3 + $0xbc] sm:$0x1]
        %v7760 = vrot.slane %v7664, 5
        %v7761 = vrot.slane %v7760, 4
        %v7762 = vrot.slane %v7665, 5
        %v7763 = vsel %vm1722, %v7761, %v7762
        %v7764 = vrot.slane %v7762, 4
        %v7765 = vrot.slane %v7666, 5
        %v7766 = vsel %vm1722, %v7764, %v7765
        %v7767 = vrot.slane %v7667, 5
        %v7768 = vrot.slane %v7767, 4
        %v7769 = vrot.slane %v7668, 5
        %v7770 = vsel %vm1722, %v7768, %v7769
        %v7771 = vrot.slane %v7769, 4
        %v7772 = vrot.slane %v7669, 5
        %v7773 = vsel %vm1722, %v7771, %v7772
        %v7774 = vrot.slane %v7670, 5
        %v7775 = vrot.slane %v7774, 4
        %v7776 = vrot.slane %v7671, 5
        %v7777 = vsel %vm1722, %v7775, %v7776
        %v7778 = vrot.slane %v7776, 4
        %v7779 = vrot.slane %v7672, 5
        %v7780 = vsel %vm1722, %v7778, %v7779
        %v7781 = vrot.slane %v7673, 5
        %v7782 = vrot.slane %v7781, 4
        %v7783 = vrot.slane %v7674, 5
        %v7784 = vsel %vm1722, %v7782, %v7783
        %v7785 = vrot.slane %v7783, 4
        %v7786 = vrot.slane %v7675, 5
        %v7787 = vsel %vm1722, %v7785, %v7786
        %v7788 = vrot.slane %v7676, 5
        %v7789 = vrot.slane %v7788, 4
        %v7790 = vrot.slane %v7677, 5
        %v7791 = vsel %vm1722, %v7789, %v7790
        %v7792 = vrot.slane %v7790, 4
        %v7793 = vrot.slane %v7678, 5
        %v7794 = vsel %vm1722, %v7792, %v7793
        %v7795 = vrot.slane %v7679, 5
        %v7796 = vrot.slane %v7795, 4
        %v7797 = vrot.slane %v7680, 5
        %v7798 = vsel %vm1722, %v7796, %v7797
        %v7799 = vrot.slane %v7797, 4
        %v7800 = vrot.slane %v7681, 5
        %v7801 = vsel %vm1722, %v7799, %v7800
        %v7802 = vrot.slane %v7682, 5
        %v7803 = vrot.slane %v7802, 4
        %v7804 = vrot.slane %v7683, 5
        %v7805 = vsel %vm1722, %v7803, %v7804
        %v7806 = vrot.slane %v7804, 4
        %v7807 = vrot.slane %v7684, 5
        %v7808 = vsel %vm1722, %v7806, %v7807
        %v7809 = vrot.slane %v7685, 5
        %v7810 = vrot.slane %v7809, 4
        %v7811 = vrot.slane %v7686, 5
        %v7812 = vsel %vm1722, %v7810, %v7811
        %v7813 = vrot.slane %v7811, 4
        %v7814 = vrot.slane %v7687, 5
        %v7815 = vsel %vm1722, %v7813, %v7814
        %v7816 = vrot.slane %v7688, 5
        %v7817 = vrot.slane %v7816, 4
        %v7818 = vrot.slane %v7689, 5
        %v7819 = vsel %vm1722, %v7817, %v7818
        %v7820 = vrot.slane %v7818, 4
        %v7821 = vrot.slane %v7690, 5
        %v7822 = vsel %vm1722, %v7820, %v7821
        %v7823 = vrot.slane %v7691, 5
        %v7824 = vrot.slane %v7823, 4
        %v7825 = vrot.slane %v7692, 5
        %v7826 = vsel %vm1722, %v7824, %v7825
        %v7827 = vrot.slane %v7825, 4
        %v7828 = vrot.slane %v7693, 5
        %v7829 = vsel %vm1722, %v7827, %v7828
        %v7830 = vrot.slane %v7694, 5
        %v7831 = vrot.slane %v7830, 4
        %v7832 = vrot.slane %v7695, 5
        %v7833 = vsel %vm1722, %v7831, %v7832
        %v7834 = vrot.slane %v7832, 4
        %v7835 = vrot.slane %v7696, 5
        %v7836 = vsel %vm1722, %v7834, %v7835
        %v7837 = vrot.slane %v7697, 5
        %v7838 = vrot.slane %v7837, 4
        %v7839 = vrot.slane %v7698, 5
        %v7840 = vsel %vm1722, %v7838, %v7839
        %v7841 = vrot.slane %v7839, 4
        %v7842 = vrot.slane %v7699, 5
        %v7843 = vsel %vm1722, %v7841, %v7842
        %v7844 = vrot.slane %v7700, 5
        %v7845 = vrot.slane %v7844, 4
        %v7846 = vrot.slane %v7701, 5
        %v7847 = vsel %vm1722, %v7845, %v7846
        %v7848 = vrot.slane %v7846, 4
        %v7849 = vrot.slane %v7702, 5
        %v7850 = vsel %vm1722, %v7848, %v7849
        %v7851 = vrot.slane %v7703, 5
        %v7852 = vrot.slane %v7851, 4
        %v7853 = vrot.slane %v7704, 5
        %v7854 = vsel %vm1722, %v7852, %v7853
        %v7855 = vrot.slane %v7853, 4
        %v7856 = vrot.slane %v7705, 5
        %v7857 = vsel %vm1722, %v7855, %v7856
        %v7858 = vrot.slane %v7706, 5
        %v7859 = vrot.slane %v7858, 4
        %v7860 = vrot.slane %v7707, 5
        %v7861 = vsel %vm1722, %v7859, %v7860
        %v7862 = vrot.slane %v7860, 4
        %v7863 = vrot.slane %v7708, 5
        %v7864 = vsel %vm1722, %v7862, %v7863
        %v7865 = vrot.slane %v7709, 5
        %v7866 = vrot.slane %v7865, 4
        %v7867 = vrot.slane %v7710, 5
        %v7868 = vsel %vm1722, %v7866, %v7867
        %v7869 = vrot.slane %v7867, 4
        %v7870 = vrot.slane %v7711, 5
        %v7871 = vsel %vm1722, %v7869, %v7870
        %s7872 = scalar_lea.vmem %s2, 128
        %v7873 = vld [vmem:[%s7872] sm:$0xf]
        %v7874 = vld [vmem:[%s7872 + $0x4] sm:$0xf]
        %v7875 = vld [vmem:[%s7872 + $0x8] sm:$0xf]
        %v7876 = vld [vmem:[%s7872 + $0xc] sm:$0xf]
        %v7877 = vld [vmem:[%s7872 + $0x10] sm:$0xf]
        %v7878 = vld [vmem:[%s7872 + $0x14] sm:$0xf]
        %v7879 = vld [vmem:[%s7872 + $0x18] sm:$0xf]
        %v7880 = vld [vmem:[%s7872 + $0x1c] sm:$0xf]
        %v7881 = vld [vmem:[%s7872 + $0x20] sm:$0xf]
        %v7882 = vld [vmem:[%s7872 + $0x24] sm:$0xf]
        %v7883 = vld [vmem:[%s7872 + $0x28] sm:$0xf]
        %v7884 = vld [vmem:[%s7872 + $0x2c] sm:$0xf]
        %v7885 = vld [vmem:[%s7872 + $0x30] sm:$0xf]
        %v7886 = vld [vmem:[%s7872 + $0x34] sm:$0xf]
        %v7887 = vld [vmem:[%s7872 + $0x38] sm:$0xf]
        %v7888 = vld [vmem:[%s7872 + $0x3c] sm:$0xf]
        %v7889 = vunpack.c.l.b16 %v7763
        %v7890 = vunpack.c.l.b16 %v7766
        %v7891 = vunpack.c.l.b16 %v7770
        %v7892 = vunpack.c.l.b16 %v7773
        %v7893 = vunpack.c.l.b16 %v7777
        %v7894 = vunpack.c.l.b16 %v7780
        %v7895 = vunpack.c.l.b16 %v7784
        %v7896 = vunpack.c.l.b16 %v7787
        %v7897 = vunpack.c.l.b16 %v7791
        %v7898 = vunpack.c.l.b16 %v7794
        %v7899 = vunpack.c.l.b16 %v7798
        %v7900 = vunpack.c.l.b16 %v7801
        %v7901 = vunpack.c.l.b16 %v7805
        %v7902 = vunpack.c.l.b16 %v7808
        %v7903 = vunpack.c.l.b16 %v7812
        %v7904 = vunpack.c.l.b16 %v7815
        %v7905 = vunpack.c.l.b16 %v7819
        %v7906 = vunpack.c.l.b16 %v7822
        %v7907 = vunpack.c.l.b16 %v7826
        %v7908 = vunpack.c.l.b16 %v7829
        %v7909 = vunpack.c.l.b16 %v7833
        %v7910 = vunpack.c.l.b16 %v7836
        %v7911 = vunpack.c.l.b16 %v7840
        %v7912 = vunpack.c.l.b16 %v7843
        %v7913 = vunpack.c.l.b16 %v7847
        %v7914 = vunpack.c.l.b16 %v7850
        %v7915 = vunpack.c.l.b16 %v7854
        %v7916 = vunpack.c.l.b16 %v7857
        %v7917 = vunpack.c.l.b16 %v7861
        %v7918 = vunpack.c.l.b16 %v7864
        %v7919 = vunpack.c.l.b16 %v7868
        %v7920 = vunpack.c.l.b16 %v7871
        %v7921 = vpack.c.b16 %v7890, %v7889
        %v7922 = vpack.c.b16 %v7892, %v7891
        %v7923 = vpack.c.b16 %v7894, %v7893
        %v7924 = vpack.c.b16 %v7896, %v7895
        %v7925 = vpack.c.b16 %v7898, %v7897
        %v7926 = vpack.c.b16 %v7900, %v7899
        %v7927 = vpack.c.b16 %v7902, %v7901
        %v7928 = vpack.c.b16 %v7904, %v7903
        %v7929 = vpack.c.b16 %v7906, %v7905
        %v7930 = vpack.c.b16 %v7908, %v7907
        %v7931 = vpack.c.b16 %v7910, %v7909
        %v7932 = vpack.c.b16 %v7912, %v7911
        %v7933 = vpack.c.b16 %v7914, %v7913
        %v7934 = vpack.c.b16 %v7916, %v7915
        %v7935 = vpack.c.b16 %v7918, %v7917
        %v7936 = vpack.c.b16 %v7920, %v7919
        %v7969 = vunpack.c.l.b16 %v7873
        %v7970 = vunpack.c.l.b16 %v7874
        %v7971 = vunpack.c.l.b16 %v7875
        %v7972 = vunpack.c.l.b16 %v7876
        %v7973 = vunpack.c.l.b16 %v7877
        %v7974 = vunpack.c.l.b16 %v7878
        %v7975 = vunpack.c.l.b16 %v7879
        %v7976 = vunpack.c.l.b16 %v7880
        %v7977 = vunpack.c.l.b16 %v7881
        %v7978 = vunpack.c.l.b16 %v7882
        %v7979 = vunpack.c.l.b16 %v7883
        %v7980 = vunpack.c.l.b16 %v7884
        %v7981 = vunpack.c.l.b16 %v7885
        %v7982 = vunpack.c.l.b16 %v7886
        %v7983 = vunpack.c.l.b16 %v7887
        %v7984 = vunpack.c.l.b16 %v7888
        %v7985 = vpack.c.b16 %v7970, %v7969
        %v7986 = vpack.c.b16 %v7972, %v7971
        %v7987 = vpack.c.b16 %v7974, %v7973
        %v7988 = vpack.c.b16 %v7976, %v7975
        %v7989 = vpack.c.b16 %v7978, %v7977
        %v7990 = vpack.c.b16 %v7980, %v7979
        %v7991 = vpack.c.b16 %v7982, %v7981
        %v7992 = vpack.c.b16 %v7984, %v7983
        %8001 = vmatpush.bf16.msra.mxu0 %v7992
        %8002 = vmatpush.bf16.msra.mxu0 %v7991
        %8003 = vmatpush.bf16.msra.mxu0 %v7990
        %8004 = vmatpush.bf16.msra.mxu0 %v7989
        %8005 = vmatpush.bf16.msra.mxu0 %v7988
        %8006 = vmatpush.bf16.msra.mxu0 %v7987
        %8007 = vmatpush.bf16.msra.mxu0 %v7986
        %8008 = vmatpush.bf16.msra.mxu0 %v7985
        %8009 = vmatmul.bf16.gmra.mxu0 %v7921
        %v8010 = vpop.f32.mrf.mxu0
        %v8011 = vadd.f32 0.0, %v8010
        %v8012 = vpop.f32.mrf.mxu0
        %v8013 = vadd.f32 0.0, %v8012
        %8014 = vmatmul.bf16.gmra.mxu0 %v7922
        %v8015 = vpop.f32.mrf.mxu0
        %v8016 = vadd.f32 0.0, %v8015
        %v8017 = vpop.f32.mrf.mxu0
        %v8018 = vadd.f32 0.0, %v8017
        %8019 = vmatmul.bf16.gmra.mxu0 %v7923
        %v8020 = vpop.f32.mrf.mxu0
        %v8021 = vadd.f32 0.0, %v8020
        %v8022 = vpop.f32.mrf.mxu0
        %v8023 = vadd.f32 0.0, %v8022
        %8024 = vmatmul.bf16.gmra.mxu0 %v7924
        %v8025 = vpop.f32.mrf.mxu0
        %v8026 = vadd.f32 0.0, %v8025
        %v8027 = vpop.f32.mrf.mxu0
        %v8028 = vadd.f32 0.0, %v8027
        %8029 = vmatmul.bf16.gmra.mxu0 %v7925
        %v8030 = vpop.f32.mrf.mxu0
        %v8031 = vadd.f32 0.0, %v8030
        %v8032 = vpop.f32.mrf.mxu0
        %v8033 = vadd.f32 0.0, %v8032
        %8034 = vmatmul.bf16.gmra.mxu0 %v7926
        %v8035 = vpop.f32.mrf.mxu0
        %v8036 = vadd.f32 0.0, %v8035
        %v8037 = vpop.f32.mrf.mxu0
        %v8038 = vadd.f32 0.0, %v8037
        %8039 = vmatmul.bf16.gmra.mxu0 %v7927
        %v8040 = vpop.f32.mrf.mxu0
        %v8041 = vadd.f32 0.0, %v8040
        %v8042 = vpop.f32.mrf.mxu0
        %v8043 = vadd.f32 0.0, %v8042
        %8044 = vmatmul.bf16.gmra.mxu0 %v7928
        %v8045 = vpop.f32.mrf.mxu0
        %v8046 = vadd.f32 0.0, %v8045
        %v8047 = vpop.f32.mrf.mxu0
        %v8048 = vadd.f32 0.0, %v8047
        %8049 = vmatmul.bf16.gmra.mxu0 %v7929
        %v8050 = vpop.f32.mrf.mxu0
        %v8051 = vadd.f32 0.0, %v8050
        %v8052 = vpop.f32.mrf.mxu0
        %v8053 = vadd.f32 0.0, %v8052
        %8054 = vmatmul.bf16.gmra.mxu0 %v7930
        %v8055 = vpop.f32.mrf.mxu0
        %v8056 = vadd.f32 0.0, %v8055
        %v8057 = vpop.f32.mrf.mxu0
        %v8058 = vadd.f32 0.0, %v8057
        %8059 = vmatmul.bf16.gmra.mxu0 %v7931
        %v8060 = vpop.f32.mrf.mxu0
        %v8061 = vadd.f32 0.0, %v8060
        %v8062 = vpop.f32.mrf.mxu0
        %v8063 = vadd.f32 0.0, %v8062
        %8064 = vmatmul.bf16.gmra.mxu0 %v7932
        %v8065 = vpop.f32.mrf.mxu0
        %v8066 = vadd.f32 0.0, %v8065
        %v8067 = vpop.f32.mrf.mxu0
        %v8068 = vadd.f32 0.0, %v8067
        %8069 = vmatmul.bf16.gmra.mxu0 %v7933
        %v8070 = vpop.f32.mrf.mxu0
        %v8071 = vadd.f32 0.0, %v8070
        %v8072 = vpop.f32.mrf.mxu0
        %v8073 = vadd.f32 0.0, %v8072
        %8074 = vmatmul.bf16.gmra.mxu0 %v7934
        %v8075 = vpop.f32.mrf.mxu0
        %v8076 = vadd.f32 0.0, %v8075
        %v8077 = vpop.f32.mrf.mxu0
        %v8078 = vadd.f32 0.0, %v8077
        %8079 = vmatmul.bf16.gmra.mxu0 %v7935
        %v8080 = vpop.f32.mrf.mxu0
        %v8081 = vadd.f32 0.0, %v8080
        %v8082 = vpop.f32.mrf.mxu0
        %v8083 = vadd.f32 0.0, %v8082
        %8084 = vmatmul.bf16.gmra.mxu0 %v7936
        %v8085 = vpop.f32.mrf.mxu0
        %v8086 = vadd.f32 0.0, %v8085
        %v8087 = vpop.f32.mrf.mxu0
        %v8088 = vadd.f32 0.0, %v8087
        %8089 = vdwg.mxu0
        %v8090 = vld [vmem:[#allocation4] sm:$0xff]
        %v8091 = vld [vmem:[#allocation4 + $0x8] sm:$0xff]
        %v8092 = vld [vmem:[#allocation4 + $0x10] sm:$0xff]
        %v8093 = vld [vmem:[#allocation4 + $0x18] sm:$0xff]
        %v8094 = vld [vmem:[#allocation4 + $0x20] sm:$0xff]
        %v8095 = vld [vmem:[#allocation4 + $0x28] sm:$0xff]
        %v8096 = vld [vmem:[#allocation4 + $0x30] sm:$0xff]
        %v8097 = vld [vmem:[#allocation4 + $0x38] sm:$0xff]
        %v8098 = vld [vmem:[#allocation4 + $0x40] sm:$0xff]
        %v8099 = vld [vmem:[#allocation4 + $0x48] sm:$0xff]
        %v8100 = vld [vmem:[#allocation4 + $0x50] sm:$0xff]
        %v8101 = vld [vmem:[#allocation4 + $0x58] sm:$0xff]
        %v8102 = vld [vmem:[#allocation4 + $0x60] sm:$0xff]
        %v8103 = vld [vmem:[#allocation4 + $0x68] sm:$0xff]
        %v8104 = vld [vmem:[#allocation4 + $0x70] sm:$0xff]
        %v8105 = vld [vmem:[#allocation4 + $0x78] sm:$0xff]
        %v8106 = vld [vmem:[#allocation4 + $0x80] sm:$0xff]
        %v8107 = vld [vmem:[#allocation4 + $0x88] sm:$0xff]
        %v8108 = vld [vmem:[#allocation4 + $0x90] sm:$0xff]
        %v8109 = vld [vmem:[#allocation4 + $0x98] sm:$0xff]
        %v8110 = vld [vmem:[#allocation4 + $0xa0] sm:$0xff]
        %v8111 = vld [vmem:[#allocation4 + $0xa8] sm:$0xff]
        %v8112 = vld [vmem:[#allocation4 + $0xb0] sm:$0xff]
        %v8113 = vld [vmem:[#allocation4 + $0xb8] sm:$0xff]
        %v8114 = vld [vmem:[#allocation4 + $0xc0] sm:$0xff]
        %v8115 = vld [vmem:[#allocation4 + $0xc8] sm:$0xff]
        %v8116 = vld [vmem:[#allocation4 + $0xd0] sm:$0xff]
        %v8117 = vld [vmem:[#allocation4 + $0xd8] sm:$0xff]
        %v8118 = vld [vmem:[#allocation4 + $0xe0] sm:$0xff]
        %v8119 = vld [vmem:[#allocation4 + $0xe8] sm:$0xff]
        %v8120 = vld [vmem:[#allocation4 + $0xf0] sm:$0xff]
        %v8121 = vld [vmem:[#allocation4 + $0xf8] sm:$0xff]
        %v8122 = vadd.f32 %v8090, %v8011
        %v8123 = vadd.f32 %v8091, %v8013
        %v8124 = vadd.f32 %v8092, %v8016
        %v8125 = vadd.f32 %v8093, %v8018
        %v8126 = vadd.f32 %v8094, %v8021
        %v8127 = vadd.f32 %v8095, %v8023
        %v8128 = vadd.f32 %v8096, %v8026
        %v8129 = vadd.f32 %v8097, %v8028
        %v8130 = vadd.f32 %v8098, %v8031
        %v8131 = vadd.f32 %v8099, %v8033
        %v8132 = vadd.f32 %v8100, %v8036
        %v8133 = vadd.f32 %v8101, %v8038
        %v8134 = vadd.f32 %v8102, %v8041
        %v8135 = vadd.f32 %v8103, %v8043
        %v8136 = vadd.f32 %v8104, %v8046
        %v8137 = vadd.f32 %v8105, %v8048
        %v8138 = vadd.f32 %v8106, %v8051
        %v8139 = vadd.f32 %v8107, %v8053
        %v8140 = vadd.f32 %v8108, %v8056
        %v8141 = vadd.f32 %v8109, %v8058
        %v8142 = vadd.f32 %v8110, %v8061
        %v8143 = vadd.f32 %v8111, %v8063
        %v8144 = vadd.f32 %v8112, %v8066
        %v8145 = vadd.f32 %v8113, %v8068
        %v8146 = vadd.f32 %v8114, %v8071
        %v8147 = vadd.f32 %v8115, %v8073
        %v8148 = vadd.f32 %v8116, %v8076
        %v8149 = vadd.f32 %v8117, %v8078
        %v8150 = vadd.f32 %v8118, %v8081
        %v8151 = vadd.f32 %v8119, %v8083
        %v8152 = vadd.f32 %v8120, %v8086
        %v8153 = vadd.f32 %v8121, %v8088
        %8154 = vst [vmem:[#allocation4] sm:$0xff] %v8122
        %8155 = vst [vmem:[#allocation4 + $0x8] sm:$0xff] %v8123
        %8156 = vst [vmem:[#allocation4 + $0x10] sm:$0xff] %v8124
        %8157 = vst [vmem:[#allocation4 + $0x18] sm:$0xff] %v8125
        %8158 = vst [vmem:[#allocation4 + $0x20] sm:$0xff] %v8126
        %8159 = vst [vmem:[#allocation4 + $0x28] sm:$0xff] %v8127
        %8160 = vst [vmem:[#allocation4 + $0x30] sm:$0xff] %v8128
        %8161 = vst [vmem:[#allocation4 + $0x38] sm:$0xff] %v8129
        %8162 = vst [vmem:[#allocation4 + $0x40] sm:$0xff] %v8130
        %8163 = vst [vmem:[#allocation4 + $0x48] sm:$0xff] %v8131
        %8164 = vst [vmem:[#allocation4 + $0x50] sm:$0xff] %v8132
        %8165 = vst [vmem:[#allocation4 + $0x58] sm:$0xff] %v8133
        %8166 = vst [vmem:[#allocation4 + $0x60] sm:$0xff] %v8134
        %8167 = vst [vmem:[#allocation4 + $0x68] sm:$0xff] %v8135
        %8168 = vst [vmem:[#allocation4 + $0x70] sm:$0xff] %v8136
        %8169 = vst [vmem:[#allocation4 + $0x78] sm:$0xff] %v8137
        %8170 = vst [vmem:[#allocation4 + $0x80] sm:$0xff] %v8138
        %8171 = vst [vmem:[#allocation4 + $0x88] sm:$0xff] %v8139
        %8172 = vst [vmem:[#allocation4 + $0x90] sm:$0xff] %v8140
        %8173 = vst [vmem:[#allocation4 + $0x98] sm:$0xff] %v8141
        %8174 = vst [vmem:[#allocation4 + $0xa0] sm:$0xff] %v8142
        %8175 = vst [vmem:[#allocation4 + $0xa8] sm:$0xff] %v8143
        %8176 = vst [vmem:[#allocation4 + $0xb0] sm:$0xff] %v8144
        %8177 = vst [vmem:[#allocation4 + $0xb8] sm:$0xff] %v8145
        %8178 = vst [vmem:[#allocation4 + $0xc0] sm:$0xff] %v8146
        %8179 = vst [vmem:[#allocation4 + $0xc8] sm:$0xff] %v8147
        %8180 = vst [vmem:[#allocation4 + $0xd0] sm:$0xff] %v8148
        %8181 = vst [vmem:[#allocation4 + $0xd8] sm:$0xff] %v8149
        %8182 = vst [vmem:[#allocation4 + $0xe0] sm:$0xff] %v8150
        %8183 = vst [vmem:[#allocation4 + $0xe8] sm:$0xff] %v8151
        %8184 = vst [vmem:[#allocation4 + $0xf0] sm:$0xff] %v8152
        %8185 = vst [vmem:[#allocation4 + $0xf8] sm:$0xff] %v8153
        %s8186 = scalar_lea.vmem [#allocation3], 12
        %v8187 = vld [vmem:[%s8186] sm:$0xf]
        %v8188 = vld [vmem:[%s8186 + $0x4] sm:$0xf]
        %v8189 = vld [vmem:[%s8186 + $0xc] sm:$0xf]
        %v8190 = vld [vmem:[%s8186 + $0x10] sm:$0xf]
        %v8191 = vld [vmem:[%s8186 + $0x18] sm:$0xf]
        %v8192 = vld [vmem:[%s8186 + $0x1c] sm:$0xf]
        %v8193 = vld [vmem:[%s8186 + $0x24] sm:$0xf]
        %v8194 = vld [vmem:[%s8186 + $0x28] sm:$0xf]
        %v8195 = vld [vmem:[%s8186 + $0x30] sm:$0xf]
        %v8196 = vld [vmem:[%s8186 + $0x34] sm:$0xf]
        %v8197 = vld [vmem:[%s8186 + $0x3c] sm:$0xf]
        %v8198 = vld [vmem:[%s8186 + $0x40] sm:$0xf]
        %v8199 = vld [vmem:[%s8186 + $0x48] sm:$0xf]
        %v8200 = vld [vmem:[%s8186 + $0x4c] sm:$0xf]
        %v8201 = vld [vmem:[%s8186 + $0x54] sm:$0xf]
        %v8202 = vld [vmem:[%s8186 + $0x58] sm:$0xf]
        %v8203 = vld [vmem:[%s8186 + $0x60] sm:$0xf]
        %v8204 = vld [vmem:[%s8186 + $0x64] sm:$0xf]
        %v8205 = vld [vmem:[%s8186 + $0x6c] sm:$0xf]
        %v8206 = vld [vmem:[%s8186 + $0x70] sm:$0xf]
        %v8207 = vld [vmem:[%s8186 + $0x78] sm:$0xf]
        %v8208 = vld [vmem:[%s8186 + $0x7c] sm:$0xf]
        %v8209 = vld [vmem:[%s8186 + $0x84] sm:$0xf]
        %v8210 = vld [vmem:[%s8186 + $0x88] sm:$0xf]
        %v8211 = vld [vmem:[%s8186 + $0x90] sm:$0xf]
        %v8212 = vld [vmem:[%s8186 + $0x94] sm:$0xf]
        %v8213 = vld [vmem:[%s8186 + $0x9c] sm:$0xf]
        %v8214 = vld [vmem:[%s8186 + $0xa0] sm:$0xf]
        %v8215 = vld [vmem:[%s8186 + $0xa8] sm:$0xf]
        %v8216 = vld [vmem:[%s8186 + $0xac] sm:$0xf]
        %v8217 = vld [vmem:[%s8186 + $0xb4] sm:$0xf]
        %v8218 = vld [vmem:[%s8186 + $0xb8] sm:$0xf]
        %s8219 = scalar_lea.vmem %s2, 192
        %v8220 = vld [vmem:[%s8219] sm:$0xf]
        %v8221 = vld [vmem:[%s8219 + $0x4] sm:$0xf]
        %v8222 = vld [vmem:[%s8219 + $0x8] sm:$0xf]
        %v8223 = vld [vmem:[%s8219 + $0xc] sm:$0xf]
        %v8224 = vld [vmem:[%s8219 + $0x10] sm:$0xf]
        %v8225 = vld [vmem:[%s8219 + $0x14] sm:$0xf]
        %v8226 = vld [vmem:[%s8219 + $0x18] sm:$0xf]
        %v8227 = vld [vmem:[%s8219 + $0x1c] sm:$0xf]
        %v8228 = vld [vmem:[%s8219 + $0x20] sm:$0xf]
        %v8229 = vld [vmem:[%s8219 + $0x24] sm:$0xf]
        %v8230 = vld [vmem:[%s8219 + $0x28] sm:$0xf]
        %v8231 = vld [vmem:[%s8219 + $0x2c] sm:$0xf]
        %v8232 = vld [vmem:[%s8219 + $0x30] sm:$0xf]
        %v8233 = vld [vmem:[%s8219 + $0x34] sm:$0xf]
        %v8234 = vld [vmem:[%s8219 + $0x38] sm:$0xf]
        %v8235 = vld [vmem:[%s8219 + $0x3c] sm:$0xf]
        %v8268 = vunpack.c.l.b16 %v8187
        %v8269 = vunpack.c.l.b16 %v8188
        %v8270 = vunpack.c.l.b16 %v8189
        %v8271 = vunpack.c.l.b16 %v8190
        %v8272 = vunpack.c.l.b16 %v8191
        %v8273 = vunpack.c.l.b16 %v8192
        %v8274 = vunpack.c.l.b16 %v8193
        %v8275 = vunpack.c.l.b16 %v8194
        %v8276 = vunpack.c.l.b16 %v8195
        %v8277 = vunpack.c.l.b16 %v8196
        %v8278 = vunpack.c.l.b16 %v8197
        %v8279 = vunpack.c.l.b16 %v8198
        %v8280 = vunpack.c.l.b16 %v8199
        %v8281 = vunpack.c.l.b16 %v8200
        %v8282 = vunpack.c.l.b16 %v8201
        %v8283 = vunpack.c.l.b16 %v8202
        %v8284 = vunpack.c.l.b16 %v8203
        %v8285 = vunpack.c.l.b16 %v8204
        %v8286 = vunpack.c.l.b16 %v8205
        %v8287 = vunpack.c.l.b16 %v8206
        %v8288 = vunpack.c.l.b16 %v8207
        %v8289 = vunpack.c.l.b16 %v8208
        %v8290 = vunpack.c.l.b16 %v8209
        %v8291 = vunpack.c.l.b16 %v8210
        %v8292 = vunpack.c.l.b16 %v8211
        %v8293 = vunpack.c.l.b16 %v8212
        %v8294 = vunpack.c.l.b16 %v8213
        %v8295 = vunpack.c.l.b16 %v8214
        %v8296 = vunpack.c.l.b16 %v8215
        %v8297 = vunpack.c.l.b16 %v8216
        %v8298 = vunpack.c.l.b16 %v8217
        %v8299 = vunpack.c.l.b16 %v8218
        %v8300 = vpack.c.b16 %v8269, %v8268
        %v8301 = vpack.c.b16 %v8271, %v8270
        %v8302 = vpack.c.b16 %v8273, %v8272
        %v8303 = vpack.c.b16 %v8275, %v8274
        %v8304 = vpack.c.b16 %v8277, %v8276
        %v8305 = vpack.c.b16 %v8279, %v8278
        %v8306 = vpack.c.b16 %v8281, %v8280
        %v8307 = vpack.c.b16 %v8283, %v8282
        %v8308 = vpack.c.b16 %v8285, %v8284
        %v8309 = vpack.c.b16 %v8287, %v8286
        %v8310 = vpack.c.b16 %v8289, %v8288
        %v8311 = vpack.c.b16 %v8291, %v8290
        %v8312 = vpack.c.b16 %v8293, %v8292
        %v8313 = vpack.c.b16 %v8295, %v8294
        %v8314 = vpack.c.b16 %v8297, %v8296
        %v8315 = vpack.c.b16 %v8299, %v8298
        %v8348 = vunpack.c.l.b16 %v8220
        %v8349 = vunpack.c.l.b16 %v8221
        %v8350 = vunpack.c.l.b16 %v8222
        %v8351 = vunpack.c.l.b16 %v8223
        %v8352 = vunpack.c.l.b16 %v8224
        %v8353 = vunpack.c.l.b16 %v8225
        %v8354 = vunpack.c.l.b16 %v8226
        %v8355 = vunpack.c.l.b16 %v8227
        %v8356 = vunpack.c.l.b16 %v8228
        %v8357 = vunpack.c.l.b16 %v8229
        %v8358 = vunpack.c.l.b16 %v8230
        %v8359 = vunpack.c.l.b16 %v8231
        %v8360 = vunpack.c.l.b16 %v8232
        %v8361 = vunpack.c.l.b16 %v8233
        %v8362 = vunpack.c.l.b16 %v8234
        %v8363 = vunpack.c.l.b16 %v8235
        %v8364 = vpack.c.b16 %v8349, %v8348
        %v8365 = vpack.c.b16 %v8351, %v8350
        %v8366 = vpack.c.b16 %v8353, %v8352
        %v8367 = vpack.c.b16 %v8355, %v8354
        %v8368 = vpack.c.b16 %v8357, %v8356
        %v8369 = vpack.c.b16 %v8359, %v8358
        %v8370 = vpack.c.b16 %v8361, %v8360
        %v8371 = vpack.c.b16 %v8363, %v8362
        %8380 = vmatpush.bf16.msra.mxu0 %v8371
        %8381 = vmatpush.bf16.msra.mxu0 %v8370
        %8382 = vmatpush.bf16.msra.mxu0 %v8369
        %8383 = vmatpush.bf16.msra.mxu0 %v8368
        %8384 = vmatpush.bf16.msra.mxu0 %v8367
        %8385 = vmatpush.bf16.msra.mxu0 %v8366
        %8386 = vmatpush.bf16.msra.mxu0 %v8365
        %8387 = vmatpush.bf16.msra.mxu0 %v8364
        %8388 = vmatmul.bf16.gmra.mxu0 %v8300
        %v8389 = vpop.f32.mrf.mxu0
        %v8390 = vadd.f32 0.0, %v8389
        %v8391 = vpop.f32.mrf.mxu0
        %v8392 = vadd.f32 0.0, %v8391
        %8393 = vmatmul.bf16.gmra.mxu0 %v8301
        %v8394 = vpop.f32.mrf.mxu0
        %v8395 = vadd.f32 0.0, %v8394
        %v8396 = vpop.f32.mrf.mxu0
        %v8397 = vadd.f32 0.0, %v8396
        %8398 = vmatmul.bf16.gmra.mxu0 %v8302
        %v8399 = vpop.f32.mrf.mxu0
        %v8400 = vadd.f32 0.0, %v8399
        %v8401 = vpop.f32.mrf.mxu0
        %v8402 = vadd.f32 0.0, %v8401
        %8403 = vmatmul.bf16.gmra.mxu0 %v8303
        %v8404 = vpop.f32.mrf.mxu0
        %v8405 = vadd.f32 0.0, %v8404
        %v8406 = vpop.f32.mrf.mxu0
        %v8407 = vadd.f32 0.0, %v8406
        %8408 = vmatmul.bf16.gmra.mxu0 %v8304
        %v8409 = vpop.f32.mrf.mxu0
        %v8410 = vadd.f32 0.0, %v8409
        %v8411 = vpop.f32.mrf.mxu0
        %v8412 = vadd.f32 0.0, %v8411
        %8413 = vmatmul.bf16.gmra.mxu0 %v8305
        %v8414 = vpop.f32.mrf.mxu0
        %v8415 = vadd.f32 0.0, %v8414
        %v8416 = vpop.f32.mrf.mxu0
        %v8417 = vadd.f32 0.0, %v8416
        %8418 = vmatmul.bf16.gmra.mxu0 %v8306
        %v8419 = vpop.f32.mrf.mxu0
        %v8420 = vadd.f32 0.0, %v8419
        %v8421 = vpop.f32.mrf.mxu0
        %v8422 = vadd.f32 0.0, %v8421
        %8423 = vmatmul.bf16.gmra.mxu0 %v8307
        %v8424 = vpop.f32.mrf.mxu0
        %v8425 = vadd.f32 0.0, %v8424
        %v8426 = vpop.f32.mrf.mxu0
        %v8427 = vadd.f32 0.0, %v8426
        %8428 = vmatmul.bf16.gmra.mxu0 %v8308
        %v8429 = vpop.f32.mrf.mxu0
        %v8430 = vadd.f32 0.0, %v8429
        %v8431 = vpop.f32.mrf.mxu0
        %v8432 = vadd.f32 0.0, %v8431
        %8433 = vmatmul.bf16.gmra.mxu0 %v8309
        %v8434 = vpop.f32.mrf.mxu0
        %v8435 = vadd.f32 0.0, %v8434
        %v8436 = vpop.f32.mrf.mxu0
        %v8437 = vadd.f32 0.0, %v8436
        %8438 = vmatmul.bf16.gmra.mxu0 %v8310
        %v8439 = vpop.f32.mrf.mxu0
        %v8440 = vadd.f32 0.0, %v8439
        %v8441 = vpop.f32.mrf.mxu0
        %v8442 = vadd.f32 0.0, %v8441
        %8443 = vmatmul.bf16.gmra.mxu0 %v8311
        %v8444 = vpop.f32.mrf.mxu0
        %v8445 = vadd.f32 0.0, %v8444
        %v8446 = vpop.f32.mrf.mxu0
        %v8447 = vadd.f32 0.0, %v8446
        %8448 = vmatmul.bf16.gmra.mxu0 %v8312
        %v8449 = vpop.f32.mrf.mxu0
        %v8450 = vadd.f32 0.0, %v8449
        %v8451 = vpop.f32.mrf.mxu0
        %v8452 = vadd.f32 0.0, %v8451
        %8453 = vmatmul.bf16.gmra.mxu0 %v8313
        %v8454 = vpop.f32.mrf.mxu0
        %v8455 = vadd.f32 0.0, %v8454
        %v8456 = vpop.f32.mrf.mxu0
        %v8457 = vadd.f32 0.0, %v8456
        %8458 = vmatmul.bf16.gmra.mxu0 %v8314
        %v8459 = vpop.f32.mrf.mxu0
        %v8460 = vadd.f32 0.0, %v8459
        %v8461 = vpop.f32.mrf.mxu0
        %v8462 = vadd.f32 0.0, %v8461
        %8463 = vmatmul.bf16.gmra.mxu0 %v8315
        %v8464 = vpop.f32.mrf.mxu0
        %v8465 = vadd.f32 0.0, %v8464
        %v8466 = vpop.f32.mrf.mxu0
        %v8467 = vadd.f32 0.0, %v8466
        %8468 = vdwg.mxu0
        %v8469 = vld [vmem:[#allocation4] sm:$0xff]
        %v8470 = vld [vmem:[#allocation4 + $0x8] sm:$0xff]
        %v8471 = vld [vmem:[#allocation4 + $0x10] sm:$0xff]
        %v8472 = vld [vmem:[#allocation4 + $0x18] sm:$0xff]
        %v8473 = vld [vmem:[#allocation4 + $0x20] sm:$0xff]
        %v8474 = vld [vmem:[#allocation4 + $0x28] sm:$0xff]
        %v8475 = vld [vmem:[#allocation4 + $0x30] sm:$0xff]
        %v8476 = vld [vmem:[#allocation4 + $0x38] sm:$0xff]
        %v8477 = vld [vmem:[#allocation4 + $0x40] sm:$0xff]
        %v8478 = vld [vmem:[#allocation4 + $0x48] sm:$0xff]
        %v8479 = vld [vmem:[#allocation4 + $0x50] sm:$0xff]
        %v8480 = vld [vmem:[#allocation4 + $0x58] sm:$0xff]
        %v8481 = vld [vmem:[#allocation4 + $0x60] sm:$0xff]
        %v8482 = vld [vmem:[#allocation4 + $0x68] sm:$0xff]
        %v8483 = vld [vmem:[#allocation4 + $0x70] sm:$0xff]
        %v8484 = vld [vmem:[#allocation4 + $0x78] sm:$0xff]
        %v8485 = vld [vmem:[#allocation4 + $0x80] sm:$0xff]
        %v8486 = vld [vmem:[#allocation4 + $0x88] sm:$0xff]
        %v8487 = vld [vmem:[#allocation4 + $0x90] sm:$0xff]
        %v8488 = vld [vmem:[#allocation4 + $0x98] sm:$0xff]
        %v8489 = vld [vmem:[#allocation4 + $0xa0] sm:$0xff]
        %v8490 = vld [vmem:[#allocation4 + $0xa8] sm:$0xff]
        %v8491 = vld [vmem:[#allocation4 + $0xb0] sm:$0xff]
        %v8492 = vld [vmem:[#allocation4 + $0xb8] sm:$0xff]
        %v8493 = vld [vmem:[#allocation4 + $0xc0] sm:$0xff]
        %v8494 = vld [vmem:[#allocation4 + $0xc8] sm:$0xff]
        %v8495 = vld [vmem:[#allocation4 + $0xd0] sm:$0xff]
        %v8496 = vld [vmem:[#allocation4 + $0xd8] sm:$0xff]
        %v8497 = vld [vmem:[#allocation4 + $0xe0] sm:$0xff]
        %v8498 = vld [vmem:[#allocation4 + $0xe8] sm:$0xff]
        %v8499 = vld [vmem:[#allocation4 + $0xf0] sm:$0xff]
        %v8500 = vld [vmem:[#allocation4 + $0xf8] sm:$0xff]
        %v8501 = vadd.f32 %v8469, %v8390
        %v8502 = vadd.f32 %v8470, %v8392
        %v8503 = vadd.f32 %v8471, %v8395
        %v8504 = vadd.f32 %v8472, %v8397
        %v8505 = vadd.f32 %v8473, %v8400
        %v8506 = vadd.f32 %v8474, %v8402
        %v8507 = vadd.f32 %v8475, %v8405
        %v8508 = vadd.f32 %v8476, %v8407
        %v8509 = vadd.f32 %v8477, %v8410
        %v8510 = vadd.f32 %v8478, %v8412
        %v8511 = vadd.f32 %v8479, %v8415
        %v8512 = vadd.f32 %v8480, %v8417
        %v8513 = vadd.f32 %v8481, %v8420
        %v8514 = vadd.f32 %v8482, %v8422
        %v8515 = vadd.f32 %v8483, %v8425
        %v8516 = vadd.f32 %v8484, %v8427
        %v8517 = vadd.f32 %v8485, %v8430
        %v8518 = vadd.f32 %v8486, %v8432
        %v8519 = vadd.f32 %v8487, %v8435
        %v8520 = vadd.f32 %v8488, %v8437
        %v8521 = vadd.f32 %v8489, %v8440
        %v8522 = vadd.f32 %v8490, %v8442
        %v8523 = vadd.f32 %v8491, %v8445
        %v8524 = vadd.f32 %v8492, %v8447
        %v8525 = vadd.f32 %v8493, %v8450
        %v8526 = vadd.f32 %v8494, %v8452
        %v8527 = vadd.f32 %v8495, %v8455
        %v8528 = vadd.f32 %v8496, %v8457
        %v8529 = vadd.f32 %v8497, %v8460
        %v8530 = vadd.f32 %v8498, %v8462
        %v8531 = vadd.f32 %v8499, %v8465
        %v8532 = vadd.f32 %v8500, %v8467
        %8533 = vst [vmem:[#allocation4] sm:$0xff] %v8501
        %8534 = vst [vmem:[#allocation4 + $0x8] sm:$0xff] %v8502
        %8535 = vst [vmem:[#allocation4 + $0x10] sm:$0xff] %v8503
        %8536 = vst [vmem:[#allocation4 + $0x18] sm:$0xff] %v8504
        %8537 = vst [vmem:[#allocation4 + $0x20] sm:$0xff] %v8505
        %8538 = vst [vmem:[#allocation4 + $0x28] sm:$0xff] %v8506
        %8539 = vst [vmem:[#allocation4 + $0x30] sm:$0xff] %v8507
        %8540 = vst [vmem:[#allocation4 + $0x38] sm:$0xff] %v8508
        %8541 = vst [vmem:[#allocation4 + $0x40] sm:$0xff] %v8509
        %8542 = vst [vmem:[#allocation4 + $0x48] sm:$0xff] %v8510
        %8543 = vst [vmem:[#allocation4 + $0x50] sm:$0xff] %v8511
        %8544 = vst [vmem:[#allocation4 + $0x58] sm:$0xff] %v8512
        %8545 = vst [vmem:[#allocation4 + $0x60] sm:$0xff] %v8513
        %8546 = vst [vmem:[#allocation4 + $0x68] sm:$0xff] %v8514
        %8547 = vst [vmem:[#allocation4 + $0x70] sm:$0xff] %v8515
        %8548 = vst [vmem:[#allocation4 + $0x78] sm:$0xff] %v8516
        %8549 = vst [vmem:[#allocation4 + $0x80] sm:$0xff] %v8517
        %8550 = vst [vmem:[#allocation4 + $0x88] sm:$0xff] %v8518
        %8551 = vst [vmem:[#allocation4 + $0x90] sm:$0xff] %v8519
        %8552 = vst [vmem:[#allocation4 + $0x98] sm:$0xff] %v8520
        %8553 = vst [vmem:[#allocation4 + $0xa0] sm:$0xff] %v8521
        %8554 = vst [vmem:[#allocation4 + $0xa8] sm:$0xff] %v8522
        %8555 = vst [vmem:[#allocation4 + $0xb0] sm:$0xff] %v8523
        %8556 = vst [vmem:[#allocation4 + $0xb8] sm:$0xff] %v8524
        %8557 = vst [vmem:[#allocation4 + $0xc0] sm:$0xff] %v8525
        %8558 = vst [vmem:[#allocation4 + $0xc8] sm:$0xff] %v8526
        %8559 = vst [vmem:[#allocation4 + $0xd0] sm:$0xff] %v8527
        %8560 = vst [vmem:[#allocation4 + $0xd8] sm:$0xff] %v8528
        %8561 = vst [vmem:[#allocation4 + $0xe0] sm:$0xff] %v8529
        %8562 = vst [vmem:[#allocation4 + $0xe8] sm:$0xff] %v8530
        %8563 = vst [vmem:[#allocation4 + $0xf0] sm:$0xff] %v8531
        %8564 = vst [vmem:[#allocation4 + $0xf8] sm:$0xff] %v8532
        %v8565 = vld [vmem:[%s8186] sm:$0xf]
        %v8566 = vld [vmem:[%s8186 + $0x4] sm:$0xf]
        %v8567 = vld [vmem:[%s8186 + $0x8] sm:$0x1]
        %v8568 = vld [vmem:[%s8186 + $0xc] sm:$0xf]
        %v8569 = vld [vmem:[%s8186 + $0x10] sm:$0xf]
        %v8570 = vld [vmem:[%s8186 + $0x14] sm:$0x1]
        %v8571 = vld [vmem:[%s8186 + $0x18] sm:$0xf]
        %v8572 = vld [vmem:[%s8186 + $0x1c] sm:$0xf]
        %v8573 = vld [vmem:[%s8186 + $0x20] sm:$0x1]
        %v8574 = vld [vmem:[%s8186 + $0x24] sm:$0xf]
        %v8575 = vld [vmem:[%s8186 + $0x28] sm:$0xf]
        %v8576 = vld [vmem:[%s8186 + $0x2c] sm:$0x1]
        %v8577 = vld [vmem:[%s8186 + $0x30] sm:$0xf]
        %v8578 = vld [vmem:[%s8186 + $0x34] sm:$0xf]
        %v8579 = vld [vmem:[%s8186 + $0x38] sm:$0x1]
        %v8580 = vld [vmem:[%s8186 + $0x3c] sm:$0xf]
        %v8581 = vld [vmem:[%s8186 + $0x40] sm:$0xf]
        %v8582 = vld [vmem:[%s8186 + $0x44] sm:$0x1]
        %v8583 = vld [vmem:[%s8186 + $0x48] sm:$0xf]
        %v8584 = vld [vmem:[%s8186 + $0x4c] sm:$0xf]
        %v8585 = vld [vmem:[%s8186 + $0x50] sm:$0x1]
        %v8586 = vld [vmem:[%s8186 + $0x54] sm:$0xf]
        %v8587 = vld [vmem:[%s8186 + $0x58] sm:$0xf]
        %v8588 = vld [vmem:[%s8186 + $0x5c] sm:$0x1]
        %v8589 = vld [vmem:[%s8186 + $0x60] sm:$0xf]
        %v8590 = vld [vmem:[%s8186 + $0x64] sm:$0xf]
        %v8591 = vld [vmem:[%s8186 + $0x68] sm:$0x1]
        %v8592 = vld [vmem:[%s8186 + $0x6c] sm:$0xf]
        %v8593 = vld [vmem:[%s8186 + $0x70] sm:$0xf]
        %v8594 = vld [vmem:[%s8186 + $0x74] sm:$0x1]
        %v8595 = vld [vmem:[%s8186 + $0x78] sm:$0xf]
        %v8596 = vld [vmem:[%s8186 + $0x7c] sm:$0xf]
        %v8597 = vld [vmem:[%s8186 + $0x80] sm:$0x1]
        %v8598 = vld [vmem:[%s8186 + $0x84] sm:$0xf]
        %v8599 = vld [vmem:[%s8186 + $0x88] sm:$0xf]
        %v8600 = vld [vmem:[%s8186 + $0x8c] sm:$0x1]
        %v8601 = vld [vmem:[%s8186 + $0x90] sm:$0xf]
        %v8602 = vld [vmem:[%s8186 + $0x94] sm:$0xf]
        %v8603 = vld [vmem:[%s8186 + $0x98] sm:$0x1]
        %v8604 = vld [vmem:[%s8186 + $0x9c] sm:$0xf]
        %v8605 = vld [vmem:[%s8186 + $0xa0] sm:$0xf]
        %v8606 = vld [vmem:[%s8186 + $0xa4] sm:$0x1]
        %v8607 = vld [vmem:[%s8186 + $0xa8] sm:$0xf]
        %v8608 = vld [vmem:[%s8186 + $0xac] sm:$0xf]
        %v8609 = vld [vmem:[%s8186 + $0xb0] sm:$0x1]
        %v8610 = vld [vmem:[%s8186 + $0xb4] sm:$0xf]
        %v8611 = vld [vmem:[%s8186 + $0xb8] sm:$0xf]
        %v8612 = vld [vmem:[%s8186 + $0xbc] sm:$0x1]
        %v8614 = vshrl.u32 %v8565, 16
        %v8616 = vrot.slane %v8614, 4
        %v8617 = vshll.u32 %v8565, 16
        %v8619 = vrot.slane %v8617, 5
        %v8620 = vor.u32 %v8616, %v8619
        %v8621 = vrot.slane %v8620, 4
        %v8623 = vshll.u32 %v8566, 16
        %v8625 = vrot.slane %v8623, 5
        %v8626 = vsel %vm835, %v8621, %v8625
        %v8627 = vshrl.u32 %v8566, 16
        %v8629 = vrot.slane %v8627, 4
        %v8630 = vor.u32 %v8629, %v8625
        %v8631 = vrot.slane %v8630, 4
        %v8633 = vshll.u32 %v8567, 16
        %v8635 = vrot.slane %v8633, 5
        %v8636 = vsel %vm835, %v8631, %v8635
        %v8638 = vshrl.u32 %v8568, 16
        %v8640 = vrot.slane %v8638, 4
        %v8641 = vshll.u32 %v8568, 16
        %v8643 = vrot.slane %v8641, 5
        %v8644 = vor.u32 %v8640, %v8643
        %v8645 = vrot.slane %v8644, 4
        %v8647 = vshll.u32 %v8569, 16
        %v8649 = vrot.slane %v8647, 5
        %v8650 = vsel %vm835, %v8645, %v8649
        %v8651 = vshrl.u32 %v8569, 16
        %v8653 = vrot.slane %v8651, 4
        %v8654 = vor.u32 %v8653, %v8649
        %v8655 = vrot.slane %v8654, 4
        %v8657 = vshll.u32 %v8570, 16
        %v8659 = vrot.slane %v8657, 5
        %v8660 = vsel %vm835, %v8655, %v8659
        %v8662 = vshrl.u32 %v8571, 16
        %v8664 = vrot.slane %v8662, 4
        %v8665 = vshll.u32 %v8571, 16
        %v8667 = vrot.slane %v8665, 5
        %v8668 = vor.u32 %v8664, %v8667
        %v8669 = vrot.slane %v8668, 4
        %v8671 = vshll.u32 %v8572, 16
        %v8673 = vrot.slane %v8671, 5
        %v8674 = vsel %vm835, %v8669, %v8673
        %v8675 = vshrl.u32 %v8572, 16
        %v8677 = vrot.slane %v8675, 4
        %v8678 = vor.u32 %v8677, %v8673
        %v8679 = vrot.slane %v8678, 4
        %v8681 = vshll.u32 %v8573, 16
        %v8683 = vrot.slane %v8681, 5
        %v8684 = vsel %vm835, %v8679, %v8683
        %v8686 = vshrl.u32 %v8574, 16
        %v8688 = vrot.slane %v8686, 4
        %v8689 = vshll.u32 %v8574, 16
        %v8691 = vrot.slane %v8689, 5
        %v8692 = vor.u32 %v8688, %v8691
        %v8693 = vrot.slane %v8692, 4
        %v8695 = vshll.u32 %v8575, 16
        %v8697 = vrot.slane %v8695, 5
        %v8698 = vsel %vm835, %v8693, %v8697
        %v8699 = vshrl.u32 %v8575, 16
        %v8701 = vrot.slane %v8699, 4
        %v8702 = vor.u32 %v8701, %v8697
        %v8703 = vrot.slane %v8702, 4
        %v8705 = vshll.u32 %v8576, 16
        %v8707 = vrot.slane %v8705, 5
        %v8708 = vsel %vm835, %v8703, %v8707
        %v8710 = vshrl.u32 %v8577, 16
        %v8712 = vrot.slane %v8710, 4
        %v8713 = vshll.u32 %v8577, 16
        %v8715 = vrot.slane %v8713, 5
        %v8716 = vor.u32 %v8712, %v8715
        %v8717 = vrot.slane %v8716, 4
        %v8719 = vshll.u32 %v8578, 16
        %v8721 = vrot.slane %v8719, 5
        %v8722 = vsel %vm835, %v8717, %v8721
        %v8723 = vshrl.u32 %v8578, 16
        %v8725 = vrot.slane %v8723, 4
        %v8726 = vor.u32 %v8725, %v8721
        %v8727 = vrot.slane %v8726, 4
        %v8729 = vshll.u32 %v8579, 16
        %v8731 = vrot.slane %v8729, 5
        %v8732 = vsel %vm835, %v8727, %v8731
        %v8734 = vshrl.u32 %v8580, 16
        %v8736 = vrot.slane %v8734, 4
        %v8737 = vshll.u32 %v8580, 16
        %v8739 = vrot.slane %v8737, 5
        %v8740 = vor.u32 %v8736, %v8739
        %v8741 = vrot.slane %v8740, 4
        %v8743 = vshll.u32 %v8581, 16
        %v8745 = vrot.slane %v8743, 5
        %v8746 = vsel %vm835, %v8741, %v8745
        %v8747 = vshrl.u32 %v8581, 16
        %v8749 = vrot.slane %v8747, 4
        %v8750 = vor.u32 %v8749, %v8745
        %v8751 = vrot.slane %v8750, 4
        %v8753 = vshll.u32 %v8582, 16
        %v8755 = vrot.slane %v8753, 5
        %v8756 = vsel %vm835, %v8751, %v8755
        %v8758 = vshrl.u32 %v8583, 16
        %v8760 = vrot.slane %v8758, 4
        %v8761 = vshll.u32 %v8583, 16
        %v8763 = vrot.slane %v8761, 5
        %v8764 = vor.u32 %v8760, %v8763
        %v8765 = vrot.slane %v8764, 4
        %v8767 = vshll.u32 %v8584, 16
        %v8769 = vrot.slane %v8767, 5
        %v8770 = vsel %vm835, %v8765, %v8769
        %v8771 = vshrl.u32 %v8584, 16
        %v8773 = vrot.slane %v8771, 4
        %v8774 = vor.u32 %v8773, %v8769
        %v8775 = vrot.slane %v8774, 4
        %v8777 = vshll.u32 %v8585, 16
        %v8779 = vrot.slane %v8777, 5
        %v8780 = vsel %vm835, %v8775, %v8779
        %v8782 = vshrl.u32 %v8586, 16
        %v8784 = vrot.slane %v8782, 4
        %v8785 = vshll.u32 %v8586, 16
        %v8787 = vrot.slane %v8785, 5
        %v8788 = vor.u32 %v8784, %v8787
        %v8789 = vrot.slane %v8788, 4
        %v8791 = vshll.u32 %v8587, 16
        %v8793 = vrot.slane %v8791, 5
        %v8794 = vsel %vm835, %v8789, %v8793
        %v8795 = vshrl.u32 %v8587, 16
        %v8797 = vrot.slane %v8795, 4
        %v8798 = vor.u32 %v8797, %v8793
        %v8799 = vrot.slane %v8798, 4
        %v8801 = vshll.u32 %v8588, 16
        %v8803 = vrot.slane %v8801, 5
        %v8804 = vsel %vm835, %v8799, %v8803
        %v8806 = vshrl.u32 %v8589, 16
        %v8808 = vrot.slane %v8806, 4
        %v8809 = vshll.u32 %v8589, 16
        %v8811 = vrot.slane %v8809, 5
        %v8812 = vor.u32 %v8808, %v8811
        %v8813 = vrot.slane %v8812, 4
        %v8815 = vshll.u32 %v8590, 16
        %v8817 = vrot.slane %v8815, 5
        %v8818 = vsel %vm835, %v8813, %v8817
        %v8819 = vshrl.u32 %v8590, 16
        %v8821 = vrot.slane %v8819, 4
        %v8822 = vor.u32 %v8821, %v8817
        %v8823 = vrot.slane %v8822, 4
        %v8825 = vshll.u32 %v8591, 16
        %v8827 = vrot.slane %v8825, 5
        %v8828 = vsel %vm835, %v8823, %v8827
        %v8830 = vshrl.u32 %v8592, 16
        %v8832 = vrot.slane %v8830, 4
        %v8833 = vshll.u32 %v8592, 16
        %v8835 = vrot.slane %v8833, 5
        %v8836 = vor.u32 %v8832, %v8835
        %v8837 = vrot.slane %v8836, 4
        %v8839 = vshll.u32 %v8593, 16
        %v8841 = vrot.slane %v8839, 5
        %v8842 = vsel %vm835, %v8837, %v8841
        %v8843 = vshrl.u32 %v8593, 16
        %v8845 = vrot.slane %v8843, 4
        %v8846 = vor.u32 %v8845, %v8841
        %v8847 = vrot.slane %v8846, 4
        %v8849 = vshll.u32 %v8594, 16
        %v8851 = vrot.slane %v8849, 5
        %v8852 = vsel %vm835, %v8847, %v8851
        %v8854 = vshrl.u32 %v8595, 16
        %v8856 = vrot.slane %v8854, 4
        %v8857 = vshll.u32 %v8595, 16
        %v8859 = vrot.slane %v8857, 5
        %v8860 = vor.u32 %v8856, %v8859
        %v8861 = vrot.slane %v8860, 4
        %v8863 = vshll.u32 %v8596, 16
        %v8865 = vrot.slane %v8863, 5
        %v8866 = vsel %vm835, %v8861, %v8865
        %v8867 = vshrl.u32 %v8596, 16
        %v8869 = vrot.slane %v8867, 4
        %v8870 = vor.u32 %v8869, %v8865
        %v8871 = vrot.slane %v8870, 4
        %v8873 = vshll.u32 %v8597, 16
        %v8875 = vrot.slane %v8873, 5
        %v8876 = vsel %vm835, %v8871, %v8875
        %v8878 = vshrl.u32 %v8598, 16
        %v8880 = vrot.slane %v8878, 4
        %v8881 = vshll.u32 %v8598, 16
        %v8883 = vrot.slane %v8881, 5
        %v8884 = vor.u32 %v8880, %v8883
        %v8885 = vrot.slane %v8884, 4
        %v8887 = vshll.u32 %v8599, 16
        %v8889 = vrot.slane %v8887, 5
        %v8890 = vsel %vm835, %v8885, %v8889
        %v8891 = vshrl.u32 %v8599, 16
        %v8893 = vrot.slane %v8891, 4
        %v8894 = vor.u32 %v8893, %v8889
        %v8895 = vrot.slane %v8894, 4
        %v8897 = vshll.u32 %v8600, 16
        %v8899 = vrot.slane %v8897, 5
        %v8900 = vsel %vm835, %v8895, %v8899
        %v8902 = vshrl.u32 %v8601, 16
        %v8904 = vrot.slane %v8902, 4
        %v8905 = vshll.u32 %v8601, 16
        %v8907 = vrot.slane %v8905, 5
        %v8908 = vor.u32 %v8904, %v8907
        %v8909 = vrot.slane %v8908, 4
        %v8911 = vshll.u32 %v8602, 16
        %v8913 = vrot.slane %v8911, 5
        %v8914 = vsel %vm835, %v8909, %v8913
        %v8915 = vshrl.u32 %v8602, 16
        %v8917 = vrot.slane %v8915, 4
        %v8918 = vor.u32 %v8917, %v8913
        %v8919 = vrot.slane %v8918, 4
        %v8921 = vshll.u32 %v8603, 16
        %v8923 = vrot.slane %v8921, 5
        %v8924 = vsel %vm835, %v8919, %v8923
        %v8926 = vshrl.u32 %v8604, 16
        %v8928 = vrot.slane %v8926, 4
        %v8929 = vshll.u32 %v8604, 16
        %v8931 = vrot.slane %v8929, 5
        %v8932 = vor.u32 %v8928, %v8931
        %v8933 = vrot.slane %v8932, 4
        %v8935 = vshll.u32 %v8605, 16
        %v8937 = vrot.slane %v8935, 5
        %v8938 = vsel %vm835, %v8933, %v8937
        %v8939 = vshrl.u32 %v8605, 16
        %v8941 = vrot.slane %v8939, 4
        %v8942 = vor.u32 %v8941, %v8937
        %v8943 = vrot.slane %v8942, 4
        %v8945 = vshll.u32 %v8606, 16
        %v8947 = vrot.slane %v8945, 5
        %v8948 = vsel %vm835, %v8943, %v8947
        %v8950 = vshrl.u32 %v8607, 16
        %v8952 = vrot.slane %v8950, 4
        %v8953 = vshll.u32 %v8607, 16
        %v8955 = vrot.slane %v8953, 5
        %v8956 = vor.u32 %v8952, %v8955
        %v8957 = vrot.slane %v8956, 4
        %v8959 = vshll.u32 %v8608, 16
        %v8961 = vrot.slane %v8959, 5
        %v8962 = vsel %vm835, %v8957, %v8961
        %v8963 = vshrl.u32 %v8608, 16
        %v8965 = vrot.slane %v8963, 4
        %v8966 = vor.u32 %v8965, %v8961
        %v8967 = vrot.slane %v8966, 4
        %v8969 = vshll.u32 %v8609, 16
        %v8971 = vrot.slane %v8969, 5
        %v8972 = vsel %vm835, %v8967, %v8971
        %v8974 = vshrl.u32 %v8610, 16
        %v8976 = vrot.slane %v8974, 4
        %v8977 = vshll.u32 %v8610, 16
        %v8979 = vrot.slane %v8977, 5
        %v8980 = vor.u32 %v8976, %v8979
        %v8981 = vrot.slane %v8980, 4
        %v8983 = vshll.u32 %v8611, 16
        %v8985 = vrot.slane %v8983, 5
        %v8986 = vsel %vm835, %v8981, %v8985
        %v8987 = vshrl.u32 %v8611, 16
        %v8989 = vrot.slane %v8987, 4
        %v8990 = vor.u32 %v8989, %v8985
        %v8991 = vrot.slane %v8990, 4
        %v8993 = vshll.u32 %v8612, 16
        %v8995 = vrot.slane %v8993, 5
        %v8996 = vsel %vm835, %v8991, %v8995
        %s8997 = scalar_lea.vmem %s2, 256
        %v8998 = vld [vmem:[%s8997] sm:$0xf]
        %v8999 = vld [vmem:[%s8997 + $0x4] sm:$0xf]
        %v9000 = vld [vmem:[%s8997 + $0x8] sm:$0xf]
        %v9001 = vld [vmem:[%s8997 + $0xc] sm:$0xf]
        %v9002 = vld [vmem:[%s8997 + $0x10] sm:$0xf]
        %v9003 = vld [vmem:[%s8997 + $0x14] sm:$0xf]
        %v9004 = vld [vmem:[%s8997 + $0x18] sm:$0xf]
        %v9005 = vld [vmem:[%s8997 + $0x1c] sm:$0xf]
        %v9006 = vld [vmem:[%s8997 + $0x20] sm:$0xf]
        %v9007 = vld [vmem:[%s8997 + $0x24] sm:$0xf]
        %v9008 = vld [vmem:[%s8997 + $0x28] sm:$0xf]
        %v9009 = vld [vmem:[%s8997 + $0x2c] sm:$0xf]
        %v9010 = vld [vmem:[%s8997 + $0x30] sm:$0xf]
        %v9011 = vld [vmem:[%s8997 + $0x34] sm:$0xf]
        %v9012 = vld [vmem:[%s8997 + $0x38] sm:$0xf]
        %v9013 = vld [vmem:[%s8997 + $0x3c] sm:$0xf]
        %v9014 = vunpack.c.l.b16 %v8626
        %v9015 = vunpack.c.l.b16 %v8636
        %v9016 = vunpack.c.l.b16 %v8650
        %v9017 = vunpack.c.l.b16 %v8660
        %v9018 = vunpack.c.l.b16 %v8674
        %v9019 = vunpack.c.l.b16 %v8684
        %v9020 = vunpack.c.l.b16 %v8698
        %v9021 = vunpack.c.l.b16 %v8708
        %v9022 = vunpack.c.l.b16 %v8722
        %v9023 = vunpack.c.l.b16 %v8732
        %v9024 = vunpack.c.l.b16 %v8746
        %v9025 = vunpack.c.l.b16 %v8756
        %v9026 = vunpack.c.l.b16 %v8770
        %v9027 = vunpack.c.l.b16 %v8780
        %v9028 = vunpack.c.l.b16 %v8794
        %v9029 = vunpack.c.l.b16 %v8804
        %v9030 = vunpack.c.l.b16 %v8818
        %v9031 = vunpack.c.l.b16 %v8828
        %v9032 = vunpack.c.l.b16 %v8842
        %v9033 = vunpack.c.l.b16 %v8852
        %v9034 = vunpack.c.l.b16 %v8866
        %v9035 = vunpack.c.l.b16 %v8876
        %v9036 = vunpack.c.l.b16 %v8890
        %v9037 = vunpack.c.l.b16 %v8900
        %v9038 = vunpack.c.l.b16 %v8914
        %v9039 = vunpack.c.l.b16 %v8924
        %v9040 = vunpack.c.l.b16 %v8938
        %v9041 = vunpack.c.l.b16 %v8948
        %v9042 = vunpack.c.l.b16 %v8962
        %v9043 = vunpack.c.l.b16 %v8972
        %v9044 = vunpack.c.l.b16 %v8986
        %v9045 = vunpack.c.l.b16 %v8996
        %v9046 = vpack.c.b16 %v9015, %v9014
        %v9047 = vpack.c.b16 %v9017, %v9016
        %v9048 = vpack.c.b16 %v9019, %v9018
        %v9049 = vpack.c.b16 %v9021, %v9020
        %v9050 = vpack.c.b16 %v9023, %v9022
        %v9051 = vpack.c.b16 %v9025, %v9024
        %v9052 = vpack.c.b16 %v9027, %v9026
        %v9053 = vpack.c.b16 %v9029, %v9028
        %v9054 = vpack.c.b16 %v9031, %v9030
        %v9055 = vpack.c.b16 %v9033, %v9032
        %v9056 = vpack.c.b16 %v9035, %v9034
        %v9057 = vpack.c.b16 %v9037, %v9036
        %v9058 = vpack.c.b16 %v9039, %v9038
        %v9059 = vpack.c.b16 %v9041, %v9040
        %v9060 = vpack.c.b16 %v9043, %v9042
        %v9061 = vpack.c.b16 %v9045, %v9044
        %v9094 = vunpack.c.l.b16 %v8998
        %v9095 = vunpack.c.l.b16 %v8999
        %v9096 = vunpack.c.l.b16 %v9000
        %v9097 = vunpack.c.l.b16 %v9001
        %v9098 = vunpack.c.l.b16 %v9002
        %v9099 = vunpack.c.l.b16 %v9003
        %v9100 = vunpack.c.l.b16 %v9004
        %v9101 = vunpack.c.l.b16 %v9005
        %v9102 = vunpack.c.l.b16 %v9006
        %v9103 = vunpack.c.l.b16 %v9007
        %v9104 = vunpack.c.l.b16 %v9008
        %v9105 = vunpack.c.l.b16 %v9009
        %v9106 = vunpack.c.l.b16 %v9010
        %v9107 = vunpack.c.l.b16 %v9011
        %v9108 = vunpack.c.l.b16 %v9012
        %v9109 = vunpack.c.l.b16 %v9013
        %v9110 = vpack.c.b16 %v9095, %v9094
        %v9111 = vpack.c.b16 %v9097, %v9096
        %v9112 = vpack.c.b16 %v9099, %v9098
        %v9113 = vpack.c.b16 %v9101, %v9100
        %v9114 = vpack.c.b16 %v9103, %v9102
        %v9115 = vpack.c.b16 %v9105, %v9104
        %v9116 = vpack.c.b16 %v9107, %v9106
        %v9117 = vpack.c.b16 %v9109, %v9108
        %9126 = vmatpush.bf16.msra.mxu0 %v9117
        %9127 = vmatpush.bf16.msra.mxu0 %v9116
        %9128 = vmatpush.bf16.msra.mxu0 %v9115
        %9129 = vmatpush.bf16.msra.mxu0 %v9114
        %9130 = vmatpush.bf16.msra.mxu0 %v9113
        %9131 = vmatpush.bf16.msra.mxu0 %v9112
        %9132 = vmatpush.bf16.msra.mxu0 %v9111
        %9133 = vmatpush.bf16.msra.mxu0 %v9110
        %9134 = vmatmul.bf16.gmra.mxu0 %v9046
        %v9135 = vpop.f32.mrf.mxu0
        %v9136 = vadd.f32 0.0, %v9135
        %v9137 = vpop.f32.mrf.mxu0
        %v9138 = vadd.f32 0.0, %v9137
        %9139 = vmatmul.bf16.gmra.mxu0 %v9047
        %v9140 = vpop.f32.mrf.mxu0
        %v9141 = vadd.f32 0.0, %v9140
        %v9142 = vpop.f32.mrf.mxu0
        %v9143 = vadd.f32 0.0, %v9142
        %9144 = vmatmul.bf16.gmra.mxu0 %v9048
        %v9145 = vpop.f32.mrf.mxu0
        %v9146 = vadd.f32 0.0, %v9145
        %v9147 = vpop.f32.mrf.mxu0
        %v9148 = vadd.f32 0.0, %v9147
        %9149 = vmatmul.bf16.gmra.mxu0 %v9049
        %v9150 = vpop.f32.mrf.mxu0
        %v9151 = vadd.f32 0.0, %v9150
        %v9152 = vpop.f32.mrf.mxu0
        %v9153 = vadd.f32 0.0, %v9152
        %9154 = vmatmul.bf16.gmra.mxu0 %v9050
        %v9155 = vpop.f32.mrf.mxu0
        %v9156 = vadd.f32 0.0, %v9155
        %v9157 = vpop.f32.mrf.mxu0
        %v9158 = vadd.f32 0.0, %v9157
        %9159 = vmatmul.bf16.gmra.mxu0 %v9051
        %v9160 = vpop.f32.mrf.mxu0
        %v9161 = vadd.f32 0.0, %v9160
        %v9162 = vpop.f32.mrf.mxu0
        %v9163 = vadd.f32 0.0, %v9162
        %9164 = vmatmul.bf16.gmra.mxu0 %v9052
        %v9165 = vpop.f32.mrf.mxu0
        %v9166 = vadd.f32 0.0, %v9165
        %v9167 = vpop.f32.mrf.mxu0
        %v9168 = vadd.f32 0.0, %v9167
        %9169 = vmatmul.bf16.gmra.mxu0 %v9053
        %v9170 = vpop.f32.mrf.mxu0
        %v9171 = vadd.f32 0.0, %v9170
        %v9172 = vpop.f32.mrf.mxu0
        %v9173 = vadd.f32 0.0, %v9172
        %9174 = vmatmul.bf16.gmra.mxu0 %v9054
        %v9175 = vpop.f32.mrf.mxu0
        %v9176 = vadd.f32 0.0, %v9175
        %v9177 = vpop.f32.mrf.mxu0
        %v9178 = vadd.f32 0.0, %v9177
        %9179 = vmatmul.bf16.gmra.mxu0 %v9055
        %v9180 = vpop.f32.mrf.mxu0
        %v9181 = vadd.f32 0.0, %v9180
        %v9182 = vpop.f32.mrf.mxu0
        %v9183 = vadd.f32 0.0, %v9182
        %9184 = vmatmul.bf16.gmra.mxu0 %v9056
        %v9185 = vpop.f32.mrf.mxu0
        %v9186 = vadd.f32 0.0, %v9185
        %v9187 = vpop.f32.mrf.mxu0
        %v9188 = vadd.f32 0.0, %v9187
        %9189 = vmatmul.bf16.gmra.mxu0 %v9057
        %v9190 = vpop.f32.mrf.mxu0
        %v9191 = vadd.f32 0.0, %v9190
        %v9192 = vpop.f32.mrf.mxu0
        %v9193 = vadd.f32 0.0, %v9192
        %9194 = vmatmul.bf16.gmra.mxu0 %v9058
        %v9195 = vpop.f32.mrf.mxu0
        %v9196 = vadd.f32 0.0, %v9195
        %v9197 = vpop.f32.mrf.mxu0
        %v9198 = vadd.f32 0.0, %v9197
        %9199 = vmatmul.bf16.gmra.mxu0 %v9059
        %v9200 = vpop.f32.mrf.mxu0
        %v9201 = vadd.f32 0.0, %v9200
        %v9202 = vpop.f32.mrf.mxu0
        %v9203 = vadd.f32 0.0, %v9202
        %9204 = vmatmul.bf16.gmra.mxu0 %v9060
        %v9205 = vpop.f32.mrf.mxu0
        %v9206 = vadd.f32 0.0, %v9205
        %v9207 = vpop.f32.mrf.mxu0
        %v9208 = vadd.f32 0.0, %v9207
        %9209 = vmatmul.bf16.gmra.mxu0 %v9061
        %v9210 = vpop.f32.mrf.mxu0
        %v9211 = vadd.f32 0.0, %v9210
        %v9212 = vpop.f32.mrf.mxu0
        %v9213 = vadd.f32 0.0, %v9212
        %9214 = vdwg.mxu0
        %v9215 = vld [vmem:[#allocation4] sm:$0xff]
        %v9216 = vld [vmem:[#allocation4 + $0x8] sm:$0xff]
        %v9217 = vld [vmem:[#allocation4 + $0x10] sm:$0xff]
        %v9218 = vld [vmem:[#allocation4 + $0x18] sm:$0xff]
        %v9219 = vld [vmem:[#allocation4 + $0x20] sm:$0xff]
        %v9220 = vld [vmem:[#allocation4 + $0x28] sm:$0xff]
        %v9221 = vld [vmem:[#allocation4 + $0x30] sm:$0xff]
        %v9222 = vld [vmem:[#allocation4 + $0x38] sm:$0xff]
        %v9223 = vld [vmem:[#allocation4 + $0x40] sm:$0xff]
        %v9224 = vld [vmem:[#allocation4 + $0x48] sm:$0xff]
        %v9225 = vld [vmem:[#allocation4 + $0x50] sm:$0xff]
        %v9226 = vld [vmem:[#allocation4 + $0x58] sm:$0xff]
        %v9227 = vld [vmem:[#allocation4 + $0x60] sm:$0xff]
        %v9228 = vld [vmem:[#allocation4 + $0x68] sm:$0xff]
        %v9229 = vld [vmem:[#allocation4 + $0x70] sm:$0xff]
        %v9230 = vld [vmem:[#allocation4 + $0x78] sm:$0xff]
        %v9231 = vld [vmem:[#allocation4 + $0x80] sm:$0xff]
        %v9232 = vld [vmem:[#allocation4 + $0x88] sm:$0xff]
        %v9233 = vld [vmem:[#allocation4 + $0x90] sm:$0xff]
        %v9234 = vld [vmem:[#allocation4 + $0x98] sm:$0xff]
        %v9235 = vld [vmem:[#allocation4 + $0xa0] sm:$0xff]
        %v9236 = vld [vmem:[#allocation4 + $0xa8] sm:$0xff]
        %v9237 = vld [vmem:[#allocation4 + $0xb0] sm:$0xff]
        %v9238 = vld [vmem:[#allocation4 + $0xb8] sm:$0xff]
        %v9239 = vld [vmem:[#allocation4 + $0xc0] sm:$0xff]
        %v9240 = vld [vmem:[#allocation4 + $0xc8] sm:$0xff]
        %v9241 = vld [vmem:[#allocation4 + $0xd0] sm:$0xff]
        %v9242 = vld [vmem:[#allocation4 + $0xd8] sm:$0xff]
        %v9243 = vld [vmem:[#allocation4 + $0xe0] sm:$0xff]
        %v9244 = vld [vmem:[#allocation4 + $0xe8] sm:$0xff]
        %v9245 = vld [vmem:[#allocation4 + $0xf0] sm:$0xff]
        %v9246 = vld [vmem:[#allocation4 + $0xf8] sm:$0xff]
        %v9247 = vadd.f32 %v9215, %v9136
        %v9248 = vadd.f32 %v9216, %v9138
        %v9249 = vadd.f32 %v9217, %v9141
        %v9250 = vadd.f32 %v9218, %v9143
        %v9251 = vadd.f32 %v9219, %v9146
        %v9252 = vadd.f32 %v9220, %v9148
        %v9253 = vadd.f32 %v9221, %v9151
        %v9254 = vadd.f32 %v9222, %v9153
        %v9255 = vadd.f32 %v9223, %v9156
        %v9256 = vadd.f32 %v9224, %v9158
        %v9257 = vadd.f32 %v9225, %v9161
        %v9258 = vadd.f32 %v9226, %v9163
        %v9259 = vadd.f32 %v9227, %v9166
        %v9260 = vadd.f32 %v9228, %v9168
        %v9261 = vadd.f32 %v9229, %v9171
        %v9262 = vadd.f32 %v9230, %v9173
        %v9263 = vadd.f32 %v9231, %v9176
        %v9264 = vadd.f32 %v9232, %v9178
        %v9265 = vadd.f32 %v9233, %v9181
        %v9266 = vadd.f32 %v9234, %v9183
        %v9267 = vadd.f32 %v9235, %v9186
        %v9268 = vadd.f32 %v9236, %v9188
        %v9269 = vadd.f32 %v9237, %v9191
        %v9270 = vadd.f32 %v9238, %v9193
        %v9271 = vadd.f32 %v9239, %v9196
        %v9272 = vadd.f32 %v9240, %v9198
        %v9273 = vadd.f32 %v9241, %v9201
        %v9274 = vadd.f32 %v9242, %v9203
        %v9275 = vadd.f32 %v9243, %v9206
        %v9276 = vadd.f32 %v9244, %v9208
        %v9277 = vadd.f32 %v9245, %v9211
        %v9278 = vadd.f32 %v9246, %v9213
        %9279 = vst [vmem:[#allocation4] sm:$0xff] %v9247
        %9280 = vst [vmem:[#allocation4 + $0x8] sm:$0xff] %v9248
        %9281 = vst [vmem:[#allocation4 + $0x10] sm:$0xff] %v9249
        %9282 = vst [vmem:[#allocation4 + $0x18] sm:$0xff] %v9250
        %9283 = vst [vmem:[#allocation4 + $0x20] sm:$0xff] %v9251
        %9284 = vst [vmem:[#allocation4 + $0x28] sm:$0xff] %v9252
        %9285 = vst [vmem:[#allocation4 + $0x30] sm:$0xff] %v9253
        %9286 = vst [vmem:[#allocation4 + $0x38] sm:$0xff] %v9254
        %9287 = vst [vmem:[#allocation4 + $0x40] sm:$0xff] %v9255
        %9288 = vst [vmem:[#allocation4 + $0x48] sm:$0xff] %v9256
        %9289 = vst [vmem:[#allocation4 + $0x50] sm:$0xff] %v9257
        %9290 = vst [vmem:[#allocation4 + $0x58] sm:$0xff] %v9258
        %9291 = vst [vmem:[#allocation4 + $0x60] sm:$0xff] %v9259
        %9292 = vst [vmem:[#allocation4 + $0x68] sm:$0xff] %v9260
        %9293 = vst [vmem:[#allocation4 + $0x70] sm:$0xff] %v9261
        %9294 = vst [vmem:[#allocation4 + $0x78] sm:$0xff] %v9262
        %9295 = vst [vmem:[#allocation4 + $0x80] sm:$0xff] %v9263
        %9296 = vst [vmem:[#allocation4 + $0x88] sm:$0xff] %v9264
        %9297 = vst [vmem:[#allocation4 + $0x90] sm:$0xff] %v9265
        %9298 = vst [vmem:[#allocation4 + $0x98] sm:$0xff] %v9266
        %9299 = vst [vmem:[#allocation4 + $0xa0] sm:$0xff] %v9267
        %9300 = vst [vmem:[#allocation4 + $0xa8] sm:$0xff] %v9268
        %9301 = vst [vmem:[#allocation4 + $0xb0] sm:$0xff] %v9269
        %9302 = vst [vmem:[#allocation4 + $0xb8] sm:$0xff] %v9270
        %9303 = vst [vmem:[#allocation4 + $0xc0] sm:$0xff] %v9271
        %9304 = vst [vmem:[#allocation4 + $0xc8] sm:$0xff] %v9272
        %9305 = vst [vmem:[#allocation4 + $0xd0] sm:$0xff] %v9273
        %9306 = vst [vmem:[#allocation4 + $0xd8] sm:$0xff] %v9274
        %9307 = vst [vmem:[#allocation4 + $0xe0] sm:$0xff] %v9275
        %9308 = vst [vmem:[#allocation4 + $0xe8] sm:$0xff] %v9276
        %9309 = vst [vmem:[#allocation4 + $0xf0] sm:$0xff] %v9277
        %9310 = vst [vmem:[#allocation4 + $0xf8] sm:$0xff] %v9278
        %v9311 = vld [vmem:[%s8186] sm:$0xe]
        %v9312 = vld [vmem:[%s8186 + $0x4] sm:$0xf]
        %v9313 = vld [vmem:[%s8186 + $0x8] sm:$0x1]
        %v9314 = vld [vmem:[%s8186 + $0xc] sm:$0xe]
        %v9315 = vld [vmem:[%s8186 + $0x10] sm:$0xf]
        %v9316 = vld [vmem:[%s8186 + $0x14] sm:$0x1]
        %v9317 = vld [vmem:[%s8186 + $0x18] sm:$0xe]
        %v9318 = vld [vmem:[%s8186 + $0x1c] sm:$0xf]
        %v9319 = vld [vmem:[%s8186 + $0x20] sm:$0x1]
        %v9320 = vld [vmem:[%s8186 + $0x24] sm:$0xe]
        %v9321 = vld [vmem:[%s8186 + $0x28] sm:$0xf]
        %v9322 = vld [vmem:[%s8186 + $0x2c] sm:$0x1]
        %v9323 = vld [vmem:[%s8186 + $0x30] sm:$0xe]
        %v9324 = vld [vmem:[%s8186 + $0x34] sm:$0xf]
        %v9325 = vld [vmem:[%s8186 + $0x38] sm:$0x1]
        %v9326 = vld [vmem:[%s8186 + $0x3c] sm:$0xe]
        %v9327 = vld [vmem:[%s8186 + $0x40] sm:$0xf]
        %v9328 = vld [vmem:[%s8186 + $0x44] sm:$0x1]
        %v9329 = vld [vmem:[%s8186 + $0x48] sm:$0xe]
        %v9330 = vld [vmem:[%s8186 + $0x4c] sm:$0xf]
        %v9331 = vld [vmem:[%s8186 + $0x50] sm:$0x1]
        %v9332 = vld [vmem:[%s8186 + $0x54] sm:$0xe]
        %v9333 = vld [vmem:[%s8186 + $0x58] sm:$0xf]
        %v9334 = vld [vmem:[%s8186 + $0x5c] sm:$0x1]
        %v9335 = vld [vmem:[%s8186 + $0x60] sm:$0xe]
        %v9336 = vld [vmem:[%s8186 + $0x64] sm:$0xf]
        %v9337 = vld [vmem:[%s8186 + $0x68] sm:$0x1]
        %v9338 = vld [vmem:[%s8186 + $0x6c] sm:$0xe]
        %v9339 = vld [vmem:[%s8186 + $0x70] sm:$0xf]
        %v9340 = vld [vmem:[%s8186 + $0x74] sm:$0x1]
        %v9341 = vld [vmem:[%s8186 + $0x78] sm:$0xe]
        %v9342 = vld [vmem:[%s8186 + $0x7c] sm:$0xf]
        %v9343 = vld [vmem:[%s8186 + $0x80] sm:$0x1]
        %v9344 = vld [vmem:[%s8186 + $0x84] sm:$0xe]
        %v9345 = vld [vmem:[%s8186 + $0x88] sm:$0xf]
        %v9346 = vld [vmem:[%s8186 + $0x8c] sm:$0x1]
        %v9347 = vld [vmem:[%s8186 + $0x90] sm:$0xe]
        %v9348 = vld [vmem:[%s8186 + $0x94] sm:$0xf]
        %v9349 = vld [vmem:[%s8186 + $0x98] sm:$0x1]
        %v9350 = vld [vmem:[%s8186 + $0x9c] sm:$0xe]
        %v9351 = vld [vmem:[%s8186 + $0xa0] sm:$0xf]
        %v9352 = vld [vmem:[%s8186 + $0xa4] sm:$0x1]
        %v9353 = vld [vmem:[%s8186 + $0xa8] sm:$0xe]
        %v9354 = vld [vmem:[%s8186 + $0xac] sm:$0xf]
        %v9355 = vld [vmem:[%s8186 + $0xb0] sm:$0x1]
        %v9356 = vld [vmem:[%s8186 + $0xb4] sm:$0xe]
        %v9357 = vld [vmem:[%s8186 + $0xb8] sm:$0xf]
        %v9358 = vld [vmem:[%s8186 + $0xbc] sm:$0x1]
        %v9407 = vrot.slane %v9311, 5
        %v9408 = vrot.slane %v9407, 4
        %v9409 = vrot.slane %v9312, 5
        %v9410 = vsel %vm1722, %v9408, %v9409
        %v9411 = vrot.slane %v9409, 4
        %v9412 = vrot.slane %v9313, 5
        %v9413 = vsel %vm1722, %v9411, %v9412
        %v9414 = vrot.slane %v9314, 5
        %v9415 = vrot.slane %v9414, 4
        %v9416 = vrot.slane %v9315, 5
        %v9417 = vsel %vm1722, %v9415, %v9416
        %v9418 = vrot.slane %v9416, 4
        %v9419 = vrot.slane %v9316, 5
        %v9420 = vsel %vm1722, %v9418, %v9419
        %v9421 = vrot.slane %v9317, 5
        %v9422 = vrot.slane %v9421, 4
        %v9423 = vrot.slane %v9318, 5
        %v9424 = vsel %vm1722, %v9422, %v9423
        %v9425 = vrot.slane %v9423, 4
        %v9426 = vrot.slane %v9319, 5
        %v9427 = vsel %vm1722, %v9425, %v9426
        %v9428 = vrot.slane %v9320, 5
        %v9429 = vrot.slane %v9428, 4
        %v9430 = vrot.slane %v9321, 5
        %v9431 = vsel %vm1722, %v9429, %v9430
        %v9432 = vrot.slane %v9430, 4
        %v9433 = vrot.slane %v9322, 5
        %v9434 = vsel %vm1722, %v9432, %v9433
        %v9435 = vrot.slane %v9323, 5
        %v9436 = vrot.slane %v9435, 4
        %v9437 = vrot.slane %v9324, 5
        %v9438 = vsel %vm1722, %v9436, %v9437
        %v9439 = vrot.slane %v9437, 4
        %v9440 = vrot.slane %v9325, 5
        %v9441 = vsel %vm1722, %v9439, %v9440
        %v9442 = vrot.slane %v9326, 5
        %v9443 = vrot.slane %v9442, 4
        %v9444 = vrot.slane %v9327, 5
        %v9445 = vsel %vm1722, %v9443, %v9444
        %v9446 = vrot.slane %v9444, 4
        %v9447 = vrot.slane %v9328, 5
        %v9448 = vsel %vm1722, %v9446, %v9447
        %v9449 = vrot.slane %v9329, 5
        %v9450 = vrot.slane %v9449, 4
        %v9451 = vrot.slane %v9330, 5
        %v9452 = vsel %vm1722, %v9450, %v9451
        %v9453 = vrot.slane %v9451, 4
        %v9454 = vrot.slane %v9331, 5
        %v9455 = vsel %vm1722, %v9453, %v9454
        %v9456 = vrot.slane %v9332, 5
        %v9457 = vrot.slane %v9456, 4
        %v9458 = vrot.slane %v9333, 5
        %v9459 = vsel %vm1722, %v9457, %v9458
        %v9460 = vrot.slane %v9458, 4
        %v9461 = vrot.slane %v9334, 5
        %v9462 = vsel %vm1722, %v9460, %v9461
        %v9463 = vrot.slane %v9335, 5
        %v9464 = vrot.slane %v9463, 4
        %v9465 = vrot.slane %v9336, 5
        %v9466 = vsel %vm1722, %v9464, %v9465
        %v9467 = vrot.slane %v9465, 4
        %v9468 = vrot.slane %v9337, 5
        %v9469 = vsel %vm1722, %v9467, %v9468
        %v9470 = vrot.slane %v9338, 5
        %v9471 = vrot.slane %v9470, 4
        %v9472 = vrot.slane %v9339, 5
        %v9473 = vsel %vm1722, %v9471, %v9472
        %v9474 = vrot.slane %v9472, 4
        %v9475 = vrot.slane %v9340, 5
        %v9476 = vsel %vm1722, %v9474, %v9475
        %v9477 = vrot.slane %v9341, 5
        %v9478 = vrot.slane %v9477, 4
        %v9479 = vrot.slane %v9342, 5
        %v9480 = vsel %vm1722, %v9478, %v9479
        %v9481 = vrot.slane %v9479, 4
        %v9482 = vrot.slane %v9343, 5
        %v9483 = vsel %vm1722, %v9481, %v9482
        %v9484 = vrot.slane %v9344, 5
        %v9485 = vrot.slane %v9484, 4
        %v9486 = vrot.slane %v9345, 5
        %v9487 = vsel %vm1722, %v9485, %v9486
        %v9488 = vrot.slane %v9486, 4
        %v9489 = vrot.slane %v9346, 5
        %v9490 = vsel %vm1722, %v9488, %v9489
        %v9491 = vrot.slane %v9347, 5
        %v9492 = vrot.slane %v9491, 4
        %v9493 = vrot.slane %v9348, 5
        %v9494 = vsel %vm1722, %v9492, %v9493
        %v9495 = vrot.slane %v9493, 4
        %v9496 = vrot.slane %v9349, 5
        %v9497 = vsel %vm1722, %v9495, %v9496
        %v9498 = vrot.slane %v9350, 5
        %v9499 = vrot.slane %v9498, 4
        %v9500 = vrot.slane %v9351, 5
        %v9501 = vsel %vm1722, %v9499, %v9500
        %v9502 = vrot.slane %v9500, 4
        %v9503 = vrot.slane %v9352, 5
        %v9504 = vsel %vm1722, %v9502, %v9503
        %v9505 = vrot.slane %v9353, 5
        %v9506 = vrot.slane %v9505, 4
        %v9507 = vrot.slane %v9354, 5
        %v9508 = vsel %vm1722, %v9506, %v9507
        %v9509 = vrot.slane %v9507, 4
        %v9510 = vrot.slane %v9355, 5
        %v9511 = vsel %vm1722, %v9509, %v9510
        %v9512 = vrot.slane %v9356, 5
        %v9513 = vrot.slane %v9512, 4
        %v9514 = vrot.slane %v9357, 5
        %v9515 = vsel %vm1722, %v9513, %v9514
        %v9516 = vrot.slane %v9514, 4
        %v9517 = vrot.slane %v9358, 5
        %v9518 = vsel %vm1722, %v9516, %v9517
        %s9519 = scalar_lea.vmem %s2, 320
        %v9520 = vld [vmem:[%s9519] sm:$0xf]
        %v9521 = vld [vmem:[%s9519 + $0x4] sm:$0xf]
        %v9522 = vld [vmem:[%s9519 + $0x8] sm:$0xf]
        %v9523 = vld [vmem:[%s9519 + $0xc] sm:$0xf]
        %v9524 = vld [vmem:[%s9519 + $0x10] sm:$0xf]
        %v9525 = vld [vmem:[%s9519 + $0x14] sm:$0xf]
        %v9526 = vld [vmem:[%s9519 + $0x18] sm:$0xf]
        %v9527 = vld [vmem:[%s9519 + $0x1c] sm:$0xf]
        %v9528 = vld [vmem:[%s9519 + $0x20] sm:$0xf]
        %v9529 = vld [vmem:[%s9519 + $0x24] sm:$0xf]
        %v9530 = vld [vmem:[%s9519 + $0x28] sm:$0xf]
        %v9531 = vld [vmem:[%s9519 + $0x2c] sm:$0xf]
        %v9532 = vld [vmem:[%s9519 + $0x30] sm:$0xf]
        %v9533 = vld [vmem:[%s9519 + $0x34] sm:$0xf]
        %v9534 = vld [vmem:[%s9519 + $0x38] sm:$0xf]
        %v9535 = vld [vmem:[%s9519 + $0x3c] sm:$0xf]
        %v9536 = vunpack.c.l.b16 %v9410
        %v9537 = vunpack.c.l.b16 %v9413
        %v9538 = vunpack.c.l.b16 %v9417
        %v9539 = vunpack.c.l.b16 %v9420
        %v9540 = vunpack.c.l.b16 %v9424
        %v9541 = vunpack.c.l.b16 %v9427
        %v9542 = vunpack.c.l.b16 %v9431
        %v9543 = vunpack.c.l.b16 %v9434
        %v9544 = vunpack.c.l.b16 %v9438
        %v9545 = vunpack.c.l.b16 %v9441
        %v9546 = vunpack.c.l.b16 %v9445
        %v9547 = vunpack.c.l.b16 %v9448
        %v9548 = vunpack.c.l.b16 %v9452
        %v9549 = vunpack.c.l.b16 %v9455
        %v9550 = vunpack.c.l.b16 %v9459
        %v9551 = vunpack.c.l.b16 %v9462
        %v9552 = vunpack.c.l.b16 %v9466
        %v9553 = vunpack.c.l.b16 %v9469
        %v9554 = vunpack.c.l.b16 %v9473
        %v9555 = vunpack.c.l.b16 %v9476
        %v9556 = vunpack.c.l.b16 %v9480
        %v9557 = vunpack.c.l.b16 %v9483
        %v9558 = vunpack.c.l.b16 %v9487
        %v9559 = vunpack.c.l.b16 %v9490
        %v9560 = vunpack.c.l.b16 %v9494
        %v9561 = vunpack.c.l.b16 %v9497
        %v9562 = vunpack.c.l.b16 %v9501
        %v9563 = vunpack.c.l.b16 %v9504
        %v9564 = vunpack.c.l.b16 %v9508
        %v9565 = vunpack.c.l.b16 %v9511
        %v9566 = vunpack.c.l.b16 %v9515
        %v9567 = vunpack.c.l.b16 %v9518
        %v9568 = vpack.c.b16 %v9537, %v9536
        %v9569 = vpack.c.b16 %v9539, %v9538
        %v9570 = vpack.c.b16 %v9541, %v9540
        %v9571 = vpack.c.b16 %v9543, %v9542
        %v9572 = vpack.c.b16 %v9545, %v9544
        %v9573 = vpack.c.b16 %v9547, %v9546
        %v9574 = vpack.c.b16 %v9549, %v9548
        %v9575 = vpack.c.b16 %v9551, %v9550
        %v9576 = vpack.c.b16 %v9553, %v9552
        %v9577 = vpack.c.b16 %v9555, %v9554
        %v9578 = vpack.c.b16 %v9557, %v9556
        %v9579 = vpack.c.b16 %v9559, %v9558
        %v9580 = vpack.c.b16 %v9561, %v9560
        %v9581 = vpack.c.b16 %v9563, %v9562
        %v9582 = vpack.c.b16 %v9565, %v9564
        %v9583 = vpack.c.b16 %v9567, %v9566
        %v9616 = vunpack.c.l.b16 %v9520
        %v9617 = vunpack.c.l.b16 %v9521
        %v9618 = vunpack.c.l.b16 %v9522
        %v9619 = vunpack.c.l.b16 %v9523
        %v9620 = vunpack.c.l.b16 %v9524
        %v9621 = vunpack.c.l.b16 %v9525
        %v9622 = vunpack.c.l.b16 %v9526
        %v9623 = vunpack.c.l.b16 %v9527
        %v9624 = vunpack.c.l.b16 %v9528
        %v9625 = vunpack.c.l.b16 %v9529
        %v9626 = vunpack.c.l.b16 %v9530
        %v9627 = vunpack.c.l.b16 %v9531
        %v9628 = vunpack.c.l.b16 %v9532
        %v9629 = vunpack.c.l.b16 %v9533
        %v9630 = vunpack.c.l.b16 %v9534
        %v9631 = vunpack.c.l.b16 %v9535
        %v9632 = vpack.c.b16 %v9617, %v9616
        %v9633 = vpack.c.b16 %v9619, %v9618
        %v9634 = vpack.c.b16 %v9621, %v9620
        %v9635 = vpack.c.b16 %v9623, %v9622
        %v9636 = vpack.c.b16 %v9625, %v9624
        %v9637 = vpack.c.b16 %v9627, %v9626
        %v9638 = vpack.c.b16 %v9629, %v9628
        %v9639 = vpack.c.b16 %v9631, %v9630
        %9648 = vmatpush.bf16.msra.mxu0 %v9639
        %9649 = vmatpush.bf16.msra.mxu0 %v9638
        %9650 = vmatpush.bf16.msra.mxu0 %v9637
        %9651 = vmatpush.bf16.msra.mxu0 %v9636
        %9652 = vmatpush.bf16.msra.mxu0 %v9635
        %9653 = vmatpush.bf16.msra.mxu0 %v9634
        %9654 = vmatpush.bf16.msra.mxu0 %v9633
        %9655 = vmatpush.bf16.msra.mxu0 %v9632
        %9656 = vmatmul.bf16.gmra.mxu0 %v9568
        %v9657 = vpop.f32.mrf.mxu0
        %v9658 = vadd.f32 0.0, %v9657
        %v9659 = vpop.f32.mrf.mxu0
        %v9660 = vadd.f32 0.0, %v9659
        %9661 = vmatmul.bf16.gmra.mxu0 %v9569
        %v9662 = vpop.f32.mrf.mxu0
        %v9663 = vadd.f32 0.0, %v9662
        %v9664 = vpop.f32.mrf.mxu0
        %v9665 = vadd.f32 0.0, %v9664
        %9666 = vmatmul.bf16.gmra.mxu0 %v9570
        %v9667 = vpop.f32.mrf.mxu0
        %v9668 = vadd.f32 0.0, %v9667
        %v9669 = vpop.f32.mrf.mxu0
        %v9670 = vadd.f32 0.0, %v9669
        %9671 = vmatmul.bf16.gmra.mxu0 %v9571
        %v9672 = vpop.f32.mrf.mxu0
        %v9673 = vadd.f32 0.0, %v9672
        %v9674 = vpop.f32.mrf.mxu0
        %v9675 = vadd.f32 0.0, %v9674
        %9676 = vmatmul.bf16.gmra.mxu0 %v9572
        %v9677 = vpop.f32.mrf.mxu0
        %v9678 = vadd.f32 0.0, %v9677
        %v9679 = vpop.f32.mrf.mxu0
        %v9680 = vadd.f32 0.0, %v9679
        %9681 = vmatmul.bf16.gmra.mxu0 %v9573
        %v9682 = vpop.f32.mrf.mxu0
        %v9683 = vadd.f32 0.0, %v9682
        %v9684 = vpop.f32.mrf.mxu0
        %v9685 = vadd.f32 0.0, %v9684
        %9686 = vmatmul.bf16.gmra.mxu0 %v9574
        %v9687 = vpop.f32.mrf.mxu0
        %v9688 = vadd.f32 0.0, %v9687
        %v9689 = vpop.f32.mrf.mxu0
        %v9690 = vadd.f32 0.0, %v9689
        %9691 = vmatmul.bf16.gmra.mxu0 %v9575
        %v9692 = vpop.f32.mrf.mxu0
        %v9693 = vadd.f32 0.0, %v9692
        %v9694 = vpop.f32.mrf.mxu0
        %v9695 = vadd.f32 0.0, %v9694
        %9696 = vmatmul.bf16.gmra.mxu0 %v9576
        %v9697 = vpop.f32.mrf.mxu0
        %v9698 = vadd.f32 0.0, %v9697
        %v9699 = vpop.f32.mrf.mxu0
        %v9700 = vadd.f32 0.0, %v9699
        %9701 = vmatmul.bf16.gmra.mxu0 %v9577
        %v9702 = vpop.f32.mrf.mxu0
        %v9703 = vadd.f32 0.0, %v9702
        %v9704 = vpop.f32.mrf.mxu0
        %v9705 = vadd.f32 0.0, %v9704
        %9706 = vmatmul.bf16.gmra.mxu0 %v9578
        %v9707 = vpop.f32.mrf.mxu0
        %v9708 = vadd.f32 0.0, %v9707
        %v9709 = vpop.f32.mrf.mxu0
        %v9710 = vadd.f32 0.0, %v9709
        %9711 = vmatmul.bf16.gmra.mxu0 %v9579
        %v9712 = vpop.f32.mrf.mxu0
        %v9713 = vadd.f32 0.0, %v9712
        %v9714 = vpop.f32.mrf.mxu0
        %v9715 = vadd.f32 0.0, %v9714
        %9716 = vmatmul.bf16.gmra.mxu0 %v9580
        %v9717 = vpop.f32.mrf.mxu0
        %v9718 = vadd.f32 0.0, %v9717
        %v9719 = vpop.f32.mrf.mxu0
        %v9720 = vadd.f32 0.0, %v9719
        %9721 = vmatmul.bf16.gmra.mxu0 %v9581
        %v9722 = vpop.f32.mrf.mxu0
        %v9723 = vadd.f32 0.0, %v9722
        %v9724 = vpop.f32.mrf.mxu0
        %v9725 = vadd.f32 0.0, %v9724
        %9726 = vmatmul.bf16.gmra.mxu0 %v9582
        %v9727 = vpop.f32.mrf.mxu0
        %v9728 = vadd.f32 0.0, %v9727
        %v9729 = vpop.f32.mrf.mxu0
        %v9730 = vadd.f32 0.0, %v9729
        %9731 = vmatmul.bf16.gmra.mxu0 %v9583
        %v9732 = vpop.f32.mrf.mxu0
        %v9733 = vadd.f32 0.0, %v9732
        %v9734 = vpop.f32.mrf.mxu0
        %v9735 = vadd.f32 0.0, %v9734
        %9736 = vdwg.mxu0
        %v9737 = vld [vmem:[#allocation4] sm:$0xff]
        %v9738 = vld [vmem:[#allocation4 + $0x8] sm:$0xff]
        %v9739 = vld [vmem:[#allocation4 + $0x10] sm:$0xff]
        %v9740 = vld [vmem:[#allocation4 + $0x18] sm:$0xff]
        %v9741 = vld [vmem:[#allocation4 + $0x20] sm:$0xff]
        %v9742 = vld [vmem:[#allocation4 + $0x28] sm:$0xff]
        %v9743 = vld [vmem:[#allocation4 + $0x30] sm:$0xff]
        %v9744 = vld [vmem:[#allocation4 + $0x38] sm:$0xff]
        %v9745 = vld [vmem:[#allocation4 + $0x40] sm:$0xff]
        %v9746 = vld [vmem:[#allocation4 + $0x48] sm:$0xff]
        %v9747 = vld [vmem:[#allocation4 + $0x50] sm:$0xff]
        %v9748 = vld [vmem:[#allocation4 + $0x58] sm:$0xff]
        %v9749 = vld [vmem:[#allocation4 + $0x60] sm:$0xff]
        %v9750 = vld [vmem:[#allocation4 + $0x68] sm:$0xff]
        %v9751 = vld [vmem:[#allocation4 + $0x70] sm:$0xff]
        %v9752 = vld [vmem:[#allocation4 + $0x78] sm:$0xff]
        %v9753 = vld [vmem:[#allocation4 + $0x80] sm:$0xff]
        %v9754 = vld [vmem:[#allocation4 + $0x88] sm:$0xff]
        %v9755 = vld [vmem:[#allocation4 + $0x90] sm:$0xff]
        %v9756 = vld [vmem:[#allocation4 + $0x98] sm:$0xff]
        %v9757 = vld [vmem:[#allocation4 + $0xa0] sm:$0xff]
        %v9758 = vld [vmem:[#allocation4 + $0xa8] sm:$0xff]
        %v9759 = vld [vmem:[#allocation4 + $0xb0] sm:$0xff]
        %v9760 = vld [vmem:[#allocation4 + $0xb8] sm:$0xff]
        %v9761 = vld [vmem:[#allocation4 + $0xc0] sm:$0xff]
        %v9762 = vld [vmem:[#allocation4 + $0xc8] sm:$0xff]
        %v9763 = vld [vmem:[#allocation4 + $0xd0] sm:$0xff]
        %v9764 = vld [vmem:[#allocation4 + $0xd8] sm:$0xff]
        %v9765 = vld [vmem:[#allocation4 + $0xe0] sm:$0xff]
        %v9766 = vld [vmem:[#allocation4 + $0xe8] sm:$0xff]
        %v9767 = vld [vmem:[#allocation4 + $0xf0] sm:$0xff]
        %v9768 = vld [vmem:[#allocation4 + $0xf8] sm:$0xff]
        %v9769 = vadd.f32 %v9737, %v9658
        %v9770 = vadd.f32 %v9738, %v9660
        %v9771 = vadd.f32 %v9739, %v9663
        %v9772 = vadd.f32 %v9740, %v9665
        %v9773 = vadd.f32 %v9741, %v9668
        %v9774 = vadd.f32 %v9742, %v9670
        %v9775 = vadd.f32 %v9743, %v9673
        %v9776 = vadd.f32 %v9744, %v9675
        %v9777 = vadd.f32 %v9745, %v9678
        %v9778 = vadd.f32 %v9746, %v9680
        %v9779 = vadd.f32 %v9747, %v9683
        %v9780 = vadd.f32 %v9748, %v9685
        %v9781 = vadd.f32 %v9749, %v9688
        %v9782 = vadd.f32 %v9750, %v9690
        %v9783 = vadd.f32 %v9751, %v9693
        %v9784 = vadd.f32 %v9752, %v9695
        %v9785 = vadd.f32 %v9753, %v9698
        %v9786 = vadd.f32 %v9754, %v9700
        %v9787 = vadd.f32 %v9755, %v9703
        %v9788 = vadd.f32 %v9756, %v9705
        %v9789 = vadd.f32 %v9757, %v9708
        %v9790 = vadd.f32 %v9758, %v9710
        %v9791 = vadd.f32 %v9759, %v9713
        %v9792 = vadd.f32 %v9760, %v9715
        %v9793 = vadd.f32 %v9761, %v9718
        %v9794 = vadd.f32 %v9762, %v9720
        %v9795 = vadd.f32 %v9763, %v9723
        %v9796 = vadd.f32 %v9764, %v9725
        %v9797 = vadd.f32 %v9765, %v9728
        %v9798 = vadd.f32 %v9766, %v9730
        %v9799 = vadd.f32 %v9767, %v9733
        %v9800 = vadd.f32 %v9768, %v9735
        %9801 = vst [vmem:[#allocation4] sm:$0xff] %v9769
        %9802 = vst [vmem:[#allocation4 + $0x8] sm:$0xff] %v9770
        %9803 = vst [vmem:[#allocation4 + $0x10] sm:$0xff] %v9771
        %9804 = vst [vmem:[#allocation4 + $0x18] sm:$0xff] %v9772
        %9805 = vst [vmem:[#allocation4 + $0x20] sm:$0xff] %v9773
        %9806 = vst [vmem:[#allocation4 + $0x28] sm:$0xff] %v9774
        %9807 = vst [vmem:[#allocation4 + $0x30] sm:$0xff] %v9775
        %9808 = vst [vmem:[#allocation4 + $0x38] sm:$0xff] %v9776
        %9809 = vst [vmem:[#allocation4 + $0x40] sm:$0xff] %v9777
        %9810 = vst [vmem:[#allocation4 + $0x48] sm:$0xff] %v9778
        %9811 = vst [vmem:[#allocation4 + $0x50] sm:$0xff] %v9779
        %9812 = vst [vmem:[#allocation4 + $0x58] sm:$0xff] %v9780
        %9813 = vst [vmem:[#allocation4 + $0x60] sm:$0xff] %v9781
        %9814 = vst [vmem:[#allocation4 + $0x68] sm:$0xff] %v9782
        %9815 = vst [vmem:[#allocation4 + $0x70] sm:$0xff] %v9783
        %9816 = vst [vmem:[#allocation4 + $0x78] sm:$0xff] %v9784
        %9817 = vst [vmem:[#allocation4 + $0x80] sm:$0xff] %v9785
        %9818 = vst [vmem:[#allocation4 + $0x88] sm:$0xff] %v9786
        %9819 = vst [vmem:[#allocation4 + $0x90] sm:$0xff] %v9787
        %9820 = vst [vmem:[#allocation4 + $0x98] sm:$0xff] %v9788
        %9821 = vst [vmem:[#allocation4 + $0xa0] sm:$0xff] %v9789
        %9822 = vst [vmem:[#allocation4 + $0xa8] sm:$0xff] %v9790
        %9823 = vst [vmem:[#allocation4 + $0xb0] sm:$0xff] %v9791
        %9824 = vst [vmem:[#allocation4 + $0xb8] sm:$0xff] %v9792
        %9825 = vst [vmem:[#allocation4 + $0xc0] sm:$0xff] %v9793
        %9826 = vst [vmem:[#allocation4 + $0xc8] sm:$0xff] %v9794
        %9827 = vst [vmem:[#allocation4 + $0xd0] sm:$0xff] %v9795
        %9828 = vst [vmem:[#allocation4 + $0xd8] sm:$0xff] %v9796
        %9829 = vst [vmem:[#allocation4 + $0xe0] sm:$0xff] %v9797
        %9830 = vst [vmem:[#allocation4 + $0xe8] sm:$0xff] %v9798
        %9831 = vst [vmem:[#allocation4 + $0xf0] sm:$0xff] %v9799
        %9832 = vst [vmem:[#allocation4 + $0xf8] sm:$0xff] %v9800
        %s9833 = scalar_lea.vmem [#allocation3], 24
        %v9834 = vld [vmem:[%s9833] sm:$0xf]
        %v9835 = vld [vmem:[%s9833 + $0x4] sm:$0xf]
        %v9836 = vld [vmem:[%s9833 + $0xc] sm:$0xf]
        %v9837 = vld [vmem:[%s9833 + $0x10] sm:$0xf]
        %v9838 = vld [vmem:[%s9833 + $0x18] sm:$0xf]
        %v9839 = vld [vmem:[%s9833 + $0x1c] sm:$0xf]
        %v9840 = vld [vmem:[%s9833 + $0x24] sm:$0xf]
        %v9841 = vld [vmem:[%s9833 + $0x28] sm:$0xf]
        %v9842 = vld [vmem:[%s9833 + $0x30] sm:$0xf]
        %v9843 = vld [vmem:[%s9833 + $0x34] sm:$0xf]
        %v9844 = vld [vmem:[%s9833 + $0x3c] sm:$0xf]
        %v9845 = vld [vmem:[%s9833 + $0x40] sm:$0xf]
        %v9846 = vld [vmem:[%s9833 + $0x48] sm:$0xf]
        %v9847 = vld [vmem:[%s9833 + $0x4c] sm:$0xf]
        %v9848 = vld [vmem:[%s9833 + $0x54] sm:$0xf]
        %v9849 = vld [vmem:[%s9833 + $0x58] sm:$0xf]
        %v9850 = vld [vmem:[%s9833 + $0x60] sm:$0xf]
        %v9851 = vld [vmem:[%s9833 + $0x64] sm:$0xf]
        %v9852 = vld [vmem:[%s9833 + $0x6c] sm:$0xf]
        %v9853 = vld [vmem:[%s9833 + $0x70] sm:$0xf]
        %v9854 = vld [vmem:[%s9833 + $0x78] sm:$0xf]
        %v9855 = vld [vmem:[%s9833 + $0x7c] sm:$0xf]
        %v9856 = vld [vmem:[%s9833 + $0x84] sm:$0xf]
        %v9857 = vld [vmem:[%s9833 + $0x88] sm:$0xf]
        %v9858 = vld [vmem:[%s9833 + $0x90] sm:$0xf]
        %v9859 = vld [vmem:[%s9833 + $0x94] sm:$0xf]
        %v9860 = vld [vmem:[%s9833 + $0x9c] sm:$0xf]
        %v9861 = vld [vmem:[%s9833 + $0xa0] sm:$0xf]
        %v9862 = vld [vmem:[%s9833 + $0xa8] sm:$0xf]
        %v9863 = vld [vmem:[%s9833 + $0xac] sm:$0xf]
        %v9864 = vld [vmem:[%s9833 + $0xb4] sm:$0xf]
        %v9865 = vld [vmem:[%s9833 + $0xb8] sm:$0xf]
        %s9866 = scalar_lea.vmem %s2, 384
        %v9867 = vld [vmem:[%s9866] sm:$0xf]
        %v9868 = vld [vmem:[%s9866 + $0x4] sm:$0xf]
        %v9869 = vld [vmem:[%s9866 + $0x8] sm:$0xf]
        %v9870 = vld [vmem:[%s9866 + $0xc] sm:$0xf]
        %v9871 = vld [vmem:[%s9866 + $0x10] sm:$0xf]
        %v9872 = vld [vmem:[%s9866 + $0x14] sm:$0xf]
        %v9873 = vld [vmem:[%s9866 + $0x18] sm:$0xf]
        %v9874 = vld [vmem:[%s9866 + $0x1c] sm:$0xf]
        %v9875 = vld [vmem:[%s9866 + $0x20] sm:$0xf]
        %v9876 = vld [vmem:[%s9866 + $0x24] sm:$0xf]
        %v9877 = vld [vmem:[%s9866 + $0x28] sm:$0xf]
        %v9878 = vld [vmem:[%s9866 + $0x2c] sm:$0xf]
        %v9879 = vld [vmem:[%s9866 + $0x30] sm:$0xf]
        %v9880 = vld [vmem:[%s9866 + $0x34] sm:$0xf]
        %v9881 = vld [vmem:[%s9866 + $0x38] sm:$0xf]
        %v9882 = vld [vmem:[%s9866 + $0x3c] sm:$0xf]
        %v9915 = vunpack.c.l.b16 %v9834
        %v9916 = vunpack.c.l.b16 %v9835
        %v9917 = vunpack.c.l.b16 %v9836
        %v9918 = vunpack.c.l.b16 %v9837
        %v9919 = vunpack.c.l.b16 %v9838
        %v9920 = vunpack.c.l.b16 %v9839
        %v9921 = vunpack.c.l.b16 %v9840
        %v9922 = vunpack.c.l.b16 %v9841
        %v9923 = vunpack.c.l.b16 %v9842
        %v9924 = vunpack.c.l.b16 %v9843
        %v9925 = vunpack.c.l.b16 %v9844
        %v9926 = vunpack.c.l.b16 %v9845
        %v9927 = vunpack.c.l.b16 %v9846
        %v9928 = vunpack.c.l.b16 %v9847
        %v9929 = vunpack.c.l.b16 %v9848
        %v9930 = vunpack.c.l.b16 %v9849
        %v9931 = vunpack.c.l.b16 %v9850
        %v9932 = vunpack.c.l.b16 %v9851
        %v9933 = vunpack.c.l.b16 %v9852
        %v9934 = vunpack.c.l.b16 %v9853
        %v9935 = vunpack.c.l.b16 %v9854
        %v9936 = vunpack.c.l.b16 %v9855
        %v9937 = vunpack.c.l.b16 %v9856
        %v9938 = vunpack.c.l.b16 %v9857
        %v9939 = vunpack.c.l.b16 %v9858
        %v9940 = vunpack.c.l.b16 %v9859
        %v9941 = vunpack.c.l.b16 %v9860
        %v9942 = vunpack.c.l.b16 %v9861
        %v9943 = vunpack.c.l.b16 %v9862
        %v9944 = vunpack.c.l.b16 %v9863
        %v9945 = vunpack.c.l.b16 %v9864
        %v9946 = vunpack.c.l.b16 %v9865
        %v9947 = vpack.c.b16 %v9916, %v9915
        %v9948 = vpack.c.b16 %v9918, %v9917
        %v9949 = vpack.c.b16 %v9920, %v9919
        %v9950 = vpack.c.b16 %v9922, %v9921
        %v9951 = vpack.c.b16 %v9924, %v9923
        %v9952 = vpack.c.b16 %v9926, %v9925
        %v9953 = vpack.c.b16 %v9928, %v9927
        %v9954 = vpack.c.b16 %v9930, %v9929
        %v9955 = vpack.c.b16 %v9932, %v9931
        %v9956 = vpack.c.b16 %v9934, %v9933
        %v9957 = vpack.c.b16 %v9936, %v9935
        %v9958 = vpack.c.b16 %v9938, %v9937
        %v9959 = vpack.c.b16 %v9940, %v9939
        %v9960 = vpack.c.b16 %v9942, %v9941
        %v9961 = vpack.c.b16 %v9944, %v9943
        %v9962 = vpack.c.b16 %v9946, %v9945
        %v9995 = vunpack.c.l.b16 %v9867
        %v9996 = vunpack.c.l.b16 %v9868
        %v9997 = vunpack.c.l.b16 %v9869
        %v9998 = vunpack.c.l.b16 %v9870
        %v9999 = vunpack.c.l.b16 %v9871
        %v10000 = vunpack.c.l.b16 %v9872
        %v10001 = vunpack.c.l.b16 %v9873
        %v10002 = vunpack.c.l.b16 %v9874
        %v10003 = vunpack.c.l.b16 %v9875
        %v10004 = vunpack.c.l.b16 %v9876
        %v10005 = vunpack.c.l.b16 %v9877
        %v10006 = vunpack.c.l.b16 %v9878
        %v10007 = vunpack.c.l.b16 %v9879
        %v10008 = vunpack.c.l.b16 %v9880
        %v10009 = vunpack.c.l.b16 %v9881
        %v10010 = vunpack.c.l.b16 %v9882
        %v10011 = vpack.c.b16 %v9996, %v9995
        %v10012 = vpack.c.b16 %v9998, %v9997
        %v10013 = vpack.c.b16 %v10000, %v9999
        %v10014 = vpack.c.b16 %v10002, %v10001
        %v10015 = vpack.c.b16 %v10004, %v10003
        %v10016 = vpack.c.b16 %v10006, %v10005
        %v10017 = vpack.c.b16 %v10008, %v10007
        %v10018 = vpack.c.b16 %v10010, %v10009
        %10027 = vmatpush.bf16.msra.mxu0 %v10018
        %10028 = vmatpush.bf16.msra.mxu0 %v10017
        %10029 = vmatpush.bf16.msra.mxu0 %v10016
        %10030 = vmatpush.bf16.msra.mxu0 %v10015
        %10031 = vmatpush.bf16.msra.mxu0 %v10014
        %10032 = vmatpush.bf16.msra.mxu0 %v10013
        %10033 = vmatpush.bf16.msra.mxu0 %v10012
        %10034 = vmatpush.bf16.msra.mxu0 %v10011
        %10035 = vmatmul.bf16.gmra.mxu0 %v9947
        %v10036 = vpop.f32.mrf.mxu0
        %v10037 = vadd.f32 0.0, %v10036
        %v10038 = vpop.f32.mrf.mxu0
        %v10039 = vadd.f32 0.0, %v10038
        %10040 = vmatmul.bf16.gmra.mxu0 %v9948
        %v10041 = vpop.f32.mrf.mxu0
        %v10042 = vadd.f32 0.0, %v10041
        %v10043 = vpop.f32.mrf.mxu0
        %v10044 = vadd.f32 0.0, %v10043
        %10045 = vmatmul.bf16.gmra.mxu0 %v9949
        %v10046 = vpop.f32.mrf.mxu0
        %v10047 = vadd.f32 0.0, %v10046
        %v10048 = vpop.f32.mrf.mxu0
        %v10049 = vadd.f32 0.0, %v10048
        %10050 = vmatmul.bf16.gmra.mxu0 %v9950
        %v10051 = vpop.f32.mrf.mxu0
        %v10052 = vadd.f32 0.0, %v10051
        %v10053 = vpop.f32.mrf.mxu0
        %v10054 = vadd.f32 0.0, %v10053
        %10055 = vmatmul.bf16.gmra.mxu0 %v9951
        %v10056 = vpop.f32.mrf.mxu0
        %v10057 = vadd.f32 0.0, %v10056
        %v10058 = vpop.f32.mrf.mxu0
        %v10059 = vadd.f32 0.0, %v10058
        %10060 = vmatmul.bf16.gmra.mxu0 %v9952
        %v10061 = vpop.f32.mrf.mxu0
        %v10062 = vadd.f32 0.0, %v10061
        %v10063 = vpop.f32.mrf.mxu0
        %v10064 = vadd.f32 0.0, %v10063
        %10065 = vmatmul.bf16.gmra.mxu0 %v9953
        %v10066 = vpop.f32.mrf.mxu0
        %v10067 = vadd.f32 0.0, %v10066
        %v10068 = vpop.f32.mrf.mxu0
        %v10069 = vadd.f32 0.0, %v10068
        %10070 = vmatmul.bf16.gmra.mxu0 %v9954
        %v10071 = vpop.f32.mrf.mxu0
        %v10072 = vadd.f32 0.0, %v10071
        %v10073 = vpop.f32.mrf.mxu0
        %v10074 = vadd.f32 0.0, %v10073
        %10075 = vmatmul.bf16.gmra.mxu0 %v9955
        %v10076 = vpop.f32.mrf.mxu0
        %v10077 = vadd.f32 0.0, %v10076
        %v10078 = vpop.f32.mrf.mxu0
        %v10079 = vadd.f32 0.0, %v10078
        %10080 = vmatmul.bf16.gmra.mxu0 %v9956
        %v10081 = vpop.f32.mrf.mxu0
        %v10082 = vadd.f32 0.0, %v10081
        %v10083 = vpop.f32.mrf.mxu0
        %v10084 = vadd.f32 0.0, %v10083
        %10085 = vmatmul.bf16.gmra.mxu0 %v9957
        %v10086 = vpop.f32.mrf.mxu0
        %v10087 = vadd.f32 0.0, %v10086
        %v10088 = vpop.f32.mrf.mxu0
        %v10089 = vadd.f32 0.0, %v10088
        %10090 = vmatmul.bf16.gmra.mxu0 %v9958
        %v10091 = vpop.f32.mrf.mxu0
        %v10092 = vadd.f32 0.0, %v10091
        %v10093 = vpop.f32.mrf.mxu0
        %v10094 = vadd.f32 0.0, %v10093
        %10095 = vmatmul.bf16.gmra.mxu0 %v9959
        %v10096 = vpop.f32.mrf.mxu0
        %v10097 = vadd.f32 0.0, %v10096
        %v10098 = vpop.f32.mrf.mxu0
        %v10099 = vadd.f32 0.0, %v10098
        %10100 = vmatmul.bf16.gmra.mxu0 %v9960
        %v10101 = vpop.f32.mrf.mxu0
        %v10102 = vadd.f32 0.0, %v10101
        %v10103 = vpop.f32.mrf.mxu0
        %v10104 = vadd.f32 0.0, %v10103
        %10105 = vmatmul.bf16.gmra.mxu0 %v9961
        %v10106 = vpop.f32.mrf.mxu0
        %v10107 = vadd.f32 0.0, %v10106
        %v10108 = vpop.f32.mrf.mxu0
        %v10109 = vadd.f32 0.0, %v10108
        %10110 = vmatmul.bf16.gmra.mxu0 %v9962
        %v10111 = vpop.f32.mrf.mxu0
        %v10112 = vadd.f32 0.0, %v10111
        %v10113 = vpop.f32.mrf.mxu0
        %v10114 = vadd.f32 0.0, %v10113
        %10115 = vdwg.mxu0
        %v10116 = vld [vmem:[#allocation4] sm:$0xff]
        %v10117 = vld [vmem:[#allocation4 + $0x8] sm:$0xff]
        %v10118 = vld [vmem:[#allocation4 + $0x10] sm:$0xff]
        %v10119 = vld [vmem:[#allocation4 + $0x18] sm:$0xff]
        %v10120 = vld [vmem:[#allocation4 + $0x20] sm:$0xff]
        %v10121 = vld [vmem:[#allocation4 + $0x28] sm:$0xff]
        %v10122 = vld [vmem:[#allocation4 + $0x30] sm:$0xff]
        %v10123 = vld [vmem:[#allocation4 + $0x38] sm:$0xff]
        %v10124 = vld [vmem:[#allocation4 + $0x40] sm:$0xff]
        %v10125 = vld [vmem:[#allocation4 + $0x48] sm:$0xff]
        %v10126 = vld [vmem:[#allocation4 + $0x50] sm:$0xff]
        %v10127 = vld [vmem:[#allocation4 + $0x58] sm:$0xff]
        %v10128 = vld [vmem:[#allocation4 + $0x60] sm:$0xff]
        %v10129 = vld [vmem:[#allocation4 + $0x68] sm:$0xff]
        %v10130 = vld [vmem:[#allocation4 + $0x70] sm:$0xff]
        %v10131 = vld [vmem:[#allocation4 + $0x78] sm:$0xff]
        %v10132 = vld [vmem:[#allocation4 + $0x80] sm:$0xff]
        %v10133 = vld [vmem:[#allocation4 + $0x88] sm:$0xff]
        %v10134 = vld [vmem:[#allocation4 + $0x90] sm:$0xff]
        %v10135 = vld [vmem:[#allocation4 + $0x98] sm:$0xff]
        %v10136 = vld [vmem:[#allocation4 + $0xa0] sm:$0xff]
        %v10137 = vld [vmem:[#allocation4 + $0xa8] sm:$0xff]
        %v10138 = vld [vmem:[#allocation4 + $0xb0] sm:$0xff]
        %v10139 = vld [vmem:[#allocation4 + $0xb8] sm:$0xff]
        %v10140 = vld [vmem:[#allocation4 + $0xc0] sm:$0xff]
        %v10141 = vld [vmem:[#allocation4 + $0xc8] sm:$0xff]
        %v10142 = vld [vmem:[#allocation4 + $0xd0] sm:$0xff]
        %v10143 = vld [vmem:[#allocation4 + $0xd8] sm:$0xff]
        %v10144 = vld [vmem:[#allocation4 + $0xe0] sm:$0xff]
        %v10145 = vld [vmem:[#allocation4 + $0xe8] sm:$0xff]
        %v10146 = vld [vmem:[#allocation4 + $0xf0] sm:$0xff]
        %v10147 = vld [vmem:[#allocation4 + $0xf8] sm:$0xff]
        %v10148 = vadd.f32 %v10116, %v10037
        %v10149 = vadd.f32 %v10117, %v10039
        %v10150 = vadd.f32 %v10118, %v10042
        %v10151 = vadd.f32 %v10119, %v10044
        %v10152 = vadd.f32 %v10120, %v10047
        %v10153 = vadd.f32 %v10121, %v10049
        %v10154 = vadd.f32 %v10122, %v10052
        %v10155 = vadd.f32 %v10123, %v10054
        %v10156 = vadd.f32 %v10124, %v10057
        %v10157 = vadd.f32 %v10125, %v10059
        %v10158 = vadd.f32 %v10126, %v10062
        %v10159 = vadd.f32 %v10127, %v10064
        %v10160 = vadd.f32 %v10128, %v10067
        %v10161 = vadd.f32 %v10129, %v10069
        %v10162 = vadd.f32 %v10130, %v10072
        %v10163 = vadd.f32 %v10131, %v10074
        %v10164 = vadd.f32 %v10132, %v10077
        %v10165 = vadd.f32 %v10133, %v10079
        %v10166 = vadd.f32 %v10134, %v10082
        %v10167 = vadd.f32 %v10135, %v10084
        %v10168 = vadd.f32 %v10136, %v10087
        %v10169 = vadd.f32 %v10137, %v10089
        %v10170 = vadd.f32 %v10138, %v10092
        %v10171 = vadd.f32 %v10139, %v10094
        %v10172 = vadd.f32 %v10140, %v10097
        %v10173 = vadd.f32 %v10141, %v10099
        %v10174 = vadd.f32 %v10142, %v10102
        %v10175 = vadd.f32 %v10143, %v10104
        %v10176 = vadd.f32 %v10144, %v10107
        %v10177 = vadd.f32 %v10145, %v10109
        %v10178 = vadd.f32 %v10146, %v10112
        %v10179 = vadd.f32 %v10147, %v10114
        %10180 = vst [vmem:[#allocation4] sm:$0xff] %v10148
        %10181 = vst [vmem:[#allocation4 + $0x8] sm:$0xff] %v10149
        %10182 = vst [vmem:[#allocation4 + $0x10] sm:$0xff] %v10150
        %10183 = vst [vmem:[#allocation4 + $0x18] sm:$0xff] %v10151
        %10184 = vst [vmem:[#allocation4 + $0x20] sm:$0xff] %v10152
        %10185 = vst [vmem:[#allocation4 + $0x28] sm:$0xff] %v10153
        %10186 = vst [vmem:[#allocation4 + $0x30] sm:$0xff] %v10154
        %10187 = vst [vmem:[#allocation4 + $0x38] sm:$0xff] %v10155
        %10188 = vst [vmem:[#allocation4 + $0x40] sm:$0xff] %v10156
        %10189 = vst [vmem:[#allocation4 + $0x48] sm:$0xff] %v10157
        %10190 = vst [vmem:[#allocation4 + $0x50] sm:$0xff] %v10158
        %10191 = vst [vmem:[#allocation4 + $0x58] sm:$0xff] %v10159
        %10192 = vst [vmem:[#allocation4 + $0x60] sm:$0xff] %v10160
        %10193 = vst [vmem:[#allocation4 + $0x68] sm:$0xff] %v10161
        %10194 = vst [vmem:[#allocation4 + $0x70] sm:$0xff] %v10162
        %10195 = vst [vmem:[#allocation4 + $0x78] sm:$0xff] %v10163
        %10196 = vst [vmem:[#allocation4 + $0x80] sm:$0xff] %v10164
        %10197 = vst [vmem:[#allocation4 + $0x88] sm:$0xff] %v10165
        %10198 = vst [vmem:[#allocation4 + $0x90] sm:$0xff] %v10166
        %10199 = vst [vmem:[#allocation4 + $0x98] sm:$0xff] %v10167
        %10200 = vst [vmem:[#allocation4 + $0xa0] sm:$0xff] %v10168
        %10201 = vst [vmem:[#allocation4 + $0xa8] sm:$0xff] %v10169
        %10202 = vst [vmem:[#allocation4 + $0xb0] sm:$0xff] %v10170
        %10203 = vst [vmem:[#allocation4 + $0xb8] sm:$0xff] %v10171
        %10204 = vst [vmem:[#allocation4 + $0xc0] sm:$0xff] %v10172
        %10205 = vst [vmem:[#allocation4 + $0xc8] sm:$0xff] %v10173
        %10206 = vst [vmem:[#allocation4 + $0xd0] sm:$0xff] %v10174
        %10207 = vst [vmem:[#allocation4 + $0xd8] sm:$0xff] %v10175
        %10208 = vst [vmem:[#allocation4 + $0xe0] sm:$0xff] %v10176
        %10209 = vst [vmem:[#allocation4 + $0xe8] sm:$0xff] %v10177
        %10210 = vst [vmem:[#allocation4 + $0xf0] sm:$0xff] %v10178
        %10211 = vst [vmem:[#allocation4 + $0xf8] sm:$0xff] %v10179
        %v10212 = vld [vmem:[%s9833] sm:$0xf]
        %v10213 = vld [vmem:[%s9833 + $0x4] sm:$0xf]
        %v10214 = vld [vmem:[%s9833 + $0x8] sm:$0x1]
        %v10215 = vld [vmem:[%s9833 + $0xc] sm:$0xf]
        %v10216 = vld [vmem:[%s9833 + $0x10] sm:$0xf]
        %v10217 = vld [vmem:[%s9833 + $0x14] sm:$0x1]
        %v10218 = vld [vmem:[%s9833 + $0x18] sm:$0xf]
        %v10219 = vld [vmem:[%s9833 + $0x1c] sm:$0xf]
        %v10220 = vld [vmem:[%s9833 + $0x20] sm:$0x1]
        %v10221 = vld [vmem:[%s9833 + $0x24] sm:$0xf]
        %v10222 = vld [vmem:[%s9833 + $0x28] sm:$0xf]
        %v10223 = vld [vmem:[%s9833 + $0x2c] sm:$0x1]
        %v10224 = vld [vmem:[%s9833 + $0x30] sm:$0xf]
        %v10225 = vld [vmem:[%s9833 + $0x34] sm:$0xf]
        %v10226 = vld [vmem:[%s9833 + $0x38] sm:$0x1]
        %v10227 = vld [vmem:[%s9833 + $0x3c] sm:$0xf]
        %v10228 = vld [vmem:[%s9833 + $0x40] sm:$0xf]
        %v10229 = vld [vmem:[%s9833 + $0x44] sm:$0x1]
        %v10230 = vld [vmem:[%s9833 + $0x48] sm:$0xf]
        %v10231 = vld [vmem:[%s9833 + $0x4c] sm:$0xf]
        %v10232 = vld [vmem:[%s9833 + $0x50] sm:$0x1]
        %v10233 = vld [vmem:[%s9833 + $0x54] sm:$0xf]
        %v10234 = vld [vmem:[%s9833 + $0x58] sm:$0xf]
        %v10235 = vld [vmem:[%s9833 + $0x5c] sm:$0x1]
        %v10236 = vld [vmem:[%s9833 + $0x60] sm:$0xf]
        %v10237 = vld [vmem:[%s9833 + $0x64] sm:$0xf]
        %v10238 = vld [vmem:[%s9833 + $0x68] sm:$0x1]
        %v10239 = vld [vmem:[%s9833 + $0x6c] sm:$0xf]
        %v10240 = vld [vmem:[%s9833 + $0x70] sm:$0xf]
        %v10241 = vld [vmem:[%s9833 + $0x74] sm:$0x1]
        %v10242 = vld [vmem:[%s9833 + $0x78] sm:$0xf]
        %v10243 = vld [vmem:[%s9833 + $0x7c] sm:$0xf]
        %v10244 = vld [vmem:[%s9833 + $0x80] sm:$0x1]
        %v10245 = vld [vmem:[%s9833 + $0x84] sm:$0xf]
        %v10246 = vld [vmem:[%s9833 + $0x88] sm:$0xf]
        %v10247 = vld [vmem:[%s9833 + $0x8c] sm:$0x1]
        %v10248 = vld [vmem:[%s9833 + $0x90] sm:$0xf]
        %v10249 = vld [vmem:[%s9833 + $0x94] sm:$0xf]
        %v10250 = vld [vmem:[%s9833 + $0x98] sm:$0x1]
        %v10251 = vld [vmem:[%s9833 + $0x9c] sm:$0xf]
        %v10252 = vld [vmem:[%s9833 + $0xa0] sm:$0xf]
        %v10253 = vld [vmem:[%s9833 + $0xa4] sm:$0x1]
        %v10254 = vld [vmem:[%s9833 + $0xa8] sm:$0xf]
        %v10255 = vld [vmem:[%s9833 + $0xac] sm:$0xf]
        %v10256 = vld [vmem:[%s9833 + $0xb0] sm:$0x1]
        %v10257 = vld [vmem:[%s9833 + $0xb4] sm:$0xf]
        %v10258 = vld [vmem:[%s9833 + $0xb8] sm:$0xf]
        %v10259 = vld [vmem:[%s9833 + $0xbc] sm:$0x1]
        %v10261 = vshrl.u32 %v10212, 16
        %v10263 = vrot.slane %v10261, 4
        %v10264 = vshll.u32 %v10212, 16
        %v10266 = vrot.slane %v10264, 5
        %v10267 = vor.u32 %v10263, %v10266
        %v10268 = vrot.slane %v10267, 4
        %v10270 = vshll.u32 %v10213, 16
        %v10272 = vrot.slane %v10270, 5
        %v10273 = vsel %vm835, %v10268, %v10272
        %v10274 = vshrl.u32 %v10213, 16
        %v10276 = vrot.slane %v10274, 4
        %v10277 = vor.u32 %v10276, %v10272
        %v10278 = vrot.slane %v10277, 4
        %v10280 = vshll.u32 %v10214, 16
        %v10282 = vrot.slane %v10280, 5
        %v10283 = vsel %vm835, %v10278, %v10282
        %v10285 = vshrl.u32 %v10215, 16
        %v10287 = vrot.slane %v10285, 4
        %v10288 = vshll.u32 %v10215, 16
        %v10290 = vrot.slane %v10288, 5
        %v10291 = vor.u32 %v10287, %v10290
        %v10292 = vrot.slane %v10291, 4
        %v10294 = vshll.u32 %v10216, 16
        %v10296 = vrot.slane %v10294, 5
        %v10297 = vsel %vm835, %v10292, %v10296
        %v10298 = vshrl.u32 %v10216, 16
        %v10300 = vrot.slane %v10298, 4
        %v10301 = vor.u32 %v10300, %v10296
        %v10302 = vrot.slane %v10301, 4
        %v10304 = vshll.u32 %v10217, 16
        %v10306 = vrot.slane %v10304, 5
        %v10307 = vsel %vm835, %v10302, %v10306
        %v10309 = vshrl.u32 %v10218, 16
        %v10311 = vrot.slane %v10309, 4
        %v10312 = vshll.u32 %v10218, 16
        %v10314 = vrot.slane %v10312, 5
        %v10315 = vor.u32 %v10311, %v10314
        %v10316 = vrot.slane %v10315, 4
        %v10318 = vshll.u32 %v10219, 16
        %v10320 = vrot.slane %v10318, 5
        %v10321 = vsel %vm835, %v10316, %v10320
        %v10322 = vshrl.u32 %v10219, 16
        %v10324 = vrot.slane %v10322, 4
        %v10325 = vor.u32 %v10324, %v10320
        %v10326 = vrot.slane %v10325, 4
        %v10328 = vshll.u32 %v10220, 16
        %v10330 = vrot.slane %v10328, 5
        %v10331 = vsel %vm835, %v10326, %v10330
        %v10333 = vshrl.u32 %v10221, 16
        %v10335 = vrot.slane %v10333, 4
        %v10336 = vshll.u32 %v10221, 16
        %v10338 = vrot.slane %v10336, 5
        %v10339 = vor.u32 %v10335, %v10338
        %v10340 = vrot.slane %v10339, 4
        %v10342 = vshll.u32 %v10222, 16
        %v10344 = vrot.slane %v10342, 5
        %v10345 = vsel %vm835, %v10340, %v10344
        %v10346 = vshrl.u32 %v10222, 16
        %v10348 = vrot.slane %v10346, 4
        %v10349 = vor.u32 %v10348, %v10344
        %v10350 = vrot.slane %v10349, 4
        %v10352 = vshll.u32 %v10223, 16
        %v10354 = vrot.slane %v10352, 5
        %v10355 = vsel %vm835, %v10350, %v10354
        %v10357 = vshrl.u32 %v10224, 16
        %v10359 = vrot.slane %v10357, 4
        %v10360 = vshll.u32 %v10224, 16
        %v10362 = vrot.slane %v10360, 5
        %v10363 = vor.u32 %v10359, %v10362
        %v10364 = vrot.slane %v10363, 4
        %v10366 = vshll.u32 %v10225, 16
        %v10368 = vrot.slane %v10366, 5
        %v10369 = vsel %vm835, %v10364, %v10368
        %v10370 = vshrl.u32 %v10225, 16
        %v10372 = vrot.slane %v10370, 4
        %v10373 = vor.u32 %v10372, %v10368
        %v10374 = vrot.slane %v10373, 4
        %v10376 = vshll.u32 %v10226, 16
        %v10378 = vrot.slane %v10376, 5
        %v10379 = vsel %vm835, %v10374, %v10378
        %v10381 = vshrl.u32 %v10227, 16
        %v10383 = vrot.slane %v10381, 4
        %v10384 = vshll.u32 %v10227, 16
        %v10386 = vrot.slane %v10384, 5
        %v10387 = vor.u32 %v10383, %v10386
        %v10388 = vrot.slane %v10387, 4
        %v10390 = vshll.u32 %v10228, 16
        %v10392 = vrot.slane %v10390, 5
        %v10393 = vsel %vm835, %v10388, %v10392
        %v10394 = vshrl.u32 %v10228, 16
        %v10396 = vrot.slane %v10394, 4
        %v10397 = vor.u32 %v10396, %v10392
        %v10398 = vrot.slane %v10397, 4
        %v10400 = vshll.u32 %v10229, 16
        %v10402 = vrot.slane %v10400, 5
        %v10403 = vsel %vm835, %v10398, %v10402
        %v10405 = vshrl.u32 %v10230, 16
        %v10407 = vrot.slane %v10405, 4
        %v10408 = vshll.u32 %v10230, 16
        %v10410 = vrot.slane %v10408, 5
        %v10411 = vor.u32 %v10407, %v10410
        %v10412 = vrot.slane %v10411, 4
        %v10414 = vshll.u32 %v10231, 16
        %v10416 = vrot.slane %v10414, 5
        %v10417 = vsel %vm835, %v10412, %v10416
        %v10418 = vshrl.u32 %v10231, 16
        %v10420 = vrot.slane %v10418, 4
        %v10421 = vor.u32 %v10420, %v10416
        %v10422 = vrot.slane %v10421, 4
        %v10424 = vshll.u32 %v10232, 16
        %v10426 = vrot.slane %v10424, 5
        %v10427 = vsel %vm835, %v10422, %v10426
        %v10429 = vshrl.u32 %v10233, 16
        %v10431 = vrot.slane %v10429, 4
        %v10432 = vshll.u32 %v10233, 16
        %v10434 = vrot.slane %v10432, 5
        %v10435 = vor.u32 %v10431, %v10434
        %v10436 = vrot.slane %v10435, 4
        %v10438 = vshll.u32 %v10234, 16
        %v10440 = vrot.slane %v10438, 5
        %v10441 = vsel %vm835, %v10436, %v10440
        %v10442 = vshrl.u32 %v10234, 16
        %v10444 = vrot.slane %v10442, 4
        %v10445 = vor.u32 %v10444, %v10440
        %v10446 = vrot.slane %v10445, 4
        %v10448 = vshll.u32 %v10235, 16
        %v10450 = vrot.slane %v10448, 5
        %v10451 = vsel %vm835, %v10446, %v10450
        %v10453 = vshrl.u32 %v10236, 16
        %v10455 = vrot.slane %v10453, 4
        %v10456 = vshll.u32 %v10236, 16
        %v10458 = vrot.slane %v10456, 5
        %v10459 = vor.u32 %v10455, %v10458
        %v10460 = vrot.slane %v10459, 4
        %v10462 = vshll.u32 %v10237, 16
        %v10464 = vrot.slane %v10462, 5
        %v10465 = vsel %vm835, %v10460, %v10464
        %v10466 = vshrl.u32 %v10237, 16
        %v10468 = vrot.slane %v10466, 4
        %v10469 = vor.u32 %v10468, %v10464
        %v10470 = vrot.slane %v10469, 4
        %v10472 = vshll.u32 %v10238, 16
        %v10474 = vrot.slane %v10472, 5
        %v10475 = vsel %vm835, %v10470, %v10474
        %v10477 = vshrl.u32 %v10239, 16
        %v10479 = vrot.slane %v10477, 4
        %v10480 = vshll.u32 %v10239, 16
        %v10482 = vrot.slane %v10480, 5
        %v10483 = vor.u32 %v10479, %v10482
        %v10484 = vrot.slane %v10483, 4
        %v10486 = vshll.u32 %v10240, 16
        %v10488 = vrot.slane %v10486, 5
        %v10489 = vsel %vm835, %v10484, %v10488
        %v10490 = vshrl.u32 %v10240, 16
        %v10492 = vrot.slane %v10490, 4
        %v10493 = vor.u32 %v10492, %v10488
        %v10494 = vrot.slane %v10493, 4
        %v10496 = vshll.u32 %v10241, 16
        %v10498 = vrot.slane %v10496, 5
        %v10499 = vsel %vm835, %v10494, %v10498
        %v10501 = vshrl.u32 %v10242, 16
        %v10503 = vrot.slane %v10501, 4
        %v10504 = vshll.u32 %v10242, 16
        %v10506 = vrot.slane %v10504, 5
        %v10507 = vor.u32 %v10503, %v10506
        %v10508 = vrot.slane %v10507, 4
        %v10510 = vshll.u32 %v10243, 16
        %v10512 = vrot.slane %v10510, 5
        %v10513 = vsel %vm835, %v10508, %v10512
        %v10514 = vshrl.u32 %v10243, 16
        %v10516 = vrot.slane %v10514, 4
        %v10517 = vor.u32 %v10516, %v10512
        %v10518 = vrot.slane %v10517, 4
        %v10520 = vshll.u32 %v10244, 16
        %v10522 = vrot.slane %v10520, 5
        %v10523 = vsel %vm835, %v10518, %v10522
        %v10525 = vshrl.u32 %v10245, 16
        %v10527 = vrot.slane %v10525, 4
        %v10528 = vshll.u32 %v10245, 16
        %v10530 = vrot.slane %v10528, 5
        %v10531 = vor.u32 %v10527, %v10530
        %v10532 = vrot.slane %v10531, 4
        %v10534 = vshll.u32 %v10246, 16
        %v10536 = vrot.slane %v10534, 5
        %v10537 = vsel %vm835, %v10532, %v10536
        %v10538 = vshrl.u32 %v10246, 16
        %v10540 = vrot.slane %v10538, 4
        %v10541 = vor.u32 %v10540, %v10536
        %v10542 = vrot.slane %v10541, 4
        %v10544 = vshll.u32 %v10247, 16
        %v10546 = vrot.slane %v10544, 5
        %v10547 = vsel %vm835, %v10542, %v10546
        %v10549 = vshrl.u32 %v10248, 16
        %v10551 = vrot.slane %v10549, 4
        %v10552 = vshll.u32 %v10248, 16
        %v10554 = vrot.slane %v10552, 5
        %v10555 = vor.u32 %v10551, %v10554
        %v10556 = vrot.slane %v10555, 4
        %v10558 = vshll.u32 %v10249, 16
        %v10560 = vrot.slane %v10558, 5
        %v10561 = vsel %vm835, %v10556, %v10560
        %v10562 = vshrl.u32 %v10249, 16
        %v10564 = vrot.slane %v10562, 4
        %v10565 = vor.u32 %v10564, %v10560
        %v10566 = vrot.slane %v10565, 4
        %v10568 = vshll.u32 %v10250, 16
        %v10570 = vrot.slane %v10568, 5
        %v10571 = vsel %vm835, %v10566, %v10570
        %v10573 = vshrl.u32 %v10251, 16
        %v10575 = vrot.slane %v10573, 4
        %v10576 = vshll.u32 %v10251, 16
        %v10578 = vrot.slane %v10576, 5
        %v10579 = vor.u32 %v10575, %v10578
        %v10580 = vrot.slane %v10579, 4
        %v10582 = vshll.u32 %v10252, 16
        %v10584 = vrot.slane %v10582, 5
        %v10585 = vsel %vm835, %v10580, %v10584
        %v10586 = vshrl.u32 %v10252, 16
        %v10588 = vrot.slane %v10586, 4
        %v10589 = vor.u32 %v10588, %v10584
        %v10590 = vrot.slane %v10589, 4
        %v10592 = vshll.u32 %v10253, 16
        %v10594 = vrot.slane %v10592, 5
        %v10595 = vsel %vm835, %v10590, %v10594
        %v10597 = vshrl.u32 %v10254, 16
        %v10599 = vrot.slane %v10597, 4
        %v10600 = vshll.u32 %v10254, 16
        %v10602 = vrot.slane %v10600, 5
        %v10603 = vor.u32 %v10599, %v10602
        %v10604 = vrot.slane %v10603, 4
        %v10606 = vshll.u32 %v10255, 16
        %v10608 = vrot.slane %v10606, 5
        %v10609 = vsel %vm835, %v10604, %v10608
        %v10610 = vshrl.u32 %v10255, 16
        %v10612 = vrot.slane %v10610, 4
        %v10613 = vor.u32 %v10612, %v10608
        %v10614 = vrot.slane %v10613, 4
        %v10616 = vshll.u32 %v10256, 16
        %v10618 = vrot.slane %v10616, 5
        %v10619 = vsel %vm835, %v10614, %v10618
        %v10621 = vshrl.u32 %v10257, 16
        %v10623 = vrot.slane %v10621, 4
        %v10624 = vshll.u32 %v10257, 16
        %v10626 = vrot.slane %v10624, 5
        %v10627 = vor.u32 %v10623, %v10626
        %v10628 = vrot.slane %v10627, 4
        %v10630 = vshll.u32 %v10258, 16
        %v10632 = vrot.slane %v10630, 5
        %v10633 = vsel %vm835, %v10628, %v10632
        %v10634 = vshrl.u32 %v10258, 16
        %v10636 = vrot.slane %v10634, 4
        %v10637 = vor.u32 %v10636, %v10632
        %v10638 = vrot.slane %v10637, 4
        %v10640 = vshll.u32 %v10259, 16
        %v10642 = vrot.slane %v10640, 5
        %v10643 = vsel %vm835, %v10638, %v10642
        %s10644 = scalar_lea.vmem %s2, 448
        %v10645 = vld [vmem:[%s10644] sm:$0xf]
        %v10646 = vld [vmem:[%s10644 + $0x4] sm:$0xf]
        %v10647 = vld [vmem:[%s10644 + $0x8] sm:$0xf]
        %v10648 = vld [vmem:[%s10644 + $0xc] sm:$0xf]
        %v10649 = vld [vmem:[%s10644 + $0x10] sm:$0xf]
        %v10650 = vld [vmem:[%s10644 + $0x14] sm:$0xf]
        %v10651 = vld [vmem:[%s10644 + $0x18] sm:$0xf]
        %v10652 = vld [vmem:[%s10644 + $0x1c] sm:$0xf]
        %v10653 = vld [vmem:[%s10644 + $0x20] sm:$0xf]
        %v10654 = vld [vmem:[%s10644 + $0x24] sm:$0xf]
        %v10655 = vld [vmem:[%s10644 + $0x28] sm:$0xf]
        %v10656 = vld [vmem:[%s10644 + $0x2c] sm:$0xf]
        %v10657 = vld [vmem:[%s10644 + $0x30] sm:$0xf]
        %v10658 = vld [vmem:[%s10644 + $0x34] sm:$0xf]
        %v10659 = vld [vmem:[%s10644 + $0x38] sm:$0xf]
        %v10660 = vld [vmem:[%s10644 + $0x3c] sm:$0xf]
        %v10661 = vunpack.c.l.b16 %v10273
        %v10662 = vunpack.c.l.b16 %v10283
        %v10663 = vunpack.c.l.b16 %v10297
        %v10664 = vunpack.c.l.b16 %v10307
        %v10665 = vunpack.c.l.b16 %v10321
        %v10666 = vunpack.c.l.b16 %v10331
        %v10667 = vunpack.c.l.b16 %v10345
        %v10668 = vunpack.c.l.b16 %v10355
        %v10669 = vunpack.c.l.b16 %v10369
        %v10670 = vunpack.c.l.b16 %v10379
        %v10671 = vunpack.c.l.b16 %v10393
        %v10672 = vunpack.c.l.b16 %v10403
        %v10673 = vunpack.c.l.b16 %v10417
        %v10674 = vunpack.c.l.b16 %v10427
        %v10675 = vunpack.c.l.b16 %v10441
        %v10676 = vunpack.c.l.b16 %v10451
        %v10677 = vunpack.c.l.b16 %v10465
        %v10678 = vunpack.c.l.b16 %v10475
        %v10679 = vunpack.c.l.b16 %v10489
        %v10680 = vunpack.c.l.b16 %v10499
        %v10681 = vunpack.c.l.b16 %v10513
        %v10682 = vunpack.c.l.b16 %v10523
        %v10683 = vunpack.c.l.b16 %v10537
        %v10684 = vunpack.c.l.b16 %v10547
        %v10685 = vunpack.c.l.b16 %v10561
        %v10686 = vunpack.c.l.b16 %v10571
        %v10687 = vunpack.c.l.b16 %v10585
        %v10688 = vunpack.c.l.b16 %v10595
        %v10689 = vunpack.c.l.b16 %v10609
        %v10690 = vunpack.c.l.b16 %v10619
        %v10691 = vunpack.c.l.b16 %v10633
        %v10692 = vunpack.c.l.b16 %v10643
        %v10693 = vpack.c.b16 %v10662, %v10661
        %v10694 = vpack.c.b16 %v10664, %v10663
        %v10695 = vpack.c.b16 %v10666, %v10665
        %v10696 = vpack.c.b16 %v10668, %v10667
        %v10697 = vpack.c.b16 %v10670, %v10669
        %v10698 = vpack.c.b16 %v10672, %v10671
        %v10699 = vpack.c.b16 %v10674, %v10673
        %v10700 = vpack.c.b16 %v10676, %v10675
        %v10701 = vpack.c.b16 %v10678, %v10677
        %v10702 = vpack.c.b16 %v10680, %v10679
        %v10703 = vpack.c.b16 %v10682, %v10681
        %v10704 = vpack.c.b16 %v10684, %v10683
        %v10705 = vpack.c.b16 %v10686, %v10685
        %v10706 = vpack.c.b16 %v10688, %v10687
        %v10707 = vpack.c.b16 %v10690, %v10689
        %v10708 = vpack.c.b16 %v10692, %v10691
        %v10741 = vunpack.c.l.b16 %v10645
        %v10742 = vunpack.c.l.b16 %v10646
        %v10743 = vunpack.c.l.b16 %v10647
        %v10744 = vunpack.c.l.b16 %v10648
        %v10745 = vunpack.c.l.b16 %v10649
        %v10746 = vunpack.c.l.b16 %v10650
        %v10747 = vunpack.c.l.b16 %v10651
        %v10748 = vunpack.c.l.b16 %v10652
        %v10749 = vunpack.c.l.b16 %v10653
        %v10750 = vunpack.c.l.b16 %v10654
        %v10751 = vunpack.c.l.b16 %v10655
        %v10752 = vunpack.c.l.b16 %v10656
        %v10753 = vunpack.c.l.b16 %v10657
        %v10754 = vunpack.c.l.b16 %v10658
        %v10755 = vunpack.c.l.b16 %v10659
        %v10756 = vunpack.c.l.b16 %v10660
        %v10757 = vpack.c.b16 %v10742, %v10741
        %v10758 = vpack.c.b16 %v10744, %v10743
        %v10759 = vpack.c.b16 %v10746, %v10745
        %v10760 = vpack.c.b16 %v10748, %v10747
        %v10761 = vpack.c.b16 %v10750, %v10749
        %v10762 = vpack.c.b16 %v10752, %v10751
        %v10763 = vpack.c.b16 %v10754, %v10753
        %v10764 = vpack.c.b16 %v10756, %v10755
        %10773 = vmatpush.bf16.msra.mxu0 %v10764
        %10774 = vmatpush.bf16.msra.mxu0 %v10763
        %10775 = vmatpush.bf16.msra.mxu0 %v10762
        %10776 = vmatpush.bf16.msra.mxu0 %v10761
        %10777 = vmatpush.bf16.msra.mxu0 %v10760
        %10778 = vmatpush.bf16.msra.mxu0 %v10759
        %10779 = vmatpush.bf16.msra.mxu0 %v10758
        %10780 = vmatpush.bf16.msra.mxu0 %v10757
        %10781 = vmatmul.bf16.gmra.mxu0 %v10693
        %v10782 = vpop.f32.mrf.mxu0
        %v10783 = vadd.f32 0.0, %v10782
        %v10784 = vpop.f32.mrf.mxu0
        %v10785 = vadd.f32 0.0, %v10784
        %10786 = vmatmul.bf16.gmra.mxu0 %v10694
        %v10787 = vpop.f32.mrf.mxu0
        %v10788 = vadd.f32 0.0, %v10787
        %v10789 = vpop.f32.mrf.mxu0
        %v10790 = vadd.f32 0.0, %v10789
        %10791 = vmatmul.bf16.gmra.mxu0 %v10695
        %v10792 = vpop.f32.mrf.mxu0
        %v10793 = vadd.f32 0.0, %v10792
        %v10794 = vpop.f32.mrf.mxu0
        %v10795 = vadd.f32 0.0, %v10794
        %10796 = vmatmul.bf16.gmra.mxu0 %v10696
        %v10797 = vpop.f32.mrf.mxu0
        %v10798 = vadd.f32 0.0, %v10797
        %v10799 = vpop.f32.mrf.mxu0
        %v10800 = vadd.f32 0.0, %v10799
        %10801 = vmatmul.bf16.gmra.mxu0 %v10697
        %v10802 = vpop.f32.mrf.mxu0
        %v10803 = vadd.f32 0.0, %v10802
        %v10804 = vpop.f32.mrf.mxu0
        %v10805 = vadd.f32 0.0, %v10804
        %10806 = vmatmul.bf16.gmra.mxu0 %v10698
        %v10807 = vpop.f32.mrf.mxu0
        %v10808 = vadd.f32 0.0, %v10807
        %v10809 = vpop.f32.mrf.mxu0
        %v10810 = vadd.f32 0.0, %v10809
        %10811 = vmatmul.bf16.gmra.mxu0 %v10699
        %v10812 = vpop.f32.mrf.mxu0
        %v10813 = vadd.f32 0.0, %v10812
        %v10814 = vpop.f32.mrf.mxu0
        %v10815 = vadd.f32 0.0, %v10814
        %10816 = vmatmul.bf16.gmra.mxu0 %v10700
        %v10817 = vpop.f32.mrf.mxu0
        %v10818 = vadd.f32 0.0, %v10817
        %v10819 = vpop.f32.mrf.mxu0
        %v10820 = vadd.f32 0.0, %v10819
        %10821 = vmatmul.bf16.gmra.mxu0 %v10701
        %v10822 = vpop.f32.mrf.mxu0
        %v10823 = vadd.f32 0.0, %v10822
        %v10824 = vpop.f32.mrf.mxu0
        %v10825 = vadd.f32 0.0, %v10824
        %10826 = vmatmul.bf16.gmra.mxu0 %v10702
        %v10827 = vpop.f32.mrf.mxu0
        %v10828 = vadd.f32 0.0, %v10827
        %v10829 = vpop.f32.mrf.mxu0
        %v10830 = vadd.f32 0.0, %v10829
        %10831 = vmatmul.bf16.gmra.mxu0 %v10703
        %v10832 = vpop.f32.mrf.mxu0
        %v10833 = vadd.f32 0.0, %v10832
        %v10834 = vpop.f32.mrf.mxu0
        %v10835 = vadd.f32 0.0, %v10834
        %10836 = vmatmul.bf16.gmra.mxu0 %v10704
        %v10837 = vpop.f32.mrf.mxu0
        %v10838 = vadd.f32 0.0, %v10837
        %v10839 = vpop.f32.mrf.mxu0
        %v10840 = vadd.f32 0.0, %v10839
        %10841 = vmatmul.bf16.gmra.mxu0 %v10705
        %v10842 = vpop.f32.mrf.mxu0
        %v10843 = vadd.f32 0.0, %v10842
        %v10844 = vpop.f32.mrf.mxu0
        %v10845 = vadd.f32 0.0, %v10844
        %10846 = vmatmul.bf16.gmra.mxu0 %v10706
        %v10847 = vpop.f32.mrf.mxu0
        %v10848 = vadd.f32 0.0, %v10847
        %v10849 = vpop.f32.mrf.mxu0
        %v10850 = vadd.f32 0.0, %v10849
        %10851 = vmatmul.bf16.gmra.mxu0 %v10707
        %v10852 = vpop.f32.mrf.mxu0
        %v10853 = vadd.f32 0.0, %v10852
        %v10854 = vpop.f32.mrf.mxu0
        %v10855 = vadd.f32 0.0, %v10854
        %10856 = vmatmul.bf16.gmra.mxu0 %v10708
        %v10857 = vpop.f32.mrf.mxu0
        %v10858 = vadd.f32 0.0, %v10857
        %v10859 = vpop.f32.mrf.mxu0
        %v10860 = vadd.f32 0.0, %v10859
        %10861 = vdwg.mxu0
        %v10862 = vld [vmem:[#allocation4] sm:$0xff]
        %v10863 = vld [vmem:[#allocation4 + $0x8] sm:$0xff]
        %v10864 = vld [vmem:[#allocation4 + $0x10] sm:$0xff]
        %v10865 = vld [vmem:[#allocation4 + $0x18] sm:$0xff]
        %v10866 = vld [vmem:[#allocation4 + $0x20] sm:$0xff]
        %v10867 = vld [vmem:[#allocation4 + $0x28] sm:$0xff]
        %v10868 = vld [vmem:[#allocation4 + $0x30] sm:$0xff]
        %v10869 = vld [vmem:[#allocation4 + $0x38] sm:$0xff]
        %v10870 = vld [vmem:[#allocation4 + $0x40] sm:$0xff]
        %v10871 = vld [vmem:[#allocation4 + $0x48] sm:$0xff]
        %v10872 = vld [vmem:[#allocation4 + $0x50] sm:$0xff]
        %v10873 = vld [vmem:[#allocation4 + $0x58] sm:$0xff]
        %v10874 = vld [vmem:[#allocation4 + $0x60] sm:$0xff]
        %v10875 = vld [vmem:[#allocation4 + $0x68] sm:$0xff]
        %v10876 = vld [vmem:[#allocation4 + $0x70] sm:$0xff]
        %v10877 = vld [vmem:[#allocation4 + $0x78] sm:$0xff]
        %v10878 = vld [vmem:[#allocation4 + $0x80] sm:$0xff]
        %v10879 = vld [vmem:[#allocation4 + $0x88] sm:$0xff]
        %v10880 = vld [vmem:[#allocation4 + $0x90] sm:$0xff]
        %v10881 = vld [vmem:[#allocation4 + $0x98] sm:$0xff]
        %v10882 = vld [vmem:[#allocation4 + $0xa0] sm:$0xff]
        %v10883 = vld [vmem:[#allocation4 + $0xa8] sm:$0xff]
        %v10884 = vld [vmem:[#allocation4 + $0xb0] sm:$0xff]
        %v10885 = vld [vmem:[#allocation4 + $0xb8] sm:$0xff]
        %v10886 = vld [vmem:[#allocation4 + $0xc0] sm:$0xff]
        %v10887 = vld [vmem:[#allocation4 + $0xc8] sm:$0xff]
        %v10888 = vld [vmem:[#allocation4 + $0xd0] sm:$0xff]
        %v10889 = vld [vmem:[#allocation4 + $0xd8] sm:$0xff]
        %v10890 = vld [vmem:[#allocation4 + $0xe0] sm:$0xff]
        %v10891 = vld [vmem:[#allocation4 + $0xe8] sm:$0xff]
        %v10892 = vld [vmem:[#allocation4 + $0xf0] sm:$0xff]
        %v10893 = vld [vmem:[#allocation4 + $0xf8] sm:$0xff]
        %v10894 = vadd.f32 %v10862, %v10783
        %v10895 = vadd.f32 %v10863, %v10785
        %v10896 = vadd.f32 %v10864, %v10788
        %v10897 = vadd.f32 %v10865, %v10790
        %v10898 = vadd.f32 %v10866, %v10793
        %v10899 = vadd.f32 %v10867, %v10795
        %v10900 = vadd.f32 %v10868, %v10798
        %v10901 = vadd.f32 %v10869, %v10800
        %v10902 = vadd.f32 %v10870, %v10803
        %v10903 = vadd.f32 %v10871, %v10805
        %v10904 = vadd.f32 %v10872, %v10808
        %v10905 = vadd.f32 %v10873, %v10810
        %v10906 = vadd.f32 %v10874, %v10813
        %v10907 = vadd.f32 %v10875, %v10815
        %v10908 = vadd.f32 %v10876, %v10818
        %v10909 = vadd.f32 %v10877, %v10820
        %v10910 = vadd.f32 %v10878, %v10823
        %v10911 = vadd.f32 %v10879, %v10825
        %v10912 = vadd.f32 %v10880, %v10828
        %v10913 = vadd.f32 %v10881, %v10830
        %v10914 = vadd.f32 %v10882, %v10833
        %v10915 = vadd.f32 %v10883, %v10835
        %v10916 = vadd.f32 %v10884, %v10838
        %v10917 = vadd.f32 %v10885, %v10840
        %v10918 = vadd.f32 %v10886, %v10843
        %v10919 = vadd.f32 %v10887, %v10845
        %v10920 = vadd.f32 %v10888, %v10848
        %v10921 = vadd.f32 %v10889, %v10850
        %v10922 = vadd.f32 %v10890, %v10853
        %v10923 = vadd.f32 %v10891, %v10855
        %v10924 = vadd.f32 %v10892, %v10858
        %v10925 = vadd.f32 %v10893, %v10860
        %10926 = vst [vmem:[#allocation4] sm:$0xff] %v10894
        %10927 = vst [vmem:[#allocation4 + $0x8] sm:$0xff] %v10895
        %10928 = vst [vmem:[#allocation4 + $0x10] sm:$0xff] %v10896
        %10929 = vst [vmem:[#allocation4 + $0x18] sm:$0xff] %v10897
        %10930 = vst [vmem:[#allocation4 + $0x20] sm:$0xff] %v10898
        %10931 = vst [vmem:[#allocation4 + $0x28] sm:$0xff] %v10899
        %10932 = vst [vmem:[#allocation4 + $0x30] sm:$0xff] %v10900
        %10933 = vst [vmem:[#allocation4 + $0x38] sm:$0xff] %v10901
        %10934 = vst [vmem:[#allocation4 + $0x40] sm:$0xff] %v10902
        %10935 = vst [vmem:[#allocation4 + $0x48] sm:$0xff] %v10903
        %10936 = vst [vmem:[#allocation4 + $0x50] sm:$0xff] %v10904
        %10937 = vst [vmem:[#allocation4 + $0x58] sm:$0xff] %v10905
        %10938 = vst [vmem:[#allocation4 + $0x60] sm:$0xff] %v10906
        %10939 = vst [vmem:[#allocation4 + $0x68] sm:$0xff] %v10907
        %10940 = vst [vmem:[#allocation4 + $0x70] sm:$0xff] %v10908
        %10941 = vst [vmem:[#allocation4 + $0x78] sm:$0xff] %v10909
        %10942 = vst [vmem:[#allocation4 + $0x80] sm:$0xff] %v10910
        %10943 = vst [vmem:[#allocation4 + $0x88] sm:$0xff] %v10911
        %10944 = vst [vmem:[#allocation4 + $0x90] sm:$0xff] %v10912
        %10945 = vst [vmem:[#allocation4 + $0x98] sm:$0xff] %v10913
        %10946 = vst [vmem:[#allocation4 + $0xa0] sm:$0xff] %v10914
        %10947 = vst [vmem:[#allocation4 + $0xa8] sm:$0xff] %v10915
        %10948 = vst [vmem:[#allocation4 + $0xb0] sm:$0xff] %v10916
        %10949 = vst [vmem:[#allocation4 + $0xb8] sm:$0xff] %v10917
        %10950 = vst [vmem:[#allocation4 + $0xc0] sm:$0xff] %v10918
        %10951 = vst [vmem:[#allocation4 + $0xc8] sm:$0xff] %v10919
        %10952 = vst [vmem:[#allocation4 + $0xd0] sm:$0xff] %v10920
        %10953 = vst [vmem:[#allocation4 + $0xd8] sm:$0xff] %v10921
        %10954 = vst [vmem:[#allocation4 + $0xe0] sm:$0xff] %v10922
        %10955 = vst [vmem:[#allocation4 + $0xe8] sm:$0xff] %v10923
        %10956 = vst [vmem:[#allocation4 + $0xf0] sm:$0xff] %v10924
        %10957 = vst [vmem:[#allocation4 + $0xf8] sm:$0xff] %v10925
        %v10958 = vld [vmem:[%s9833] sm:$0xe]
        %v10959 = vld [vmem:[%s9833 + $0x4] sm:$0xf]
        %v10960 = vld [vmem:[%s9833 + $0x8] sm:$0x1]
        %v10961 = vld [vmem:[%s9833 + $0xc] sm:$0xe]
        %v10962 = vld [vmem:[%s9833 + $0x10] sm:$0xf]
        %v10963 = vld [vmem:[%s9833 + $0x14] sm:$0x1]
        %v10964 = vld [vmem:[%s9833 + $0x18] sm:$0xe]
        %v10965 = vld [vmem:[%s9833 + $0x1c] sm:$0xf]
        %v10966 = vld [vmem:[%s9833 + $0x20] sm:$0x1]
        %v10967 = vld [vmem:[%s9833 + $0x24] sm:$0xe]
        %v10968 = vld [vmem:[%s9833 + $0x28] sm:$0xf]
        %v10969 = vld [vmem:[%s9833 + $0x2c] sm:$0x1]
        %v10970 = vld [vmem:[%s9833 + $0x30] sm:$0xe]
        %v10971 = vld [vmem:[%s9833 + $0x34] sm:$0xf]
        %v10972 = vld [vmem:[%s9833 + $0x38] sm:$0x1]
        %v10973 = vld [vmem:[%s9833 + $0x3c] sm:$0xe]
        %v10974 = vld [vmem:[%s9833 + $0x40] sm:$0xf]
        %v10975 = vld [vmem:[%s9833 + $0x44] sm:$0x1]
        %v10976 = vld [vmem:[%s9833 + $0x48] sm:$0xe]
        %v10977 = vld [vmem:[%s9833 + $0x4c] sm:$0xf]
        %v10978 = vld [vmem:[%s9833 + $0x50] sm:$0x1]
        %v10979 = vld [vmem:[%s9833 + $0x54] sm:$0xe]
        %v10980 = vld [vmem:[%s9833 + $0x58] sm:$0xf]
        %v10981 = vld [vmem:[%s9833 + $0x5c] sm:$0x1]
        %v10982 = vld [vmem:[%s9833 + $0x60] sm:$0xe]
        %v10983 = vld [vmem:[%s9833 + $0x64] sm:$0xf]
        %v10984 = vld [vmem:[%s9833 + $0x68] sm:$0x1]
        %v10985 = vld [vmem:[%s9833 + $0x6c] sm:$0xe]
        %v10986 = vld [vmem:[%s9833 + $0x70] sm:$0xf]
        %v10987 = vld [vmem:[%s9833 + $0x74] sm:$0x1]
        %v10988 = vld [vmem:[%s9833 + $0x78] sm:$0xe]
        %v10989 = vld [vmem:[%s9833 + $0x7c] sm:$0xf]
        %v10990 = vld [vmem:[%s9833 + $0x80] sm:$0x1]
        %v10991 = vld [vmem:[%s9833 + $0x84] sm:$0xe]
        %v10992 = vld [vmem:[%s9833 + $0x88] sm:$0xf]
        %v10993 = vld [vmem:[%s9833 + $0x8c] sm:$0x1]
        %v10994 = vld [vmem:[%s9833 + $0x90] sm:$0xe]
        %v10995 = vld [vmem:[%s9833 + $0x94] sm:$0xf]
        %v10996 = vld [vmem:[%s9833 + $0x98] sm:$0x1]
        %v10997 = vld [vmem:[%s9833 + $0x9c] sm:$0xe]
        %v10998 = vld [vmem:[%s9833 + $0xa0] sm:$0xf]
        %v10999 = vld [vmem:[%s9833 + $0xa4] sm:$0x1]
        %v11000 = vld [vmem:[%s9833 + $0xa8] sm:$0xe]
        %v11001 = vld [vmem:[%s9833 + $0xac] sm:$0xf]
        %v11002 = vld [vmem:[%s9833 + $0xb0] sm:$0x1]
        %v11003 = vld [vmem:[%s9833 + $0xb4] sm:$0xe]
        %v11004 = vld [vmem:[%s9833 + $0xb8] sm:$0xf]
        %v11005 = vld [vmem:[%s9833 + $0xbc] sm:$0x1]
        %v11054 = vrot.slane %v10958, 5
        %v11055 = vrot.slane %v11054, 4
        %v11056 = vrot.slane %v10959, 5
        %v11057 = vsel %vm1722, %v11055, %v11056
        %v11058 = vrot.slane %v11056, 4
        %v11059 = vrot.slane %v10960, 5
        %v11060 = vsel %vm1722, %v11058, %v11059
        %v11061 = vrot.slane %v10961, 5
        %v11062 = vrot.slane %v11061, 4
        %v11063 = vrot.slane %v10962, 5
        %v11064 = vsel %vm1722, %v11062, %v11063
        %v11065 = vrot.slane %v11063, 4
        %v11066 = vrot.slane %v10963, 5
        %v11067 = vsel %vm1722, %v11065, %v11066
        %v11068 = vrot.slane %v10964, 5
        %v11069 = vrot.slane %v11068, 4
        %v11070 = vrot.slane %v10965, 5
        %v11071 = vsel %vm1722, %v11069, %v11070
        %v11072 = vrot.slane %v11070, 4
        %v11073 = vrot.slane %v10966, 5
        %v11074 = vsel %vm1722, %v11072, %v11073
        %v11075 = vrot.slane %v10967, 5
        %v11076 = vrot.slane %v11075, 4
        %v11077 = vrot.slane %v10968, 5
        %v11078 = vsel %vm1722, %v11076, %v11077
        %v11079 = vrot.slane %v11077, 4
        %v11080 = vrot.slane %v10969, 5
        %v11081 = vsel %vm1722, %v11079, %v11080
        %v11082 = vrot.slane %v10970, 5
        %v11083 = vrot.slane %v11082, 4
        %v11084 = vrot.slane %v10971, 5
        %v11085 = vsel %vm1722, %v11083, %v11084
        %v11086 = vrot.slane %v11084, 4
        %v11087 = vrot.slane %v10972, 5
        %v11088 = vsel %vm1722, %v11086, %v11087
        %v11089 = vrot.slane %v10973, 5
        %v11090 = vrot.slane %v11089, 4
        %v11091 = vrot.slane %v10974, 5
        %v11092 = vsel %vm1722, %v11090, %v11091
        %v11093 = vrot.slane %v11091, 4
        %v11094 = vrot.slane %v10975, 5
        %v11095 = vsel %vm1722, %v11093, %v11094
        %v11096 = vrot.slane %v10976, 5
        %v11097 = vrot.slane %v11096, 4
        %v11098 = vrot.slane %v10977, 5
        %v11099 = vsel %vm1722, %v11097, %v11098
        %v11100 = vrot.slane %v11098, 4
        %v11101 = vrot.slane %v10978, 5
        %v11102 = vsel %vm1722, %v11100, %v11101
        %v11103 = vrot.slane %v10979, 5
        %v11104 = vrot.slane %v11103, 4
        %v11105 = vrot.slane %v10980, 5
        %v11106 = vsel %vm1722, %v11104, %v11105
        %v11107 = vrot.slane %v11105, 4
        %v11108 = vrot.slane %v10981, 5
        %v11109 = vsel %vm1722, %v11107, %v11108
        %v11110 = vrot.slane %v10982, 5
        %v11111 = vrot.slane %v11110, 4
        %v11112 = vrot.slane %v10983, 5
        %v11113 = vsel %vm1722, %v11111, %v11112
        %v11114 = vrot.slane %v11112, 4
        %v11115 = vrot.slane %v10984, 5
        %v11116 = vsel %vm1722, %v11114, %v11115
        %v11117 = vrot.slane %v10985, 5
        %v11118 = vrot.slane %v11117, 4
        %v11119 = vrot.slane %v10986, 5
        %v11120 = vsel %vm1722, %v11118, %v11119
        %v11121 = vrot.slane %v11119, 4
        %v11122 = vrot.slane %v10987, 5
        %v11123 = vsel %vm1722, %v11121, %v11122
        %v11124 = vrot.slane %v10988, 5
        %v11125 = vrot.slane %v11124, 4
        %v11126 = vrot.slane %v10989, 5
        %v11127 = vsel %vm1722, %v11125, %v11126
        %v11128 = vrot.slane %v11126, 4
        %v11129 = vrot.slane %v10990, 5
        %v11130 = vsel %vm1722, %v11128, %v11129
        %v11131 = vrot.slane %v10991, 5
        %v11132 = vrot.slane %v11131, 4
        %v11133 = vrot.slane %v10992, 5
        %v11134 = vsel %vm1722, %v11132, %v11133
        %v11135 = vrot.slane %v11133, 4
        %v11136 = vrot.slane %v10993, 5
        %v11137 = vsel %vm1722, %v11135, %v11136
        %v11138 = vrot.slane %v10994, 5
        %v11139 = vrot.slane %v11138, 4
        %v11140 = vrot.slane %v10995, 5
        %v11141 = vsel %vm1722, %v11139, %v11140
        %v11142 = vrot.slane %v11140, 4
        %v11143 = vrot.slane %v10996, 5
        %v11144 = vsel %vm1722, %v11142, %v11143
        %v11145 = vrot.slane %v10997, 5
        %v11146 = vrot.slane %v11145, 4
        %v11147 = vrot.slane %v10998, 5
        %v11148 = vsel %vm1722, %v11146, %v11147
        %v11149 = vrot.slane %v11147, 4
        %v11150 = vrot.slane %v10999, 5
        %v11151 = vsel %vm1722, %v11149, %v11150
        %v11152 = vrot.slane %v11000, 5
        %v11153 = vrot.slane %v11152, 4
        %v11154 = vrot.slane %v11001, 5
        %v11155 = vsel %vm1722, %v11153, %v11154
        %v11156 = vrot.slane %v11154, 4
        %v11157 = vrot.slane %v11002, 5
        %v11158 = vsel %vm1722, %v11156, %v11157
        %v11159 = vrot.slane %v11003, 5
        %v11160 = vrot.slane %v11159, 4
        %v11161 = vrot.slane %v11004, 5
        %v11162 = vsel %vm1722, %v11160, %v11161
        %v11163 = vrot.slane %v11161, 4
        %v11164 = vrot.slane %v11005, 5
        %v11165 = vsel %vm1722, %v11163, %v11164
        %s11166 = scalar_lea.vmem %s2, 512
        %v11167 = vld [vmem:[%s11166] sm:$0xf]
        %v11168 = vld [vmem:[%s11166 + $0x4] sm:$0xf]
        %v11169 = vld [vmem:[%s11166 + $0x8] sm:$0xf]
        %v11170 = vld [vmem:[%s11166 + $0xc] sm:$0xf]
        %v11171 = vld [vmem:[%s11166 + $0x10] sm:$0xf]
        %v11172 = vld [vmem:[%s11166 + $0x14] sm:$0xf]
        %v11173 = vld [vmem:[%s11166 + $0x18] sm:$0xf]
        %v11174 = vld [vmem:[%s11166 + $0x1c] sm:$0xf]
        %v11175 = vld [vmem:[%s11166 + $0x20] sm:$0xf]
        %v11176 = vld [vmem:[%s11166 + $0x24] sm:$0xf]
        %v11177 = vld [vmem:[%s11166 + $0x28] sm:$0xf]
        %v11178 = vld [vmem:[%s11166 + $0x2c] sm:$0xf]
        %v11179 = vld [vmem:[%s11166 + $0x30] sm:$0xf]
        %v11180 = vld [vmem:[%s11166 + $0x34] sm:$0xf]
        %v11181 = vld [vmem:[%s11166 + $0x38] sm:$0xf]
        %v11182 = vld [vmem:[%s11166 + $0x3c] sm:$0xf]
        %v11183 = vunpack.c.l.b16 %v11057
        %v11184 = vunpack.c.l.b16 %v11060
        %v11185 = vunpack.c.l.b16 %v11064
        %v11186 = vunpack.c.l.b16 %v11067
        %v11187 = vunpack.c.l.b16 %v11071
        %v11188 = vunpack.c.l.b16 %v11074
        %v11189 = vunpack.c.l.b16 %v11078
        %v11190 = vunpack.c.l.b16 %v11081
        %v11191 = vunpack.c.l.b16 %v11085
        %v11192 = vunpack.c.l.b16 %v11088
        %v11193 = vunpack.c.l.b16 %v11092
        %v11194 = vunpack.c.l.b16 %v11095
        %v11195 = vunpack.c.l.b16 %v11099
        %v11196 = vunpack.c.l.b16 %v11102
        %v11197 = vunpack.c.l.b16 %v11106
        %v11198 = vunpack.c.l.b16 %v11109
        %v11199 = vunpack.c.l.b16 %v11113
        %v11200 = vunpack.c.l.b16 %v11116
        %v11201 = vunpack.c.l.b16 %v11120
        %v11202 = vunpack.c.l.b16 %v11123
        %v11203 = vunpack.c.l.b16 %v11127
        %v11204 = vunpack.c.l.b16 %v11130
        %v11205 = vunpack.c.l.b16 %v11134
        %v11206 = vunpack.c.l.b16 %v11137
        %v11207 = vunpack.c.l.b16 %v11141
        %v11208 = vunpack.c.l.b16 %v11144
        %v11209 = vunpack.c.l.b16 %v11148
        %v11210 = vunpack.c.l.b16 %v11151
        %v11211 = vunpack.c.l.b16 %v11155
        %v11212 = vunpack.c.l.b16 %v11158
        %v11213 = vunpack.c.l.b16 %v11162
        %v11214 = vunpack.c.l.b16 %v11165
        %v11215 = vpack.c.b16 %v11184, %v11183
        %v11216 = vpack.c.b16 %v11186, %v11185
        %v11217 = vpack.c.b16 %v11188, %v11187
        %v11218 = vpack.c.b16 %v11190, %v11189
        %v11219 = vpack.c.b16 %v11192, %v11191
        %v11220 = vpack.c.b16 %v11194, %v11193
        %v11221 = vpack.c.b16 %v11196, %v11195
        %v11222 = vpack.c.b16 %v11198, %v11197
        %v11223 = vpack.c.b16 %v11200, %v11199
        %v11224 = vpack.c.b16 %v11202, %v11201
        %v11225 = vpack.c.b16 %v11204, %v11203
        %v11226 = vpack.c.b16 %v11206, %v11205
        %v11227 = vpack.c.b16 %v11208, %v11207
        %v11228 = vpack.c.b16 %v11210, %v11209
        %v11229 = vpack.c.b16 %v11212, %v11211
        %v11230 = vpack.c.b16 %v11214, %v11213
        %v11263 = vunpack.c.l.b16 %v11167
        %v11264 = vunpack.c.l.b16 %v11168
        %v11265 = vunpack.c.l.b16 %v11169
        %v11266 = vunpack.c.l.b16 %v11170
        %v11267 = vunpack.c.l.b16 %v11171
        %v11268 = vunpack.c.l.b16 %v11172
        %v11269 = vunpack.c.l.b16 %v11173
        %v11270 = vunpack.c.l.b16 %v11174
        %v11271 = vunpack.c.l.b16 %v11175
        %v11272 = vunpack.c.l.b16 %v11176
        %v11273 = vunpack.c.l.b16 %v11177
        %v11274 = vunpack.c.l.b16 %v11178
        %v11275 = vunpack.c.l.b16 %v11179
        %v11276 = vunpack.c.l.b16 %v11180
        %v11277 = vunpack.c.l.b16 %v11181
        %v11278 = vunpack.c.l.b16 %v11182
        %v11279 = vpack.c.b16 %v11264, %v11263
        %v11280 = vpack.c.b16 %v11266, %v11265
        %v11281 = vpack.c.b16 %v11268, %v11267
        %v11282 = vpack.c.b16 %v11270, %v11269
        %v11283 = vpack.c.b16 %v11272, %v11271
        %v11284 = vpack.c.b16 %v11274, %v11273
        %v11285 = vpack.c.b16 %v11276, %v11275
        %v11286 = vpack.c.b16 %v11278, %v11277
        %11295 = vmatpush.bf16.msra.mxu0 %v11286
        %11296 = vmatpush.bf16.msra.mxu0 %v11285
        %11297 = vmatpush.bf16.msra.mxu0 %v11284
        %11298 = vmatpush.bf16.msra.mxu0 %v11283
        %11299 = vmatpush.bf16.msra.mxu0 %v11282
        %11300 = vmatpush.bf16.msra.mxu0 %v11281
        %11301 = vmatpush.bf16.msra.mxu0 %v11280
        %11302 = vmatpush.bf16.msra.mxu0 %v11279
        %11303 = vmatmul.bf16.gmra.mxu0 %v11215
        %v11304 = vpop.f32.mrf.mxu0
        %v11305 = vadd.f32 0.0, %v11304
        %v11306 = vpop.f32.mrf.mxu0
        %v11307 = vadd.f32 0.0, %v11306
        %11308 = vmatmul.bf16.gmra.mxu0 %v11216
        %v11309 = vpop.f32.mrf.mxu0
        %v11310 = vadd.f32 0.0, %v11309
        %v11311 = vpop.f32.mrf.mxu0
        %v11312 = vadd.f32 0.0, %v11311
        %11313 = vmatmul.bf16.gmra.mxu0 %v11217
        %v11314 = vpop.f32.mrf.mxu0
        %v11315 = vadd.f32 0.0, %v11314
        %v11316 = vpop.f32.mrf.mxu0
        %v11317 = vadd.f32 0.0, %v11316
        %11318 = vmatmul.bf16.gmra.mxu0 %v11218
        %v11319 = vpop.f32.mrf.mxu0
        %v11320 = vadd.f32 0.0, %v11319
        %v11321 = vpop.f32.mrf.mxu0
        %v11322 = vadd.f32 0.0, %v11321
        %11323 = vmatmul.bf16.gmra.mxu0 %v11219
        %v11324 = vpop.f32.mrf.mxu0
        %v11325 = vadd.f32 0.0, %v11324
        %v11326 = vpop.f32.mrf.mxu0
        %v11327 = vadd.f32 0.0, %v11326
        %11328 = vmatmul.bf16.gmra.mxu0 %v11220
        %v11329 = vpop.f32.mrf.mxu0
        %v11330 = vadd.f32 0.0, %v11329
        %v11331 = vpop.f32.mrf.mxu0
        %v11332 = vadd.f32 0.0, %v11331
        %11333 = vmatmul.bf16.gmra.mxu0 %v11221
        %v11334 = vpop.f32.mrf.mxu0
        %v11335 = vadd.f32 0.0, %v11334
        %v11336 = vpop.f32.mrf.mxu0
        %v11337 = vadd.f32 0.0, %v11336
        %11338 = vmatmul.bf16.gmra.mxu0 %v11222
        %v11339 = vpop.f32.mrf.mxu0
        %v11340 = vadd.f32 0.0, %v11339
        %v11341 = vpop.f32.mrf.mxu0
        %v11342 = vadd.f32 0.0, %v11341
        %11343 = vmatmul.bf16.gmra.mxu0 %v11223
        %v11344 = vpop.f32.mrf.mxu0
        %v11345 = vadd.f32 0.0, %v11344
        %v11346 = vpop.f32.mrf.mxu0
        %v11347 = vadd.f32 0.0, %v11346
        %11348 = vmatmul.bf16.gmra.mxu0 %v11224
        %v11349 = vpop.f32.mrf.mxu0
        %v11350 = vadd.f32 0.0, %v11349
        %v11351 = vpop.f32.mrf.mxu0
        %v11352 = vadd.f32 0.0, %v11351
        %11353 = vmatmul.bf16.gmra.mxu0 %v11225
        %v11354 = vpop.f32.mrf.mxu0
        %v11355 = vadd.f32 0.0, %v11354
        %v11356 = vpop.f32.mrf.mxu0
        %v11357 = vadd.f32 0.0, %v11356
        %11358 = vmatmul.bf16.gmra.mxu0 %v11226
        %v11359 = vpop.f32.mrf.mxu0
        %v11360 = vadd.f32 0.0, %v11359
        %v11361 = vpop.f32.mrf.mxu0
        %v11362 = vadd.f32 0.0, %v11361
        %11363 = vmatmul.bf16.gmra.mxu0 %v11227
        %v11364 = vpop.f32.mrf.mxu0
        %v11365 = vadd.f32 0.0, %v11364
        %v11366 = vpop.f32.mrf.mxu0
        %v11367 = vadd.f32 0.0, %v11366
        %11368 = vmatmul.bf16.gmra.mxu0 %v11228
        %v11369 = vpop.f32.mrf.mxu0
        %v11370 = vadd.f32 0.0, %v11369
        %v11371 = vpop.f32.mrf.mxu0
        %v11372 = vadd.f32 0.0, %v11371
        %11373 = vmatmul.bf16.gmra.mxu0 %v11229
        %v11374 = vpop.f32.mrf.mxu0
        %v11375 = vadd.f32 0.0, %v11374
        %v11376 = vpop.f32.mrf.mxu0
        %v11377 = vadd.f32 0.0, %v11376
        %11378 = vmatmul.bf16.gmra.mxu0 %v11230
        %v11379 = vpop.f32.mrf.mxu0
        %v11380 = vadd.f32 0.0, %v11379
        %v11381 = vpop.f32.mrf.mxu0
        %v11382 = vadd.f32 0.0, %v11381
        %11383 = vdwg.mxu0
        %v11384 = vld [vmem:[#allocation4] sm:$0xff]
        %v11385 = vld [vmem:[#allocation4 + $0x8] sm:$0xff]
        %v11386 = vld [vmem:[#allocation4 + $0x10] sm:$0xff]
        %v11387 = vld [vmem:[#allocation4 + $0x18] sm:$0xff]
        %v11388 = vld [vmem:[#allocation4 + $0x20] sm:$0xff]
        %v11389 = vld [vmem:[#allocation4 + $0x28] sm:$0xff]
        %v11390 = vld [vmem:[#allocation4 + $0x30] sm:$0xff]
        %v11391 = vld [vmem:[#allocation4 + $0x38] sm:$0xff]
        %v11392 = vld [vmem:[#allocation4 + $0x40] sm:$0xff]
        %v11393 = vld [vmem:[#allocation4 + $0x48] sm:$0xff]
        %v11394 = vld [vmem:[#allocation4 + $0x50] sm:$0xff]
        %v11395 = vld [vmem:[#allocation4 + $0x58] sm:$0xff]
        %v11396 = vld [vmem:[#allocation4 + $0x60] sm:$0xff]
        %v11397 = vld [vmem:[#allocation4 + $0x68] sm:$0xff]
        %v11398 = vld [vmem:[#allocation4 + $0x70] sm:$0xff]
        %v11399 = vld [vmem:[#allocation4 + $0x78] sm:$0xff]
        %v11400 = vld [vmem:[#allocation4 + $0x80] sm:$0xff]
        %v11401 = vld [vmem:[#allocation4 + $0x88] sm:$0xff]
        %v11402 = vld [vmem:[#allocation4 + $0x90] sm:$0xff]
        %v11403 = vld [vmem:[#allocation4 + $0x98] sm:$0xff]
        %v11404 = vld [vmem:[#allocation4 + $0xa0] sm:$0xff]
        %v11405 = vld [vmem:[#allocation4 + $0xa8] sm:$0xff]
        %v11406 = vld [vmem:[#allocation4 + $0xb0] sm:$0xff]
        %v11407 = vld [vmem:[#allocation4 + $0xb8] sm:$0xff]
        %v11408 = vld [vmem:[#allocation4 + $0xc0] sm:$0xff]
        %v11409 = vld [vmem:[#allocation4 + $0xc8] sm:$0xff]
        %v11410 = vld [vmem:[#allocation4 + $0xd0] sm:$0xff]
        %v11411 = vld [vmem:[#allocation4 + $0xd8] sm:$0xff]
        %v11412 = vld [vmem:[#allocation4 + $0xe0] sm:$0xff]
        %v11413 = vld [vmem:[#allocation4 + $0xe8] sm:$0xff]
        %v11414 = vld [vmem:[#allocation4 + $0xf0] sm:$0xff]
        %v11415 = vld [vmem:[#allocation4 + $0xf8] sm:$0xff]
        %v11416 = vadd.f32 %v11384, %v11305
        %v11417 = vadd.f32 %v11385, %v11307
        %v11418 = vadd.f32 %v11386, %v11310
        %v11419 = vadd.f32 %v11387, %v11312
        %v11420 = vadd.f32 %v11388, %v11315
        %v11421 = vadd.f32 %v11389, %v11317
        %v11422 = vadd.f32 %v11390, %v11320
        %v11423 = vadd.f32 %v11391, %v11322
        %v11424 = vadd.f32 %v11392, %v11325
        %v11425 = vadd.f32 %v11393, %v11327
        %v11426 = vadd.f32 %v11394, %v11330
        %v11427 = vadd.f32 %v11395, %v11332
        %v11428 = vadd.f32 %v11396, %v11335
        %v11429 = vadd.f32 %v11397, %v11337
        %v11430 = vadd.f32 %v11398, %v11340
        %v11431 = vadd.f32 %v11399, %v11342
        %v11432 = vadd.f32 %v11400, %v11345
        %v11433 = vadd.f32 %v11401, %v11347
        %v11434 = vadd.f32 %v11402, %v11350
        %v11435 = vadd.f32 %v11403, %v11352
        %v11436 = vadd.f32 %v11404, %v11355
        %v11437 = vadd.f32 %v11405, %v11357
        %v11438 = vadd.f32 %v11406, %v11360
        %v11439 = vadd.f32 %v11407, %v11362
        %v11440 = vadd.f32 %v11408, %v11365
        %v11441 = vadd.f32 %v11409, %v11367
        %v11442 = vadd.f32 %v11410, %v11370
        %v11443 = vadd.f32 %v11411, %v11372
        %v11444 = vadd.f32 %v11412, %v11375
        %v11445 = vadd.f32 %v11413, %v11377
        %v11446 = vadd.f32 %v11414, %v11380
        %v11447 = vadd.f32 %v11415, %v11382
        %11448 = vst [vmem:[#allocation4] sm:$0xff] %v11416
        %11449 = vst [vmem:[#allocation4 + $0x8] sm:$0xff] %v11417
        %11450 = vst [vmem:[#allocation4 + $0x10] sm:$0xff] %v11418
        %11451 = vst [vmem:[#allocation4 + $0x18] sm:$0xff] %v11419
        %11452 = vst [vmem:[#allocation4 + $0x20] sm:$0xff] %v11420
        %11453 = vst [vmem:[#allocation4 + $0x28] sm:$0xff] %v11421
        %11454 = vst [vmem:[#allocation4 + $0x30] sm:$0xff] %v11422
        %11455 = vst [vmem:[#allocation4 + $0x38] sm:$0xff] %v11423
        %11456 = vst [vmem:[#allocation4 + $0x40] sm:$0xff] %v11424
        %11457 = vst [vmem:[#allocation4 + $0x48] sm:$0xff] %v11425
        %11458 = vst [vmem:[#allocation4 + $0x50] sm:$0xff] %v11426
        %11459 = vst [vmem:[#allocation4 + $0x58] sm:$0xff] %v11427
        %11460 = vst [vmem:[#allocation4 + $0x60] sm:$0xff] %v11428
        %11461 = vst [vmem:[#allocation4 + $0x68] sm:$0xff] %v11429
        %11462 = vst [vmem:[#allocation4 + $0x70] sm:$0xff] %v11430
        %11463 = vst [vmem:[#allocation4 + $0x78] sm:$0xff] %v11431
        %11464 = vst [vmem:[#allocation4 + $0x80] sm:$0xff] %v11432
        %11465 = vst [vmem:[#allocation4 + $0x88] sm:$0xff] %v11433
        %11466 = vst [vmem:[#allocation4 + $0x90] sm:$0xff] %v11434
        %11467 = vst [vmem:[#allocation4 + $0x98] sm:$0xff] %v11435
        %11468 = vst [vmem:[#allocation4 + $0xa0] sm:$0xff] %v11436
        %11469 = vst [vmem:[#allocation4 + $0xa8] sm:$0xff] %v11437
        %11470 = vst [vmem:[#allocation4 + $0xb0] sm:$0xff] %v11438
        %11471 = vst [vmem:[#allocation4 + $0xb8] sm:$0xff] %v11439
        %11472 = vst [vmem:[#allocation4 + $0xc0] sm:$0xff] %v11440
        %11473 = vst [vmem:[#allocation4 + $0xc8] sm:$0xff] %v11441
        %11474 = vst [vmem:[#allocation4 + $0xd0] sm:$0xff] %v11442
        %11475 = vst [vmem:[#allocation4 + $0xd8] sm:$0xff] %v11443
        %11476 = vst [vmem:[#allocation4 + $0xe0] sm:$0xff] %v11444
        %11477 = vst [vmem:[#allocation4 + $0xe8] sm:$0xff] %v11445
        %11478 = vst [vmem:[#allocation4 + $0xf0] sm:$0xff] %v11446
        %11479 = vst [vmem:[#allocation4 + $0xf8] sm:$0xff] %v11447
        %v11480 = vld [vmem:[#allocation4] sm:$0xff]
        %v11481 = vld [vmem:[#allocation4 + $0x8] sm:$0xff]
        %v11482 = vld [vmem:[#allocation4 + $0x10] sm:$0xff]
        %v11483 = vld [vmem:[#allocation4 + $0x18] sm:$0xff]
        %v11484 = vld [vmem:[#allocation4 + $0x20] sm:$0xff]
        %v11485 = vld [vmem:[#allocation4 + $0x28] sm:$0xff]
        %v11486 = vld [vmem:[#allocation4 + $0x30] sm:$0xff]
        %v11487 = vld [vmem:[#allocation4 + $0x38] sm:$0xff]
        %v11488 = vld [vmem:[#allocation4 + $0x40] sm:$0xff]
        %v11489 = vld [vmem:[#allocation4 + $0x48] sm:$0xff]
        %v11490 = vld [vmem:[#allocation4 + $0x50] sm:$0xff]
        %v11491 = vld [vmem:[#allocation4 + $0x58] sm:$0xff]
        %v11492 = vld [vmem:[#allocation4 + $0x60] sm:$0xff]
        %v11493 = vld [vmem:[#allocation4 + $0x68] sm:$0xff]
        %v11494 = vld [vmem:[#allocation4 + $0x70] sm:$0xff]
        %v11495 = vld [vmem:[#allocation4 + $0x78] sm:$0xff]
        %v11496 = vld [vmem:[#allocation4 + $0x80] sm:$0xff]
        %v11497 = vld [vmem:[#allocation4 + $0x88] sm:$0xff]
        %v11498 = vld [vmem:[#allocation4 + $0x90] sm:$0xff]
        %v11499 = vld [vmem:[#allocation4 + $0x98] sm:$0xff]
        %v11500 = vld [vmem:[#allocation4 + $0xa0] sm:$0xff]
        %v11501 = vld [vmem:[#allocation4 + $0xa8] sm:$0xff]
        %v11502 = vld [vmem:[#allocation4 + $0xb0] sm:$0xff]
        %v11503 = vld [vmem:[#allocation4 + $0xb8] sm:$0xff]
        %v11504 = vld [vmem:[#allocation4 + $0xc0] sm:$0xff]
        %v11505 = vld [vmem:[#allocation4 + $0xc8] sm:$0xff]
        %v11506 = vld [vmem:[#allocation4 + $0xd0] sm:$0xff]
        %v11507 = vld [vmem:[#allocation4 + $0xd8] sm:$0xff]
        %v11508 = vld [vmem:[#allocation4 + $0xe0] sm:$0xff]
        %v11509 = vld [vmem:[#allocation4 + $0xe8] sm:$0xff]
        %v11510 = vld [vmem:[#allocation4 + $0xf0] sm:$0xff]
        %v11511 = vld [vmem:[#allocation4 + $0xf8] sm:$0xff]
        %v11512 = vld [vmem:[%s4] sm:$0x1]
        %v11514 = vperm.slane %v11512, 0
        %v11516 = vadd.f32 %v11480, %v11514
        %v11517 = vadd.f32 %v11481, %v11514
        %v11518 = vadd.f32 %v11482, %v11514
        %v11519 = vadd.f32 %v11483, %v11514
        %v11520 = vadd.f32 %v11484, %v11514
        %v11521 = vadd.f32 %v11485, %v11514
        %v11522 = vadd.f32 %v11486, %v11514
        %v11523 = vadd.f32 %v11487, %v11514
        %v11524 = vadd.f32 %v11488, %v11514
        %v11525 = vadd.f32 %v11489, %v11514
        %v11526 = vadd.f32 %v11490, %v11514
        %v11527 = vadd.f32 %v11491, %v11514
        %v11528 = vadd.f32 %v11492, %v11514
        %v11529 = vadd.f32 %v11493, %v11514
        %v11530 = vadd.f32 %v11494, %v11514
        %v11531 = vadd.f32 %v11495, %v11514
        %v11532 = vadd.f32 %v11496, %v11514
        %v11533 = vadd.f32 %v11497, %v11514
        %v11534 = vadd.f32 %v11498, %v11514
        %v11535 = vadd.f32 %v11499, %v11514
        %v11536 = vadd.f32 %v11500, %v11514
        %v11537 = vadd.f32 %v11501, %v11514
        %v11538 = vadd.f32 %v11502, %v11514
        %v11539 = vadd.f32 %v11503, %v11514
        %v11540 = vadd.f32 %v11504, %v11514
        %v11541 = vadd.f32 %v11505, %v11514
        %v11542 = vadd.f32 %v11506, %v11514
        %v11543 = vadd.f32 %v11507, %v11514
        %v11544 = vadd.f32 %v11508, %v11514
        %v11545 = vadd.f32 %v11509, %v11514
        %v11546 = vadd.f32 %v11510, %v11514
        %v11547 = vadd.f32 %v11511, %v11514
        %s11548 = scalar_lea.vmem %s250, 48
        %v11549 = vld [vmem:[%s11548 + $0x1] sm:$0xff]
        %v11550 = vld [vmem:[%s11548 + $0x9] sm:$0xff]
        %v11551 = vld [vmem:[%s11548 + $0x19] sm:$0xff]
        %v11552 = vld [vmem:[%s11548 + $0x21] sm:$0xff]
        %v11553 = vld [vmem:[%s11548 + $0x31] sm:$0xff]
        %v11554 = vld [vmem:[%s11548 + $0x39] sm:$0xff]
        %v11555 = vld [vmem:[%s11548 + $0x49] sm:$0xff]
        %v11556 = vld [vmem:[%s11548 + $0x51] sm:$0xff]
        %v11557 = vld [vmem:[%s11548 + $0x61] sm:$0xff]
        %v11558 = vld [vmem:[%s11548 + $0x69] sm:$0xff]
        %v11559 = vld [vmem:[%s11548 + $0x79] sm:$0xff]
        %v11560 = vld [vmem:[%s11548 + $0x81] sm:$0xff]
        %v11561 = vld [vmem:[%s11548 + $0x91] sm:$0xff]
        %v11562 = vld [vmem:[%s11548 + $0x99] sm:$0xff]
        %v11563 = vld [vmem:[%s11548 + $0xa9] sm:$0xff]
        %v11564 = vld [vmem:[%s11548 + $0xb1] sm:$0xff]
        %v11565 = vld [vmem:[%s11548 + $0xc1] sm:$0xff]
        %v11566 = vld [vmem:[%s11548 + $0xc9] sm:$0xff]
        %v11567 = vld [vmem:[%s11548 + $0xd9] sm:$0xff]
        %v11568 = vld [vmem:[%s11548 + $0xe1] sm:$0xff]
        %v11569 = vld [vmem:[%s11548 + $0xf1] sm:$0xff]
        %v11570 = vld [vmem:[%s11548 + $0xf9] sm:$0xff]
        %v11571 = vld [vmem:[%s11548 + $0x109] sm:$0xff]
        %v11572 = vld [vmem:[%s11548 + $0x111] sm:$0xff]
        %v11573 = vld [vmem:[%s11548 + $0x121] sm:$0xff]
        %v11574 = vld [vmem:[%s11548 + $0x129] sm:$0xff]
        %v11575 = vld [vmem:[%s11548 + $0x139] sm:$0xff]
        %v11576 = vld [vmem:[%s11548 + $0x141] sm:$0xff]
        %v11577 = vld [vmem:[%s11548 + $0x151] sm:$0xff]
        %v11578 = vld [vmem:[%s11548 + $0x159] sm:$0xff]
        %v11579 = vld [vmem:[%s11548 + $0x169] sm:$0xff]
        %v11580 = vld [vmem:[%s11548 + $0x171] sm:$0xff]
        %v11581 = vadd.f32 %v11516, %v11549
        %v11582 = vadd.f32 %v11517, %v11550
        %v11583 = vadd.f32 %v11518, %v11551
        %v11584 = vadd.f32 %v11519, %v11552
        %v11585 = vadd.f32 %v11520, %v11553
        %v11586 = vadd.f32 %v11521, %v11554
        %v11587 = vadd.f32 %v11522, %v11555
        %v11588 = vadd.f32 %v11523, %v11556
        %v11589 = vadd.f32 %v11524, %v11557
        %v11590 = vadd.f32 %v11525, %v11558
        %v11591 = vadd.f32 %v11526, %v11559
        %v11592 = vadd.f32 %v11527, %v11560
        %v11593 = vadd.f32 %v11528, %v11561
        %v11594 = vadd.f32 %v11529, %v11562
        %v11595 = vadd.f32 %v11530, %v11563
        %v11596 = vadd.f32 %v11531, %v11564
        %v11597 = vadd.f32 %v11532, %v11565
        %v11598 = vadd.f32 %v11533, %v11566
        %v11599 = vadd.f32 %v11534, %v11567
        %v11600 = vadd.f32 %v11535, %v11568
        %v11601 = vadd.f32 %v11536, %v11569
        %v11602 = vadd.f32 %v11537, %v11570
        %v11603 = vadd.f32 %v11538, %v11571
        %v11604 = vadd.f32 %v11539, %v11572
        %v11605 = vadd.f32 %v11540, %v11573
        %v11606 = vadd.f32 %v11541, %v11574
        %v11607 = vadd.f32 %v11542, %v11575
        %v11608 = vadd.f32 %v11543, %v11576
        %v11609 = vadd.f32 %v11544, %v11577
        %v11610 = vadd.f32 %v11545, %v11578
        %v11611 = vadd.f32 %v11546, %v11579
        %v11612 = vadd.f32 %v11547, %v11580
        %v11613 = vmax.f32 %v11581, 0.0
        %v11614 = vmax.f32 %v11582, 0.0
        %v11615 = vmax.f32 %v11583, 0.0
        %v11616 = vmax.f32 %v11584, 0.0
        %v11617 = vmax.f32 %v11585, 0.0
        %v11618 = vmax.f32 %v11586, 0.0
        %v11619 = vmax.f32 %v11587, 0.0
        %v11620 = vmax.f32 %v11588, 0.0
        %v11621 = vmax.f32 %v11589, 0.0
        %v11622 = vmax.f32 %v11590, 0.0
        %v11623 = vmax.f32 %v11591, 0.0
        %v11624 = vmax.f32 %v11592, 0.0
        %v11625 = vmax.f32 %v11593, 0.0
        %v11626 = vmax.f32 %v11594, 0.0
        %v11627 = vmax.f32 %v11595, 0.0
        %v11628 = vmax.f32 %v11596, 0.0
        %v11629 = vmax.f32 %v11597, 0.0
        %v11630 = vmax.f32 %v11598, 0.0
        %v11631 = vmax.f32 %v11599, 0.0
        %v11632 = vmax.f32 %v11600, 0.0
        %v11633 = vmax.f32 %v11601, 0.0
        %v11634 = vmax.f32 %v11602, 0.0
        %v11635 = vmax.f32 %v11603, 0.0
        %v11636 = vmax.f32 %v11604, 0.0
        %v11637 = vmax.f32 %v11605, 0.0
        %v11638 = vmax.f32 %v11606, 0.0
        %v11639 = vmax.f32 %v11607, 0.0
        %v11640 = vmax.f32 %v11608, 0.0
        %v11641 = vmax.f32 %v11609, 0.0
        %v11642 = vmax.f32 %v11610, 0.0
        %v11643 = vmax.f32 %v11611, 0.0
        %v11644 = vmax.f32 %v11612, 0.0
        %11645 = vst [vmem:[%s243] sm:$0xff] %v11613
        %11646 = vst [vmem:[%s243 + $0x8] sm:$0xff] %v11614
        %11647 = vst [vmem:[%s243 + $0x10] sm:$0xff] %v11615
        %11648 = vst [vmem:[%s243 + $0x18] sm:$0xff] %v11616
        %11649 = vst [vmem:[%s243 + $0x20] sm:$0xff] %v11617
        %11650 = vst [vmem:[%s243 + $0x28] sm:$0xff] %v11618
        %11651 = vst [vmem:[%s243 + $0x30] sm:$0xff] %v11619
        %11652 = vst [vmem:[%s243 + $0x38] sm:$0xff] %v11620
        %11653 = vst [vmem:[%s243 + $0x40] sm:$0xff] %v11621
        %11654 = vst [vmem:[%s243 + $0x48] sm:$0xff] %v11622
        %11655 = vst [vmem:[%s243 + $0x50] sm:$0xff] %v11623
        %11656 = vst [vmem:[%s243 + $0x58] sm:$0xff] %v11624
        %11657 = vst [vmem:[%s243 + $0x60] sm:$0xff] %v11625
        %11658 = vst [vmem:[%s243 + $0x68] sm:$0xff] %v11626
        %11659 = vst [vmem:[%s243 + $0x70] sm:$0xff] %v11627
        %11660 = vst [vmem:[%s243 + $0x78] sm:$0xff] %v11628
        %11661 = vst [vmem:[%s243 + $0x80] sm:$0xff] %v11629
        %11662 = vst [vmem:[%s243 + $0x88] sm:$0xff] %v11630
        %11663 = vst [vmem:[%s243 + $0x90] sm:$0xff] %v11631
        %11664 = vst [vmem:[%s243 + $0x98] sm:$0xff] %v11632
        %11665 = vst [vmem:[%s243 + $0xa0] sm:$0xff] %v11633
        %11666 = vst [vmem:[%s243 + $0xa8] sm:$0xff] %v11634
        %11667 = vst [vmem:[%s243 + $0xb0] sm:$0xff] %v11635
        %11668 = vst [vmem:[%s243 + $0xb8] sm:$0xff] %v11636
        %11669 = vst [vmem:[%s243 + $0xc0] sm:$0xff] %v11637
        %11670 = vst [vmem:[%s243 + $0xc8] sm:$0xff] %v11638
        %11671 = vst [vmem:[%s243 + $0xd0] sm:$0xff] %v11639
        %11672 = vst [vmem:[%s243 + $0xd8] sm:$0xff] %v11640
        %11673 = vst [vmem:[%s243 + $0xe0] sm:$0xff] %v11641
        %11674 = vst [vmem:[%s243 + $0xe8] sm:$0xff] %v11642
        %11675 = vst [vmem:[%s243 + $0xf0] sm:$0xff] %v11643
        %11676 = vst [vmem:[%s243 + $0xf8] sm:$0xff] %v11644
        %s11677 = sand.u32 %s157, 1
        %s11678 = scalar_lea.sflag [#allocation6], %s11677
        %s11679 = sand.u32 %s157, 1
        %s11680 = smul.addr %s11679, 256
        %s11681 = scalar_lea.vmem [#allocation5], %s11680
        // Predicated region
        $region45: #{tpu_custom_call.1} parent=39 // pred_check
          %p11682 = pneg %p167
        $region46: #{tpu_custom_call.1} parent=39 // pred_check_branch
          %11684 = sbr.rel (%p11682) target = $region48
        $region47: #{tpu_custom_call.1} parent=39 // pred_region
          %s11685 = smul.u32 %s23, 2
          %s11686 = sadd.s32 %s11685, %s24
          %11688 = vsyncadd %s11678, 0
          %s11689 = smul.addr %s11686, 32
          %s11690 = smul.addr %s11689, 8
          %s11691 = scalar_lea.hbm %s5, %s11690
          %s11692 = sshll.u32 %s11681, 4
          %s11693 = int_to_ptr.vmem [resolvable:$true] %s11692
          %s11694 = sshll.u32 %s11691, 4
          %s11695 = int_to_ptr.hbm [resolvable:$true] %s11694
          %11700 = dma.vmem_to_hbm [thread:$0]  %s11693, 4096, %s11695, %s11678, 128, 128, 8
        $region48: #{tpu_custom_call.1} parent=39 // pred_fallthru
          _
      $region40: #{tpu_custom_call.1} parent=5 // pred_fallthru
        _
      %p11701 = scmp.le.s32.totalorder 2, %s14
      // Predicated region
      $region49: #{tpu_custom_call.1} parent=5 // pred_check
        %p11702 = pneg %p11701
      $region50: #{tpu_custom_call.1} parent=5 // pred_check_branch
        %11704 = sbr.rel (%p11702) target = $region52
      $region51: #{tpu_custom_call.1} parent=5 // pred_region
        %s11705 = ssub.s32 %s14, 2
        // Predicated region
        $region53: #{tpu_custom_call.1} parent=51 // pred_check
          %p11706 = pneg %p173
        $region54: #{tpu_custom_call.1} parent=51 // pred_check_branch
          %11708 = sbr.rel (%p11706) target = $region56
        $region55: #{tpu_custom_call.1} parent=51 // pred_region
          %s11709 = sand.u32 %s158, 1
          %s11710 = scalar_lea.sflag [#allocation6], %s11709
          %s11711 = sand.u32 %s158, 1
          %s11712 = smul.addr %s11711, 256
          %s11713 = scalar_lea.vmem [#allocation5], %s11712
          %11715 = dma.done %s11710, 4096
        $region56: #{tpu_custom_call.1} parent=51 // pred_fallthru
          _
      $region52: #{tpu_custom_call.1} parent=5 // pred_fallthru
        _
    $region6: #{tpu_custom_call.1} parent=1 // loop_footer
      %s18 = sadd.s32 1, %s14
    $region7: #{tpu_custom_call.1} parent=1 // loop_footer_branch
      %13 = sbr.rel target = $region3
    $region8: #{tpu_custom_call.1} parent=1 // loop_exit
      _
    %11716 = vsyncpa [#allocation6], 1
    %s11717 = scalar_lea.sflag [#allocation6], 1
    %11718 = vsyncpa %s11717, 1

</llo_original>
